<compile_context>
chip_gen: v6e
topology: v6e:2x2x1
jax: 0.10.0
libtpu: 0.0.40
codegen_flags: <defaults>
</compile_context>

<pallas_src>
import functools

import jax
import jax.numpy as jnp
from jax import lax
from jax.experimental import pallas as pl
from jax.experimental.pallas import tpu as pltpu


def _round_up(v, m):
    return (v + m - 1) // m * m


def _conv_block_kernel(x_ref, w1_ref, b1_ref, w2_ref, b2_ref, o_ref,
                       xpad_ref, slab1_ref, y1_ref, slab2_ref, rp_ref,
                       *, H, W, pad, mc):
    """One grid step == one batch element; conv1+BN1+ReLU, conv2+BN2+ReLU and
    the full 2x2 max-pool, all resident in VMEM."""
    HW = H * W
    Wo = W // 2
    Cin = x_ref.shape[-1]
    Cmid = w1_ref.shape[-1]
    Cout = w2_ref.shape[-1]

    # ---- stage input into a vertically zero-padded bf16 flat buffer -------
    # (pad rows re-zeroed every step: cheap, and megacore-safe — see header.)
    xpad_ref[pl.ds(0, pad), :] = jnp.zeros((pad, Cin), xpad_ref.dtype)
    xpad_ref[pl.ds(pad + HW, pad), :] = jnp.zeros((pad, Cin), xpad_ref.dtype)
    y1_ref[pl.ds(0, pad), :] = jnp.zeros((pad, Cmid), y1_ref.dtype)
    y1_ref[pl.ds(pad + HW, pad), :] = jnp.zeros((pad, Cmid), y1_ref.dtype)
    xpad_ref[pl.ds(pad, HW), :] = x_ref[0]

    # Column index (w) of each flattened position p = h*W + w, used to zero
    # horizontally out-of-bounds taps (padding=1 semantics).
    col = lax.broadcasted_iota(jnp.int32, (HW, 1), 0) % W
    col_masks = {-1: col >= 1, 0: None, 1: col <= W - 2}

    def build_slab(src_ref, slab_ref, cin):
        """im2col: write the 9 shifted taps as column blocks of the slab."""
        tap = 0
        for oy in (-1, 0, 1):
            for ox in (-1, 0, 1):
                patch = src_ref[pl.ds(pad + oy * W + ox, HW), :]   # (HW, cin)
                if col_masks[ox] is not None:
                    patch = jnp.where(col_masks[ox], patch,
                                      jnp.zeros_like(patch))
                slab_ref[:, pl.ds(tap * cin, cin)] = patch
                tap += 1

    # ---- conv1 (+ folded BN1) + ReLU: one (mc, 9*Cin) @ (9*Cin, Cmid) ------
    build_slab(xpad_ref, slab1_ref, Cin)
    b1 = b1_ref[...]
    for m in range(0, HW, mc):
        acc = jnp.dot(slab1_ref[pl.ds(m, mc), :], w1_ref[...],
                      preferred_element_type=jnp.float32)
        y1 = jnp.maximum(acc + b1, 0.0)
        y1_ref[pl.ds(pad + m, mc), :] = y1.astype(y1_ref.dtype)

    # ---- conv2 (+ folded BN2) + ReLU + row half of the 2x2 max-pool --------
    build_slab(y1_ref, slab2_ref, Cmid)
    b2 = b2_ref[...]
    for m in range(0, HW, mc):
        acc = jnp.dot(slab2_ref[pl.ds(m, mc), :], w2_ref[...],
                      preferred_element_type=jnp.float32)
        y2 = jnp.maximum(acc + b2, 0.0)                  # (mc, Cout) f32
        r = mc // (2 * W)                                # image-row pairs
        y2r = y2.reshape(r, 2, W, Cout)                  # leading split: free
        rp = jnp.maximum(y2r[:, 0], y2r[:, 1])           # (r, W, Cout)
        rp_ref[pl.ds(m // (2 * W), r), :, :] = rp

    # ---- column half of the 2x2 max-pool + lane-dense packing -------------
    # For each pooled column w2, max its even/odd source columns and store the
    # (Ho, Cout) block at lane offset w2*Cout of the (Ho, Wo*Cout) output.
    for w2 in range(Wo):
        a = rp_ref[:, 2 * w2, :]                         # (Ho, Cout)
        b = rp_ref[:, 2 * w2 + 1, :]
        o_ref[0, :, pl.ds(w2 * Cout, Cout)] = (
            jnp.maximum(a, b).astype(o_ref.dtype))


def _fold_bn(w, bn, eps):
    """Fold eval-mode BatchNorm into the conv; return (9*Cin, Cout) bf16
    weight matrix (K ordered (tap, cin), tap = kh*3 + kw) and f32 bias."""
    gamma, beta, mean, var = bn
    s = gamma / jnp.sqrt(var + eps)
    w_folded = w * s[:, None, None, None]                # scale out-channels
    b_folded = (beta - mean * s).reshape(1, -1).astype(jnp.float32)
    cout, cin = w.shape[0], w.shape[1]
    w_mat = jnp.transpose(w_folded, (2, 3, 1, 0)).reshape(9 * cin, cout)
    return w_mat.astype(jnp.bfloat16), b_folded


def conv_basic_block_forward(x, w1, bn1, w2, bn2, *, eps=1e-5):
    """Pallas forward of ConvBasicBlock (stride=1, dilation=1, eval-mode BN).

    x  : (N, Cin, H, W) float32, NCHW (PyTorch layout)
    w1 : (Cmid, Cin, 3, 3), w2 : (Cout, Cmid, 3, 3) bias-free conv weights
    bn1, bn2 : (gamma, beta, running_mean, running_var) tuples
    returns (N, Cout, H//2, W//2) NCHW
    """
    # TODO(synk): only stride=1 / dilation=1 (the ConvBasicBlock defaults) and
    # eval-mode BatchNorm are implemented; training-mode batch statistics and
    # general stride/dilation are omitted.
    N, Cin, H, W = x.shape
    Cmid, Cout = w1.shape[0], w2.shape[0]
    assert H % 2 == 0 and W % 2 == 0, "2x2 stride-2 max-pool needs even H, W"
    HW = H * W
    Ho, Wo = H // 2, W // 2
    pad = _round_up(W + 1, 8)        # zero rows above/below the flat image

    # M-chunk for the matmuls: a multiple of two image rows (so the row half
    # of the pool stays chunk-local) that divides H*W; ~128 keeps the live
    # accumulator + patch slab well inside the vreg file.
    mc = HW
    for cand in (128, 256, 512):
        if HW % cand == 0 and cand % (2 * W) == 0:
            mc = cand
            break

    w1_mat, b1 = _fold_bn(w1, bn1, eps)     # (9*Cin, Cmid) bf16, (1,Cmid) f32
    w2_mat, b2 = _fold_bn(w2, bn2, eps)

    # NCHW -> flattened NHWC + bf16 cast, fused into one XLA pass; the
    # vertical zero-padding now happens inside the kernel (no jnp.pad pass).
    xf = jnp.transpose(x, (0, 2, 3, 1)).reshape(N, HW, Cin).astype(jnp.bfloat16)

    # Rough per-step VMEM footprint (double-buffered blocks + scratch).
    vmem_est = (
        2 * HW * Cin * 2 + 2 * Ho * Wo * Cout * 4
        + 2 * ((9 * Cin * Cmid + 9 * Cmid * Cout) * 2 + (Cmid + Cout) * 4)
        + ((HW + 2 * pad) * (Cin + Cmid) + HW * 9 * (Cin + Cmid)) * 2
        + Ho * W * Cout * 4)
    # TODO(synk): H-tile the grid (1-row halo) for images too large to keep
    # resident per step (v7x only has 64 MiB of VMEM).
    assert vmem_est < 30 * 2**20, f"per-step VMEM {vmem_est}B too large"

    kernel = functools.partial(_conv_block_kernel, H=H, W=W, pad=pad, mc=mc)

    out_flat = pl.pallas_call(
        kernel,
        out_shape=jax.ShapeDtypeStruct((N, Ho, Wo * Cout), x.dtype),
        grid_spec=pltpu.PrefetchScalarGridSpec(
            num_scalar_prefetch=0,
            grid=(N,),
            in_specs=[
                pl.BlockSpec((1, HW, Cin), lambda i: (i, 0, 0)),     # x (flat)
                pl.BlockSpec((9 * Cin, Cmid), lambda i: (0, 0)),     # W1
                pl.BlockSpec((1, Cmid), lambda i: (0, 0)),           # b1
                pl.BlockSpec((9 * Cmid, Cout), lambda i: (0, 0)),    # W2
                pl.BlockSpec((1, Cout), lambda i: (0, 0)),           # b2
            ],
            out_specs=pl.BlockSpec((1, Ho, Wo * Cout), lambda i: (i, 0, 0)),
            scratch_shapes=[
                pltpu.VMEM((HW + 2 * pad, Cin), jnp.bfloat16),   # padded x
                pltpu.VMEM((HW, 9 * Cin), jnp.bfloat16),         # im2col slab1
                pltpu.VMEM((HW + 2 * pad, Cmid), jnp.bfloat16),  # padded conv1
                pltpu.VMEM((HW, 9 * Cmid), jnp.bfloat16),        # im2col slab2
                pltpu.VMEM((Ho, W, Cout), jnp.float32),          # row-pooled
            ],
        ),
        compiler_params=pltpu.CompilerParams(
            dimension_semantics=("parallel",),
            vmem_limit_bytes=32 * 2**20,
        ),
    )(xf, w1_mat, b1, w2_mat, b2)

    out_nhwc = out_flat.reshape(N, Ho, Wo, Cout)
    return jnp.transpose(out_nhwc, (0, 3, 1, 2))                 # back to NCHW


def conv_basic_block_reference(x, w1, bn1, w2, bn2, *, eps=1e-5):
    """Pure-JAX f32 reference mirroring the PyTorch forward (eval mode)."""
    def conv_bn_relu(h, w, bn):
        y = lax.conv_general_dilated(
            h, w, window_strides=(1, 1), padding=((1, 1), (1, 1)),
            dimension_numbers=("NCHW", "OIHW", "NCHW"),
            precision=lax.Precision.HIGHEST)
        g, b, m, v = bn
        y = (y - m[None, :, None, None]) * (
            g[None, :, None, None] / jnp.sqrt(v[None, :, None, None] + eps)
        ) + b[None, :, None, None]
        return jnp.maximum(y, 0.0)

    y = conv_bn_relu(x, w1, bn1)
    y = conv_bn_relu(y, w2, bn2)
    n, c, hh, ww = y.shape
    return y.reshape(n, c, hh // 2, 2, ww // 2, 2).max(axis=(3, 5))


if __name__ == "__main__":
    # Small shapes consistent with the module: inplanes=32, planes=64.
    N, Cin, H, W = 2, 32, 16, 16
    Cmid = Cout = 64

    key = jax.random.PRNGKey(0)
    ks = jax.random.split(key, 11)

    x = jax.random.normal(ks[0], (N, Cin, H, W), dtype=jnp.float32)
    w1 = 0.05 * jax.random.normal(ks[1], (Cmid, Cin, 3, 3), dtype=jnp.float32)
    w2 = 0.05 * jax.random.normal(ks[2], (Cout, Cmid, 3, 3), dtype=jnp.float32)
    bn1 = (1.0 + 0.1 * jax.random.normal(ks[3], (Cmid,), dtype=jnp.float32),
           0.1 * jax.random.normal(ks[4], (Cmid,), dtype=jnp.float32),
           0.1 * jax.random.normal(ks[5], (Cmid,), dtype=jnp.float32),
           0.5 + jax.random.uniform(ks[6], (Cmid,), dtype=jnp.float32))
    bn2 = (1.0 + 0.1 * jax.random.normal(ks[7], (Cout,), dtype=jnp.float32),
           0.1 * jax.random.normal(ks[8], (Cout,), dtype=jnp.float32),
           0.1 * jax.random.normal(ks[9], (Cout,), dtype=jnp.float32),
           0.5 + jax.random.uniform(ks[10], (Cout,), dtype=jnp.float32))

    out = conv_basic_block_forward(x, w1, bn1, w2, bn2)
    out = jax.block_until_ready(out)

    ref = conv_basic_block_reference(x, w1, bn1, w2, bn2)
    assert out.shape == (N, Cout, H // 2, W // 2), out.shape
    # bf16 MXU operands vs. f32 HIGHEST-precision reference -> relaxed bounds.
    max_err = float(jnp.max(jnp.abs(out - ref)))
    mean_err = float(jnp.mean(jnp.abs(out - ref)))
    assert max_err < 1e-1, max_err
    assert mean_err < 1e-2, mean_err

    print("KERNEL_OK")
</pallas_src>

<mosaic_0001>
module attributes {stable_mosaic.version = 11 : i64} {
  func.func @_conv_block_kernel(%arg0: i32, %arg1: memref<1x256x32xbf16, #tpu.memory_space<vmem>>, %arg2: memref<288x64xbf16, #tpu.memory_space<vmem>>, %arg3: memref<1x64xf32, #tpu.memory_space<vmem>>, %arg4: memref<576x64xbf16, #tpu.memory_space<vmem>>, %arg5: memref<1x64xf32, #tpu.memory_space<vmem>>, %arg6: memref<1x8x512xf32, #tpu.memory_space<vmem>>, %arg7: memref<304x32xbf16, #tpu.memory_space<vmem>>, %arg8: memref<256x288xbf16, #tpu.memory_space<vmem>>, %arg9: memref<304x64xbf16, #tpu.memory_space<vmem>>, %arg10: memref<256x576xbf16, #tpu.memory_space<vmem>>, %arg11: memref<8x16x64xf32, #tpu.memory_space<vmem>>) attributes {dimension_semantics = [#tpu.dimension_semantics<parallel>], iteration_bounds = array<i64: 2>, scalar_prefetch = 0 : i64, scratch_operands = 5 : i64, tpu.core_type = #tpu.core_type<tc>, window_params = [{transform_indices = @transform_0, window_bounds = array<i64: 1, 256, 32>}, {pipeline_mode = #tpu.pipeline_mode<synchronous>, transform_indices = @transform_1, window_bounds = array<i64: 288, 64>}, {pipeline_mode = #tpu.pipeline_mode<synchronous>, transform_indices = @transform_2, window_bounds = array<i64: 1, 64>}, {pipeline_mode = #tpu.pipeline_mode<synchronous>, transform_indices = @transform_3, window_bounds = array<i64: 576, 64>}, {pipeline_mode = #tpu.pipeline_mode<synchronous>, transform_indices = @transform_4, window_bounds = array<i64: 1, 64>}, {transform_indices = @transform_5, window_bounds = array<i64: 1, 8, 512>}]} {
    %cst = arith.constant 0.000000e+00 : bf16
    %0 = vector.broadcast %cst : bf16 to vector<24x32xbf16>
    %c0 = arith.constant 0 : index
    %c0_0 = arith.constant 0 : index
    %1 = vector.load %arg7[%c0, %c0_0] : memref<304x32xbf16, #tpu.memory_space<vmem>>, vector<24x32xbf16>
    tpu.vector_store %arg7[%c0, %c0_0], %0 {strides = array<i32>} : memref<304x32xbf16, #tpu.memory_space<vmem>>, vector<24x32xbf16>,
    %cst_1 = arith.constant 0.000000e+00 : bf16
    %2 = vector.broadcast %cst_1 : bf16 to vector<24x32xbf16>
    %c280 = arith.constant 280 : index
    %c0_2 = arith.constant 0 : index
    %3 = vector.load %arg7[%c280, %c0_2] : memref<304x32xbf16, #tpu.memory_space<vmem>>, vector<24x32xbf16>
    tpu.vector_store %arg7[%c280, %c0_2], %2 {strides = array<i32>} : memref<304x32xbf16, #tpu.memory_space<vmem>>, vector<24x32xbf16>,
    %cst_3 = arith.constant 0.000000e+00 : bf16
    %4 = vector.broadcast %cst_3 : bf16 to vector<24x64xbf16>
    %c0_4 = arith.constant 0 : index
    %c0_5 = arith.constant 0 : index
    %5 = vector.load %arg9[%c0_4, %c0_5] : memref<304x64xbf16, #tpu.memory_space<vmem>>, vector<24x64xbf16>
    tpu.vector_store %arg9[%c0_4, %c0_5], %4 {strides = array<i32>} : memref<304x64xbf16, #tpu.memory_space<vmem>>, vector<24x64xbf16>,
    %cst_6 = arith.constant 0.000000e+00 : bf16
    %6 = vector.broadcast %cst_6 : bf16 to vector<24x64xbf16>
    %c280_7 = arith.constant 280 : index
    %c0_8 = arith.constant 0 : index
    %7 = vector.load %arg9[%c280_7, %c0_8] : memref<304x64xbf16, #tpu.memory_space<vmem>>, vector<24x64xbf16>
    tpu.vector_store %arg9[%c280_7, %c0_8], %6 {strides = array<i32>} : memref<304x64xbf16, #tpu.memory_space<vmem>>, vector<24x64xbf16>,
    %c0_9 = arith.constant 0 : index
    %c0_10 = arith.constant 0 : index
    %c0_11 = arith.constant 0 : index
    %8 = vector.load %arg1[%c0_9, %c0_10, %c0_11] : memref<1x256x32xbf16, #tpu.memory_space<vmem>>, vector<1x256x32xbf16>
    %9 = vector.shape_cast %8 : vector<1x256x32xbf16> to vector<256x32xbf16>
    %c24 = arith.constant 24 : index
    %c0_12 = arith.constant 0 : index
    %10 = vector.load %arg7[%c24, %c0_12] : memref<304x32xbf16, #tpu.memory_space<vmem>>, vector<256x32xbf16>
    tpu.vector_store %arg7[%c24, %c0_12], %9 {strides = array<i32>} : memref<304x32xbf16, #tpu.memory_space<vmem>>, vector<256x32xbf16>,
    %11 = tpu.iota {dimensions = array<i32: 0>} : vector<256x1xi32>
    %c16_i32 = arith.constant 16 : i32
    %c0_i32 = arith.constant 0 : i32
    %12 = arith.cmpi eq, %c16_i32, %c0_i32 : i32
    %c1_i32 = arith.constant 1 : i32
    %13 = arith.select %12, %c1_i32, %c16_i32 : i32
    %14 = vector.broadcast %13 : i32 to vector<256x1xi32>
    %15 = arith.remsi %11, %14 : vector<256x1xi32>
    %c0_i32_13 = arith.constant 0 : i32
    %16 = vector.broadcast %c0_i32_13 : i32 to vector<256x1xi32>
    %17 = arith.cmpi ne, %15, %16 : vector<256x1xi32>
    %c0_i32_14 = arith.constant 0 : i32
    %18 = vector.broadcast %c0_i32_14 : i32 to vector<256x1xi32>
    %19 = arith.cmpi slt, %15, %18 : vector<256x1xi32>
    %c0_i32_15 = arith.constant 0 : i32
    %20 = arith.cmpi slt, %13, %c0_i32_15 : i32
    %21 = vector.broadcast %20 : i1 to vector<256x1xi1>
    %22 = vector.broadcast %21 : vector<256x1xi1> to vector<256x1xi1>
    %23 = arith.xori %19, %22 : vector<256x1xi1>
    %24 = arith.andi %23, %17 : vector<256x1xi1>
    %25 = vector.broadcast %13 : i32 to vector<256x1xi32>
    %26 = arith.addi %15, %25 : vector<256x1xi32>
    %27 = arith.select %24, %26, %15 : vector<256x1xi1>, vector<256x1xi32>
    %c1_i32_16 = arith.constant 1 : i32
    %28 = vector.broadcast %c1_i32_16 : i32 to vector<256x1xi32>
    %29 = arith.cmpi sge, %27, %28 : vector<256x1xi32>
    %c14_i32 = arith.constant 14 : i32
    %30 = vector.broadcast %c14_i32 : i32 to vector<256x1xi32>
    %31 = arith.cmpi sle, %27, %30 : vector<256x1xi32>
    %c7 = arith.constant 7 : index
    %c0_17 = arith.constant 0 : index
    %32 = vector.load %arg7[%c7, %c0_17] : memref<304x32xbf16, #tpu.memory_space<vmem>>, vector<256x32xbf16>
    %cst_18 = arith.constant 0.000000e+00 : bf16
    %33 = vector.broadcast %cst_18 : bf16 to vector<256x32xbf16>
    %34 = vector.shape_cast %29 : vector<256x1xi1> to vector<256x1xi1>
    %35 = vector.broadcast %34 : vector<256x1xi1> to vector<256x32xi1>
    %36 = arith.select %35, %32, %33 : vector<256x32xi1>, vector<256x32xbf16>
    %c0_19 = arith.constant 0 : index
    %c0_20 = arith.constant 0 : index
    %37 = vector.load %arg8[%c0_19, %c0_20] : memref<256x288xbf16, #tpu.memory_space<vmem>>, vector<256x32xbf16>
    tpu.vector_store %arg8[%c0_19, %c0_20], %36 {strides = array<i32>} : memref<256x288xbf16, #tpu.memory_space<vmem>>, vector<256x32xbf16>,
    %c8 = arith.constant 8 : index
    %c0_21 = arith.constant 0 : index
    %38 = vector.load %arg7[%c8, %c0_21] : memref<304x32xbf16, #tpu.memory_space<vmem>>, vector<256x32xbf16>
    %c0_22 = arith.constant 0 : index
    %c32 = arith.constant 32 : index
    %39 = vector.load %arg8[%c0_22, %c32] : memref<256x288xbf16, #tpu.memory_space<vmem>>, vector<256x32xbf16>
    tpu.vector_store %arg8[%c0_22, %c32], %38 {strides = array<i32>} : memref<256x288xbf16, #tpu.memory_space<vmem>>, vector<256x32xbf16>,
    %c9 = arith.constant 9 : index
    %c0_23 = arith.constant 0 : index
    %40 = vector.load %arg7[%c9, %c0_23] : memref<304x32xbf16, #tpu.memory_space<vmem>>, vector<256x32xbf16>
    %cst_24 = arith.constant 0.000000e+00 : bf16
    %41 = vector.broadcast %cst_24 : bf16 to vector<256x32xbf16>
    %42 = vector.shape_cast %31 : vector<256x1xi1> to vector<256x1xi1>
    %43 = vector.broadcast %42 : vector<256x1xi1> to vector<256x32xi1>
    %44 = arith.select %43, %40, %41 : vector<256x32xi1>, vector<256x32xbf16>
    %c0_25 = arith.constant 0 : index
    %c64 = arith.constant 64 : index
    %45 = vector.load %arg8[%c0_25, %c64] : memref<256x288xbf16, #tpu.memory_space<vmem>>, vector<256x32xbf16>
    tpu.vector_store %arg8[%c0_25, %c64], %44 {strides = array<i32>} : memref<256x288xbf16, #tpu.memory_space<vmem>>, vector<256x32xbf16>,
    %c23 = arith.constant 23 : index
    %c0_26 = arith.constant 0 : index
    %46 = vector.load %arg7[%c23, %c0_26] : memref<304x32xbf16, #tpu.memory_space<vmem>>, vector<256x32xbf16>
    %cst_27 = arith.constant 0.000000e+00 : bf16
    %47 = vector.broadcast %cst_27 : bf16 to vector<256x32xbf16>
    %48 = vector.shape_cast %29 : vector<256x1xi1> to vector<256x1xi1>
    %49 = vector.broadcast %48 : vector<256x1xi1> to vector<256x32xi1>
    %50 = arith.select %49, %46, %47 : vector<256x32xi1>, vector<256x32xbf16>
    %c0_28 = arith.constant 0 : index
    %c96 = arith.constant 96 : index
    %51 = vector.load %arg8[%c0_28, %c96] : memref<256x288xbf16, #tpu.memory_space<vmem>>, vector<256x32xbf16>
    tpu.vector_store %arg8[%c0_28, %c96], %50 {strides = array<i32>} : memref<256x288xbf16, #tpu.memory_space<vmem>>, vector<256x32xbf16>,
    %c24_29 = arith.constant 24 : index
    %c0_30 = arith.constant 0 : index
    %52 = vector.load %arg7[%c24_29, %c0_30] : memref<304x32xbf16, #tpu.memory_space<vmem>>, vector<256x32xbf16>
    %c0_31 = arith.constant 0 : index
    %c128 = arith.constant 128 : index
    %53 = vector.load %arg8[%c0_31, %c128] : memref<256x288xbf16, #tpu.memory_space<vmem>>, vector<256x32xbf16>
    tpu.vector_store %arg8[%c0_31, %c128], %52 {strides = array<i32>} : memref<256x288xbf16, #tpu.memory_space<vmem>>, vector<256x32xbf16>,
    %c25 = arith.constant 25 : index
    %c0_32 = arith.constant 0 : index
    %54 = vector.load %arg7[%c25, %c0_32] : memref<304x32xbf16, #tpu.memory_space<vmem>>, vector<256x32xbf16>
    %cst_33 = arith.constant 0.000000e+00 : bf16
    %55 = vector.broadcast %cst_33 : bf16 to vector<256x32xbf16>
    %56 = vector.shape_cast %31 : vector<256x1xi1> to vector<256x1xi1>
    %57 = vector.broadcast %56 : vector<256x1xi1> to vector<256x32xi1>
    %58 = arith.select %57, %54, %55 : vector<256x32xi1>, vector<256x32xbf16>
    %c0_34 = arith.constant 0 : index
    %c160 = arith.constant 160 : index
    %59 = vector.load %arg8[%c0_34, %c160] : memref<256x288xbf16, #tpu.memory_space<vmem>>, vector<256x32xbf16>
    tpu.vector_store %arg8[%c0_34, %c160], %58 {strides = array<i32>} : memref<256x288xbf16, #tpu.memory_space<vmem>>, vector<256x32xbf16>,
    %c39 = arith.constant 39 : index
    %c0_35 = arith.constant 0 : index
    %60 = vector.load %arg7[%c39, %c0_35] : memref<304x32xbf16, #tpu.memory_space<vmem>>, vector<256x32xbf16>
    %cst_36 = arith.constant 0.000000e+00 : bf16
    %61 = vector.broadcast %cst_36 : bf16 to vector<256x32xbf16>
    %62 = vector.shape_cast %29 : vector<256x1xi1> to vector<256x1xi1>
    %63 = vector.broadcast %62 : vector<256x1xi1> to vector<256x32xi1>
    %64 = arith.select %63, %60, %61 : vector<256x32xi1>, vector<256x32xbf16>
    %c0_37 = arith.constant 0 : index
    %c192 = arith.constant 192 : index
    %65 = vector.load %arg8[%c0_37, %c192] : memref<256x288xbf16, #tpu.memory_space<vmem>>, vector<256x32xbf16>
    tpu.vector_store %arg8[%c0_37, %c192], %64 {strides = array<i32>} : memref<256x288xbf16, #tpu.memory_space<vmem>>, vector<256x32xbf16>,
    %c40 = arith.constant 40 : index
    %c0_38 = arith.constant 0 : index
    %66 = vector.load %arg7[%c40, %c0_38] : memref<304x32xbf16, #tpu.memory_space<vmem>>, vector<256x32xbf16>
    %c0_39 = arith.constant 0 : index
    %c224 = arith.constant 224 : index
    %67 = vector.load %arg8[%c0_39, %c224] : memref<256x288xbf16, #tpu.memory_space<vmem>>, vector<256x32xbf16>
    tpu.vector_store %arg8[%c0_39, %c224], %66 {strides = array<i32>} : memref<256x288xbf16, #tpu.memory_space<vmem>>, vector<256x32xbf16>,
    %c41 = arith.constant 41 : index
    %c0_40 = arith.constant 0 : index
    %68 = vector.load %arg7[%c41, %c0_40] : memref<304x32xbf16, #tpu.memory_space<vmem>>, vector<256x32xbf16>
    %cst_41 = arith.constant 0.000000e+00 : bf16
    %69 = vector.broadcast %cst_41 : bf16 to vector<256x32xbf16>
    %70 = vector.shape_cast %31 : vector<256x1xi1> to vector<256x1xi1>
    %71 = vector.broadcast %70 : vector<256x1xi1> to vector<256x32xi1>
    %72 = arith.select %71, %68, %69 : vector<256x32xi1>, vector<256x32xbf16>
    %c0_42 = arith.constant 0 : index
    %c256 = arith.constant 256 : index
    %73 = vector.load %arg8[%c0_42, %c256] : memref<256x288xbf16, #tpu.memory_space<vmem>>, vector<256x32xbf16>
    tpu.vector_store %arg8[%c0_42, %c256], %72 {strides = array<i32>} : memref<256x288xbf16, #tpu.memory_space<vmem>>, vector<256x32xbf16>,
    %c0_43 = arith.constant 0 : index
    %c0_44 = arith.constant 0 : index
    %74 = vector.load %arg3[%c0_43, %c0_44] : memref<1x64xf32, #tpu.memory_space<vmem>>, vector<1x64xf32>
    %c0_45 = arith.constant 0 : index
    %c0_46 = arith.constant 0 : index
    %75 = vector.load %arg8[%c0_45, %c0_46] : memref<256x288xbf16, #tpu.memory_space<vmem>>, vector<128x288xbf16>
    %c0_47 = arith.constant 0 : index
    %c0_48 = arith.constant 0 : index
    %76 = vector.load %arg2[%c0_47, %c0_48] : memref<288x64xbf16, #tpu.memory_space<vmem>>, vector<288x64xbf16>
    %cst_49 = arith.constant dense<0.000000e+00> : vector<128x64xf32>
    %77 = tpu.matmul %75, %76, %cst_49 {dimension_numbers = #tpu.dot_dimension_numbers<[1], [0], [0], [1], [0, 0, 1, 1], [], []>} : vector<128x288xbf16>, vector<288x64xbf16>, vector<128x64xf32> -> vector<128x64xf32>
    %78 = vector.broadcast %74 : vector<1x64xf32> to vector<128x64xf32>
    %79 = arith.addf %77, %78 : vector<128x64xf32>
    %cst_50 = arith.constant 0.000000e+00 : f32
    %80 = vector.broadcast %cst_50 : f32 to vector<128x64xf32>
    %81 = arith.maximumf %79, %80 : vector<128x64xf32>
    %82 = arith.truncf %81 : vector<128x64xf32> to vector<128x64xbf16>
    %c24_51 = arith.constant 24 : index
    %c0_52 = arith.constant 0 : index
    %83 = vector.load %arg9[%c24_51, %c0_52] : memref<304x64xbf16, #tpu.memory_space<vmem>>, vector<128x64xbf16>
    tpu.vector_store %arg9[%c24_51, %c0_52], %82 {strides = array<i32>} : memref<304x64xbf16, #tpu.memory_space<vmem>>, vector<128x64xbf16>,
    %c128_53 = arith.constant 128 : index
    %c0_54 = arith.constant 0 : index
    %84 = vector.load %arg8[%c128_53, %c0_54] : memref<256x288xbf16, #tpu.memory_space<vmem>>, vector<128x288xbf16>
    %c0_55 = arith.constant 0 : index
    %c0_56 = arith.constant 0 : index
    %85 = vector.load %arg2[%c0_55, %c0_56] : memref<288x64xbf16, #tpu.memory_space<vmem>>, vector<288x64xbf16>
    %cst_57 = arith.constant dense<0.000000e+00> : vector<128x64xf32>
    %86 = tpu.matmul %84, %85, %cst_57 {dimension_numbers = #tpu.dot_dimension_numbers<[1], [0], [0], [1], [0, 0, 1, 1], [], []>} : vector<128x288xbf16>, vector<288x64xbf16>, vector<128x64xf32> -> vector<128x64xf32>
    %87 = vector.broadcast %74 : vector<1x64xf32> to vector<128x64xf32>
    %88 = arith.addf %86, %87 : vector<128x64xf32>
    %cst_58 = arith.constant 0.000000e+00 : f32
    %89 = vector.broadcast %cst_58 : f32 to vector<128x64xf32>
    %90 = arith.maximumf %88, %89 : vector<128x64xf32>
    %91 = arith.truncf %90 : vector<128x64xf32> to vector<128x64xbf16>
    %c152 = arith.constant 152 : index
    %c0_59 = arith.constant 0 : index
    %92 = vector.load %arg9[%c152, %c0_59] : memref<304x64xbf16, #tpu.memory_space<vmem>>, vector<128x64xbf16>
    tpu.vector_store %arg9[%c152, %c0_59], %91 {strides = array<i32>} : memref<304x64xbf16, #tpu.memory_space<vmem>>, vector<128x64xbf16>,
    %c7_60 = arith.constant 7 : index
    %c0_61 = arith.constant 0 : index
    %93 = vector.load %arg9[%c7_60, %c0_61] : memref<304x64xbf16, #tpu.memory_space<vmem>>, vector<256x64xbf16>
    %cst_62 = arith.constant 0.000000e+00 : bf16
    %94 = vector.broadcast %cst_62 : bf16 to vector<256x64xbf16>
    %95 = vector.shape_cast %29 : vector<256x1xi1> to vector<256x1xi1>
    %96 = vector.broadcast %95 : vector<256x1xi1> to vector<256x64xi1>
    %97 = arith.select %96, %93, %94 : vector<256x64xi1>, vector<256x64xbf16>
    %c0_63 = arith.constant 0 : index
    %c0_64 = arith.constant 0 : index
    %98 = vector.load %arg10[%c0_63, %c0_64] : memref<256x576xbf16, #tpu.memory_space<vmem>>, vector<256x64xbf16>
    tpu.vector_store %arg10[%c0_63, %c0_64], %97 {strides = array<i32>} : memref<256x576xbf16, #tpu.memory_space<vmem>>, vector<256x64xbf16>,
    %c8_65 = arith.constant 8 : index
    %c0_66 = arith.constant 0 : index
    %99 = vector.load %arg9[%c8_65, %c0_66] : memref<304x64xbf16, #tpu.memory_space<vmem>>, vector<256x64xbf16>
    %c0_67 = arith.constant 0 : index
    %c64_68 = arith.constant 64 : index
    %100 = vector.load %arg10[%c0_67, %c64_68] : memref<256x576xbf16, #tpu.memory_space<vmem>>, vector<256x64xbf16>
    tpu.vector_store %arg10[%c0_67, %c64_68], %99 {strides = array<i32>} : memref<256x576xbf16, #tpu.memory_space<vmem>>, vector<256x64xbf16>,
    %c9_69 = arith.constant 9 : index
    %c0_70 = arith.constant 0 : index
    %101 = vector.load %arg9[%c9_69, %c0_70] : memref<304x64xbf16, #tpu.memory_space<vmem>>, vector<256x64xbf16>
    %cst_71 = arith.constant 0.000000e+00 : bf16
    %102 = vector.broadcast %cst_71 : bf16 to vector<256x64xbf16>
    %103 = vector.shape_cast %31 : vector<256x1xi1> to vector<256x1xi1>
    %104 = vector.broadcast %103 : vector<256x1xi1> to vector<256x64xi1>
    %105 = arith.select %104, %101, %102 : vector<256x64xi1>, vector<256x64xbf16>
    %c0_72 = arith.constant 0 : index
    %c128_73 = arith.constant 128 : index
    %106 = vector.load %arg10[%c0_72, %c128_73] : memref<256x576xbf16, #tpu.memory_space<vmem>>, vector<256x64xbf16>
    tpu.vector_store %arg10[%c0_72, %c128_73], %105 {strides = array<i32>} : memref<256x576xbf16, #tpu.memory_space<vmem>>, vector<256x64xbf16>,
    %c23_74 = arith.constant 23 : index
    %c0_75 = arith.constant 0 : index
    %107 = vector.load %arg9[%c23_74, %c0_75] : memref<304x64xbf16, #tpu.memory_space<vmem>>, vector<256x64xbf16>
    %cst_76 = arith.constant 0.000000e+00 : bf16
    %108 = vector.broadcast %cst_76 : bf16 to vector<256x64xbf16>
    %109 = vector.shape_cast %29 : vector<256x1xi1> to vector<256x1xi1>
    %110 = vector.broadcast %109 : vector<256x1xi1> to vector<256x64xi1>
    %111 = arith.select %110, %107, %108 : vector<256x64xi1>, vector<256x64xbf16>
    %c0_77 = arith.constant 0 : index
    %c192_78 = arith.constant 192 : index
    %112 = vector.load %arg10[%c0_77, %c192_78] : memref<256x576xbf16, #tpu.memory_space<vmem>>, vector<256x64xbf16>
    tpu.vector_store %arg10[%c0_77, %c192_78], %111 {strides = array<i32>} : memref<256x576xbf16, #tpu.memory_space<vmem>>, vector<256x64xbf16>,
    %c24_79 = arith.constant 24 : index
    %c0_80 = arith.constant 0 : index
    %113 = vector.load %arg9[%c24_79, %c0_80] : memref<304x64xbf16, #tpu.memory_space<vmem>>, vector<256x64xbf16>
    %c0_81 = arith.constant 0 : index
    %c256_82 = arith.constant 256 : index
    %114 = vector.load %arg10[%c0_81, %c256_82] : memref<256x576xbf16, #tpu.memory_space<vmem>>, vector<256x64xbf16>
    tpu.vector_store %arg10[%c0_81, %c256_82], %113 {strides = array<i32>} : memref<256x576xbf16, #tpu.memory_space<vmem>>, vector<256x64xbf16>,
    %c25_83 = arith.constant 25 : index
    %c0_84 = arith.constant 0 : index
    %115 = vector.load %arg9[%c25_83, %c0_84] : memref<304x64xbf16, #tpu.memory_space<vmem>>, vector<256x64xbf16>
    %cst_85 = arith.constant 0.000000e+00 : bf16
    %116 = vector.broadcast %cst_85 : bf16 to vector<256x64xbf16>
    %117 = vector.shape_cast %31 : vector<256x1xi1> to vector<256x1xi1>
    %118 = vector.broadcast %117 : vector<256x1xi1> to vector<256x64xi1>
    %119 = arith.select %118, %115, %116 : vector<256x64xi1>, vector<256x64xbf16>
    %c0_86 = arith.constant 0 : index
    %c320 = arith.constant 320 : index
    %120 = vector.load %arg10[%c0_86, %c320] : memref<256x576xbf16, #tpu.memory_space<vmem>>, vector<256x64xbf16>
    tpu.vector_store %arg10[%c0_86, %c320], %119 {strides = array<i32>} : memref<256x576xbf16, #tpu.memory_space<vmem>>, vector<256x64xbf16>,
    %c39_87 = arith.constant 39 : index
    %c0_88 = arith.constant 0 : index
    %121 = vector.load %arg9[%c39_87, %c0_88] : memref<304x64xbf16, #tpu.memory_space<vmem>>, vector<256x64xbf16>
    %cst_89 = arith.constant 0.000000e+00 : bf16
    %122 = vector.broadcast %cst_89 : bf16 to vector<256x64xbf16>
    %123 = vector.shape_cast %29 : vector<256x1xi1> to vector<256x1xi1>
    %124 = vector.broadcast %123 : vector<256x1xi1> to vector<256x64xi1>
    %125 = arith.select %124, %121, %122 : vector<256x64xi1>, vector<256x64xbf16>
    %c0_90 = arith.constant 0 : index
    %c384 = arith.constant 384 : index
    %126 = vector.load %arg10[%c0_90, %c384] : memref<256x576xbf16, #tpu.memory_space<vmem>>, vector<256x64xbf16>
    tpu.vector_store %arg10[%c0_90, %c384], %125 {strides = array<i32>} : memref<256x576xbf16, #tpu.memory_space<vmem>>, vector<256x64xbf16>,
    %c40_91 = arith.constant 40 : index
    %c0_92 = arith.constant 0 : index
    %127 = vector.load %arg9[%c40_91, %c0_92] : memref<304x64xbf16, #tpu.memory_space<vmem>>, vector<256x64xbf16>
    %c0_93 = arith.constant 0 : index
    %c448 = arith.constant 448 : index
    %128 = vector.load %arg10[%c0_93, %c448] : memref<256x576xbf16, #tpu.memory_space<vmem>>, vector<256x64xbf16>
    tpu.vector_store %arg10[%c0_93, %c448], %127 {strides = array<i32>} : memref<256x576xbf16, #tpu.memory_space<vmem>>, vector<256x64xbf16>,
    %c41_94 = arith.constant 41 : index
    %c0_95 = arith.constant 0 : index
    %129 = vector.load %arg9[%c41_94, %c0_95] : memref<304x64xbf16, #tpu.memory_space<vmem>>, vector<256x64xbf16>
    %cst_96 = arith.constant 0.000000e+00 : bf16
    %130 = vector.broadcast %cst_96 : bf16 to vector<256x64xbf16>
    %131 = vector.shape_cast %31 : vector<256x1xi1> to vector<256x1xi1>
    %132 = vector.broadcast %131 : vector<256x1xi1> to vector<256x64xi1>
    %133 = arith.select %132, %129, %130 : vector<256x64xi1>, vector<256x64xbf16>
    %c0_97 = arith.constant 0 : index
    %c512 = arith.constant 512 : index
    %134 = vector.load %arg10[%c0_97, %c512] : memref<256x576xbf16, #tpu.memory_space<vmem>>, vector<256x64xbf16>
    tpu.vector_store %arg10[%c0_97, %c512], %133 {strides = array<i32>} : memref<256x576xbf16, #tpu.memory_space<vmem>>, vector<256x64xbf16>,
    %c0_98 = arith.constant 0 : index
    %c0_99 = arith.constant 0 : index
    %135 = vector.load %arg5[%c0_98, %c0_99] : memref<1x64xf32, #tpu.memory_space<vmem>>, vector<1x64xf32>
    %c0_100 = arith.constant 0 : index
    %c0_101 = arith.constant 0 : index
    %136 = vector.load %arg10[%c0_100, %c0_101] : memref<256x576xbf16, #tpu.memory_space<vmem>>, vector<128x576xbf16>
    %c0_102 = arith.constant 0 : index
    %c0_103 = arith.constant 0 : index
    %137 = vector.load %arg4[%c0_102, %c0_103] : memref<576x64xbf16, #tpu.memory_space<vmem>>, vector<576x64xbf16>
    %cst_104 = arith.constant dense<0.000000e+00> : vector<128x64xf32>
    %138 = tpu.matmul %136, %137, %cst_104 {dimension_numbers = #tpu.dot_dimension_numbers<[1], [0], [0], [1], [0, 0, 1, 1], [], []>} : vector<128x576xbf16>, vector<576x64xbf16>, vector<128x64xf32> -> vector<128x64xf32>
    %139 = vector.broadcast %135 : vector<1x64xf32> to vector<128x64xf32>
    %140 = arith.addf %138, %139 : vector<128x64xf32>
    %cst_105 = arith.constant 0.000000e+00 : f32
    %141 = vector.broadcast %cst_105 : f32 to vector<128x64xf32>
    %142 = arith.maximumf %140, %141 : vector<128x64xf32>
    %143 = vector.shape_cast %142 : vector<128x64xf32> to vector<4x2x16x64xf32>
    %144 = vector.extract_strided_slice %143 {offsets = [0, 0, 0, 0], sizes = [4, 1, 16, 64], strides = [1, 1, 1, 1]} : vector<4x2x16x64xf32> to vector<4x1x16x64xf32>
    %145 = vector.shape_cast %144 : vector<4x1x16x64xf32> to vector<4x16x64xf32>
    %146 = vector.extract_strided_slice %143 {offsets = [0, 1, 0, 0], sizes = [4, 1, 16, 64], strides = [1, 1, 1, 1]} : vector<4x2x16x64xf32> to vector<4x1x16x64xf32>
    %147 = vector.shape_cast %146 : vector<4x1x16x64xf32> to vector<4x16x64xf32>
    %148 = arith.maximumf %145, %147 : vector<4x16x64xf32>
    %c0_106 = arith.constant 0 : index
    %c0_107 = arith.constant 0 : index
    %c0_108 = arith.constant 0 : index
    %149 = vector.load %arg11[%c0_106, %c0_107, %c0_108] : memref<8x16x64xf32, #tpu.memory_space<vmem>>, vector<4x16x64xf32>
    tpu.vector_store %arg11[%c0_106, %c0_107, %c0_108], %148 {strides = array<i32>} : memref<8x16x64xf32, #tpu.memory_space<vmem>>, vector<4x16x64xf32>,
    %c128_109 = arith.constant 128 : index
    %c0_110 = arith.constant 0 : index
    %150 = vector.load %arg10[%c128_109, %c0_110] : memref<256x576xbf16, #tpu.memory_space<vmem>>, vector<128x576xbf16>
    %c0_111 = arith.constant 0 : index
    %c0_112 = arith.constant 0 : index
    %151 = vector.load %arg4[%c0_111, %c0_112] : memref<576x64xbf16, #tpu.memory_space<vmem>>, vector<576x64xbf16>
    %cst_113 = arith.constant dense<0.000000e+00> : vector<128x64xf32>
    %152 = tpu.matmul %150, %151, %cst_113 {dimension_numbers = #tpu.dot_dimension_numbers<[1], [0], [0], [1], [0, 0, 1, 1], [], []>} : vector<128x576xbf16>, vector<576x64xbf16>, vector<128x64xf32> -> vector<128x64xf32>
    %153 = vector.broadcast %135 : vector<1x64xf32> to vector<128x64xf32>
    %154 = arith.addf %152, %153 : vector<128x64xf32>
    %cst_114 = arith.constant 0.000000e+00 : f32
    %155 = vector.broadcast %cst_114 : f32 to vector<128x64xf32>
    %156 = arith.maximumf %154, %155 : vector<128x64xf32>
    %157 = vector.shape_cast %156 : vector<128x64xf32> to vector<4x2x16x64xf32>
    %158 = vector.extract_strided_slice %157 {offsets = [0, 0, 0, 0], sizes = [4, 1, 16, 64], strides = [1, 1, 1, 1]} : vector<4x2x16x64xf32> to vector<4x1x16x64xf32>
    %159 = vector.shape_cast %158 : vector<4x1x16x64xf32> to vector<4x16x64xf32>
    %160 = vector.extract_strided_slice %157 {offsets = [0, 1, 0, 0], sizes = [4, 1, 16, 64], strides = [1, 1, 1, 1]} : vector<4x2x16x64xf32> to vector<4x1x16x64xf32>
    %161 = vector.shape_cast %160 : vector<4x1x16x64xf32> to vector<4x16x64xf32>
    %162 = arith.maximumf %159, %161 : vector<4x16x64xf32>
    %c4 = arith.constant 4 : index
    %c0_115 = arith.constant 0 : index
    %c0_116 = arith.constant 0 : index
    %163 = vector.load %arg11[%c4, %c0_115, %c0_116] : memref<8x16x64xf32, #tpu.memory_space<vmem>>, vector<4x16x64xf32>
    tpu.vector_store %arg11[%c4, %c0_115, %c0_116], %162 {strides = array<i32>} : memref<8x16x64xf32, #tpu.memory_space<vmem>>, vector<4x16x64xf32>,
    %c0_117 = arith.constant 0 : index
    %c0_118 = arith.constant 0 : index
    %c0_119 = arith.constant 0 : index
    %164 = vector.load %arg11[%c0_117, %c0_118, %c0_119] : memref<8x16x64xf32, #tpu.memory_space<vmem>>, vector<8x1x64xf32>
    %165 = vector.shape_cast %164 : vector<8x1x64xf32> to vector<8x64xf32>
    %c0_120 = arith.constant 0 : index
    %c1 = arith.constant 1 : index
    %c0_121 = arith.constant 0 : index
    %166 = vector.load %arg11[%c0_120, %c1, %c0_121] : memref<8x16x64xf32, #tpu.memory_space<vmem>>, vector<8x1x64xf32>
    %167 = vector.shape_cast %166 : vector<8x1x64xf32> to vector<8x64xf32>
    %168 = arith.maximumf %165, %167 : vector<8x64xf32>
    %c0_122 = arith.constant 0 : index
    %c0_123 = arith.constant 0 : index
    %c0_124 = arith.constant 0 : index
    %169 = vector.load %arg6[%c0_122, %c0_123, %c0_124] : memref<1x8x512xf32, #tpu.memory_space<vmem>>, vector<1x8x64xf32>
    %170 = vector.shape_cast %169 : vector<1x8x64xf32> to vector<8x64xf32>
    %171 = vector.shape_cast %168 : vector<8x64xf32> to vector<1x8x64xf32>
    tpu.vector_store %arg6[%c0_122, %c0_123, %c0_124], %171 {strides = array<i32>} : memref<1x8x512xf32, #tpu.memory_space<vmem>>, vector<1x8x64xf32>,
    %c0_125 = arith.constant 0 : index
    %c2 = arith.constant 2 : index
    %c0_126 = arith.constant 0 : index
    %172 = vector.load %arg11[%c0_125, %c2, %c0_126] : memref<8x16x64xf32, #tpu.memory_space<vmem>>, vector<8x1x64xf32>
    %173 = vector.shape_cast %172 : vector<8x1x64xf32> to vector<8x64xf32>
    %c0_127 = arith.constant 0 : index
    %c3 = arith.constant 3 : index
    %c0_128 = arith.constant 0 : index
    %174 = vector.load %arg11[%c0_127, %c3, %c0_128] : memref<8x16x64xf32, #tpu.memory_space<vmem>>, vector<8x1x64xf32>
    %175 = vector.shape_cast %174 : vector<8x1x64xf32> to vector<8x64xf32>
    %176 = arith.maximumf %173, %175 : vector<8x64xf32>
    %c0_129 = arith.constant 0 : index
    %c0_130 = arith.constant 0 : index
    %c64_131 = arith.constant 64 : index
    %177 = vector.load %arg6[%c0_129, %c0_130, %c64_131] : memref<1x8x512xf32, #tpu.memory_space<vmem>>, vector<1x8x64xf32>
    %178 = vector.shape_cast %177 : vector<1x8x64xf32> to vector<8x64xf32>
    %179 = vector.shape_cast %176 : vector<8x64xf32> to vector<1x8x64xf32>
    tpu.vector_store %arg6[%c0_129, %c0_130, %c64_131], %179 {strides = array<i32>} : memref<1x8x512xf32, #tpu.memory_space<vmem>>, vector<1x8x64xf32>,
    %c0_132 = arith.constant 0 : index
    %c4_133 = arith.constant 4 : index
    %c0_134 = arith.constant 0 : index
    %180 = vector.load %arg11[%c0_132, %c4_133, %c0_134] : memref<8x16x64xf32, #tpu.memory_space<vmem>>, vector<8x1x64xf32>
    %181 = vector.shape_cast %180 : vector<8x1x64xf32> to vector<8x64xf32>
    %c0_135 = arith.constant 0 : index
    %c5 = arith.constant 5 : index
    %c0_136 = arith.constant 0 : index
    %182 = vector.load %arg11[%c0_135, %c5, %c0_136] : memref<8x16x64xf32, #tpu.memory_space<vmem>>, vector<8x1x64xf32>
    %183 = vector.shape_cast %182 : vector<8x1x64xf32> to vector<8x64xf32>
    %184 = arith.maximumf %181, %183 : vector<8x64xf32>
    %c0_137 = arith.constant 0 : index
    %c0_138 = arith.constant 0 : index
    %c128_139 = arith.constant 128 : index
    %185 = vector.load %arg6[%c0_137, %c0_138, %c128_139] : memref<1x8x512xf32, #tpu.memory_space<vmem>>, vector<1x8x64xf32>
    %186 = vector.shape_cast %185 : vector<1x8x64xf32> to vector<8x64xf32>
    %187 = vector.shape_cast %184 : vector<8x64xf32> to vector<1x8x64xf32>
    tpu.vector_store %arg6[%c0_137, %c0_138, %c128_139], %187 {strides = array<i32>} : memref<1x8x512xf32, #tpu.memory_space<vmem>>, vector<1x8x64xf32>,
    %c0_140 = arith.constant 0 : index
    %c6 = arith.constant 6 : index
    %c0_141 = arith.constant 0 : index
    %188 = vector.load %arg11[%c0_140, %c6, %c0_141] : memref<8x16x64xf32, #tpu.memory_space<vmem>>, vector<8x1x64xf32>
    %189 = vector.shape_cast %188 : vector<8x1x64xf32> to vector<8x64xf32>
    %c0_142 = arith.constant 0 : index
    %c7_143 = arith.constant 7 : index
    %c0_144 = arith.constant 0 : index
    %190 = vector.load %arg11[%c0_142, %c7_143, %c0_144] : memref<8x16x64xf32, #tpu.memory_space<vmem>>, vector<8x1x64xf32>
    %191 = vector.shape_cast %190 : vector<8x1x64xf32> to vector<8x64xf32>
    %192 = arith.maximumf %189, %191 : vector<8x64xf32>
    %c0_145 = arith.constant 0 : index
    %c0_146 = arith.constant 0 : index
    %c192_147 = arith.constant 192 : index
    %193 = vector.load %arg6[%c0_145, %c0_146, %c192_147] : memref<1x8x512xf32, #tpu.memory_space<vmem>>, vector<1x8x64xf32>
    %194 = vector.shape_cast %193 : vector<1x8x64xf32> to vector<8x64xf32>
    %195 = vector.shape_cast %192 : vector<8x64xf32> to vector<1x8x64xf32>
    tpu.vector_store %arg6[%c0_145, %c0_146, %c192_147], %195 {strides = array<i32>} : memref<1x8x512xf32, #tpu.memory_space<vmem>>, vector<1x8x64xf32>,
    %c0_148 = arith.constant 0 : index
    %c8_149 = arith.constant 8 : index
    %c0_150 = arith.constant 0 : index
    %196 = vector.load %arg11[%c0_148, %c8_149, %c0_150] : memref<8x16x64xf32, #tpu.memory_space<vmem>>, vector<8x1x64xf32>
    %197 = vector.shape_cast %196 : vector<8x1x64xf32> to vector<8x64xf32>
    %c0_151 = arith.constant 0 : index
    %c9_152 = arith.constant 9 : index
    %c0_153 = arith.constant 0 : index
    %198 = vector.load %arg11[%c0_151, %c9_152, %c0_153] : memref<8x16x64xf32, #tpu.memory_space<vmem>>, vector<8x1x64xf32>
    %199 = vector.shape_cast %198 : vector<8x1x64xf32> to vector<8x64xf32>
    %200 = arith.maximumf %197, %199 : vector<8x64xf32>
    %c0_154 = arith.constant 0 : index
    %c0_155 = arith.constant 0 : index
    %c256_156 = arith.constant 256 : index
    %201 = vector.load %arg6[%c0_154, %c0_155, %c256_156] : memref<1x8x512xf32, #tpu.memory_space<vmem>>, vector<1x8x64xf32>
    %202 = vector.shape_cast %201 : vector<1x8x64xf32> to vector<8x64xf32>
    %203 = vector.shape_cast %200 : vector<8x64xf32> to vector<1x8x64xf32>
    tpu.vector_store %arg6[%c0_154, %c0_155, %c256_156], %203 {strides = array<i32>} : memref<1x8x512xf32, #tpu.memory_space<vmem>>, vector<1x8x64xf32>,
    %c0_157 = arith.constant 0 : index
    %c10 = arith.constant 10 : index
    %c0_158 = arith.constant 0 : index
    %204 = vector.load %arg11[%c0_157, %c10, %c0_158] : memref<8x16x64xf32, #tpu.memory_space<vmem>>, vector<8x1x64xf32>
    %205 = vector.shape_cast %204 : vector<8x1x64xf32> to vector<8x64xf32>
    %c0_159 = arith.constant 0 : index
    %c11 = arith.constant 11 : index
    %c0_160 = arith.constant 0 : index
    %206 = vector.load %arg11[%c0_159, %c11, %c0_160] : memref<8x16x64xf32, #tpu.memory_space<vmem>>, vector<8x1x64xf32>
    %207 = vector.shape_cast %206 : vector<8x1x64xf32> to vector<8x64xf32>
    %208 = arith.maximumf %205, %207 : vector<8x64xf32>
    %c0_161 = arith.constant 0 : index
    %c0_162 = arith.constant 0 : index
    %c320_163 = arith.constant 320 : index
    %209 = vector.load %arg6[%c0_161, %c0_162, %c320_163] : memref<1x8x512xf32, #tpu.memory_space<vmem>>, vector<1x8x64xf32>
    %210 = vector.shape_cast %209 : vector<1x8x64xf32> to vector<8x64xf32>
    %211 = vector.shape_cast %208 : vector<8x64xf32> to vector<1x8x64xf32>
    tpu.vector_store %arg6[%c0_161, %c0_162, %c320_163], %211 {strides = array<i32>} : memref<1x8x512xf32, #tpu.memory_space<vmem>>, vector<1x8x64xf32>,
    %c0_164 = arith.constant 0 : index
    %c12 = arith.constant 12 : index
    %c0_165 = arith.constant 0 : index
    %212 = vector.load %arg11[%c0_164, %c12, %c0_165] : memref<8x16x64xf32, #tpu.memory_space<vmem>>, vector<8x1x64xf32>
    %213 = vector.shape_cast %212 : vector<8x1x64xf32> to vector<8x64xf32>
    %c0_166 = arith.constant 0 : index
    %c13 = arith.constant 13 : index
    %c0_167 = arith.constant 0 : index
    %214 = vector.load %arg11[%c0_166, %c13, %c0_167] : memref<8x16x64xf32, #tpu.memory_space<vmem>>, vector<8x1x64xf32>
    %215 = vector.shape_cast %214 : vector<8x1x64xf32> to vector<8x64xf32>
    %216 = arith.maximumf %213, %215 : vector<8x64xf32>
    %c0_168 = arith.constant 0 : index
    %c0_169 = arith.constant 0 : index
    %c384_170 = arith.constant 384 : index
    %217 = vector.load %arg6[%c0_168, %c0_169, %c384_170] : memref<1x8x512xf32, #tpu.memory_space<vmem>>, vector<1x8x64xf32>
    %218 = vector.shape_cast %217 : vector<1x8x64xf32> to vector<8x64xf32>
    %219 = vector.shape_cast %216 : vector<8x64xf32> to vector<1x8x64xf32>
    tpu.vector_store %arg6[%c0_168, %c0_169, %c384_170], %219 {strides = array<i32>} : memref<1x8x512xf32, #tpu.memory_space<vmem>>, vector<1x8x64xf32>,
    %c0_171 = arith.constant 0 : index
    %c14 = arith.constant 14 : index
    %c0_172 = arith.constant 0 : index
    %220 = vector.load %arg11[%c0_171, %c14, %c0_172] : memref<8x16x64xf32, #tpu.memory_space<vmem>>, vector<8x1x64xf32>
    %221 = vector.shape_cast %220 : vector<8x1x64xf32> to vector<8x64xf32>
    %c0_173 = arith.constant 0 : index
    %c15 = arith.constant 15 : index
    %c0_174 = arith.constant 0 : index
    %222 = vector.load %arg11[%c0_173, %c15, %c0_174] : memref<8x16x64xf32, #tpu.memory_space<vmem>>, vector<8x1x64xf32>
    %223 = vector.shape_cast %222 : vector<8x1x64xf32> to vector<8x64xf32>
    %224 = arith.maximumf %221, %223 : vector<8x64xf32>
    %c0_175 = arith.constant 0 : index
    %c0_176 = arith.constant 0 : index
    %c448_177 = arith.constant 448 : index
    %225 = vector.load %arg6[%c0_175, %c0_176, %c448_177] : memref<1x8x512xf32, #tpu.memory_space<vmem>>, vector<1x8x64xf32>
    %226 = vector.shape_cast %225 : vector<1x8x64xf32> to vector<8x64xf32>
    %227 = vector.shape_cast %224 : vector<8x64xf32> to vector<1x8x64xf32>
    tpu.vector_store %arg6[%c0_175, %c0_176, %c448_177], %227 {strides = array<i32>} : memref<1x8x512xf32, #tpu.memory_space<vmem>>, vector<1x8x64xf32>,
    return
  }
  func.func @transform_0(%arg0: i32) -> (i32, i32, i32) {
    %c0_i32 = arith.constant 0 : i32
    %c0_i32_0 = arith.constant 0 : i32
    %c0_i32_1 = arith.constant 0 : i32
    return %arg0, %c0_i32, %c0_i32_0 : i32, i32, i32
  }
  func.func @transform_1(%arg0: i32) -> (i32, i32) {
    %c0_i32 = arith.constant 0 : i32
    %c0_i32_0 = arith.constant 0 : i32
    %c0_i32_1 = arith.constant 0 : i32
    return %c0_i32, %c0_i32_0 : i32, i32
  }
  func.func @transform_2(%arg0: i32) -> (i32, i32) {
    %c0_i32 = arith.constant 0 : i32
    %c0_i32_0 = arith.constant 0 : i32
    %c0_i32_1 = arith.constant 0 : i32
    return %c0_i32, %c0_i32_0 : i32, i32
  }
  func.func @transform_3(%arg0: i32) -> (i32, i32) {
    %c0_i32 = arith.constant 0 : i32
    %c0_i32_0 = arith.constant 0 : i32
    %c0_i32_1 = arith.constant 0 : i32
    return %c0_i32, %c0_i32_0 : i32, i32
  }
  func.func @transform_4(%arg0: i32) -> (i32, i32) {
    %c0_i32 = arith.constant 0 : i32
    %c0_i32_0 = arith.constant 0 : i32
    %c0_i32_1 = arith.constant 0 : i32
    return %c0_i32, %c0_i32_0 : i32, i32
  }
  func.func @transform_5(%arg0: i32) -> (i32, i32, i32) {
    %c0_i32 = arith.constant 0 : i32
    %c0_i32_0 = arith.constant 0 : i32
    %c0_i32_1 = arith.constant 0 : i32
    return %arg0, %c0_i32, %c0_i32_0 : i32, i32, i32
  }
}

</mosaic_0001>

<llo_original>
// kernel: tpu_custom_call.1
$region0: #{tpu_custom_call.1}
  #allocation0 [shape = 'u32[]', space=smem, size = 0x4, offset = 0x4, fixed_abs, tag = 'smem constant byte address 0x4 - core index']
  #allocation1 [shape = 'u32[144,128]{1,0:T(1,128)}', space=vmem, size = 0x12000, scoped, tag = 'internal scratch']
  #allocation2 [shape = 'bf16[304,32]{1,0:T(8,128)(2,1)}', space=vmem, size = 0x13000, scoped, tag = 'scratch operand']
  #allocation3 [shape = 'bf16[256,288]{1,0:T(8,128)(2,1)}', space=vmem, size = 0x30000, scoped, tag = 'scratch operand']
  #allocation4 [shape = 'bf16[304,64]{1,0:T(8,128)(2,1)}', space=vmem, size = 0x13000, scoped, tag = 'scratch operand']
  #allocation5 [shape = 'bf16[256,576]{1,0:T(8,128)(2,1)}', space=vmem, size = 0x50000, scoped, tag = 'scratch operand']
  #allocation6 [shape = 'f32[8,16,64]{2,1,0:T(8,128)}', space=vmem, size = 0x10000, scoped, tag = 'scratch operand']
  %s0 = inlined_call_operand.vmem [shape: bf16[2,256,32], index: 0, kind: input, shape index: {}]
  %s1 = inlined_call_operand.vmem [shape: bf16[288,64], index: 1, kind: input, shape index: {}]
  %s2 = inlined_call_operand.vmem [shape: f32[1,64], index: 2, kind: input, shape index: {}]
  %s3 = inlined_call_operand.vmem [shape: bf16[576,64], index: 3, kind: input, shape index: {}]
  %s4 = inlined_call_operand.vmem [shape: f32[1,64], index: 4, kind: input, shape index: {}]
  %s5 = inlined_call_operand.hbm [shape: f32[2,8,512], index: 5, kind: output, shape index: {}]
  %s6 = sld [smem:[#allocation0]]
  $region53: #{tpu_custom_call.1} parent=0
    _
  %s8 = ssub.s32 1, %s6
  %s9 = scalar_select 0, %s8, %s6
  $region1: #{tpu_custom_call.1} parent=0
    #allocation7 [shape = 'u8[32768]{0}', space=vmem, size = 0x8000, scoped, tag = 'output window, operand 0']
    #allocation8 [shape = 's32[2]{0}', space=sflag, size = 0x8, scoped, tag = 'scoped memory for tpu_custom_call.1']
    %10 = vsyncpa [#allocation8], 0
    %s11 = scalar_lea.sflag [#allocation8], 1
    %12 = vsyncpa %s11, 0
    loop: start=0, step=1, limit=4
    $region2: #{tpu_custom_call.1} parent=1 // loop_pre_header
      _
    $region3: #{tpu_custom_call.1} parent=1 // loop_header
      %s14 = sphi 0, %s18
      %p15 = scmp.ge.s32.totalorder %s14, 4
      %s24 = sphi 0, %s26
      %s27 = sphi 0, %s24
      %s28 = sphi 0, %s27
      %s44 = sphi 0, %s28
      %s48 = sphi 0, %s48
      %s50 = sphi 0, %s48
      %s51 = sphi 0, %s50
      %s65 = sphi 0, %s51
      %s69 = sphi 0, %s69
      %s71 = sphi 0, %s69
      %s72 = sphi 0, %s71
      %s86 = sphi 0, %s72
      %s90 = sphi 0, %s90
      %s92 = sphi 0, %s90
      %s93 = sphi 0, %s92
      %s107 = sphi 0, %s93
      %s111 = sphi 0, %s111
      %s113 = sphi 0, %s111
      %s114 = sphi 0, %s113
      %s128 = sphi 0, %s114
      %s134 = sphi 0, %s136
      %s137 = sphi 0, %s134
      %s138 = sphi 0, %s137
      %s154 = sphi 0, %s138
    $region4: #{tpu_custom_call.1} parent=1 // loop_header_branch
      %17 = sbr.rel (%p15) target = $region8
    $region5: #{tpu_custom_call.1} parent=1 // loop_body
      %s19 = ssub.s32 %s14, 1
      %s20 = ssub.s32 %s14, 2
      %s21 = sadd.s32 %s14, 1
      %s22 = ssub.s32 %s14, %s21
      %p23 = scmp.eq.s32.totalorder %s22, 0
      %s25 = sadd.s32 %s24, 1
      %s26 = scalar_select %p23, %s24, %s25
      %p29 = pneg %p23
      %p30 = scmp.eq.s32.totalorder %s14, 1
      %p31 = por %p29, %p30
      %p32 = scmp.ne.s32.totalorder %s24, %s27
      %p33 = scmp.eq.s32.totalorder %s14, 0
      %p34 = por %p32, %p33
      %p35 = scmp.ne.s32.totalorder %s24, %s27
      %p36 = scmp.eq.s32.totalorder %s19, 1
      %p37 = por %p35, %p36
      %p38 = scmp.ne.s32.totalorder %s27, %s28
      %p39 = scmp.eq.s32.totalorder %s19, 0
      %p40 = por %p38, %p39
      %p41 = scmp.ne.s32.totalorder %s27, %s28
      %p42 = scmp.eq.s32.totalorder %s20, 1
      %p43 = por %p41, %p42
      %p45 = scmp.ne.s32.totalorder %s28, %s44
      %p46 = scmp.eq.s32.totalorder %s20, 0
      %p47 = por %p45, %p46
      %s49 = sadd.s32 %s48, 1
      %p52 = scmp.eq.s32.totalorder %s14, 1
      %p53 = scmp.ne.s32.totalorder %s48, %s50
      %p54 = scmp.eq.s32.totalorder %s14, 0
      %p55 = por %p53, %p54
      %p56 = scmp.ne.s32.totalorder %s48, %s50
      %p57 = scmp.eq.s32.totalorder %s19, 1
      %p58 = por %p56, %p57
      %p59 = scmp.ne.s32.totalorder %s50, %s51
      %p60 = scmp.eq.s32.totalorder %s19, 0
      %p61 = por %p59, %p60
      %p62 = scmp.ne.s32.totalorder %s50, %s51
      %p63 = scmp.eq.s32.totalorder %s20, 1
      %p64 = por %p62, %p63
      %p66 = scmp.ne.s32.totalorder %s51, %s65
      %p67 = scmp.eq.s32.totalorder %s20, 0
      %p68 = por %p66, %p67
      %s70 = sadd.s32 %s69, 1
      %p73 = scmp.eq.s32.totalorder %s14, 1
      %p74 = scmp.ne.s32.totalorder %s69, %s71
      %p75 = scmp.eq.s32.totalorder %s14, 0
      %p76 = por %p74, %p75
      %p77 = scmp.ne.s32.totalorder %s69, %s71
      %p78 = scmp.eq.s32.totalorder %s19, 1
      %p79 = por %p77, %p78
      %p80 = scmp.ne.s32.totalorder %s71, %s72
      %p81 = scmp.eq.s32.totalorder %s19, 0
      %p82 = por %p80, %p81
      %p83 = scmp.ne.s32.totalorder %s71, %s72
      %p84 = scmp.eq.s32.totalorder %s20, 1
      %p85 = por %p83, %p84
      %p87 = scmp.ne.s32.totalorder %s72, %s86
      %p88 = scmp.eq.s32.totalorder %s20, 0
      %p89 = por %p87, %p88
      %s91 = sadd.s32 %s90, 1
      %p94 = scmp.eq.s32.totalorder %s14, 1
      %p95 = scmp.ne.s32.totalorder %s90, %s92
      %p96 = scmp.eq.s32.totalorder %s14, 0
      %p97 = por %p95, %p96
      %p98 = scmp.ne.s32.totalorder %s90, %s92
      %p99 = scmp.eq.s32.totalorder %s19, 1
      %p100 = por %p98, %p99
      %p101 = scmp.ne.s32.totalorder %s92, %s93
      %p102 = scmp.eq.s32.totalorder %s19, 0
      %p103 = por %p101, %p102
      %p104 = scmp.ne.s32.totalorder %s92, %s93
      %p105 = scmp.eq.s32.totalorder %s20, 1
      %p106 = por %p104, %p105
      %p108 = scmp.ne.s32.totalorder %s93, %s107
      %p109 = scmp.eq.s32.totalorder %s20, 0
      %p110 = por %p108, %p109
      %s112 = sadd.s32 %s111, 1
      %p115 = scmp.eq.s32.totalorder %s14, 1
      %p116 = scmp.ne.s32.totalorder %s111, %s113
      %p117 = scmp.eq.s32.totalorder %s14, 0
      %p118 = por %p116, %p117
      %p119 = scmp.ne.s32.totalorder %s111, %s113
      %p120 = scmp.eq.s32.totalorder %s19, 1
      %p121 = por %p119, %p120
      %p122 = scmp.ne.s32.totalorder %s113, %s114
      %p123 = scmp.eq.s32.totalorder %s19, 0
      %p124 = por %p122, %p123
      %p125 = scmp.ne.s32.totalorder %s113, %s114
      %p126 = scmp.eq.s32.totalorder %s20, 1
      %p127 = por %p125, %p126
      %p129 = scmp.ne.s32.totalorder %s114, %s128
      %p130 = scmp.eq.s32.totalorder %s20, 0
      %p131 = por %p129, %p130
      %s132 = ssub.s32 %s14, %s21
      %p133 = scmp.eq.s32.totalorder %s132, 0
      %s135 = sadd.s32 %s134, 1
      %s136 = scalar_select %p133, %s134, %s135
      %p139 = pneg %p133
      %p140 = scmp.eq.s32.totalorder %s14, 1
      %p141 = por %p139, %p140
      %p142 = scmp.ne.s32.totalorder %s134, %s137
      %p143 = scmp.eq.s32.totalorder %s14, 0
      %p144 = por %p142, %p143
      %p145 = scmp.ne.s32.totalorder %s134, %s137
      %p146 = scmp.eq.s32.totalorder %s19, 1
      %p147 = por %p145, %p146
      %p148 = scmp.ne.s32.totalorder %s137, %s138
      %p149 = scmp.eq.s32.totalorder %s19, 0
      %p150 = por %p148, %p149
      %p151 = scmp.ne.s32.totalorder %s137, %s138
      %p152 = scmp.eq.s32.totalorder %s20, 1
      %p153 = por %p151, %p152
      %p155 = scmp.ne.s32.totalorder %s138, %s154
      %p156 = scmp.eq.s32.totalorder %s20, 0
      %p157 = por %p155, %p156
      %p158 = scmp.le.s32.totalorder 1, %s14
      %p159 = scmp.lt.s32.totalorder %s14, 3
      %p160 = pnand %p158, %p159
      %p161 = pneg %p160
      // Predicated region
      $region9: #{tpu_custom_call.1} parent=5 // pred_check
        _
      $region10: #{tpu_custom_call.1} parent=5 // pred_check_branch
        %163 = sbr.rel (%p160) target = $region12
      $region11: #{tpu_custom_call.1} parent=5 // pred_region
        %s164 = ssub.s32 %s14, 1
        // Predicated region
        $region13: #{tpu_custom_call.1} parent=11 // pred_check
          %p165 = pneg %p61
        $region14: #{tpu_custom_call.1} parent=11 // pred_check_branch
          %167 = sbr.rel (%p165) target = $region16
        $region15: #{tpu_custom_call.1} parent=11 // pred_region
          _
        $region16: #{tpu_custom_call.1} parent=11 // pred_fallthru
          _
        // Predicated region
        $region17: #{tpu_custom_call.1} parent=11 // pred_check
          %p168 = pneg %p82
        $region18: #{tpu_custom_call.1} parent=11 // pred_check_branch
          %170 = sbr.rel (%p168) target = $region20
        $region19: #{tpu_custom_call.1} parent=11 // pred_region
          _
        $region20: #{tpu_custom_call.1} parent=11 // pred_fallthru
          _
        // Predicated region
        $region21: #{tpu_custom_call.1} parent=11 // pred_check
          %p171 = pneg %p103
        $region22: #{tpu_custom_call.1} parent=11 // pred_check_branch
          %173 = sbr.rel (%p171) target = $region24
        $region23: #{tpu_custom_call.1} parent=11 // pred_region
          _
        $region24: #{tpu_custom_call.1} parent=11 // pred_fallthru
          _
        // Predicated region
        $region25: #{tpu_custom_call.1} parent=11 // pred_check
          %p174 = pneg %p124
        $region26: #{tpu_custom_call.1} parent=11 // pred_check_branch
          %176 = sbr.rel (%p174) target = $region28
        $region27: #{tpu_custom_call.1} parent=11 // pred_region
          _
        $region28: #{tpu_custom_call.1} parent=11 // pred_fallthru
          _
      $region12: #{tpu_custom_call.1} parent=5 // pred_fallthru
        _
      %p177 = scmp.lt.s32.totalorder %s14, 2
      // Predicated region
      $region29: #{tpu_custom_call.1} parent=5 // pred_check
        %p178 = pneg %p177
      $region30: #{tpu_custom_call.1} parent=5 // pred_check_branch
        %180 = sbr.rel (%p178) target = $region32
      $region31: #{tpu_custom_call.1} parent=5 // pred_region
        // Predicated region
        $region33: #{tpu_custom_call.1} parent=31 // pred_check
          %p181 = pneg %p34
        $region34: #{tpu_custom_call.1} parent=31 // pred_check_branch
          %183 = sbr.rel (%p181) target = $region36
        $region35: #{tpu_custom_call.1} parent=31 // pred_region
          %p184 = scmp.lt.s32.totalorder %s14, 1
          %s185 = scalar_select %p184, %s14, 1
          %s186 = smul.addr %s185, 32
          %s187 = smul.addr %s186, 4
          %s188 = scalar_lea.vmem %s0, %s187
        $region36: #{tpu_custom_call.1} parent=31 // pred_fallthru
          _
      $region32: #{tpu_custom_call.1} parent=5 // pred_fallthru
        _
      %p189 = scmp.le.s32.totalorder 1, %s14
      %p190 = scmp.lt.s32.totalorder %s14, 3
      %p191 = pnand %p189, %p190
      %p192 = pneg %p191
      // Predicated region
      $region37: #{tpu_custom_call.1} parent=5 // pred_check
        _
      $region38: #{tpu_custom_call.1} parent=5 // pred_check_branch
        %194 = sbr.rel (%p191) target = $region40
      $region39: #{tpu_custom_call.1} parent=5 // pred_region
        %s195 = ssub.s32 %s14, 1
        %p196 = scmp.lt.s32.totalorder %s19, 1
        %s197 = scalar_select %p196, %s19, 1
        %s198 = smul.addr %s197, 32
        %s199 = smul.addr %s198, 4
        %s200 = scalar_lea.vmem %s0, %s199
        %p201 = pneg %p40
        %p202 = pneg %p37
        %p203 = pneg %p61
        %p204 = pneg %p58
        %p205 = pneg %p82
        %p206 = pneg %p79
        %p207 = pneg %p103
        %p208 = pneg %p100
        %p209 = pneg %p124
        %p210 = pneg %p121
        %p211 = pneg %p150
        %p212 = pneg %p147
        %s213 = sand.u32 %s137, 1
        %s214 = scalar_lea.sflag [#allocation8], %s213
        %s215 = sand.u32 %s137, 1
        %s216 = smul.addr %s215, 32
        %s217 = scalar_lea.vmem [#allocation7], %s216
        %p218 = scmp.lt.s32.totalorder %s19, 1
        %s219 = scalar_select %p218, %s19, 1
        %s220 = smul.addr %s219, 32
        %s221 = smul.addr %s220, 4
        %s222 = scalar_lea.vmem %s0, %s221
        %vm226 = vcmask 257024
        %227 = vst.msk [vmem:[#allocation2] sm:$0xf] %vm226, 0
        %228 = vst.msk [vmem:[#allocation2 + $0x4] sm:$0xf] %vm226, 0
        %229 = vst.msk [vmem:[#allocation2 + $0x8] sm:$0xf] %vm226, 0
        %230 = vst.msk [vmem:[#allocation2 + $0x8c] sm:$0xf] %vm226, 0
        %231 = vst.msk [vmem:[#allocation2 + $0x90] sm:$0xf] %vm226, 0
        %232 = vst.msk [vmem:[#allocation2 + $0x94] sm:$0xf] %vm226, 0
        %vm233 = vcmask 519168
        %234 = vst.msk [vmem:[#allocation4] sm:$0xf] %vm233, 0
        %235 = vst.msk [vmem:[#allocation4 + $0x4] sm:$0xf] %vm233, 0
        %236 = vst.msk [vmem:[#allocation4 + $0x8] sm:$0xf] %vm233, 0
        %237 = vst.msk [vmem:[#allocation4 + $0x8c] sm:$0xf] %vm233, 0
        %238 = vst.msk [vmem:[#allocation4 + $0x90] sm:$0xf] %vm233, 0
        %239 = vst.msk [vmem:[#allocation4 + $0x94] sm:$0xf] %vm233, 0
        %v240 = vld [vmem:[%s222] sm:$0xf]
        %v241 = vld [vmem:[%s222 + $0x4] sm:$0xf]
        %v242 = vld [vmem:[%s222 + $0x8] sm:$0xf]
        %v243 = vld [vmem:[%s222 + $0xc] sm:$0xf]
        %v244 = vld [vmem:[%s222 + $0x10] sm:$0xf]
        %v245 = vld [vmem:[%s222 + $0x14] sm:$0xf]
        %v246 = vld [vmem:[%s222 + $0x18] sm:$0xf]
        %v247 = vld [vmem:[%s222 + $0x1c] sm:$0xf]
        %v248 = vld [vmem:[%s222 + $0x20] sm:$0xf]
        %v249 = vld [vmem:[%s222 + $0x24] sm:$0xf]
        %v250 = vld [vmem:[%s222 + $0x28] sm:$0xf]
        %v251 = vld [vmem:[%s222 + $0x2c] sm:$0xf]
        %v252 = vld [vmem:[%s222 + $0x30] sm:$0xf]
        %v253 = vld [vmem:[%s222 + $0x34] sm:$0xf]
        %v254 = vld [vmem:[%s222 + $0x38] sm:$0xf]
        %v255 = vld [vmem:[%s222 + $0x3c] sm:$0xf]
        %v256 = vld [vmem:[%s222 + $0x40] sm:$0xf]
        %v257 = vld [vmem:[%s222 + $0x44] sm:$0xf]
        %v258 = vld [vmem:[%s222 + $0x48] sm:$0xf]
        %v259 = vld [vmem:[%s222 + $0x4c] sm:$0xf]
        %v260 = vld [vmem:[%s222 + $0x50] sm:$0xf]
        %v261 = vld [vmem:[%s222 + $0x54] sm:$0xf]
        %v262 = vld [vmem:[%s222 + $0x58] sm:$0xf]
        %v263 = vld [vmem:[%s222 + $0x5c] sm:$0xf]
        %v264 = vld [vmem:[%s222 + $0x60] sm:$0xf]
        %v265 = vld [vmem:[%s222 + $0x64] sm:$0xf]
        %v266 = vld [vmem:[%s222 + $0x68] sm:$0xf]
        %v267 = vld [vmem:[%s222 + $0x6c] sm:$0xf]
        %v268 = vld [vmem:[%s222 + $0x70] sm:$0xf]
        %v269 = vld [vmem:[%s222 + $0x74] sm:$0xf]
        %v270 = vld [vmem:[%s222 + $0x78] sm:$0xf]
        %v271 = vld [vmem:[%s222 + $0x7c] sm:$0xf]
        %272 = vst.msk [vmem:[#allocation2 + $0xc] sm:$0xf] %vm226, %v240
        %273 = vst.msk [vmem:[#allocation2 + $0x10] sm:$0xf] %vm226, %v241
        %274 = vst.msk [vmem:[#allocation2 + $0x14] sm:$0xf] %vm226, %v242
        %275 = vst.msk [vmem:[#allocation2 + $0x18] sm:$0xf] %vm226, %v243
        %276 = vst.msk [vmem:[#allocation2 + $0x1c] sm:$0xf] %vm226, %v244
        %277 = vst.msk [vmem:[#allocation2 + $0x20] sm:$0xf] %vm226, %v245
        %278 = vst.msk [vmem:[#allocation2 + $0x24] sm:$0xf] %vm226, %v246
        %279 = vst.msk [vmem:[#allocation2 + $0x28] sm:$0xf] %vm226, %v247
        %280 = vst.msk [vmem:[#allocation2 + $0x2c] sm:$0xf] %vm226, %v248
        %281 = vst.msk [vmem:[#allocation2 + $0x30] sm:$0xf] %vm226, %v249
        %282 = vst.msk [vmem:[#allocation2 + $0x34] sm:$0xf] %vm226, %v250
        %283 = vst.msk [vmem:[#allocation2 + $0x38] sm:$0xf] %vm226, %v251
        %284 = vst.msk [vmem:[#allocation2 + $0x3c] sm:$0xf] %vm226, %v252
        %285 = vst.msk [vmem:[#allocation2 + $0x40] sm:$0xf] %vm226, %v253
        %286 = vst.msk [vmem:[#allocation2 + $0x44] sm:$0xf] %vm226, %v254
        %287 = vst.msk [vmem:[#allocation2 + $0x48] sm:$0xf] %vm226, %v255
        %288 = vst.msk [vmem:[#allocation2 + $0x4c] sm:$0xf] %vm226, %v256
        %289 = vst.msk [vmem:[#allocation2 + $0x50] sm:$0xf] %vm226, %v257
        %290 = vst.msk [vmem:[#allocation2 + $0x54] sm:$0xf] %vm226, %v258
        %291 = vst.msk [vmem:[#allocation2 + $0x58] sm:$0xf] %vm226, %v259
        %292 = vst.msk [vmem:[#allocation2 + $0x5c] sm:$0xf] %vm226, %v260
        %293 = vst.msk [vmem:[#allocation2 + $0x60] sm:$0xf] %vm226, %v261
        %294 = vst.msk [vmem:[#allocation2 + $0x64] sm:$0xf] %vm226, %v262
        %295 = vst.msk [vmem:[#allocation2 + $0x68] sm:$0xf] %vm226, %v263
        %296 = vst.msk [vmem:[#allocation2 + $0x6c] sm:$0xf] %vm226, %v264
        %297 = vst.msk [vmem:[#allocation2 + $0x70] sm:$0xf] %vm226, %v265
        %298 = vst.msk [vmem:[#allocation2 + $0x74] sm:$0xf] %vm226, %v266
        %299 = vst.msk [vmem:[#allocation2 + $0x78] sm:$0xf] %vm226, %v267
        %300 = vst.msk [vmem:[#allocation2 + $0x7c] sm:$0xf] %vm226, %v268
        %301 = vst.msk [vmem:[#allocation2 + $0x80] sm:$0xf] %vm226, %v269
        %302 = vst.msk [vmem:[#allocation2 + $0x84] sm:$0xf] %vm226, %v270
        %303 = vst.msk [vmem:[#allocation2 + $0x88] sm:$0xf] %vm226, %v271
        %v304 = vlaneseq
        %v305 = vshrl.u32 %v304, 7
        %v306 = vadd.s32 %v305, 8
        %v307 = vadd.s32 %v305, 16
        %v308 = vadd.s32 %v305, 24
        %v309 = vadd.s32 %v305, 32
        %v310 = vadd.s32 %v305, 40
        %v311 = vadd.s32 %v305, 48
        %v312 = vadd.s32 %v305, 56
        %v313 = vadd.s32 %v305, 64
        %v314 = vadd.s32 %v305, 72
        %v315 = vadd.s32 %v305, 80
        %v316 = vadd.s32 %v305, 88
        %v317 = vadd.s32 %v305, 96
        %v318 = vadd.s32 %v305, 104
        %v319 = vadd.s32 %v305, 112
        %v320 = vadd.s32 %v305, 120
        %v321 = vadd.s32 %v305, 128
        %v322 = vadd.s32 %v305, 136
        %v323 = vadd.s32 %v305, 144
        %v324 = vadd.s32 %v305, 152
        %v325 = vadd.s32 %v305, 160
        %v326 = vadd.s32 %v305, 168
        %v327 = vadd.s32 %v305, 176
        %v328 = vadd.s32 %v305, 184
        %v329 = vadd.s32 %v305, 192
        %v330 = vadd.s32 %v305, 200
        %v331 = vadd.s32 %v305, 208
        %v332 = vadd.s32 %v305, 216
        %v333 = vadd.s32 %v305, 224
        %v334 = vadd.s32 %v305, 232
        %v335 = vadd.s32 %v305, 240
        %v336 = vadd.s32 %v305, 248
        %vm337 = vcmp.lt.s32.totalorder %v305, 0
        %v338 = vsub.s32 0, %v305
        %v339 = vsel %vm337, %v338, %v305
        %v340 = vshrl.u32 %v339, 4
        %v341 = vand.u32 %v339, 15
        %v342 = vsub.s32 0, %v341
        %v343 = vsel %vm337, %v342, %v341
        %vm344 = vcmp.lt.s32.totalorder %v306, 0
        %v345 = vsub.s32 0, %v306
        %v346 = vsel %vm344, %v345, %v306
        %v347 = vshrl.u32 %v346, 4
        %v348 = vand.u32 %v346, 15
        %v349 = vsub.s32 0, %v348
        %v350 = vsel %vm344, %v349, %v348
        %vm351 = vcmp.lt.s32.totalorder %v307, 0
        %v352 = vsub.s32 0, %v307
        %v353 = vsel %vm351, %v352, %v307
        %v354 = vshrl.u32 %v353, 4
        %v355 = vand.u32 %v353, 15
        %v356 = vsub.s32 0, %v355
        %v357 = vsel %vm351, %v356, %v355
        %vm358 = vcmp.lt.s32.totalorder %v308, 0
        %v359 = vsub.s32 0, %v308
        %v360 = vsel %vm358, %v359, %v308
        %v361 = vshrl.u32 %v360, 4
        %v362 = vand.u32 %v360, 15
        %v363 = vsub.s32 0, %v362
        %v364 = vsel %vm358, %v363, %v362
        %vm365 = vcmp.lt.s32.totalorder %v309, 0
        %v366 = vsub.s32 0, %v309
        %v367 = vsel %vm365, %v366, %v309
        %v368 = vshrl.u32 %v367, 4
        %v369 = vand.u32 %v367, 15
        %v370 = vsub.s32 0, %v369
        %v371 = vsel %vm365, %v370, %v369
        %vm372 = vcmp.lt.s32.totalorder %v310, 0
        %v373 = vsub.s32 0, %v310
        %v374 = vsel %vm372, %v373, %v310
        %v375 = vshrl.u32 %v374, 4
        %v376 = vand.u32 %v374, 15
        %v377 = vsub.s32 0, %v376
        %v378 = vsel %vm372, %v377, %v376
        %vm379 = vcmp.lt.s32.totalorder %v311, 0
        %v380 = vsub.s32 0, %v311
        %v381 = vsel %vm379, %v380, %v311
        %v382 = vshrl.u32 %v381, 4
        %v383 = vand.u32 %v381, 15
        %v384 = vsub.s32 0, %v383
        %v385 = vsel %vm379, %v384, %v383
        %vm386 = vcmp.lt.s32.totalorder %v312, 0
        %v387 = vsub.s32 0, %v312
        %v388 = vsel %vm386, %v387, %v312
        %v389 = vshrl.u32 %v388, 4
        %v390 = vand.u32 %v388, 15
        %v391 = vsub.s32 0, %v390
        %v392 = vsel %vm386, %v391, %v390
        %vm393 = vcmp.lt.s32.totalorder %v313, 0
        %v394 = vsub.s32 0, %v313
        %v395 = vsel %vm393, %v394, %v313
        %v396 = vshrl.u32 %v395, 4
        %v397 = vand.u32 %v395, 15
        %v398 = vsub.s32 0, %v397
        %v399 = vsel %vm393, %v398, %v397
        %vm400 = vcmp.lt.s32.totalorder %v314, 0
        %v401 = vsub.s32 0, %v314
        %v402 = vsel %vm400, %v401, %v314
        %v403 = vshrl.u32 %v402, 4
        %v404 = vand.u32 %v402, 15
        %v405 = vsub.s32 0, %v404
        %v406 = vsel %vm400, %v405, %v404
        %vm407 = vcmp.lt.s32.totalorder %v315, 0
        %v408 = vsub.s32 0, %v315
        %v409 = vsel %vm407, %v408, %v315
        %v410 = vshrl.u32 %v409, 4
        %v411 = vand.u32 %v409, 15
        %v412 = vsub.s32 0, %v411
        %v413 = vsel %vm407, %v412, %v411
        %vm414 = vcmp.lt.s32.totalorder %v316, 0
        %v415 = vsub.s32 0, %v316
        %v416 = vsel %vm414, %v415, %v316
        %v417 = vshrl.u32 %v416, 4
        %v418 = vand.u32 %v416, 15
        %v419 = vsub.s32 0, %v418
        %v420 = vsel %vm414, %v419, %v418
        %vm421 = vcmp.lt.s32.totalorder %v317, 0
        %v422 = vsub.s32 0, %v317
        %v423 = vsel %vm421, %v422, %v317
        %v424 = vshrl.u32 %v423, 4
        %v425 = vand.u32 %v423, 15
        %v426 = vsub.s32 0, %v425
        %v427 = vsel %vm421, %v426, %v425
        %vm428 = vcmp.lt.s32.totalorder %v318, 0
        %v429 = vsub.s32 0, %v318
        %v430 = vsel %vm428, %v429, %v318
        %v431 = vshrl.u32 %v430, 4
        %v432 = vand.u32 %v430, 15
        %v433 = vsub.s32 0, %v432
        %v434 = vsel %vm428, %v433, %v432
        %vm435 = vcmp.lt.s32.totalorder %v319, 0
        %v436 = vsub.s32 0, %v319
        %v437 = vsel %vm435, %v436, %v319
        %v438 = vshrl.u32 %v437, 4
        %v439 = vand.u32 %v437, 15
        %v440 = vsub.s32 0, %v439
        %v441 = vsel %vm435, %v440, %v439
        %vm442 = vcmp.lt.s32.totalorder %v320, 0
        %v443 = vsub.s32 0, %v320
        %v444 = vsel %vm442, %v443, %v320
        %v445 = vshrl.u32 %v444, 4
        %v446 = vand.u32 %v444, 15
        %v447 = vsub.s32 0, %v446
        %v448 = vsel %vm442, %v447, %v446
        %vm449 = vcmp.lt.s32.totalorder %v321, 0
        %v450 = vsub.s32 0, %v321
        %v451 = vsel %vm449, %v450, %v321
        %v452 = vshrl.u32 %v451, 4
        %v453 = vand.u32 %v451, 15
        %v454 = vsub.s32 0, %v453
        %v455 = vsel %vm449, %v454, %v453
        %vm456 = vcmp.lt.s32.totalorder %v322, 0
        %v457 = vsub.s32 0, %v322
        %v458 = vsel %vm456, %v457, %v322
        %v459 = vshrl.u32 %v458, 4
        %v460 = vand.u32 %v458, 15
        %v461 = vsub.s32 0, %v460
        %v462 = vsel %vm456, %v461, %v460
        %vm463 = vcmp.lt.s32.totalorder %v323, 0
        %v464 = vsub.s32 0, %v323
        %v465 = vsel %vm463, %v464, %v323
        %v466 = vshrl.u32 %v465, 4
        %v467 = vand.u32 %v465, 15
        %v468 = vsub.s32 0, %v467
        %v469 = vsel %vm463, %v468, %v467
        %vm470 = vcmp.lt.s32.totalorder %v324, 0
        %v471 = vsub.s32 0, %v324
        %v472 = vsel %vm470, %v471, %v324
        %v473 = vshrl.u32 %v472, 4
        %v474 = vand.u32 %v472, 15
        %v475 = vsub.s32 0, %v474
        %v476 = vsel %vm470, %v475, %v474
        %vm477 = vcmp.lt.s32.totalorder %v325, 0
        %v478 = vsub.s32 0, %v325
        %v479 = vsel %vm477, %v478, %v325
        %v480 = vshrl.u32 %v479, 4
        %v481 = vand.u32 %v479, 15
        %v482 = vsub.s32 0, %v481
        %v483 = vsel %vm477, %v482, %v481
        %vm484 = vcmp.lt.s32.totalorder %v326, 0
        %v485 = vsub.s32 0, %v326
        %v486 = vsel %vm484, %v485, %v326
        %v487 = vshrl.u32 %v486, 4
        %v488 = vand.u32 %v486, 15
        %v489 = vsub.s32 0, %v488
        %v490 = vsel %vm484, %v489, %v488
        %vm491 = vcmp.lt.s32.totalorder %v327, 0
        %v492 = vsub.s32 0, %v327
        %v493 = vsel %vm491, %v492, %v327
        %v494 = vshrl.u32 %v493, 4
        %v495 = vand.u32 %v493, 15
        %v496 = vsub.s32 0, %v495
        %v497 = vsel %vm491, %v496, %v495
        %vm498 = vcmp.lt.s32.totalorder %v328, 0
        %v499 = vsub.s32 0, %v328
        %v500 = vsel %vm498, %v499, %v328
        %v501 = vshrl.u32 %v500, 4
        %v502 = vand.u32 %v500, 15
        %v503 = vsub.s32 0, %v502
        %v504 = vsel %vm498, %v503, %v502
        %vm505 = vcmp.lt.s32.totalorder %v329, 0
        %v506 = vsub.s32 0, %v329
        %v507 = vsel %vm505, %v506, %v329
        %v508 = vshrl.u32 %v507, 4
        %v509 = vand.u32 %v507, 15
        %v510 = vsub.s32 0, %v509
        %v511 = vsel %vm505, %v510, %v509
        %vm512 = vcmp.lt.s32.totalorder %v330, 0
        %v513 = vsub.s32 0, %v330
        %v514 = vsel %vm512, %v513, %v330
        %v515 = vshrl.u32 %v514, 4
        %v516 = vand.u32 %v514, 15
        %v517 = vsub.s32 0, %v516
        %v518 = vsel %vm512, %v517, %v516
        %vm519 = vcmp.lt.s32.totalorder %v331, 0
        %v520 = vsub.s32 0, %v331
        %v521 = vsel %vm519, %v520, %v331
        %v522 = vshrl.u32 %v521, 4
        %v523 = vand.u32 %v521, 15
        %v524 = vsub.s32 0, %v523
        %v525 = vsel %vm519, %v524, %v523
        %vm526 = vcmp.lt.s32.totalorder %v332, 0
        %v527 = vsub.s32 0, %v332
        %v528 = vsel %vm526, %v527, %v332
        %v529 = vshrl.u32 %v528, 4
        %v530 = vand.u32 %v528, 15
        %v531 = vsub.s32 0, %v530
        %v532 = vsel %vm526, %v531, %v530
        %vm533 = vcmp.lt.s32.totalorder %v333, 0
        %v534 = vsub.s32 0, %v333
        %v535 = vsel %vm533, %v534, %v333
        %v536 = vshrl.u32 %v535, 4
        %v537 = vand.u32 %v535, 15
        %v538 = vsub.s32 0, %v537
        %v539 = vsel %vm533, %v538, %v537
        %vm540 = vcmp.lt.s32.totalorder %v334, 0
        %v541 = vsub.s32 0, %v334
        %v542 = vsel %vm540, %v541, %v334
        %v543 = vshrl.u32 %v542, 4
        %v544 = vand.u32 %v542, 15
        %v545 = vsub.s32 0, %v544
        %v546 = vsel %vm540, %v545, %v544
        %vm547 = vcmp.lt.s32.totalorder %v335, 0
        %v548 = vsub.s32 0, %v335
        %v549 = vsel %vm547, %v548, %v335
        %v550 = vshrl.u32 %v549, 4
        %v551 = vand.u32 %v549, 15
        %v552 = vsub.s32 0, %v551
        %v553 = vsel %vm547, %v552, %v551
        %vm554 = vcmp.lt.s32.totalorder %v336, 0
        %v555 = vsub.s32 0, %v336
        %v556 = vsel %vm554, %v555, %v336
        %v557 = vshrl.u32 %v556, 4
        %v558 = vand.u32 %v556, 15
        %v559 = vsub.s32 0, %v558
        %v560 = vsel %vm554, %v559, %v558
        %vm561 = vcmp.ne.s32.totalorder %v343, 0
        %vm562 = vcmp.ne.s32.totalorder %v350, 0
        %vm563 = vcmp.ne.s32.totalorder %v357, 0
        %vm564 = vcmp.ne.s32.totalorder %v364, 0
        %vm565 = vcmp.ne.s32.totalorder %v371, 0
        %vm566 = vcmp.ne.s32.totalorder %v378, 0
        %vm567 = vcmp.ne.s32.totalorder %v385, 0
        %vm568 = vcmp.ne.s32.totalorder %v392, 0
        %vm569 = vcmp.ne.s32.totalorder %v399, 0
        %vm570 = vcmp.ne.s32.totalorder %v406, 0
        %vm571 = vcmp.ne.s32.totalorder %v413, 0
        %vm572 = vcmp.ne.s32.totalorder %v420, 0
        %vm573 = vcmp.ne.s32.totalorder %v427, 0
        %vm574 = vcmp.ne.s32.totalorder %v434, 0
        %vm575 = vcmp.ne.s32.totalorder %v441, 0
        %vm576 = vcmp.ne.s32.totalorder %v448, 0
        %vm577 = vcmp.ne.s32.totalorder %v455, 0
        %vm578 = vcmp.ne.s32.totalorder %v462, 0
        %vm579 = vcmp.ne.s32.totalorder %v469, 0
        %vm580 = vcmp.ne.s32.totalorder %v476, 0
        %vm581 = vcmp.ne.s32.totalorder %v483, 0
        %vm582 = vcmp.ne.s32.totalorder %v490, 0
        %vm583 = vcmp.ne.s32.totalorder %v497, 0
        %vm584 = vcmp.ne.s32.totalorder %v504, 0
        %vm585 = vcmp.ne.s32.totalorder %v511, 0
        %vm586 = vcmp.ne.s32.totalorder %v518, 0
        %vm587 = vcmp.ne.s32.totalorder %v525, 0
        %vm588 = vcmp.ne.s32.totalorder %v532, 0
        %vm589 = vcmp.ne.s32.totalorder %v539, 0
        %vm590 = vcmp.ne.s32.totalorder %v546, 0
        %vm591 = vcmp.ne.s32.totalorder %v553, 0
        %vm592 = vcmp.ne.s32.totalorder %v560, 0
        %vm593 = vcmp.lt.s32.totalorder %v343, 0
        %vm594 = vcmp.lt.s32.totalorder %v350, 0
        %vm595 = vcmp.lt.s32.totalorder %v357, 0
        %vm596 = vcmp.lt.s32.totalorder %v364, 0
        %vm597 = vcmp.lt.s32.totalorder %v371, 0
        %vm598 = vcmp.lt.s32.totalorder %v378, 0
        %vm599 = vcmp.lt.s32.totalorder %v385, 0
        %vm600 = vcmp.lt.s32.totalorder %v392, 0
        %vm601 = vcmp.lt.s32.totalorder %v399, 0
        %vm602 = vcmp.lt.s32.totalorder %v406, 0
        %vm603 = vcmp.lt.s32.totalorder %v413, 0
        %vm604 = vcmp.lt.s32.totalorder %v420, 0
        %vm605 = vcmp.lt.s32.totalorder %v427, 0
        %vm606 = vcmp.lt.s32.totalorder %v434, 0
        %vm607 = vcmp.lt.s32.totalorder %v441, 0
        %vm608 = vcmp.lt.s32.totalorder %v448, 0
        %vm609 = vcmp.lt.s32.totalorder %v455, 0
        %vm610 = vcmp.lt.s32.totalorder %v462, 0
        %vm611 = vcmp.lt.s32.totalorder %v469, 0
        %vm612 = vcmp.lt.s32.totalorder %v476, 0
        %vm613 = vcmp.lt.s32.totalorder %v483, 0
        %vm614 = vcmp.lt.s32.totalorder %v490, 0
        %vm615 = vcmp.lt.s32.totalorder %v497, 0
        %vm616 = vcmp.lt.s32.totalorder %v504, 0
        %vm617 = vcmp.lt.s32.totalorder %v511, 0
        %vm618 = vcmp.lt.s32.totalorder %v518, 0
        %vm619 = vcmp.lt.s32.totalorder %v525, 0
        %vm620 = vcmp.lt.s32.totalorder %v532, 0
        %vm621 = vcmp.lt.s32.totalorder %v539, 0
        %vm622 = vcmp.lt.s32.totalorder %v546, 0
        %vm623 = vcmp.lt.s32.totalorder %v553, 0
        %vm624 = vcmp.lt.s32.totalorder %v560, 0
        %vm625 = vmand %vm593, %vm561
        %vm626 = vmand %vm594, %vm562
        %vm627 = vmand %vm595, %vm563
        %vm628 = vmand %vm596, %vm564
        %vm629 = vmand %vm597, %vm565
        %vm630 = vmand %vm598, %vm566
        %vm631 = vmand %vm599, %vm567
        %vm632 = vmand %vm600, %vm568
        %vm633 = vmand %vm601, %vm569
        %vm634 = vmand %vm602, %vm570
        %vm635 = vmand %vm603, %vm571
        %vm636 = vmand %vm604, %vm572
        %vm637 = vmand %vm605, %vm573
        %vm638 = vmand %vm606, %vm574
        %vm639 = vmand %vm607, %vm575
        %vm640 = vmand %vm608, %vm576
        %vm641 = vmand %vm609, %vm577
        %vm642 = vmand %vm610, %vm578
        %vm643 = vmand %vm611, %vm579
        %vm644 = vmand %vm612, %vm580
        %vm645 = vmand %vm613, %vm581
        %vm646 = vmand %vm614, %vm582
        %vm647 = vmand %vm615, %vm583
        %vm648 = vmand %vm616, %vm584
        %vm649 = vmand %vm617, %vm585
        %vm650 = vmand %vm618, %vm586
        %vm651 = vmand %vm619, %vm587
        %vm652 = vmand %vm620, %vm588
        %vm653 = vmand %vm621, %vm589
        %vm654 = vmand %vm622, %vm590
        %vm655 = vmand %vm623, %vm591
        %vm656 = vmand %vm624, %vm592
        %v657 = vadd.s32 %v343, 16
        %v658 = vadd.s32 %v350, 16
        %v659 = vadd.s32 %v357, 16
        %v660 = vadd.s32 %v364, 16
        %v661 = vadd.s32 %v371, 16
        %v662 = vadd.s32 %v378, 16
        %v663 = vadd.s32 %v385, 16
        %v664 = vadd.s32 %v392, 16
        %v665 = vadd.s32 %v399, 16
        %v666 = vadd.s32 %v406, 16
        %v667 = vadd.s32 %v413, 16
        %v668 = vadd.s32 %v420, 16
        %v669 = vadd.s32 %v427, 16
        %v670 = vadd.s32 %v434, 16
        %v671 = vadd.s32 %v441, 16
        %v672 = vadd.s32 %v448, 16
        %v673 = vadd.s32 %v455, 16
        %v674 = vadd.s32 %v462, 16
        %v675 = vadd.s32 %v469, 16
        %v676 = vadd.s32 %v476, 16
        %v677 = vadd.s32 %v483, 16
        %v678 = vadd.s32 %v490, 16
        %v679 = vadd.s32 %v497, 16
        %v680 = vadd.s32 %v504, 16
        %v681 = vadd.s32 %v511, 16
        %v682 = vadd.s32 %v518, 16
        %v683 = vadd.s32 %v525, 16
        %v684 = vadd.s32 %v532, 16
        %v685 = vadd.s32 %v539, 16
        %v686 = vadd.s32 %v546, 16
        %v687 = vadd.s32 %v553, 16
        %v688 = vadd.s32 %v560, 16
        %v689 = vsel %vm625, %v657, %v343
        %v690 = vsel %vm626, %v658, %v350
        %v691 = vsel %vm627, %v659, %v357
        %v692 = vsel %vm628, %v660, %v364
        %v693 = vsel %vm629, %v661, %v371
        %v694 = vsel %vm630, %v662, %v378
        %v695 = vsel %vm631, %v663, %v385
        %v696 = vsel %vm632, %v664, %v392
        %v697 = vsel %vm633, %v665, %v399
        %v698 = vsel %vm634, %v666, %v406
        %v699 = vsel %vm635, %v667, %v413
        %v700 = vsel %vm636, %v668, %v420
        %v701 = vsel %vm637, %v669, %v427
        %v702 = vsel %vm638, %v670, %v434
        %v703 = vsel %vm639, %v671, %v441
        %v704 = vsel %vm640, %v672, %v448
        %v705 = vsel %vm641, %v673, %v455
        %v706 = vsel %vm642, %v674, %v462
        %v707 = vsel %vm643, %v675, %v469
        %v708 = vsel %vm644, %v676, %v476
        %v709 = vsel %vm645, %v677, %v483
        %v710 = vsel %vm646, %v678, %v490
        %v711 = vsel %vm647, %v679, %v497
        %v712 = vsel %vm648, %v680, %v504
        %v713 = vsel %vm649, %v681, %v511
        %v714 = vsel %vm650, %v682, %v518
        %v715 = vsel %vm651, %v683, %v525
        %v716 = vsel %vm652, %v684, %v532
        %v717 = vsel %vm653, %v685, %v539
        %v718 = vsel %vm654, %v686, %v546
        %v719 = vsel %vm655, %v687, %v553
        %v720 = vsel %vm656, %v688, %v560
        %vm721 = vcmp.ge.s32.totalorder %v689, 1
        %vm722 = vcmp.ge.s32.totalorder %v690, 1
        %vm723 = vcmp.ge.s32.totalorder %v691, 1
        %vm724 = vcmp.ge.s32.totalorder %v692, 1
        %vm725 = vcmp.ge.s32.totalorder %v693, 1
        %vm726 = vcmp.ge.s32.totalorder %v694, 1
        %vm727 = vcmp.ge.s32.totalorder %v695, 1
        %vm728 = vcmp.ge.s32.totalorder %v696, 1
        %vm729 = vcmp.ge.s32.totalorder %v697, 1
        %vm730 = vcmp.ge.s32.totalorder %v698, 1
        %vm731 = vcmp.ge.s32.totalorder %v699, 1
        %vm732 = vcmp.ge.s32.totalorder %v700, 1
        %vm733 = vcmp.ge.s32.totalorder %v701, 1
        %vm734 = vcmp.ge.s32.totalorder %v702, 1
        %vm735 = vcmp.ge.s32.totalorder %v703, 1
        %vm736 = vcmp.ge.s32.totalorder %v704, 1
        %vm737 = vcmp.ge.s32.totalorder %v705, 1
        %vm738 = vcmp.ge.s32.totalorder %v706, 1
        %vm739 = vcmp.ge.s32.totalorder %v707, 1
        %vm740 = vcmp.ge.s32.totalorder %v708, 1
        %vm741 = vcmp.ge.s32.totalorder %v709, 1
        %vm742 = vcmp.ge.s32.totalorder %v710, 1
        %vm743 = vcmp.ge.s32.totalorder %v711, 1
        %vm744 = vcmp.ge.s32.totalorder %v712, 1
        %vm745 = vcmp.ge.s32.totalorder %v713, 1
        %vm746 = vcmp.ge.s32.totalorder %v714, 1
        %vm747 = vcmp.ge.s32.totalorder %v715, 1
        %vm748 = vcmp.ge.s32.totalorder %v716, 1
        %vm749 = vcmp.ge.s32.totalorder %v717, 1
        %vm750 = vcmp.ge.s32.totalorder %v718, 1
        %vm751 = vcmp.ge.s32.totalorder %v719, 1
        %vm752 = vcmp.ge.s32.totalorder %v720, 1
        %vm753 = vcmp.le.s32.totalorder %v689, 14
        %vm754 = vcmp.le.s32.totalorder %v690, 14
        %vm755 = vcmp.le.s32.totalorder %v691, 14
        %vm756 = vcmp.le.s32.totalorder %v692, 14
        %vm757 = vcmp.le.s32.totalorder %v693, 14
        %vm758 = vcmp.le.s32.totalorder %v694, 14
        %vm759 = vcmp.le.s32.totalorder %v695, 14
        %vm760 = vcmp.le.s32.totalorder %v696, 14
        %vm761 = vcmp.le.s32.totalorder %v697, 14
        %vm762 = vcmp.le.s32.totalorder %v698, 14
        %vm763 = vcmp.le.s32.totalorder %v699, 14
        %vm764 = vcmp.le.s32.totalorder %v700, 14
        %vm765 = vcmp.le.s32.totalorder %v701, 14
        %vm766 = vcmp.le.s32.totalorder %v702, 14
        %vm767 = vcmp.le.s32.totalorder %v703, 14
        %vm768 = vcmp.le.s32.totalorder %v704, 14
        %vm769 = vcmp.le.s32.totalorder %v705, 14
        %vm770 = vcmp.le.s32.totalorder %v706, 14
        %vm771 = vcmp.le.s32.totalorder %v707, 14
        %vm772 = vcmp.le.s32.totalorder %v708, 14
        %vm773 = vcmp.le.s32.totalorder %v709, 14
        %vm774 = vcmp.le.s32.totalorder %v710, 14
        %vm775 = vcmp.le.s32.totalorder %v711, 14
        %vm776 = vcmp.le.s32.totalorder %v712, 14
        %vm777 = vcmp.le.s32.totalorder %v713, 14
        %vm778 = vcmp.le.s32.totalorder %v714, 14
        %vm779 = vcmp.le.s32.totalorder %v715, 14
        %vm780 = vcmp.le.s32.totalorder %v716, 14
        %vm781 = vcmp.le.s32.totalorder %v717, 14
        %vm782 = vcmp.le.s32.totalorder %v718, 14
        %vm783 = vcmp.le.s32.totalorder %v719, 14
        %vm784 = vcmp.le.s32.totalorder %v720, 14
        %v785 = vld [vmem:[#allocation2] sm:$0x8]
        %v786 = vld [vmem:[#allocation2 + $0x4] sm:$0xf]
        %v787 = vld [vmem:[#allocation2 + $0x8] sm:$0xf]
        %v788 = vld [vmem:[#allocation2 + $0xc] sm:$0xf]
        %v789 = vld [vmem:[#allocation2 + $0x10] sm:$0xf]
        %v790 = vld [vmem:[#allocation2 + $0x14] sm:$0xf]
        %v791 = vld [vmem:[#allocation2 + $0x18] sm:$0xf]
        %v792 = vld [vmem:[#allocation2 + $0x1c] sm:$0xf]
        %v793 = vld [vmem:[#allocation2 + $0x20] sm:$0xf]
        %v794 = vld [vmem:[#allocation2 + $0x24] sm:$0xf]
        %v795 = vld [vmem:[#allocation2 + $0x28] sm:$0xf]
        %v796 = vld [vmem:[#allocation2 + $0x2c] sm:$0xf]
        %v797 = vld [vmem:[#allocation2 + $0x30] sm:$0xf]
        %v798 = vld [vmem:[#allocation2 + $0x34] sm:$0xf]
        %v799 = vld [vmem:[#allocation2 + $0x38] sm:$0xf]
        %v800 = vld [vmem:[#allocation2 + $0x3c] sm:$0xf]
        %v801 = vld [vmem:[#allocation2 + $0x40] sm:$0xf]
        %v802 = vld [vmem:[#allocation2 + $0x44] sm:$0xf]
        %v803 = vld [vmem:[#allocation2 + $0x48] sm:$0xf]
        %v804 = vld [vmem:[#allocation2 + $0x4c] sm:$0xf]
        %v805 = vld [vmem:[#allocation2 + $0x50] sm:$0xf]
        %v806 = vld [vmem:[#allocation2 + $0x54] sm:$0xf]
        %v807 = vld [vmem:[#allocation2 + $0x58] sm:$0xf]
        %v808 = vld [vmem:[#allocation2 + $0x5c] sm:$0xf]
        %v809 = vld [vmem:[#allocation2 + $0x60] sm:$0xf]
        %v810 = vld [vmem:[#allocation2 + $0x64] sm:$0xf]
        %v811 = vld [vmem:[#allocation2 + $0x68] sm:$0xf]
        %v812 = vld [vmem:[#allocation2 + $0x6c] sm:$0xf]
        %v813 = vld [vmem:[#allocation2 + $0x70] sm:$0xf]
        %v814 = vld [vmem:[#allocation2 + $0x74] sm:$0xf]
        %v815 = vld [vmem:[#allocation2 + $0x78] sm:$0xf]
        %v816 = vld [vmem:[#allocation2 + $0x7c] sm:$0xf]
        %v817 = vld [vmem:[#allocation2 + $0x80] sm:$0xf]
        %v818 = vsel %vm721, 1, 0
        %v819 = vsel %vm722, 1, 0
        %v820 = vsel %vm723, 1, 0
        %v821 = vsel %vm724, 1, 0
        %v822 = vsel %vm725, 1, 0
        %v823 = vsel %vm726, 1, 0
        %v824 = vsel %vm727, 1, 0
        %v825 = vsel %vm728, 1, 0
        %v826 = vsel %vm729, 1, 0
        %v827 = vsel %vm730, 1, 0
        %v828 = vsel %vm731, 1, 0
        %v829 = vsel %vm732, 1, 0
        %v830 = vsel %vm733, 1, 0
        %v831 = vsel %vm734, 1, 0
        %v832 = vsel %vm735, 1, 0
        %v833 = vsel %vm736, 1, 0
        %v834 = vsel %vm737, 1, 0
        %v835 = vsel %vm738, 1, 0
        %v836 = vsel %vm739, 1, 0
        %v837 = vsel %vm740, 1, 0
        %v838 = vsel %vm741, 1, 0
        %v839 = vsel %vm742, 1, 0
        %v840 = vsel %vm743, 1, 0
        %v841 = vsel %vm744, 1, 0
        %v842 = vsel %vm745, 1, 0
        %v843 = vsel %vm746, 1, 0
        %v844 = vsel %vm747, 1, 0
        %v845 = vsel %vm748, 1, 0
        %v846 = vsel %vm749, 1, 0
        %v847 = vsel %vm750, 1, 0
        %v848 = vsel %vm751, 1, 0
        %v849 = vsel %vm752, 1, 0
        %vm850 = vcmp.eq.s32.totalorder %v818, 1
        %vm851 = vcmp.eq.s32.totalorder %v819, 1
        %vm852 = vcmp.eq.s32.totalorder %v820, 1
        %vm853 = vcmp.eq.s32.totalorder %v821, 1
        %vm854 = vcmp.eq.s32.totalorder %v822, 1
        %vm855 = vcmp.eq.s32.totalorder %v823, 1
        %vm856 = vcmp.eq.s32.totalorder %v824, 1
        %vm857 = vcmp.eq.s32.totalorder %v825, 1
        %vm858 = vcmp.eq.s32.totalorder %v826, 1
        %vm859 = vcmp.eq.s32.totalorder %v827, 1
        %vm860 = vcmp.eq.s32.totalorder %v828, 1
        %vm861 = vcmp.eq.s32.totalorder %v829, 1
        %vm862 = vcmp.eq.s32.totalorder %v830, 1
        %vm863 = vcmp.eq.s32.totalorder %v831, 1
        %vm864 = vcmp.eq.s32.totalorder %v832, 1
        %vm865 = vcmp.eq.s32.totalorder %v833, 1
        %vm866 = vcmp.eq.s32.totalorder %v834, 1
        %vm867 = vcmp.eq.s32.totalorder %v835, 1
        %vm868 = vcmp.eq.s32.totalorder %v836, 1
        %vm869 = vcmp.eq.s32.totalorder %v837, 1
        %vm870 = vcmp.eq.s32.totalorder %v838, 1
        %vm871 = vcmp.eq.s32.totalorder %v839, 1
        %vm872 = vcmp.eq.s32.totalorder %v840, 1
        %vm873 = vcmp.eq.s32.totalorder %v841, 1
        %vm874 = vcmp.eq.s32.totalorder %v842, 1
        %vm875 = vcmp.eq.s32.totalorder %v843, 1
        %vm876 = vcmp.eq.s32.totalorder %v844, 1
        %vm877 = vcmp.eq.s32.totalorder %v845, 1
        %vm878 = vcmp.eq.s32.totalorder %v846, 1
        %vm879 = vcmp.eq.s32.totalorder %v847, 1
        %vm880 = vcmp.eq.s32.totalorder %v848, 1
        %vm881 = vcmp.eq.s32.totalorder %v849, 1
        %vm882 = vmpackc.low %vm850, %vm850
        %vm883 = vmpackc.low %vm851, %vm851
        %vm884 = vmpackc.low %vm852, %vm852
        %vm885 = vmpackc.low %vm853, %vm853
        %vm886 = vmpackc.low %vm854, %vm854
        %vm887 = vmpackc.low %vm855, %vm855
        %vm888 = vmpackc.low %vm856, %vm856
        %vm889 = vmpackc.low %vm857, %vm857
        %vm890 = vmpackc.low %vm858, %vm858
        %vm891 = vmpackc.low %vm859, %vm859
        %vm892 = vmpackc.low %vm860, %vm860
        %vm893 = vmpackc.low %vm861, %vm861
        %vm894 = vmpackc.low %vm862, %vm862
        %vm895 = vmpackc.low %vm863, %vm863
        %vm896 = vmpackc.low %vm864, %vm864
        %vm897 = vmpackc.low %vm865, %vm865
        %vm898 = vmpackc.low %vm866, %vm866
        %vm899 = vmpackc.low %vm867, %vm867
        %vm900 = vmpackc.low %vm868, %vm868
        %vm901 = vmpackc.low %vm869, %vm869
        %vm902 = vmpackc.low %vm870, %vm870
        %vm903 = vmpackc.low %vm871, %vm871
        %vm904 = vmpackc.low %vm872, %vm872
        %vm905 = vmpackc.low %vm873, %vm873
        %vm906 = vmpackc.low %vm874, %vm874
        %vm907 = vmpackc.low %vm875, %vm875
        %vm908 = vmpackc.low %vm876, %vm876
        %vm909 = vmpackc.low %vm877, %vm877
        %vm910 = vmpackc.low %vm878, %vm878
        %vm911 = vmpackc.low %vm879, %vm879
        %vm912 = vmpackc.low %vm880, %vm880
        %vm913 = vmpackc.low %vm881, %vm881
        %v914 = vsel %vm882, 65537, 0
        %v915 = vsel %vm883, 65537, 0
        %v916 = vsel %vm884, 65537, 0
        %v917 = vsel %vm885, 65537, 0
        %v918 = vsel %vm886, 65537, 0
        %v919 = vsel %vm887, 65537, 0
        %v920 = vsel %vm888, 65537, 0
        %v921 = vsel %vm889, 65537, 0
        %v922 = vsel %vm890, 65537, 0
        %v923 = vsel %vm891, 65537, 0
        %v924 = vsel %vm892, 65537, 0
        %v925 = vsel %vm893, 65537, 0
        %v926 = vsel %vm894, 65537, 0
        %v927 = vsel %vm895, 65537, 0
        %v928 = vsel %vm896, 65537, 0
        %v929 = vsel %vm897, 65537, 0
        %v930 = vsel %vm898, 65537, 0
        %v931 = vsel %vm899, 65537, 0
        %v932 = vsel %vm900, 65537, 0
        %v933 = vsel %vm901, 65537, 0
        %v934 = vsel %vm902, 65537, 0
        %v935 = vsel %vm903, 65537, 0
        %v936 = vsel %vm904, 65537, 0
        %v937 = vsel %vm905, 65537, 0
        %v938 = vsel %vm906, 65537, 0
        %v939 = vsel %vm907, 65537, 0
        %v940 = vsel %vm908, 65537, 0
        %v941 = vsel %vm909, 65537, 0
        %v942 = vsel %vm910, 65537, 0
        %v943 = vsel %vm911, 65537, 0
        %v944 = vsel %vm912, 65537, 0
        %v945 = vsel %vm913, 65537, 0
        %vm946 = vsmask.f32 3328
        %vm947 = vsmask.f32 7440
        %vm948 = vmor %vm946, %vm947
        %v950 = vshll.u32 %v914, 16
        %v952 = vrot.slane %v950, 5
        %v953 = vshrl.u32 %v914, 16
        %v955 = vrot.slane %v953, 4
        %v956 = vor.u32 %v955, %v952
        %v957 = vrot.slane %v956, 4
        %v959 = vshll.u32 %v915, 16
        %v961 = vrot.slane %v959, 5
        %v962 = vsel %vm948, %v957, %v961
        %v963 = vshrl.u32 %v915, 16
        %v965 = vrot.slane %v963, 4
        %v966 = vor.u32 %v965, %v961
        %v967 = vrot.slane %v966, 4
        %v969 = vshll.u32 %v916, 16
        %v971 = vrot.slane %v969, 5
        %v972 = vsel %vm948, %v967, %v971
        %v973 = vshrl.u32 %v916, 16
        %v975 = vrot.slane %v973, 4
        %v976 = vor.u32 %v975, %v971
        %v977 = vrot.slane %v976, 4
        %v979 = vshll.u32 %v917, 16
        %v981 = vrot.slane %v979, 5
        %v982 = vsel %vm948, %v977, %v981
        %v983 = vshrl.u32 %v917, 16
        %v985 = vrot.slane %v983, 4
        %v986 = vor.u32 %v985, %v981
        %v987 = vrot.slane %v986, 4
        %v989 = vshll.u32 %v918, 16
        %v991 = vrot.slane %v989, 5
        %v992 = vsel %vm948, %v987, %v991
        %v993 = vshrl.u32 %v918, 16
        %v995 = vrot.slane %v993, 4
        %v996 = vor.u32 %v995, %v991
        %v997 = vrot.slane %v996, 4
        %v999 = vshll.u32 %v919, 16
        %v1001 = vrot.slane %v999, 5
        %v1002 = vsel %vm948, %v997, %v1001
        %v1003 = vshrl.u32 %v919, 16
        %v1005 = vrot.slane %v1003, 4
        %v1006 = vor.u32 %v1005, %v1001
        %v1007 = vrot.slane %v1006, 4
        %v1009 = vshll.u32 %v920, 16
        %v1011 = vrot.slane %v1009, 5
        %v1012 = vsel %vm948, %v1007, %v1011
        %v1013 = vshrl.u32 %v920, 16
        %v1015 = vrot.slane %v1013, 4
        %v1016 = vor.u32 %v1015, %v1011
        %v1017 = vrot.slane %v1016, 4
        %v1019 = vshll.u32 %v921, 16
        %v1021 = vrot.slane %v1019, 5
        %v1022 = vsel %vm948, %v1017, %v1021
        %v1023 = vshrl.u32 %v921, 16
        %v1025 = vrot.slane %v1023, 4
        %v1026 = vor.u32 %v1025, %v1021
        %v1027 = vrot.slane %v1026, 4
        %v1029 = vshll.u32 %v922, 16
        %v1031 = vrot.slane %v1029, 5
        %v1032 = vsel %vm948, %v1027, %v1031
        %v1033 = vshrl.u32 %v922, 16
        %v1035 = vrot.slane %v1033, 4
        %v1036 = vor.u32 %v1035, %v1031
        %v1037 = vrot.slane %v1036, 4
        %v1039 = vshll.u32 %v923, 16
        %v1041 = vrot.slane %v1039, 5
        %v1042 = vsel %vm948, %v1037, %v1041
        %v1043 = vshrl.u32 %v923, 16
        %v1045 = vrot.slane %v1043, 4
        %v1046 = vor.u32 %v1045, %v1041
        %v1047 = vrot.slane %v1046, 4
        %v1049 = vshll.u32 %v924, 16
        %v1051 = vrot.slane %v1049, 5
        %v1052 = vsel %vm948, %v1047, %v1051
        %v1053 = vshrl.u32 %v924, 16
        %v1055 = vrot.slane %v1053, 4
        %v1056 = vor.u32 %v1055, %v1051
        %v1057 = vrot.slane %v1056, 4
        %v1059 = vshll.u32 %v925, 16
        %v1061 = vrot.slane %v1059, 5
        %v1062 = vsel %vm948, %v1057, %v1061
        %v1063 = vshrl.u32 %v925, 16
        %v1065 = vrot.slane %v1063, 4
        %v1066 = vor.u32 %v1065, %v1061
        %v1067 = vrot.slane %v1066, 4
        %v1069 = vshll.u32 %v926, 16
        %v1071 = vrot.slane %v1069, 5
        %v1072 = vsel %vm948, %v1067, %v1071
        %v1073 = vshrl.u32 %v926, 16
        %v1075 = vrot.slane %v1073, 4
        %v1076 = vor.u32 %v1075, %v1071
        %v1077 = vrot.slane %v1076, 4
        %v1079 = vshll.u32 %v927, 16
        %v1081 = vrot.slane %v1079, 5
        %v1082 = vsel %vm948, %v1077, %v1081
        %v1083 = vshrl.u32 %v927, 16
        %v1085 = vrot.slane %v1083, 4
        %v1086 = vor.u32 %v1085, %v1081
        %v1087 = vrot.slane %v1086, 4
        %v1089 = vshll.u32 %v928, 16
        %v1091 = vrot.slane %v1089, 5
        %v1092 = vsel %vm948, %v1087, %v1091
        %v1093 = vshrl.u32 %v928, 16
        %v1095 = vrot.slane %v1093, 4
        %v1096 = vor.u32 %v1095, %v1091
        %v1097 = vrot.slane %v1096, 4
        %v1099 = vshll.u32 %v929, 16
        %v1101 = vrot.slane %v1099, 5
        %v1102 = vsel %vm948, %v1097, %v1101
        %v1103 = vshrl.u32 %v929, 16
        %v1105 = vrot.slane %v1103, 4
        %v1106 = vor.u32 %v1105, %v1101
        %v1107 = vrot.slane %v1106, 4
        %v1109 = vshll.u32 %v930, 16
        %v1111 = vrot.slane %v1109, 5
        %v1112 = vsel %vm948, %v1107, %v1111
        %v1113 = vshrl.u32 %v930, 16
        %v1115 = vrot.slane %v1113, 4
        %v1116 = vor.u32 %v1115, %v1111
        %v1117 = vrot.slane %v1116, 4
        %v1119 = vshll.u32 %v931, 16
        %v1121 = vrot.slane %v1119, 5
        %v1122 = vsel %vm948, %v1117, %v1121
        %v1123 = vshrl.u32 %v931, 16
        %v1125 = vrot.slane %v1123, 4
        %v1126 = vor.u32 %v1125, %v1121
        %v1127 = vrot.slane %v1126, 4
        %v1129 = vshll.u32 %v932, 16
        %v1131 = vrot.slane %v1129, 5
        %v1132 = vsel %vm948, %v1127, %v1131
        %v1133 = vshrl.u32 %v932, 16
        %v1135 = vrot.slane %v1133, 4
        %v1136 = vor.u32 %v1135, %v1131
        %v1137 = vrot.slane %v1136, 4
        %v1139 = vshll.u32 %v933, 16
        %v1141 = vrot.slane %v1139, 5
        %v1142 = vsel %vm948, %v1137, %v1141
        %v1143 = vshrl.u32 %v933, 16
        %v1145 = vrot.slane %v1143, 4
        %v1146 = vor.u32 %v1145, %v1141
        %v1147 = vrot.slane %v1146, 4
        %v1149 = vshll.u32 %v934, 16
        %v1151 = vrot.slane %v1149, 5
        %v1152 = vsel %vm948, %v1147, %v1151
        %v1153 = vshrl.u32 %v934, 16
        %v1155 = vrot.slane %v1153, 4
        %v1156 = vor.u32 %v1155, %v1151
        %v1157 = vrot.slane %v1156, 4
        %v1159 = vshll.u32 %v935, 16
        %v1161 = vrot.slane %v1159, 5
        %v1162 = vsel %vm948, %v1157, %v1161
        %v1163 = vshrl.u32 %v935, 16
        %v1165 = vrot.slane %v1163, 4
        %v1166 = vor.u32 %v1165, %v1161
        %v1167 = vrot.slane %v1166, 4
        %v1169 = vshll.u32 %v936, 16
        %v1171 = vrot.slane %v1169, 5
        %v1172 = vsel %vm948, %v1167, %v1171
        %v1173 = vshrl.u32 %v936, 16
        %v1175 = vrot.slane %v1173, 4
        %v1176 = vor.u32 %v1175, %v1171
        %v1177 = vrot.slane %v1176, 4
        %v1179 = vshll.u32 %v937, 16
        %v1181 = vrot.slane %v1179, 5
        %v1182 = vsel %vm948, %v1177, %v1181
        %v1183 = vshrl.u32 %v937, 16
        %v1185 = vrot.slane %v1183, 4
        %v1186 = vor.u32 %v1185, %v1181
        %v1187 = vrot.slane %v1186, 4
        %v1189 = vshll.u32 %v938, 16
        %v1191 = vrot.slane %v1189, 5
        %v1192 = vsel %vm948, %v1187, %v1191
        %v1193 = vshrl.u32 %v938, 16
        %v1195 = vrot.slane %v1193, 4
        %v1196 = vor.u32 %v1195, %v1191
        %v1197 = vrot.slane %v1196, 4
        %v1199 = vshll.u32 %v939, 16
        %v1201 = vrot.slane %v1199, 5
        %v1202 = vsel %vm948, %v1197, %v1201
        %v1203 = vshrl.u32 %v939, 16
        %v1205 = vrot.slane %v1203, 4
        %v1206 = vor.u32 %v1205, %v1201
        %v1207 = vrot.slane %v1206, 4
        %v1209 = vshll.u32 %v940, 16
        %v1211 = vrot.slane %v1209, 5
        %v1212 = vsel %vm948, %v1207, %v1211
        %v1213 = vshrl.u32 %v940, 16
        %v1215 = vrot.slane %v1213, 4
        %v1216 = vor.u32 %v1215, %v1211
        %v1217 = vrot.slane %v1216, 4
        %v1219 = vshll.u32 %v941, 16
        %v1221 = vrot.slane %v1219, 5
        %v1222 = vsel %vm948, %v1217, %v1221
        %v1223 = vshrl.u32 %v941, 16
        %v1225 = vrot.slane %v1223, 4
        %v1226 = vor.u32 %v1225, %v1221
        %v1227 = vrot.slane %v1226, 4
        %v1229 = vshll.u32 %v942, 16
        %v1231 = vrot.slane %v1229, 5
        %v1232 = vsel %vm948, %v1227, %v1231
        %v1233 = vshrl.u32 %v942, 16
        %v1235 = vrot.slane %v1233, 4
        %v1236 = vor.u32 %v1235, %v1231
        %v1237 = vrot.slane %v1236, 4
        %v1239 = vshll.u32 %v943, 16
        %v1241 = vrot.slane %v1239, 5
        %v1242 = vsel %vm948, %v1237, %v1241
        %v1243 = vshrl.u32 %v943, 16
        %v1245 = vrot.slane %v1243, 4
        %v1246 = vor.u32 %v1245, %v1241
        %v1247 = vrot.slane %v1246, 4
        %v1249 = vshll.u32 %v944, 16
        %v1251 = vrot.slane %v1249, 5
        %v1252 = vsel %vm948, %v1247, %v1251
        %v1253 = vshrl.u32 %v944, 16
        %v1255 = vrot.slane %v1253, 4
        %v1256 = vor.u32 %v1255, %v1251
        %v1257 = vrot.slane %v1256, 4
        %v1259 = vshll.u32 %v945, 16
        %v1261 = vrot.slane %v1259, 5
        %v1262 = vsel %vm948, %v1257, %v1261
        %v1263 = vshrl.u32 %v945, 16
        %v1265 = vrot.slane %v1263, 4
        %v1266 = vor.u32 %v1265, %v1261
        %v1267 = vrot.slane %v1266, 4
        %vm1268 = vcmp.ne.s16.totalorder %v952, 0
        %vm1269 = vcmp.ne.s16.totalorder %v962, 0
        %vm1270 = vcmp.ne.s16.totalorder %v972, 0
        %vm1271 = vcmp.ne.s16.totalorder %v982, 0
        %vm1272 = vcmp.ne.s16.totalorder %v992, 0
        %vm1273 = vcmp.ne.s16.totalorder %v1002, 0
        %vm1274 = vcmp.ne.s16.totalorder %v1012, 0
        %vm1275 = vcmp.ne.s16.totalorder %v1022, 0
        %vm1276 = vcmp.ne.s16.totalorder %v1032, 0
        %vm1277 = vcmp.ne.s16.totalorder %v1042, 0
        %vm1278 = vcmp.ne.s16.totalorder %v1052, 0
        %vm1279 = vcmp.ne.s16.totalorder %v1062, 0
        %vm1280 = vcmp.ne.s16.totalorder %v1072, 0
        %vm1281 = vcmp.ne.s16.totalorder %v1082, 0
        %vm1282 = vcmp.ne.s16.totalorder %v1092, 0
        %vm1283 = vcmp.ne.s16.totalorder %v1102, 0
        %vm1284 = vcmp.ne.s16.totalorder %v1112, 0
        %vm1285 = vcmp.ne.s16.totalorder %v1122, 0
        %vm1286 = vcmp.ne.s16.totalorder %v1132, 0
        %vm1287 = vcmp.ne.s16.totalorder %v1142, 0
        %vm1288 = vcmp.ne.s16.totalorder %v1152, 0
        %vm1289 = vcmp.ne.s16.totalorder %v1162, 0
        %vm1290 = vcmp.ne.s16.totalorder %v1172, 0
        %vm1291 = vcmp.ne.s16.totalorder %v1182, 0
        %vm1292 = vcmp.ne.s16.totalorder %v1192, 0
        %vm1293 = vcmp.ne.s16.totalorder %v1202, 0
        %vm1294 = vcmp.ne.s16.totalorder %v1212, 0
        %vm1295 = vcmp.ne.s16.totalorder %v1222, 0
        %vm1296 = vcmp.ne.s16.totalorder %v1232, 0
        %vm1297 = vcmp.ne.s16.totalorder %v1242, 0
        %vm1298 = vcmp.ne.s16.totalorder %v1252, 0
        %vm1299 = vcmp.ne.s16.totalorder %v1262, 0
        %vm1300 = vcmp.ne.s16.totalorder %v1267, 0
        %v1301 = vsel %vm1268, %v785, 0
        %v1302 = vsel %vm1269, %v786, 0
        %v1303 = vsel %vm1270, %v787, 0
        %v1304 = vsel %vm1271, %v788, 0
        %v1305 = vsel %vm1272, %v789, 0
        %v1306 = vsel %vm1273, %v790, 0
        %v1307 = vsel %vm1274, %v791, 0
        %v1308 = vsel %vm1275, %v792, 0
        %v1309 = vsel %vm1276, %v793, 0
        %v1310 = vsel %vm1277, %v794, 0
        %v1311 = vsel %vm1278, %v795, 0
        %v1312 = vsel %vm1279, %v796, 0
        %v1313 = vsel %vm1280, %v797, 0
        %v1314 = vsel %vm1281, %v798, 0
        %v1315 = vsel %vm1282, %v799, 0
        %v1316 = vsel %vm1283, %v800, 0
        %v1317 = vsel %vm1284, %v801, 0
        %v1318 = vsel %vm1285, %v802, 0
        %v1319 = vsel %vm1286, %v803, 0
        %v1320 = vsel %vm1287, %v804, 0
        %v1321 = vsel %vm1288, %v805, 0
        %v1322 = vsel %vm1289, %v806, 0
        %v1323 = vsel %vm1290, %v807, 0
        %v1324 = vsel %vm1291, %v808, 0
        %v1325 = vsel %vm1292, %v809, 0
        %v1326 = vsel %vm1293, %v810, 0
        %v1327 = vsel %vm1294, %v811, 0
        %v1328 = vsel %vm1295, %v812, 0
        %v1329 = vsel %vm1296, %v813, 0
        %v1330 = vsel %vm1297, %v814, 0
        %v1331 = vsel %vm1298, %v815, 0
        %v1332 = vsel %vm1299, %v816, 0
        %v1333 = vsel %vm1300, %v817, 0
        %vm1334 = vsmask.f32 256
        %vm1335 = vsmask.f32 4368
        %vm1336 = vmor %vm1334, %vm1335
        %v1338 = vshrl.u32 %v1301, 16
        %v1340 = vrot.slane %v1338, 7
        %v1341 = vrot.slane %v1340, 4
        %v1343 = vshrl.u32 %v1302, 16
        %v1345 = vrot.slane %v1343, 7
        %v1346 = vshll.u32 %v1302, 16
        %v1348 = vor.u32 %v1345, %v1346
        %v1349 = vsel %vm1336, %v1341, %v1348
        %v1350 = vrot.slane %v1345, 4
        %v1352 = vshrl.u32 %v1303, 16
        %v1354 = vrot.slane %v1352, 7
        %v1355 = vshll.u32 %v1303, 16
        %v1357 = vor.u32 %v1354, %v1355
        %v1358 = vsel %vm1336, %v1350, %v1357
        %v1359 = vrot.slane %v1354, 4
        %v1361 = vshrl.u32 %v1304, 16
        %v1363 = vrot.slane %v1361, 7
        %v1364 = vshll.u32 %v1304, 16
        %v1366 = vor.u32 %v1363, %v1364
        %v1367 = vsel %vm1336, %v1359, %v1366
        %v1368 = vrot.slane %v1363, 4
        %v1370 = vshrl.u32 %v1305, 16
        %v1372 = vrot.slane %v1370, 7
        %v1373 = vshll.u32 %v1305, 16
        %v1375 = vor.u32 %v1372, %v1373
        %v1376 = vsel %vm1336, %v1368, %v1375
        %v1377 = vrot.slane %v1372, 4
        %v1379 = vshrl.u32 %v1306, 16
        %v1381 = vrot.slane %v1379, 7
        %v1382 = vshll.u32 %v1306, 16
        %v1384 = vor.u32 %v1381, %v1382
        %v1385 = vsel %vm1336, %v1377, %v1384
        %v1386 = vrot.slane %v1381, 4
        %v1388 = vshrl.u32 %v1307, 16
        %v1390 = vrot.slane %v1388, 7
        %v1391 = vshll.u32 %v1307, 16
        %v1393 = vor.u32 %v1390, %v1391
        %v1394 = vsel %vm1336, %v1386, %v1393
        %v1395 = vrot.slane %v1390, 4
        %v1397 = vshrl.u32 %v1308, 16
        %v1399 = vrot.slane %v1397, 7
        %v1400 = vshll.u32 %v1308, 16
        %v1402 = vor.u32 %v1399, %v1400
        %v1403 = vsel %vm1336, %v1395, %v1402
        %v1404 = vrot.slane %v1399, 4
        %v1406 = vshrl.u32 %v1309, 16
        %v1408 = vrot.slane %v1406, 7
        %v1409 = vshll.u32 %v1309, 16
        %v1411 = vor.u32 %v1408, %v1409
        %v1412 = vsel %vm1336, %v1404, %v1411
        %v1413 = vrot.slane %v1408, 4
        %v1415 = vshrl.u32 %v1310, 16
        %v1417 = vrot.slane %v1415, 7
        %v1418 = vshll.u32 %v1310, 16
        %v1420 = vor.u32 %v1417, %v1418
        %v1421 = vsel %vm1336, %v1413, %v1420
        %v1422 = vrot.slane %v1417, 4
        %v1424 = vshrl.u32 %v1311, 16
        %v1426 = vrot.slane %v1424, 7
        %v1427 = vshll.u32 %v1311, 16
        %v1429 = vor.u32 %v1426, %v1427
        %v1430 = vsel %vm1336, %v1422, %v1429
        %v1431 = vrot.slane %v1426, 4
        %v1433 = vshrl.u32 %v1312, 16
        %v1435 = vrot.slane %v1433, 7
        %v1436 = vshll.u32 %v1312, 16
        %v1438 = vor.u32 %v1435, %v1436
        %v1439 = vsel %vm1336, %v1431, %v1438
        %v1440 = vrot.slane %v1435, 4
        %v1442 = vshrl.u32 %v1313, 16
        %v1444 = vrot.slane %v1442, 7
        %v1445 = vshll.u32 %v1313, 16
        %v1447 = vor.u32 %v1444, %v1445
        %v1448 = vsel %vm1336, %v1440, %v1447
        %v1449 = vrot.slane %v1444, 4
        %v1451 = vshrl.u32 %v1314, 16
        %v1453 = vrot.slane %v1451, 7
        %v1454 = vshll.u32 %v1314, 16
        %v1456 = vor.u32 %v1453, %v1454
        %v1457 = vsel %vm1336, %v1449, %v1456
        %v1458 = vrot.slane %v1453, 4
        %v1460 = vshrl.u32 %v1315, 16
        %v1462 = vrot.slane %v1460, 7
        %v1463 = vshll.u32 %v1315, 16
        %v1465 = vor.u32 %v1462, %v1463
        %v1466 = vsel %vm1336, %v1458, %v1465
        %v1467 = vrot.slane %v1462, 4
        %v1469 = vshrl.u32 %v1316, 16
        %v1471 = vrot.slane %v1469, 7
        %v1472 = vshll.u32 %v1316, 16
        %v1474 = vor.u32 %v1471, %v1472
        %v1475 = vsel %vm1336, %v1467, %v1474
        %v1476 = vrot.slane %v1471, 4
        %v1478 = vshrl.u32 %v1317, 16
        %v1480 = vrot.slane %v1478, 7
        %v1481 = vshll.u32 %v1317, 16
        %v1483 = vor.u32 %v1480, %v1481
        %v1484 = vsel %vm1336, %v1476, %v1483
        %v1485 = vrot.slane %v1480, 4
        %v1487 = vshrl.u32 %v1318, 16
        %v1489 = vrot.slane %v1487, 7
        %v1490 = vshll.u32 %v1318, 16
        %v1492 = vor.u32 %v1489, %v1490
        %v1493 = vsel %vm1336, %v1485, %v1492
        %v1494 = vrot.slane %v1489, 4
        %v1496 = vshrl.u32 %v1319, 16
        %v1498 = vrot.slane %v1496, 7
        %v1499 = vshll.u32 %v1319, 16
        %v1501 = vor.u32 %v1498, %v1499
        %v1502 = vsel %vm1336, %v1494, %v1501
        %v1503 = vrot.slane %v1498, 4
        %v1505 = vshrl.u32 %v1320, 16
        %v1507 = vrot.slane %v1505, 7
        %v1508 = vshll.u32 %v1320, 16
        %v1510 = vor.u32 %v1507, %v1508
        %v1511 = vsel %vm1336, %v1503, %v1510
        %v1512 = vrot.slane %v1507, 4
        %v1514 = vshrl.u32 %v1321, 16
        %v1516 = vrot.slane %v1514, 7
        %v1517 = vshll.u32 %v1321, 16
        %v1519 = vor.u32 %v1516, %v1517
        %v1520 = vsel %vm1336, %v1512, %v1519
        %v1521 = vrot.slane %v1516, 4
        %v1523 = vshrl.u32 %v1322, 16
        %v1525 = vrot.slane %v1523, 7
        %v1526 = vshll.u32 %v1322, 16
        %v1528 = vor.u32 %v1525, %v1526
        %v1529 = vsel %vm1336, %v1521, %v1528
        %v1530 = vrot.slane %v1525, 4
        %v1532 = vshrl.u32 %v1323, 16
        %v1534 = vrot.slane %v1532, 7
        %v1535 = vshll.u32 %v1323, 16
        %v1537 = vor.u32 %v1534, %v1535
        %v1538 = vsel %vm1336, %v1530, %v1537
        %v1539 = vrot.slane %v1534, 4
        %v1541 = vshrl.u32 %v1324, 16
        %v1543 = vrot.slane %v1541, 7
        %v1544 = vshll.u32 %v1324, 16
        %v1546 = vor.u32 %v1543, %v1544
        %v1547 = vsel %vm1336, %v1539, %v1546
        %v1548 = vrot.slane %v1543, 4
        %v1550 = vshrl.u32 %v1325, 16
        %v1552 = vrot.slane %v1550, 7
        %v1553 = vshll.u32 %v1325, 16
        %v1555 = vor.u32 %v1552, %v1553
        %v1556 = vsel %vm1336, %v1548, %v1555
        %v1557 = vrot.slane %v1552, 4
        %v1559 = vshrl.u32 %v1326, 16
        %v1561 = vrot.slane %v1559, 7
        %v1562 = vshll.u32 %v1326, 16
        %v1564 = vor.u32 %v1561, %v1562
        %v1565 = vsel %vm1336, %v1557, %v1564
        %v1566 = vrot.slane %v1561, 4
        %v1568 = vshrl.u32 %v1327, 16
        %v1570 = vrot.slane %v1568, 7
        %v1571 = vshll.u32 %v1327, 16
        %v1573 = vor.u32 %v1570, %v1571
        %v1574 = vsel %vm1336, %v1566, %v1573
        %v1575 = vrot.slane %v1570, 4
        %v1577 = vshrl.u32 %v1328, 16
        %v1579 = vrot.slane %v1577, 7
        %v1580 = vshll.u32 %v1328, 16
        %v1582 = vor.u32 %v1579, %v1580
        %v1583 = vsel %vm1336, %v1575, %v1582
        %v1584 = vrot.slane %v1579, 4
        %v1586 = vshrl.u32 %v1329, 16
        %v1588 = vrot.slane %v1586, 7
        %v1589 = vshll.u32 %v1329, 16
        %v1591 = vor.u32 %v1588, %v1589
        %v1592 = vsel %vm1336, %v1584, %v1591
        %v1593 = vrot.slane %v1588, 4
        %v1595 = vshrl.u32 %v1330, 16
        %v1597 = vrot.slane %v1595, 7
        %v1598 = vshll.u32 %v1330, 16
        %v1600 = vor.u32 %v1597, %v1598
        %v1601 = vsel %vm1336, %v1593, %v1600
        %v1602 = vrot.slane %v1597, 4
        %v1604 = vshrl.u32 %v1331, 16
        %v1606 = vrot.slane %v1604, 7
        %v1607 = vshll.u32 %v1331, 16
        %v1609 = vor.u32 %v1606, %v1607
        %v1610 = vsel %vm1336, %v1602, %v1609
        %v1611 = vrot.slane %v1606, 4
        %v1613 = vshrl.u32 %v1332, 16
        %v1615 = vrot.slane %v1613, 7
        %v1616 = vshll.u32 %v1332, 16
        %v1618 = vor.u32 %v1615, %v1616
        %v1619 = vsel %vm1336, %v1611, %v1618
        %v1620 = vrot.slane %v1615, 4
        %v1622 = vshrl.u32 %v1333, 16
        %v1624 = vrot.slane %v1622, 7
        %v1625 = vshll.u32 %v1333, 16
        %v1627 = vor.u32 %v1624, %v1625
        %v1628 = vsel %vm1336, %v1620, %v1627
        %1661 = vst.msk [vmem:[#allocation3] sm:$0xf] %vm226, %v1349
        %1662 = vst.msk [vmem:[#allocation3 + $0xc] sm:$0xf] %vm226, %v1358
        %1663 = vst.msk [vmem:[#allocation3 + $0x18] sm:$0xf] %vm226, %v1367
        %1664 = vst.msk [vmem:[#allocation3 + $0x24] sm:$0xf] %vm226, %v1376
        %1665 = vst.msk [vmem:[#allocation3 + $0x30] sm:$0xf] %vm226, %v1385
        %1666 = vst.msk [vmem:[#allocation3 + $0x3c] sm:$0xf] %vm226, %v1394
        %1667 = vst.msk [vmem:[#allocation3 + $0x48] sm:$0xf] %vm226, %v1403
        %1668 = vst.msk [vmem:[#allocation3 + $0x54] sm:$0xf] %vm226, %v1412
        %1669 = vst.msk [vmem:[#allocation3 + $0x60] sm:$0xf] %vm226, %v1421
        %1670 = vst.msk [vmem:[#allocation3 + $0x6c] sm:$0xf] %vm226, %v1430
        %1671 = vst.msk [vmem:[#allocation3 + $0x78] sm:$0xf] %vm226, %v1439
        %1672 = vst.msk [vmem:[#allocation3 + $0x84] sm:$0xf] %vm226, %v1448
        %1673 = vst.msk [vmem:[#allocation3 + $0x90] sm:$0xf] %vm226, %v1457
        %1674 = vst.msk [vmem:[#allocation3 + $0x9c] sm:$0xf] %vm226, %v1466
        %1675 = vst.msk [vmem:[#allocation3 + $0xa8] sm:$0xf] %vm226, %v1475
        %1676 = vst.msk [vmem:[#allocation3 + $0xb4] sm:$0xf] %vm226, %v1484
        %1677 = vst.msk [vmem:[#allocation3 + $0xc0] sm:$0xf] %vm226, %v1493
        %1678 = vst.msk [vmem:[#allocation3 + $0xcc] sm:$0xf] %vm226, %v1502
        %1679 = vst.msk [vmem:[#allocation3 + $0xd8] sm:$0xf] %vm226, %v1511
        %1680 = vst.msk [vmem:[#allocation3 + $0xe4] sm:$0xf] %vm226, %v1520
        %1681 = vst.msk [vmem:[#allocation3 + $0xf0] sm:$0xf] %vm226, %v1529
        %1682 = vst.msk [vmem:[#allocation3 + $0xfc] sm:$0xf] %vm226, %v1538
        %1683 = vst.msk [vmem:[#allocation3 + $0x108] sm:$0xf] %vm226, %v1547
        %1684 = vst.msk [vmem:[#allocation3 + $0x114] sm:$0xf] %vm226, %v1556
        %1685 = vst.msk [vmem:[#allocation3 + $0x120] sm:$0xf] %vm226, %v1565
        %1686 = vst.msk [vmem:[#allocation3 + $0x12c] sm:$0xf] %vm226, %v1574
        %1687 = vst.msk [vmem:[#allocation3 + $0x138] sm:$0xf] %vm226, %v1583
        %1688 = vst.msk [vmem:[#allocation3 + $0x144] sm:$0xf] %vm226, %v1592
        %1689 = vst.msk [vmem:[#allocation3 + $0x150] sm:$0xf] %vm226, %v1601
        %1690 = vst.msk [vmem:[#allocation3 + $0x15c] sm:$0xf] %vm226, %v1610
        %1691 = vst.msk [vmem:[#allocation3 + $0x168] sm:$0xf] %vm226, %v1619
        %1692 = vst.msk [vmem:[#allocation3 + $0x174] sm:$0xf] %vm226, %v1628
        %v1693 = vld [vmem:[#allocation2 + $0x4] sm:$0xf]
        %v1694 = vld [vmem:[#allocation2 + $0x8] sm:$0xf]
        %v1695 = vld [vmem:[#allocation2 + $0xc] sm:$0xf]
        %v1696 = vld [vmem:[#allocation2 + $0x10] sm:$0xf]
        %v1697 = vld [vmem:[#allocation2 + $0x14] sm:$0xf]
        %v1698 = vld [vmem:[#allocation2 + $0x18] sm:$0xf]
        %v1699 = vld [vmem:[#allocation2 + $0x1c] sm:$0xf]
        %v1700 = vld [vmem:[#allocation2 + $0x20] sm:$0xf]
        %v1701 = vld [vmem:[#allocation2 + $0x24] sm:$0xf]
        %v1702 = vld [vmem:[#allocation2 + $0x28] sm:$0xf]
        %v1703 = vld [vmem:[#allocation2 + $0x2c] sm:$0xf]
        %v1704 = vld [vmem:[#allocation2 + $0x30] sm:$0xf]
        %v1705 = vld [vmem:[#allocation2 + $0x34] sm:$0xf]
        %v1706 = vld [vmem:[#allocation2 + $0x38] sm:$0xf]
        %v1707 = vld [vmem:[#allocation2 + $0x3c] sm:$0xf]
        %v1708 = vld [vmem:[#allocation2 + $0x40] sm:$0xf]
        %v1709 = vld [vmem:[#allocation2 + $0x44] sm:$0xf]
        %v1710 = vld [vmem:[#allocation2 + $0x48] sm:$0xf]
        %v1711 = vld [vmem:[#allocation2 + $0x4c] sm:$0xf]
        %v1712 = vld [vmem:[#allocation2 + $0x50] sm:$0xf]
        %v1713 = vld [vmem:[#allocation2 + $0x54] sm:$0xf]
        %v1714 = vld [vmem:[#allocation2 + $0x58] sm:$0xf]
        %v1715 = vld [vmem:[#allocation2 + $0x5c] sm:$0xf]
        %v1716 = vld [vmem:[#allocation2 + $0x60] sm:$0xf]
        %v1717 = vld [vmem:[#allocation2 + $0x64] sm:$0xf]
        %v1718 = vld [vmem:[#allocation2 + $0x68] sm:$0xf]
        %v1719 = vld [vmem:[#allocation2 + $0x6c] sm:$0xf]
        %v1720 = vld [vmem:[#allocation2 + $0x70] sm:$0xf]
        %v1721 = vld [vmem:[#allocation2 + $0x74] sm:$0xf]
        %v1722 = vld [vmem:[#allocation2 + $0x78] sm:$0xf]
        %v1723 = vld [vmem:[#allocation2 + $0x7c] sm:$0xf]
        %v1724 = vld [vmem:[#allocation2 + $0x80] sm:$0xf]
        %1757 = vrot.lane.b32.xlu0 %v1693, 32
        %v1758 = vpop.permute.xlu0 %1757
        %1759 = vrot.lane.b32.xlu0 %v1694, 32
        %v1760 = vpop.permute.xlu0 %1759
        %1761 = vrot.lane.b32.xlu0 %v1695, 32
        %v1762 = vpop.permute.xlu0 %1761
        %1763 = vrot.lane.b32.xlu0 %v1696, 32
        %v1764 = vpop.permute.xlu0 %1763
        %1765 = vrot.lane.b32.xlu0 %v1697, 32
        %v1766 = vpop.permute.xlu0 %1765
        %1767 = vrot.lane.b32.xlu0 %v1698, 32
        %v1768 = vpop.permute.xlu0 %1767
        %1769 = vrot.lane.b32.xlu0 %v1699, 32
        %v1770 = vpop.permute.xlu0 %1769
        %1771 = vrot.lane.b32.xlu0 %v1700, 32
        %v1772 = vpop.permute.xlu0 %1771
        %1773 = vrot.lane.b32.xlu0 %v1701, 32
        %v1774 = vpop.permute.xlu0 %1773
        %1775 = vrot.lane.b32.xlu0 %v1702, 32
        %v1776 = vpop.permute.xlu0 %1775
        %1777 = vrot.lane.b32.xlu0 %v1703, 32
        %v1778 = vpop.permute.xlu0 %1777
        %1779 = vrot.lane.b32.xlu0 %v1704, 32
        %v1780 = vpop.permute.xlu0 %1779
        %1781 = vrot.lane.b32.xlu0 %v1705, 32
        %v1782 = vpop.permute.xlu0 %1781
        %1783 = vrot.lane.b32.xlu0 %v1706, 32
        %v1784 = vpop.permute.xlu0 %1783
        %1785 = vrot.lane.b32.xlu0 %v1707, 32
        %v1786 = vpop.permute.xlu0 %1785
        %1787 = vrot.lane.b32.xlu0 %v1708, 32
        %v1788 = vpop.permute.xlu0 %1787
        %1789 = vrot.lane.b32.xlu0 %v1709, 32
        %v1790 = vpop.permute.xlu0 %1789
        %1791 = vrot.lane.b32.xlu0 %v1710, 32
        %v1792 = vpop.permute.xlu0 %1791
        %1793 = vrot.lane.b32.xlu0 %v1711, 32
        %v1794 = vpop.permute.xlu0 %1793
        %1795 = vrot.lane.b32.xlu0 %v1712, 32
        %v1796 = vpop.permute.xlu0 %1795
        %1797 = vrot.lane.b32.xlu0 %v1713, 32
        %v1798 = vpop.permute.xlu0 %1797
        %1799 = vrot.lane.b32.xlu0 %v1714, 32
        %v1800 = vpop.permute.xlu0 %1799
        %1801 = vrot.lane.b32.xlu0 %v1715, 32
        %v1802 = vpop.permute.xlu0 %1801
        %1803 = vrot.lane.b32.xlu0 %v1716, 32
        %v1804 = vpop.permute.xlu0 %1803
        %1805 = vrot.lane.b32.xlu0 %v1717, 32
        %v1806 = vpop.permute.xlu0 %1805
        %1807 = vrot.lane.b32.xlu0 %v1718, 32
        %v1808 = vpop.permute.xlu0 %1807
        %1809 = vrot.lane.b32.xlu0 %v1719, 32
        %v1810 = vpop.permute.xlu0 %1809
        %1811 = vrot.lane.b32.xlu0 %v1720, 32
        %v1812 = vpop.permute.xlu0 %1811
        %1813 = vrot.lane.b32.xlu0 %v1721, 32
        %v1814 = vpop.permute.xlu0 %1813
        %1815 = vrot.lane.b32.xlu0 %v1722, 32
        %v1816 = vpop.permute.xlu0 %1815
        %1817 = vrot.lane.b32.xlu0 %v1723, 32
        %v1818 = vpop.permute.xlu0 %1817
        %1819 = vrot.lane.b32.xlu0 %v1724, 32
        %v1820 = vpop.permute.xlu0 %1819
        %vm1853 = vcmask 519424
        %1854 = vst.msk [vmem:[#allocation3] sm:$0xf] %vm1853, %v1758
        %1855 = vst.msk [vmem:[#allocation3 + $0xc] sm:$0xf] %vm1853, %v1760
        %1856 = vst.msk [vmem:[#allocation3 + $0x18] sm:$0xf] %vm1853, %v1762
        %1857 = vst.msk [vmem:[#allocation3 + $0x24] sm:$0xf] %vm1853, %v1764
        %1858 = vst.msk [vmem:[#allocation3 + $0x30] sm:$0xf] %vm1853, %v1766
        %1859 = vst.msk [vmem:[#allocation3 + $0x3c] sm:$0xf] %vm1853, %v1768
        %1860 = vst.msk [vmem:[#allocation3 + $0x48] sm:$0xf] %vm1853, %v1770
        %1861 = vst.msk [vmem:[#allocation3 + $0x54] sm:$0xf] %vm1853, %v1772
        %1862 = vst.msk [vmem:[#allocation3 + $0x60] sm:$0xf] %vm1853, %v1774
        %1863 = vst.msk [vmem:[#allocation3 + $0x6c] sm:$0xf] %vm1853, %v1776
        %1864 = vst.msk [vmem:[#allocation3 + $0x78] sm:$0xf] %vm1853, %v1778
        %1865 = vst.msk [vmem:[#allocation3 + $0x84] sm:$0xf] %vm1853, %v1780
        %1866 = vst.msk [vmem:[#allocation3 + $0x90] sm:$0xf] %vm1853, %v1782
        %1867 = vst.msk [vmem:[#allocation3 + $0x9c] sm:$0xf] %vm1853, %v1784
        %1868 = vst.msk [vmem:[#allocation3 + $0xa8] sm:$0xf] %vm1853, %v1786
        %1869 = vst.msk [vmem:[#allocation3 + $0xb4] sm:$0xf] %vm1853, %v1788
        %1870 = vst.msk [vmem:[#allocation3 + $0xc0] sm:$0xf] %vm1853, %v1790
        %1871 = vst.msk [vmem:[#allocation3 + $0xcc] sm:$0xf] %vm1853, %v1792
        %1872 = vst.msk [vmem:[#allocation3 + $0xd8] sm:$0xf] %vm1853, %v1794
        %1873 = vst.msk [vmem:[#allocation3 + $0xe4] sm:$0xf] %vm1853, %v1796
        %1874 = vst.msk [vmem:[#allocation3 + $0xf0] sm:$0xf] %vm1853, %v1798
        %1875 = vst.msk [vmem:[#allocation3 + $0xfc] sm:$0xf] %vm1853, %v1800
        %1876 = vst.msk [vmem:[#allocation3 + $0x108] sm:$0xf] %vm1853, %v1802
        %1877 = vst.msk [vmem:[#allocation3 + $0x114] sm:$0xf] %vm1853, %v1804
        %1878 = vst.msk [vmem:[#allocation3 + $0x120] sm:$0xf] %vm1853, %v1806
        %1879 = vst.msk [vmem:[#allocation3 + $0x12c] sm:$0xf] %vm1853, %v1808
        %1880 = vst.msk [vmem:[#allocation3 + $0x138] sm:$0xf] %vm1853, %v1810
        %1881 = vst.msk [vmem:[#allocation3 + $0x144] sm:$0xf] %vm1853, %v1812
        %1882 = vst.msk [vmem:[#allocation3 + $0x150] sm:$0xf] %vm1853, %v1814
        %1883 = vst.msk [vmem:[#allocation3 + $0x15c] sm:$0xf] %vm1853, %v1816
        %1884 = vst.msk [vmem:[#allocation3 + $0x168] sm:$0xf] %vm1853, %v1818
        %1885 = vst.msk [vmem:[#allocation3 + $0x174] sm:$0xf] %vm1853, %v1820
        %v1886 = vld [vmem:[#allocation2 + $0x4] sm:$0xf]
        %v1887 = vld [vmem:[#allocation2 + $0x8] sm:$0xf]
        %v1888 = vld [vmem:[#allocation2 + $0xc] sm:$0xf]
        %v1889 = vld [vmem:[#allocation2 + $0x10] sm:$0xf]
        %v1890 = vld [vmem:[#allocation2 + $0x14] sm:$0xf]
        %v1891 = vld [vmem:[#allocation2 + $0x18] sm:$0xf]
        %v1892 = vld [vmem:[#allocation2 + $0x1c] sm:$0xf]
        %v1893 = vld [vmem:[#allocation2 + $0x20] sm:$0xf]
        %v1894 = vld [vmem:[#allocation2 + $0x24] sm:$0xf]
        %v1895 = vld [vmem:[#allocation2 + $0x28] sm:$0xf]
        %v1896 = vld [vmem:[#allocation2 + $0x2c] sm:$0xf]
        %v1897 = vld [vmem:[#allocation2 + $0x30] sm:$0xf]
        %v1898 = vld [vmem:[#allocation2 + $0x34] sm:$0xf]
        %v1899 = vld [vmem:[#allocation2 + $0x38] sm:$0xf]
        %v1900 = vld [vmem:[#allocation2 + $0x3c] sm:$0xf]
        %v1901 = vld [vmem:[#allocation2 + $0x40] sm:$0xf]
        %v1902 = vld [vmem:[#allocation2 + $0x44] sm:$0xf]
        %v1903 = vld [vmem:[#allocation2 + $0x48] sm:$0xf]
        %v1904 = vld [vmem:[#allocation2 + $0x4c] sm:$0xf]
        %v1905 = vld [vmem:[#allocation2 + $0x50] sm:$0xf]
        %v1906 = vld [vmem:[#allocation2 + $0x54] sm:$0xf]
        %v1907 = vld [vmem:[#allocation2 + $0x58] sm:$0xf]
        %v1908 = vld [vmem:[#allocation2 + $0x5c] sm:$0xf]
        %v1909 = vld [vmem:[#allocation2 + $0x60] sm:$0xf]
        %v1910 = vld [vmem:[#allocation2 + $0x64] sm:$0xf]
        %v1911 = vld [vmem:[#allocation2 + $0x68] sm:$0xf]
        %v1912 = vld [vmem:[#allocation2 + $0x6c] sm:$0xf]
        %v1913 = vld [vmem:[#allocation2 + $0x70] sm:$0xf]
        %v1914 = vld [vmem:[#allocation2 + $0x74] sm:$0xf]
        %v1915 = vld [vmem:[#allocation2 + $0x78] sm:$0xf]
        %v1916 = vld [vmem:[#allocation2 + $0x7c] sm:$0xf]
        %v1917 = vld [vmem:[#allocation2 + $0x80] sm:$0xf]
        %v1918 = vld [vmem:[#allocation2 + $0x84] sm:$0x1]
        %v1919 = vsel %vm753, 1, 0
        %v1920 = vsel %vm754, 1, 0
        %v1921 = vsel %vm755, 1, 0
        %v1922 = vsel %vm756, 1, 0
        %v1923 = vsel %vm757, 1, 0
        %v1924 = vsel %vm758, 1, 0
        %v1925 = vsel %vm759, 1, 0
        %v1926 = vsel %vm760, 1, 0
        %v1927 = vsel %vm761, 1, 0
        %v1928 = vsel %vm762, 1, 0
        %v1929 = vsel %vm763, 1, 0
        %v1930 = vsel %vm764, 1, 0
        %v1931 = vsel %vm765, 1, 0
        %v1932 = vsel %vm766, 1, 0
        %v1933 = vsel %vm767, 1, 0
        %v1934 = vsel %vm768, 1, 0
        %v1935 = vsel %vm769, 1, 0
        %v1936 = vsel %vm770, 1, 0
        %v1937 = vsel %vm771, 1, 0
        %v1938 = vsel %vm772, 1, 0
        %v1939 = vsel %vm773, 1, 0
        %v1940 = vsel %vm774, 1, 0
        %v1941 = vsel %vm775, 1, 0
        %v1942 = vsel %vm776, 1, 0
        %v1943 = vsel %vm777, 1, 0
        %v1944 = vsel %vm778, 1, 0
        %v1945 = vsel %vm779, 1, 0
        %v1946 = vsel %vm780, 1, 0
        %v1947 = vsel %vm781, 1, 0
        %v1948 = vsel %vm782, 1, 0
        %v1949 = vsel %vm783, 1, 0
        %v1950 = vsel %vm784, 1, 0
        %vm1951 = vcmp.eq.s32.totalorder %v1919, 1
        %vm1952 = vcmp.eq.s32.totalorder %v1920, 1
        %vm1953 = vcmp.eq.s32.totalorder %v1921, 1
        %vm1954 = vcmp.eq.s32.totalorder %v1922, 1
        %vm1955 = vcmp.eq.s32.totalorder %v1923, 1
        %vm1956 = vcmp.eq.s32.totalorder %v1924, 1
        %vm1957 = vcmp.eq.s32.totalorder %v1925, 1
        %vm1958 = vcmp.eq.s32.totalorder %v1926, 1
        %vm1959 = vcmp.eq.s32.totalorder %v1927, 1
        %vm1960 = vcmp.eq.s32.totalorder %v1928, 1
        %vm1961 = vcmp.eq.s32.totalorder %v1929, 1
        %vm1962 = vcmp.eq.s32.totalorder %v1930, 1
        %vm1963 = vcmp.eq.s32.totalorder %v1931, 1
        %vm1964 = vcmp.eq.s32.totalorder %v1932, 1
        %vm1965 = vcmp.eq.s32.totalorder %v1933, 1
        %vm1966 = vcmp.eq.s32.totalorder %v1934, 1
        %vm1967 = vcmp.eq.s32.totalorder %v1935, 1
        %vm1968 = vcmp.eq.s32.totalorder %v1936, 1
        %vm1969 = vcmp.eq.s32.totalorder %v1937, 1
        %vm1970 = vcmp.eq.s32.totalorder %v1938, 1
        %vm1971 = vcmp.eq.s32.totalorder %v1939, 1
        %vm1972 = vcmp.eq.s32.totalorder %v1940, 1
        %vm1973 = vcmp.eq.s32.totalorder %v1941, 1
        %vm1974 = vcmp.eq.s32.totalorder %v1942, 1
        %vm1975 = vcmp.eq.s32.totalorder %v1943, 1
        %vm1976 = vcmp.eq.s32.totalorder %v1944, 1
        %vm1977 = vcmp.eq.s32.totalorder %v1945, 1
        %vm1978 = vcmp.eq.s32.totalorder %v1946, 1
        %vm1979 = vcmp.eq.s32.totalorder %v1947, 1
        %vm1980 = vcmp.eq.s32.totalorder %v1948, 1
        %vm1981 = vcmp.eq.s32.totalorder %v1949, 1
        %vm1982 = vcmp.eq.s32.totalorder %v1950, 1
        %vm1983 = vmpackc.low %vm1951, %vm1951
        %vm1984 = vmpackc.low %vm1952, %vm1952
        %vm1985 = vmpackc.low %vm1953, %vm1953
        %vm1986 = vmpackc.low %vm1954, %vm1954
        %vm1987 = vmpackc.low %vm1955, %vm1955
        %vm1988 = vmpackc.low %vm1956, %vm1956
        %vm1989 = vmpackc.low %vm1957, %vm1957
        %vm1990 = vmpackc.low %vm1958, %vm1958
        %vm1991 = vmpackc.low %vm1959, %vm1959
        %vm1992 = vmpackc.low %vm1960, %vm1960
        %vm1993 = vmpackc.low %vm1961, %vm1961
        %vm1994 = vmpackc.low %vm1962, %vm1962
        %vm1995 = vmpackc.low %vm1963, %vm1963
        %vm1996 = vmpackc.low %vm1964, %vm1964
        %vm1997 = vmpackc.low %vm1965, %vm1965
        %vm1998 = vmpackc.low %vm1966, %vm1966
        %vm1999 = vmpackc.low %vm1967, %vm1967
        %vm2000 = vmpackc.low %vm1968, %vm1968
        %vm2001 = vmpackc.low %vm1969, %vm1969
        %vm2002 = vmpackc.low %vm1970, %vm1970
        %vm2003 = vmpackc.low %vm1971, %vm1971
        %vm2004 = vmpackc.low %vm1972, %vm1972
        %vm2005 = vmpackc.low %vm1973, %vm1973
        %vm2006 = vmpackc.low %vm1974, %vm1974
        %vm2007 = vmpackc.low %vm1975, %vm1975
        %vm2008 = vmpackc.low %vm1976, %vm1976
        %vm2009 = vmpackc.low %vm1977, %vm1977
        %vm2010 = vmpackc.low %vm1978, %vm1978
        %vm2011 = vmpackc.low %vm1979, %vm1979
        %vm2012 = vmpackc.low %vm1980, %vm1980
        %vm2013 = vmpackc.low %vm1981, %vm1981
        %vm2014 = vmpackc.low %vm1982, %vm1982
        %v2015 = vsel %vm1983, 65537, 0
        %v2016 = vsel %vm1984, 65537, 0
        %v2017 = vsel %vm1985, 65537, 0
        %v2018 = vsel %vm1986, 65537, 0
        %v2019 = vsel %vm1987, 65537, 0
        %v2020 = vsel %vm1988, 65537, 0
        %v2021 = vsel %vm1989, 65537, 0
        %v2022 = vsel %vm1990, 65537, 0
        %v2023 = vsel %vm1991, 65537, 0
        %v2024 = vsel %vm1992, 65537, 0
        %v2025 = vsel %vm1993, 65537, 0
        %v2026 = vsel %vm1994, 65537, 0
        %v2027 = vsel %vm1995, 65537, 0
        %v2028 = vsel %vm1996, 65537, 0
        %v2029 = vsel %vm1997, 65537, 0
        %v2030 = vsel %vm1998, 65537, 0
        %v2031 = vsel %vm1999, 65537, 0
        %v2032 = vsel %vm2000, 65537, 0
        %v2033 = vsel %vm2001, 65537, 0
        %v2034 = vsel %vm2002, 65537, 0
        %v2035 = vsel %vm2003, 65537, 0
        %v2036 = vsel %vm2004, 65537, 0
        %v2037 = vsel %vm2005, 65537, 0
        %v2038 = vsel %vm2006, 65537, 0
        %v2039 = vsel %vm2007, 65537, 0
        %v2040 = vsel %vm2008, 65537, 0
        %v2041 = vsel %vm2009, 65537, 0
        %v2042 = vsel %vm2010, 65537, 0
        %v2043 = vsel %vm2011, 65537, 0
        %v2044 = vsel %vm2012, 65537, 0
        %v2045 = vsel %vm2013, 65537, 0
        %v2046 = vsel %vm2014, 65537, 0
        %v2048 = vshrl.u32 %v2015, 16
        %v2050 = vrot.slane %v2048, 7
        %v2051 = vshll.u32 %v2015, 16
        %v2053 = vor.u32 %v2050, %v2051
        %v2054 = vrot.slane %v2050, 4
        %v2056 = vshrl.u32 %v2016, 16
        %v2058 = vrot.slane %v2056, 7
        %v2059 = vshll.u32 %v2016, 16
        %v2061 = vor.u32 %v2058, %v2059
        %v2062 = vsel %vm1336, %v2054, %v2061
        %v2063 = vrot.slane %v2058, 4
        %v2065 = vshrl.u32 %v2017, 16
        %v2067 = vrot.slane %v2065, 7
        %v2068 = vshll.u32 %v2017, 16
        %v2070 = vor.u32 %v2067, %v2068
        %v2071 = vsel %vm1336, %v2063, %v2070
        %v2072 = vrot.slane %v2067, 4
        %v2074 = vshrl.u32 %v2018, 16
        %v2076 = vrot.slane %v2074, 7
        %v2077 = vshll.u32 %v2018, 16
        %v2079 = vor.u32 %v2076, %v2077
        %v2080 = vsel %vm1336, %v2072, %v2079
        %v2081 = vrot.slane %v2076, 4
        %v2083 = vshrl.u32 %v2019, 16
        %v2085 = vrot.slane %v2083, 7
        %v2086 = vshll.u32 %v2019, 16
        %v2088 = vor.u32 %v2085, %v2086
        %v2089 = vsel %vm1336, %v2081, %v2088
        %v2090 = vrot.slane %v2085, 4
        %v2092 = vshrl.u32 %v2020, 16
        %v2094 = vrot.slane %v2092, 7
        %v2095 = vshll.u32 %v2020, 16
        %v2097 = vor.u32 %v2094, %v2095
        %v2098 = vsel %vm1336, %v2090, %v2097
        %v2099 = vrot.slane %v2094, 4
        %v2101 = vshrl.u32 %v2021, 16
        %v2103 = vrot.slane %v2101, 7
        %v2104 = vshll.u32 %v2021, 16
        %v2106 = vor.u32 %v2103, %v2104
        %v2107 = vsel %vm1336, %v2099, %v2106
        %v2108 = vrot.slane %v2103, 4
        %v2110 = vshrl.u32 %v2022, 16
        %v2112 = vrot.slane %v2110, 7
        %v2113 = vshll.u32 %v2022, 16
        %v2115 = vor.u32 %v2112, %v2113
        %v2116 = vsel %vm1336, %v2108, %v2115
        %v2117 = vrot.slane %v2112, 4
        %v2119 = vshrl.u32 %v2023, 16
        %v2121 = vrot.slane %v2119, 7
        %v2122 = vshll.u32 %v2023, 16
        %v2124 = vor.u32 %v2121, %v2122
        %v2125 = vsel %vm1336, %v2117, %v2124
        %v2126 = vrot.slane %v2121, 4
        %v2128 = vshrl.u32 %v2024, 16
        %v2130 = vrot.slane %v2128, 7
        %v2131 = vshll.u32 %v2024, 16
        %v2133 = vor.u32 %v2130, %v2131
        %v2134 = vsel %vm1336, %v2126, %v2133
        %v2135 = vrot.slane %v2130, 4
        %v2137 = vshrl.u32 %v2025, 16
        %v2139 = vrot.slane %v2137, 7
        %v2140 = vshll.u32 %v2025, 16
        %v2142 = vor.u32 %v2139, %v2140
        %v2143 = vsel %vm1336, %v2135, %v2142
        %v2144 = vrot.slane %v2139, 4
        %v2146 = vshrl.u32 %v2026, 16
        %v2148 = vrot.slane %v2146, 7
        %v2149 = vshll.u32 %v2026, 16
        %v2151 = vor.u32 %v2148, %v2149
        %v2152 = vsel %vm1336, %v2144, %v2151
        %v2153 = vrot.slane %v2148, 4
        %v2155 = vshrl.u32 %v2027, 16
        %v2157 = vrot.slane %v2155, 7
        %v2158 = vshll.u32 %v2027, 16
        %v2160 = vor.u32 %v2157, %v2158
        %v2161 = vsel %vm1336, %v2153, %v2160
        %v2162 = vrot.slane %v2157, 4
        %v2164 = vshrl.u32 %v2028, 16
        %v2166 = vrot.slane %v2164, 7
        %v2167 = vshll.u32 %v2028, 16
        %v2169 = vor.u32 %v2166, %v2167
        %v2170 = vsel %vm1336, %v2162, %v2169
        %v2171 = vrot.slane %v2166, 4
        %v2173 = vshrl.u32 %v2029, 16
        %v2175 = vrot.slane %v2173, 7
        %v2176 = vshll.u32 %v2029, 16
        %v2178 = vor.u32 %v2175, %v2176
        %v2179 = vsel %vm1336, %v2171, %v2178
        %v2180 = vrot.slane %v2175, 4
        %v2182 = vshrl.u32 %v2030, 16
        %v2184 = vrot.slane %v2182, 7
        %v2185 = vshll.u32 %v2030, 16
        %v2187 = vor.u32 %v2184, %v2185
        %v2188 = vsel %vm1336, %v2180, %v2187
        %v2189 = vrot.slane %v2184, 4
        %v2191 = vshrl.u32 %v2031, 16
        %v2193 = vrot.slane %v2191, 7
        %v2194 = vshll.u32 %v2031, 16
        %v2196 = vor.u32 %v2193, %v2194
        %v2197 = vsel %vm1336, %v2189, %v2196
        %v2198 = vrot.slane %v2193, 4
        %v2200 = vshrl.u32 %v2032, 16
        %v2202 = vrot.slane %v2200, 7
        %v2203 = vshll.u32 %v2032, 16
        %v2205 = vor.u32 %v2202, %v2203
        %v2206 = vsel %vm1336, %v2198, %v2205
        %v2207 = vrot.slane %v2202, 4
        %v2209 = vshrl.u32 %v2033, 16
        %v2211 = vrot.slane %v2209, 7
        %v2212 = vshll.u32 %v2033, 16
        %v2214 = vor.u32 %v2211, %v2212
        %v2215 = vsel %vm1336, %v2207, %v2214
        %v2216 = vrot.slane %v2211, 4
        %v2218 = vshrl.u32 %v2034, 16
        %v2220 = vrot.slane %v2218, 7
        %v2221 = vshll.u32 %v2034, 16
        %v2223 = vor.u32 %v2220, %v2221
        %v2224 = vsel %vm1336, %v2216, %v2223
        %v2225 = vrot.slane %v2220, 4
        %v2227 = vshrl.u32 %v2035, 16
        %v2229 = vrot.slane %v2227, 7
        %v2230 = vshll.u32 %v2035, 16
        %v2232 = vor.u32 %v2229, %v2230
        %v2233 = vsel %vm1336, %v2225, %v2232
        %v2234 = vrot.slane %v2229, 4
        %v2236 = vshrl.u32 %v2036, 16
        %v2238 = vrot.slane %v2236, 7
        %v2239 = vshll.u32 %v2036, 16
        %v2241 = vor.u32 %v2238, %v2239
        %v2242 = vsel %vm1336, %v2234, %v2241
        %v2243 = vrot.slane %v2238, 4
        %v2245 = vshrl.u32 %v2037, 16
        %v2247 = vrot.slane %v2245, 7
        %v2248 = vshll.u32 %v2037, 16
        %v2250 = vor.u32 %v2247, %v2248
        %v2251 = vsel %vm1336, %v2243, %v2250
        %v2252 = vrot.slane %v2247, 4
        %v2254 = vshrl.u32 %v2038, 16
        %v2256 = vrot.slane %v2254, 7
        %v2257 = vshll.u32 %v2038, 16
        %v2259 = vor.u32 %v2256, %v2257
        %v2260 = vsel %vm1336, %v2252, %v2259
        %v2261 = vrot.slane %v2256, 4
        %v2263 = vshrl.u32 %v2039, 16
        %v2265 = vrot.slane %v2263, 7
        %v2266 = vshll.u32 %v2039, 16
        %v2268 = vor.u32 %v2265, %v2266
        %v2269 = vsel %vm1336, %v2261, %v2268
        %v2270 = vrot.slane %v2265, 4
        %v2272 = vshrl.u32 %v2040, 16
        %v2274 = vrot.slane %v2272, 7
        %v2275 = vshll.u32 %v2040, 16
        %v2277 = vor.u32 %v2274, %v2275
        %v2278 = vsel %vm1336, %v2270, %v2277
        %v2279 = vrot.slane %v2274, 4
        %v2281 = vshrl.u32 %v2041, 16
        %v2283 = vrot.slane %v2281, 7
        %v2284 = vshll.u32 %v2041, 16
        %v2286 = vor.u32 %v2283, %v2284
        %v2287 = vsel %vm1336, %v2279, %v2286
        %v2288 = vrot.slane %v2283, 4
        %v2290 = vshrl.u32 %v2042, 16
        %v2292 = vrot.slane %v2290, 7
        %v2293 = vshll.u32 %v2042, 16
        %v2295 = vor.u32 %v2292, %v2293
        %v2296 = vsel %vm1336, %v2288, %v2295
        %v2297 = vrot.slane %v2292, 4
        %v2299 = vshrl.u32 %v2043, 16
        %v2301 = vrot.slane %v2299, 7
        %v2302 = vshll.u32 %v2043, 16
        %v2304 = vor.u32 %v2301, %v2302
        %v2305 = vsel %vm1336, %v2297, %v2304
        %v2306 = vrot.slane %v2301, 4
        %v2308 = vshrl.u32 %v2044, 16
        %v2310 = vrot.slane %v2308, 7
        %v2311 = vshll.u32 %v2044, 16
        %v2313 = vor.u32 %v2310, %v2311
        %v2314 = vsel %vm1336, %v2306, %v2313
        %v2315 = vrot.slane %v2310, 4
        %v2317 = vshrl.u32 %v2045, 16
        %v2319 = vrot.slane %v2317, 7
        %v2320 = vshll.u32 %v2045, 16
        %v2322 = vor.u32 %v2319, %v2320
        %v2323 = vsel %vm1336, %v2315, %v2322
        %v2324 = vrot.slane %v2319, 4
        %v2326 = vshrl.u32 %v2046, 16
        %v2328 = vrot.slane %v2326, 7
        %v2329 = vshll.u32 %v2046, 16
        %v2331 = vor.u32 %v2328, %v2329
        %v2332 = vsel %vm1336, %v2324, %v2331
        %v2333 = vrot.slane %v2328, 4
        %vm2334 = vcmp.ne.s16.totalorder %v2053, 0
        %vm2335 = vcmp.ne.s16.totalorder %v2062, 0
        %vm2336 = vcmp.ne.s16.totalorder %v2071, 0
        %vm2337 = vcmp.ne.s16.totalorder %v2080, 0
        %vm2338 = vcmp.ne.s16.totalorder %v2089, 0
        %vm2339 = vcmp.ne.s16.totalorder %v2098, 0
        %vm2340 = vcmp.ne.s16.totalorder %v2107, 0
        %vm2341 = vcmp.ne.s16.totalorder %v2116, 0
        %vm2342 = vcmp.ne.s16.totalorder %v2125, 0
        %vm2343 = vcmp.ne.s16.totalorder %v2134, 0
        %vm2344 = vcmp.ne.s16.totalorder %v2143, 0
        %vm2345 = vcmp.ne.s16.totalorder %v2152, 0
        %vm2346 = vcmp.ne.s16.totalorder %v2161, 0
        %vm2347 = vcmp.ne.s16.totalorder %v2170, 0
        %vm2348 = vcmp.ne.s16.totalorder %v2179, 0
        %vm2349 = vcmp.ne.s16.totalorder %v2188, 0
        %vm2350 = vcmp.ne.s16.totalorder %v2197, 0
        %vm2351 = vcmp.ne.s16.totalorder %v2206, 0
        %vm2352 = vcmp.ne.s16.totalorder %v2215, 0
        %vm2353 = vcmp.ne.s16.totalorder %v2224, 0
        %vm2354 = vcmp.ne.s16.totalorder %v2233, 0
        %vm2355 = vcmp.ne.s16.totalorder %v2242, 0
        %vm2356 = vcmp.ne.s16.totalorder %v2251, 0
        %vm2357 = vcmp.ne.s16.totalorder %v2260, 0
        %vm2358 = vcmp.ne.s16.totalorder %v2269, 0
        %vm2359 = vcmp.ne.s16.totalorder %v2278, 0
        %vm2360 = vcmp.ne.s16.totalorder %v2287, 0
        %vm2361 = vcmp.ne.s16.totalorder %v2296, 0
        %vm2362 = vcmp.ne.s16.totalorder %v2305, 0
        %vm2363 = vcmp.ne.s16.totalorder %v2314, 0
        %vm2364 = vcmp.ne.s16.totalorder %v2323, 0
        %vm2365 = vcmp.ne.s16.totalorder %v2332, 0
        %vm2366 = vcmp.ne.s16.totalorder %v2333, 0
        %v2367 = vsel %vm2334, %v1886, 0
        %v2368 = vsel %vm2335, %v1887, 0
        %v2369 = vsel %vm2336, %v1888, 0
        %v2370 = vsel %vm2337, %v1889, 0
        %v2371 = vsel %vm2338, %v1890, 0
        %v2372 = vsel %vm2339, %v1891, 0
        %v2373 = vsel %vm2340, %v1892, 0
        %v2374 = vsel %vm2341, %v1893, 0
        %v2375 = vsel %vm2342, %v1894, 0
        %v2376 = vsel %vm2343, %v1895, 0
        %v2377 = vsel %vm2344, %v1896, 0
        %v2378 = vsel %vm2345, %v1897, 0
        %v2379 = vsel %vm2346, %v1898, 0
        %v2380 = vsel %vm2347, %v1899, 0
        %v2381 = vsel %vm2348, %v1900, 0
        %v2382 = vsel %vm2349, %v1901, 0
        %v2383 = vsel %vm2350, %v1902, 0
        %v2384 = vsel %vm2351, %v1903, 0
        %v2385 = vsel %vm2352, %v1904, 0
        %v2386 = vsel %vm2353, %v1905, 0
        %v2387 = vsel %vm2354, %v1906, 0
        %v2388 = vsel %vm2355, %v1907, 0
        %v2389 = vsel %vm2356, %v1908, 0
        %v2390 = vsel %vm2357, %v1909, 0
        %v2391 = vsel %vm2358, %v1910, 0
        %v2392 = vsel %vm2359, %v1911, 0
        %v2393 = vsel %vm2360, %v1912, 0
        %v2394 = vsel %vm2361, %v1913, 0
        %v2395 = vsel %vm2362, %v1914, 0
        %v2396 = vsel %vm2363, %v1915, 0
        %v2397 = vsel %vm2364, %v1916, 0
        %v2398 = vsel %vm2365, %v1917, 0
        %v2399 = vsel %vm2366, %v1918, 0
        %v2401 = vshrl.u32 %v2367, 16
        %v2403 = vrot.slane %v2401, 4
        %v2404 = vshll.u32 %v2367, 16
        %v2406 = vrot.slane %v2404, 5
        %v2407 = vor.u32 %v2403, %v2406
        %v2408 = vrot.slane %v2407, 4
        %v2410 = vshll.u32 %v2368, 16
        %v2412 = vrot.slane %v2410, 5
        %v2413 = vsel %vm948, %v2408, %v2412
        %v2414 = vshrl.u32 %v2368, 16
        %v2416 = vrot.slane %v2414, 4
        %v2417 = vor.u32 %v2416, %v2412
        %v2418 = vrot.slane %v2417, 4
        %v2420 = vshll.u32 %v2369, 16
        %v2422 = vrot.slane %v2420, 5
        %v2423 = vsel %vm948, %v2418, %v2422
        %v2424 = vshrl.u32 %v2369, 16
        %v2426 = vrot.slane %v2424, 4
        %v2427 = vor.u32 %v2426, %v2422
        %v2428 = vrot.slane %v2427, 4
        %v2430 = vshll.u32 %v2370, 16
        %v2432 = vrot.slane %v2430, 5
        %v2433 = vsel %vm948, %v2428, %v2432
        %v2434 = vshrl.u32 %v2370, 16
        %v2436 = vrot.slane %v2434, 4
        %v2437 = vor.u32 %v2436, %v2432
        %v2438 = vrot.slane %v2437, 4
        %v2440 = vshll.u32 %v2371, 16
        %v2442 = vrot.slane %v2440, 5
        %v2443 = vsel %vm948, %v2438, %v2442
        %v2444 = vshrl.u32 %v2371, 16
        %v2446 = vrot.slane %v2444, 4
        %v2447 = vor.u32 %v2446, %v2442
        %v2448 = vrot.slane %v2447, 4
        %v2450 = vshll.u32 %v2372, 16
        %v2452 = vrot.slane %v2450, 5
        %v2453 = vsel %vm948, %v2448, %v2452
        %v2454 = vshrl.u32 %v2372, 16
        %v2456 = vrot.slane %v2454, 4
        %v2457 = vor.u32 %v2456, %v2452
        %v2458 = vrot.slane %v2457, 4
        %v2460 = vshll.u32 %v2373, 16
        %v2462 = vrot.slane %v2460, 5
        %v2463 = vsel %vm948, %v2458, %v2462
        %v2464 = vshrl.u32 %v2373, 16
        %v2466 = vrot.slane %v2464, 4
        %v2467 = vor.u32 %v2466, %v2462
        %v2468 = vrot.slane %v2467, 4
        %v2470 = vshll.u32 %v2374, 16
        %v2472 = vrot.slane %v2470, 5
        %v2473 = vsel %vm948, %v2468, %v2472
        %v2474 = vshrl.u32 %v2374, 16
        %v2476 = vrot.slane %v2474, 4
        %v2477 = vor.u32 %v2476, %v2472
        %v2478 = vrot.slane %v2477, 4
        %v2480 = vshll.u32 %v2375, 16
        %v2482 = vrot.slane %v2480, 5
        %v2483 = vsel %vm948, %v2478, %v2482
        %v2484 = vshrl.u32 %v2375, 16
        %v2486 = vrot.slane %v2484, 4
        %v2487 = vor.u32 %v2486, %v2482
        %v2488 = vrot.slane %v2487, 4
        %v2490 = vshll.u32 %v2376, 16
        %v2492 = vrot.slane %v2490, 5
        %v2493 = vsel %vm948, %v2488, %v2492
        %v2494 = vshrl.u32 %v2376, 16
        %v2496 = vrot.slane %v2494, 4
        %v2497 = vor.u32 %v2496, %v2492
        %v2498 = vrot.slane %v2497, 4
        %v2500 = vshll.u32 %v2377, 16
        %v2502 = vrot.slane %v2500, 5
        %v2503 = vsel %vm948, %v2498, %v2502
        %v2504 = vshrl.u32 %v2377, 16
        %v2506 = vrot.slane %v2504, 4
        %v2507 = vor.u32 %v2506, %v2502
        %v2508 = vrot.slane %v2507, 4
        %v2510 = vshll.u32 %v2378, 16
        %v2512 = vrot.slane %v2510, 5
        %v2513 = vsel %vm948, %v2508, %v2512
        %v2514 = vshrl.u32 %v2378, 16
        %v2516 = vrot.slane %v2514, 4
        %v2517 = vor.u32 %v2516, %v2512
        %v2518 = vrot.slane %v2517, 4
        %v2520 = vshll.u32 %v2379, 16
        %v2522 = vrot.slane %v2520, 5
        %v2523 = vsel %vm948, %v2518, %v2522
        %v2524 = vshrl.u32 %v2379, 16
        %v2526 = vrot.slane %v2524, 4
        %v2527 = vor.u32 %v2526, %v2522
        %v2528 = vrot.slane %v2527, 4
        %v2530 = vshll.u32 %v2380, 16
        %v2532 = vrot.slane %v2530, 5
        %v2533 = vsel %vm948, %v2528, %v2532
        %v2534 = vshrl.u32 %v2380, 16
        %v2536 = vrot.slane %v2534, 4
        %v2537 = vor.u32 %v2536, %v2532
        %v2538 = vrot.slane %v2537, 4
        %v2540 = vshll.u32 %v2381, 16
        %v2542 = vrot.slane %v2540, 5
        %v2543 = vsel %vm948, %v2538, %v2542
        %v2544 = vshrl.u32 %v2381, 16
        %v2546 = vrot.slane %v2544, 4
        %v2547 = vor.u32 %v2546, %v2542
        %v2548 = vrot.slane %v2547, 4
        %v2550 = vshll.u32 %v2382, 16
        %v2552 = vrot.slane %v2550, 5
        %v2553 = vsel %vm948, %v2548, %v2552
        %v2554 = vshrl.u32 %v2382, 16
        %v2556 = vrot.slane %v2554, 4
        %v2557 = vor.u32 %v2556, %v2552
        %v2558 = vrot.slane %v2557, 4
        %v2560 = vshll.u32 %v2383, 16
        %v2562 = vrot.slane %v2560, 5
        %v2563 = vsel %vm948, %v2558, %v2562
        %v2564 = vshrl.u32 %v2383, 16
        %v2566 = vrot.slane %v2564, 4
        %v2567 = vor.u32 %v2566, %v2562
        %v2568 = vrot.slane %v2567, 4
        %v2570 = vshll.u32 %v2384, 16
        %v2572 = vrot.slane %v2570, 5
        %v2573 = vsel %vm948, %v2568, %v2572
        %v2574 = vshrl.u32 %v2384, 16
        %v2576 = vrot.slane %v2574, 4
        %v2577 = vor.u32 %v2576, %v2572
        %v2578 = vrot.slane %v2577, 4
        %v2580 = vshll.u32 %v2385, 16
        %v2582 = vrot.slane %v2580, 5
        %v2583 = vsel %vm948, %v2578, %v2582
        %v2584 = vshrl.u32 %v2385, 16
        %v2586 = vrot.slane %v2584, 4
        %v2587 = vor.u32 %v2586, %v2582
        %v2588 = vrot.slane %v2587, 4
        %v2590 = vshll.u32 %v2386, 16
        %v2592 = vrot.slane %v2590, 5
        %v2593 = vsel %vm948, %v2588, %v2592
        %v2594 = vshrl.u32 %v2386, 16
        %v2596 = vrot.slane %v2594, 4
        %v2597 = vor.u32 %v2596, %v2592
        %v2598 = vrot.slane %v2597, 4
        %v2600 = vshll.u32 %v2387, 16
        %v2602 = vrot.slane %v2600, 5
        %v2603 = vsel %vm948, %v2598, %v2602
        %v2604 = vshrl.u32 %v2387, 16
        %v2606 = vrot.slane %v2604, 4
        %v2607 = vor.u32 %v2606, %v2602
        %v2608 = vrot.slane %v2607, 4
        %v2610 = vshll.u32 %v2388, 16
        %v2612 = vrot.slane %v2610, 5
        %v2613 = vsel %vm948, %v2608, %v2612
        %v2614 = vshrl.u32 %v2388, 16
        %v2616 = vrot.slane %v2614, 4
        %v2617 = vor.u32 %v2616, %v2612
        %v2618 = vrot.slane %v2617, 4
        %v2620 = vshll.u32 %v2389, 16
        %v2622 = vrot.slane %v2620, 5
        %v2623 = vsel %vm948, %v2618, %v2622
        %v2624 = vshrl.u32 %v2389, 16
        %v2626 = vrot.slane %v2624, 4
        %v2627 = vor.u32 %v2626, %v2622
        %v2628 = vrot.slane %v2627, 4
        %v2630 = vshll.u32 %v2390, 16
        %v2632 = vrot.slane %v2630, 5
        %v2633 = vsel %vm948, %v2628, %v2632
        %v2634 = vshrl.u32 %v2390, 16
        %v2636 = vrot.slane %v2634, 4
        %v2637 = vor.u32 %v2636, %v2632
        %v2638 = vrot.slane %v2637, 4
        %v2640 = vshll.u32 %v2391, 16
        %v2642 = vrot.slane %v2640, 5
        %v2643 = vsel %vm948, %v2638, %v2642
        %v2644 = vshrl.u32 %v2391, 16
        %v2646 = vrot.slane %v2644, 4
        %v2647 = vor.u32 %v2646, %v2642
        %v2648 = vrot.slane %v2647, 4
        %v2650 = vshll.u32 %v2392, 16
        %v2652 = vrot.slane %v2650, 5
        %v2653 = vsel %vm948, %v2648, %v2652
        %v2654 = vshrl.u32 %v2392, 16
        %v2656 = vrot.slane %v2654, 4
        %v2657 = vor.u32 %v2656, %v2652
        %v2658 = vrot.slane %v2657, 4
        %v2660 = vshll.u32 %v2393, 16
        %v2662 = vrot.slane %v2660, 5
        %v2663 = vsel %vm948, %v2658, %v2662
        %v2664 = vshrl.u32 %v2393, 16
        %v2666 = vrot.slane %v2664, 4
        %v2667 = vor.u32 %v2666, %v2662
        %v2668 = vrot.slane %v2667, 4
        %v2670 = vshll.u32 %v2394, 16
        %v2672 = vrot.slane %v2670, 5
        %v2673 = vsel %vm948, %v2668, %v2672
        %v2674 = vshrl.u32 %v2394, 16
        %v2676 = vrot.slane %v2674, 4
        %v2677 = vor.u32 %v2676, %v2672
        %v2678 = vrot.slane %v2677, 4
        %v2680 = vshll.u32 %v2395, 16
        %v2682 = vrot.slane %v2680, 5
        %v2683 = vsel %vm948, %v2678, %v2682
        %v2684 = vshrl.u32 %v2395, 16
        %v2686 = vrot.slane %v2684, 4
        %v2687 = vor.u32 %v2686, %v2682
        %v2688 = vrot.slane %v2687, 4
        %v2690 = vshll.u32 %v2396, 16
        %v2692 = vrot.slane %v2690, 5
        %v2693 = vsel %vm948, %v2688, %v2692
        %v2694 = vshrl.u32 %v2396, 16
        %v2696 = vrot.slane %v2694, 4
        %v2697 = vor.u32 %v2696, %v2692
        %v2698 = vrot.slane %v2697, 4
        %v2700 = vshll.u32 %v2397, 16
        %v2702 = vrot.slane %v2700, 5
        %v2703 = vsel %vm948, %v2698, %v2702
        %v2704 = vshrl.u32 %v2397, 16
        %v2706 = vrot.slane %v2704, 4
        %v2707 = vor.u32 %v2706, %v2702
        %v2708 = vrot.slane %v2707, 4
        %v2710 = vshll.u32 %v2398, 16
        %v2712 = vrot.slane %v2710, 5
        %v2713 = vsel %vm948, %v2708, %v2712
        %v2714 = vshrl.u32 %v2398, 16
        %v2716 = vrot.slane %v2714, 4
        %v2717 = vor.u32 %v2716, %v2712
        %v2718 = vrot.slane %v2717, 4
        %v2720 = vshll.u32 %v2399, 16
        %v2722 = vrot.slane %v2720, 5
        %v2723 = vsel %vm948, %v2718, %v2722
        %2724 = vrot.lane.b32.xlu0 %v2413, 64
        %v2725 = vpop.permute.xlu0 %2724
        %2726 = vrot.lane.b32.xlu0 %v2423, 64
        %v2727 = vpop.permute.xlu0 %2726
        %2728 = vrot.lane.b32.xlu0 %v2433, 64
        %v2729 = vpop.permute.xlu0 %2728
        %2730 = vrot.lane.b32.xlu0 %v2443, 64
        %v2731 = vpop.permute.xlu0 %2730
        %2732 = vrot.lane.b32.xlu0 %v2453, 64
        %v2733 = vpop.permute.xlu0 %2732
        %2734 = vrot.lane.b32.xlu0 %v2463, 64
        %v2735 = vpop.permute.xlu0 %2734
        %2736 = vrot.lane.b32.xlu0 %v2473, 64
        %v2737 = vpop.permute.xlu0 %2736
        %2738 = vrot.lane.b32.xlu0 %v2483, 64
        %v2739 = vpop.permute.xlu0 %2738
        %2740 = vrot.lane.b32.xlu0 %v2493, 64
        %v2741 = vpop.permute.xlu0 %2740
        %2742 = vrot.lane.b32.xlu0 %v2503, 64
        %v2743 = vpop.permute.xlu0 %2742
        %2744 = vrot.lane.b32.xlu0 %v2513, 64
        %v2745 = vpop.permute.xlu0 %2744
        %2746 = vrot.lane.b32.xlu0 %v2523, 64
        %v2747 = vpop.permute.xlu0 %2746
        %2748 = vrot.lane.b32.xlu0 %v2533, 64
        %v2749 = vpop.permute.xlu0 %2748
        %2750 = vrot.lane.b32.xlu0 %v2543, 64
        %v2751 = vpop.permute.xlu0 %2750
        %2752 = vrot.lane.b32.xlu0 %v2553, 64
        %v2753 = vpop.permute.xlu0 %2752
        %2754 = vrot.lane.b32.xlu0 %v2563, 64
        %v2755 = vpop.permute.xlu0 %2754
        %2756 = vrot.lane.b32.xlu0 %v2573, 64
        %v2757 = vpop.permute.xlu0 %2756
        %2758 = vrot.lane.b32.xlu0 %v2583, 64
        %v2759 = vpop.permute.xlu0 %2758
        %2760 = vrot.lane.b32.xlu0 %v2593, 64
        %v2761 = vpop.permute.xlu0 %2760
        %2762 = vrot.lane.b32.xlu0 %v2603, 64
        %v2763 = vpop.permute.xlu0 %2762
        %2764 = vrot.lane.b32.xlu0 %v2613, 64
        %v2765 = vpop.permute.xlu0 %2764
        %2766 = vrot.lane.b32.xlu0 %v2623, 64
        %v2767 = vpop.permute.xlu0 %2766
        %2768 = vrot.lane.b32.xlu0 %v2633, 64
        %v2769 = vpop.permute.xlu0 %2768
        %2770 = vrot.lane.b32.xlu0 %v2643, 64
        %v2771 = vpop.permute.xlu0 %2770
        %2772 = vrot.lane.b32.xlu0 %v2653, 64
        %v2773 = vpop.permute.xlu0 %2772
        %2774 = vrot.lane.b32.xlu0 %v2663, 64
        %v2775 = vpop.permute.xlu0 %2774
        %2776 = vrot.lane.b32.xlu0 %v2673, 64
        %v2777 = vpop.permute.xlu0 %2776
        %2778 = vrot.lane.b32.xlu0 %v2683, 64
        %v2779 = vpop.permute.xlu0 %2778
        %2780 = vrot.lane.b32.xlu0 %v2693, 64
        %v2781 = vpop.permute.xlu0 %2780
        %2782 = vrot.lane.b32.xlu0 %v2703, 64
        %v2783 = vpop.permute.xlu0 %2782
        %2784 = vrot.lane.b32.xlu0 %v2713, 64
        %v2785 = vpop.permute.xlu0 %2784
        %2786 = vrot.lane.b32.xlu0 %v2723, 64
        %v2787 = vpop.permute.xlu0 %2786
        %vm2820 = vcmask 781824
        %2821 = vst.msk [vmem:[#allocation3] sm:$0xf] %vm2820, %v2725
        %2822 = vst.msk [vmem:[#allocation3 + $0xc] sm:$0xf] %vm2820, %v2727
        %2823 = vst.msk [vmem:[#allocation3 + $0x18] sm:$0xf] %vm2820, %v2729
        %2824 = vst.msk [vmem:[#allocation3 + $0x24] sm:$0xf] %vm2820, %v2731
        %2825 = vst.msk [vmem:[#allocation3 + $0x30] sm:$0xf] %vm2820, %v2733
        %2826 = vst.msk [vmem:[#allocation3 + $0x3c] sm:$0xf] %vm2820, %v2735
        %2827 = vst.msk [vmem:[#allocation3 + $0x48] sm:$0xf] %vm2820, %v2737
        %2828 = vst.msk [vmem:[#allocation3 + $0x54] sm:$0xf] %vm2820, %v2739
        %2829 = vst.msk [vmem:[#allocation3 + $0x60] sm:$0xf] %vm2820, %v2741
        %2830 = vst.msk [vmem:[#allocation3 + $0x6c] sm:$0xf] %vm2820, %v2743
        %2831 = vst.msk [vmem:[#allocation3 + $0x78] sm:$0xf] %vm2820, %v2745
        %2832 = vst.msk [vmem:[#allocation3 + $0x84] sm:$0xf] %vm2820, %v2747
        %2833 = vst.msk [vmem:[#allocation3 + $0x90] sm:$0xf] %vm2820, %v2749
        %2834 = vst.msk [vmem:[#allocation3 + $0x9c] sm:$0xf] %vm2820, %v2751
        %2835 = vst.msk [vmem:[#allocation3 + $0xa8] sm:$0xf] %vm2820, %v2753
        %2836 = vst.msk [vmem:[#allocation3 + $0xb4] sm:$0xf] %vm2820, %v2755
        %2837 = vst.msk [vmem:[#allocation3 + $0xc0] sm:$0xf] %vm2820, %v2757
        %2838 = vst.msk [vmem:[#allocation3 + $0xcc] sm:$0xf] %vm2820, %v2759
        %2839 = vst.msk [vmem:[#allocation3 + $0xd8] sm:$0xf] %vm2820, %v2761
        %2840 = vst.msk [vmem:[#allocation3 + $0xe4] sm:$0xf] %vm2820, %v2763
        %2841 = vst.msk [vmem:[#allocation3 + $0xf0] sm:$0xf] %vm2820, %v2765
        %2842 = vst.msk [vmem:[#allocation3 + $0xfc] sm:$0xf] %vm2820, %v2767
        %2843 = vst.msk [vmem:[#allocation3 + $0x108] sm:$0xf] %vm2820, %v2769
        %2844 = vst.msk [vmem:[#allocation3 + $0x114] sm:$0xf] %vm2820, %v2771
        %2845 = vst.msk [vmem:[#allocation3 + $0x120] sm:$0xf] %vm2820, %v2773
        %2846 = vst.msk [vmem:[#allocation3 + $0x12c] sm:$0xf] %vm2820, %v2775
        %2847 = vst.msk [vmem:[#allocation3 + $0x138] sm:$0xf] %vm2820, %v2777
        %2848 = vst.msk [vmem:[#allocation3 + $0x144] sm:$0xf] %vm2820, %v2779
        %2849 = vst.msk [vmem:[#allocation3 + $0x150] sm:$0xf] %vm2820, %v2781
        %2850 = vst.msk [vmem:[#allocation3 + $0x15c] sm:$0xf] %vm2820, %v2783
        %2851 = vst.msk [vmem:[#allocation3 + $0x168] sm:$0xf] %vm2820, %v2785
        %2852 = vst.msk [vmem:[#allocation3 + $0x174] sm:$0xf] %vm2820, %v2787
        %v2853 = vld [vmem:[#allocation2 + $0x8] sm:$0x8]
        %v2854 = vld [vmem:[#allocation2 + $0xc] sm:$0xf]
        %v2855 = vld [vmem:[#allocation2 + $0x10] sm:$0xf]
        %v2856 = vld [vmem:[#allocation2 + $0x14] sm:$0xf]
        %v2857 = vld [vmem:[#allocation2 + $0x18] sm:$0xf]
        %v2858 = vld [vmem:[#allocation2 + $0x1c] sm:$0xf]
        %v2859 = vld [vmem:[#allocation2 + $0x20] sm:$0xf]
        %v2860 = vld [vmem:[#allocation2 + $0x24] sm:$0xf]
        %v2861 = vld [vmem:[#allocation2 + $0x28] sm:$0xf]
        %v2862 = vld [vmem:[#allocation2 + $0x2c] sm:$0xf]
        %v2863 = vld [vmem:[#allocation2 + $0x30] sm:$0xf]
        %v2864 = vld [vmem:[#allocation2 + $0x34] sm:$0xf]
        %v2865 = vld [vmem:[#allocation2 + $0x38] sm:$0xf]
        %v2866 = vld [vmem:[#allocation2 + $0x3c] sm:$0xf]
        %v2867 = vld [vmem:[#allocation2 + $0x40] sm:$0xf]
        %v2868 = vld [vmem:[#allocation2 + $0x44] sm:$0xf]
        %v2869 = vld [vmem:[#allocation2 + $0x48] sm:$0xf]
        %v2870 = vld [vmem:[#allocation2 + $0x4c] sm:$0xf]
        %v2871 = vld [vmem:[#allocation2 + $0x50] sm:$0xf]
        %v2872 = vld [vmem:[#allocation2 + $0x54] sm:$0xf]
        %v2873 = vld [vmem:[#allocation2 + $0x58] sm:$0xf]
        %v2874 = vld [vmem:[#allocation2 + $0x5c] sm:$0xf]
        %v2875 = vld [vmem:[#allocation2 + $0x60] sm:$0xf]
        %v2876 = vld [vmem:[#allocation2 + $0x64] sm:$0xf]
        %v2877 = vld [vmem:[#allocation2 + $0x68] sm:$0xf]
        %v2878 = vld [vmem:[#allocation2 + $0x6c] sm:$0xf]
        %v2879 = vld [vmem:[#allocation2 + $0x70] sm:$0xf]
        %v2880 = vld [vmem:[#allocation2 + $0x74] sm:$0xf]
        %v2881 = vld [vmem:[#allocation2 + $0x78] sm:$0xf]
        %v2882 = vld [vmem:[#allocation2 + $0x7c] sm:$0xf]
        %v2883 = vld [vmem:[#allocation2 + $0x80] sm:$0xf]
        %v2884 = vld [vmem:[#allocation2 + $0x84] sm:$0xf]
        %v2885 = vld [vmem:[#allocation2 + $0x88] sm:$0xf]
        %v2886 = vsel %vm1268, %v2853, 0
        %v2887 = vsel %vm1269, %v2854, 0
        %v2888 = vsel %vm1270, %v2855, 0
        %v2889 = vsel %vm1271, %v2856, 0
        %v2890 = vsel %vm1272, %v2857, 0
        %v2891 = vsel %vm1273, %v2858, 0
        %v2892 = vsel %vm1274, %v2859, 0
        %v2893 = vsel %vm1275, %v2860, 0
        %v2894 = vsel %vm1276, %v2861, 0
        %v2895 = vsel %vm1277, %v2862, 0
        %v2896 = vsel %vm1278, %v2863, 0
        %v2897 = vsel %vm1279, %v2864, 0
        %v2898 = vsel %vm1280, %v2865, 0
        %v2899 = vsel %vm1281, %v2866, 0
        %v2900 = vsel %vm1282, %v2867, 0
        %v2901 = vsel %vm1283, %v2868, 0
        %v2902 = vsel %vm1284, %v2869, 0
        %v2903 = vsel %vm1285, %v2870, 0
        %v2904 = vsel %vm1286, %v2871, 0
        %v2905 = vsel %vm1287, %v2872, 0
        %v2906 = vsel %vm1288, %v2873, 0
        %v2907 = vsel %vm1289, %v2874, 0
        %v2908 = vsel %vm1290, %v2875, 0
        %v2909 = vsel %vm1291, %v2876, 0
        %v2910 = vsel %vm1292, %v2877, 0
        %v2911 = vsel %vm1293, %v2878, 0
        %v2912 = vsel %vm1294, %v2879, 0
        %v2913 = vsel %vm1295, %v2880, 0
        %v2914 = vsel %vm1296, %v2881, 0
        %v2915 = vsel %vm1297, %v2882, 0
        %v2916 = vsel %vm1298, %v2883, 0
        %v2917 = vsel %vm1299, %v2884, 0
        %v2918 = vsel %vm1300, %v2885, 0
        %v2920 = vshrl.u32 %v2886, 16
        %v2922 = vrot.slane %v2920, 7
        %v2923 = vrot.slane %v2922, 4
        %v2925 = vshrl.u32 %v2887, 16
        %v2927 = vrot.slane %v2925, 7
        %v2928 = vshll.u32 %v2887, 16
        %v2930 = vor.u32 %v2927, %v2928
        %v2931 = vsel %vm1336, %v2923, %v2930
        %v2932 = vrot.slane %v2927, 4
        %v2934 = vshrl.u32 %v2888, 16
        %v2936 = vrot.slane %v2934, 7
        %v2937 = vshll.u32 %v2888, 16
        %v2939 = vor.u32 %v2936, %v2937
        %v2940 = vsel %vm1336, %v2932, %v2939
        %v2941 = vrot.slane %v2936, 4
        %v2943 = vshrl.u32 %v2889, 16
        %v2945 = vrot.slane %v2943, 7
        %v2946 = vshll.u32 %v2889, 16
        %v2948 = vor.u32 %v2945, %v2946
        %v2949 = vsel %vm1336, %v2941, %v2948
        %v2950 = vrot.slane %v2945, 4
        %v2952 = vshrl.u32 %v2890, 16
        %v2954 = vrot.slane %v2952, 7
        %v2955 = vshll.u32 %v2890, 16
        %v2957 = vor.u32 %v2954, %v2955
        %v2958 = vsel %vm1336, %v2950, %v2957
        %v2959 = vrot.slane %v2954, 4
        %v2961 = vshrl.u32 %v2891, 16
        %v2963 = vrot.slane %v2961, 7
        %v2964 = vshll.u32 %v2891, 16
        %v2966 = vor.u32 %v2963, %v2964
        %v2967 = vsel %vm1336, %v2959, %v2966
        %v2968 = vrot.slane %v2963, 4
        %v2970 = vshrl.u32 %v2892, 16
        %v2972 = vrot.slane %v2970, 7
        %v2973 = vshll.u32 %v2892, 16
        %v2975 = vor.u32 %v2972, %v2973
        %v2976 = vsel %vm1336, %v2968, %v2975
        %v2977 = vrot.slane %v2972, 4
        %v2979 = vshrl.u32 %v2893, 16
        %v2981 = vrot.slane %v2979, 7
        %v2982 = vshll.u32 %v2893, 16
        %v2984 = vor.u32 %v2981, %v2982
        %v2985 = vsel %vm1336, %v2977, %v2984
        %v2986 = vrot.slane %v2981, 4
        %v2988 = vshrl.u32 %v2894, 16
        %v2990 = vrot.slane %v2988, 7
        %v2991 = vshll.u32 %v2894, 16
        %v2993 = vor.u32 %v2990, %v2991
        %v2994 = vsel %vm1336, %v2986, %v2993
        %v2995 = vrot.slane %v2990, 4
        %v2997 = vshrl.u32 %v2895, 16
        %v2999 = vrot.slane %v2997, 7
        %v3000 = vshll.u32 %v2895, 16
        %v3002 = vor.u32 %v2999, %v3000
        %v3003 = vsel %vm1336, %v2995, %v3002
        %v3004 = vrot.slane %v2999, 4
        %v3006 = vshrl.u32 %v2896, 16
        %v3008 = vrot.slane %v3006, 7
        %v3009 = vshll.u32 %v2896, 16
        %v3011 = vor.u32 %v3008, %v3009
        %v3012 = vsel %vm1336, %v3004, %v3011
        %v3013 = vrot.slane %v3008, 4
        %v3015 = vshrl.u32 %v2897, 16
        %v3017 = vrot.slane %v3015, 7
        %v3018 = vshll.u32 %v2897, 16
        %v3020 = vor.u32 %v3017, %v3018
        %v3021 = vsel %vm1336, %v3013, %v3020
        %v3022 = vrot.slane %v3017, 4
        %v3024 = vshrl.u32 %v2898, 16
        %v3026 = vrot.slane %v3024, 7
        %v3027 = vshll.u32 %v2898, 16
        %v3029 = vor.u32 %v3026, %v3027
        %v3030 = vsel %vm1336, %v3022, %v3029
        %v3031 = vrot.slane %v3026, 4
        %v3033 = vshrl.u32 %v2899, 16
        %v3035 = vrot.slane %v3033, 7
        %v3036 = vshll.u32 %v2899, 16
        %v3038 = vor.u32 %v3035, %v3036
        %v3039 = vsel %vm1336, %v3031, %v3038
        %v3040 = vrot.slane %v3035, 4
        %v3042 = vshrl.u32 %v2900, 16
        %v3044 = vrot.slane %v3042, 7
        %v3045 = vshll.u32 %v2900, 16
        %v3047 = vor.u32 %v3044, %v3045
        %v3048 = vsel %vm1336, %v3040, %v3047
        %v3049 = vrot.slane %v3044, 4
        %v3051 = vshrl.u32 %v2901, 16
        %v3053 = vrot.slane %v3051, 7
        %v3054 = vshll.u32 %v2901, 16
        %v3056 = vor.u32 %v3053, %v3054
        %v3057 = vsel %vm1336, %v3049, %v3056
        %v3058 = vrot.slane %v3053, 4
        %v3060 = vshrl.u32 %v2902, 16
        %v3062 = vrot.slane %v3060, 7
        %v3063 = vshll.u32 %v2902, 16
        %v3065 = vor.u32 %v3062, %v3063
        %v3066 = vsel %vm1336, %v3058, %v3065
        %v3067 = vrot.slane %v3062, 4
        %v3069 = vshrl.u32 %v2903, 16
        %v3071 = vrot.slane %v3069, 7
        %v3072 = vshll.u32 %v2903, 16
        %v3074 = vor.u32 %v3071, %v3072
        %v3075 = vsel %vm1336, %v3067, %v3074
        %v3076 = vrot.slane %v3071, 4
        %v3078 = vshrl.u32 %v2904, 16
        %v3080 = vrot.slane %v3078, 7
        %v3081 = vshll.u32 %v2904, 16
        %v3083 = vor.u32 %v3080, %v3081
        %v3084 = vsel %vm1336, %v3076, %v3083
        %v3085 = vrot.slane %v3080, 4
        %v3087 = vshrl.u32 %v2905, 16
        %v3089 = vrot.slane %v3087, 7
        %v3090 = vshll.u32 %v2905, 16
        %v3092 = vor.u32 %v3089, %v3090
        %v3093 = vsel %vm1336, %v3085, %v3092
        %v3094 = vrot.slane %v3089, 4
        %v3096 = vshrl.u32 %v2906, 16
        %v3098 = vrot.slane %v3096, 7
        %v3099 = vshll.u32 %v2906, 16
        %v3101 = vor.u32 %v3098, %v3099
        %v3102 = vsel %vm1336, %v3094, %v3101
        %v3103 = vrot.slane %v3098, 4
        %v3105 = vshrl.u32 %v2907, 16
        %v3107 = vrot.slane %v3105, 7
        %v3108 = vshll.u32 %v2907, 16
        %v3110 = vor.u32 %v3107, %v3108
        %v3111 = vsel %vm1336, %v3103, %v3110
        %v3112 = vrot.slane %v3107, 4
        %v3114 = vshrl.u32 %v2908, 16
        %v3116 = vrot.slane %v3114, 7
        %v3117 = vshll.u32 %v2908, 16
        %v3119 = vor.u32 %v3116, %v3117
        %v3120 = vsel %vm1336, %v3112, %v3119
        %v3121 = vrot.slane %v3116, 4
        %v3123 = vshrl.u32 %v2909, 16
        %v3125 = vrot.slane %v3123, 7
        %v3126 = vshll.u32 %v2909, 16
        %v3128 = vor.u32 %v3125, %v3126
        %v3129 = vsel %vm1336, %v3121, %v3128
        %v3130 = vrot.slane %v3125, 4
        %v3132 = vshrl.u32 %v2910, 16
        %v3134 = vrot.slane %v3132, 7
        %v3135 = vshll.u32 %v2910, 16
        %v3137 = vor.u32 %v3134, %v3135
        %v3138 = vsel %vm1336, %v3130, %v3137
        %v3139 = vrot.slane %v3134, 4
        %v3141 = vshrl.u32 %v2911, 16
        %v3143 = vrot.slane %v3141, 7
        %v3144 = vshll.u32 %v2911, 16
        %v3146 = vor.u32 %v3143, %v3144
        %v3147 = vsel %vm1336, %v3139, %v3146
        %v3148 = vrot.slane %v3143, 4
        %v3150 = vshrl.u32 %v2912, 16
        %v3152 = vrot.slane %v3150, 7
        %v3153 = vshll.u32 %v2912, 16
        %v3155 = vor.u32 %v3152, %v3153
        %v3156 = vsel %vm1336, %v3148, %v3155
        %v3157 = vrot.slane %v3152, 4
        %v3159 = vshrl.u32 %v2913, 16
        %v3161 = vrot.slane %v3159, 7
        %v3162 = vshll.u32 %v2913, 16
        %v3164 = vor.u32 %v3161, %v3162
        %v3165 = vsel %vm1336, %v3157, %v3164
        %v3166 = vrot.slane %v3161, 4
        %v3168 = vshrl.u32 %v2914, 16
        %v3170 = vrot.slane %v3168, 7
        %v3171 = vshll.u32 %v2914, 16
        %v3173 = vor.u32 %v3170, %v3171
        %v3174 = vsel %vm1336, %v3166, %v3173
        %v3175 = vrot.slane %v3170, 4
        %v3177 = vshrl.u32 %v2915, 16
        %v3179 = vrot.slane %v3177, 7
        %v3180 = vshll.u32 %v2915, 16
        %v3182 = vor.u32 %v3179, %v3180
        %v3183 = vsel %vm1336, %v3175, %v3182
        %v3184 = vrot.slane %v3179, 4
        %v3186 = vshrl.u32 %v2916, 16
        %v3188 = vrot.slane %v3186, 7
        %v3189 = vshll.u32 %v2916, 16
        %v3191 = vor.u32 %v3188, %v3189
        %v3192 = vsel %vm1336, %v3184, %v3191
        %v3193 = vrot.slane %v3188, 4
        %v3195 = vshrl.u32 %v2917, 16
        %v3197 = vrot.slane %v3195, 7
        %v3198 = vshll.u32 %v2917, 16
        %v3200 = vor.u32 %v3197, %v3198
        %v3201 = vsel %vm1336, %v3193, %v3200
        %v3202 = vrot.slane %v3197, 4
        %v3204 = vshrl.u32 %v2918, 16
        %v3206 = vrot.slane %v3204, 7
        %v3207 = vshll.u32 %v2918, 16
        %v3209 = vor.u32 %v3206, %v3207
        %v3210 = vsel %vm1336, %v3202, %v3209
        %3211 = vrot.lane.b32.xlu0 %v2931, 96
        %v3212 = vpop.permute.xlu0 %3211
        %3213 = vrot.lane.b32.xlu0 %v2940, 96
        %v3214 = vpop.permute.xlu0 %3213
        %3215 = vrot.lane.b32.xlu0 %v2949, 96
        %v3216 = vpop.permute.xlu0 %3215
        %3217 = vrot.lane.b32.xlu0 %v2958, 96
        %v3218 = vpop.permute.xlu0 %3217
        %3219 = vrot.lane.b32.xlu0 %v2967, 96
        %v3220 = vpop.permute.xlu0 %3219
        %3221 = vrot.lane.b32.xlu0 %v2976, 96
        %v3222 = vpop.permute.xlu0 %3221
        %3223 = vrot.lane.b32.xlu0 %v2985, 96
        %v3224 = vpop.permute.xlu0 %3223
        %3225 = vrot.lane.b32.xlu0 %v2994, 96
        %v3226 = vpop.permute.xlu0 %3225
        %3227 = vrot.lane.b32.xlu0 %v3003, 96
        %v3228 = vpop.permute.xlu0 %3227
        %3229 = vrot.lane.b32.xlu0 %v3012, 96
        %v3230 = vpop.permute.xlu0 %3229
        %3231 = vrot.lane.b32.xlu0 %v3021, 96
        %v3232 = vpop.permute.xlu0 %3231
        %3233 = vrot.lane.b32.xlu0 %v3030, 96
        %v3234 = vpop.permute.xlu0 %3233
        %3235 = vrot.lane.b32.xlu0 %v3039, 96
        %v3236 = vpop.permute.xlu0 %3235
        %3237 = vrot.lane.b32.xlu0 %v3048, 96
        %v3238 = vpop.permute.xlu0 %3237
        %3239 = vrot.lane.b32.xlu0 %v3057, 96
        %v3240 = vpop.permute.xlu0 %3239
        %3241 = vrot.lane.b32.xlu0 %v3066, 96
        %v3242 = vpop.permute.xlu0 %3241
        %3243 = vrot.lane.b32.xlu0 %v3075, 96
        %v3244 = vpop.permute.xlu0 %3243
        %3245 = vrot.lane.b32.xlu0 %v3084, 96
        %v3246 = vpop.permute.xlu0 %3245
        %3247 = vrot.lane.b32.xlu0 %v3093, 96
        %v3248 = vpop.permute.xlu0 %3247
        %3249 = vrot.lane.b32.xlu0 %v3102, 96
        %v3250 = vpop.permute.xlu0 %3249
        %3251 = vrot.lane.b32.xlu0 %v3111, 96
        %v3252 = vpop.permute.xlu0 %3251
        %3253 = vrot.lane.b32.xlu0 %v3120, 96
        %v3254 = vpop.permute.xlu0 %3253
        %3255 = vrot.lane.b32.xlu0 %v3129, 96
        %v3256 = vpop.permute.xlu0 %3255
        %3257 = vrot.lane.b32.xlu0 %v3138, 96
        %v3258 = vpop.permute.xlu0 %3257
        %3259 = vrot.lane.b32.xlu0 %v3147, 96
        %v3260 = vpop.permute.xlu0 %3259
        %3261 = vrot.lane.b32.xlu0 %v3156, 96
        %v3262 = vpop.permute.xlu0 %3261
        %3263 = vrot.lane.b32.xlu0 %v3165, 96
        %v3264 = vpop.permute.xlu0 %3263
        %3265 = vrot.lane.b32.xlu0 %v3174, 96
        %v3266 = vpop.permute.xlu0 %3265
        %3267 = vrot.lane.b32.xlu0 %v3183, 96
        %v3268 = vpop.permute.xlu0 %3267
        %3269 = vrot.lane.b32.xlu0 %v3192, 96
        %v3270 = vpop.permute.xlu0 %3269
        %3271 = vrot.lane.b32.xlu0 %v3201, 96
        %v3272 = vpop.permute.xlu0 %3271
        %3273 = vrot.lane.b32.xlu0 %v3210, 96
        %v3274 = vpop.permute.xlu0 %3273
        %vm3307 = vcmask 1044224
        %3308 = vst.msk [vmem:[#allocation3] sm:$0xf] %vm3307, %v3212
        %3309 = vst.msk [vmem:[#allocation3 + $0xc] sm:$0xf] %vm3307, %v3214
        %3310 = vst.msk [vmem:[#allocation3 + $0x18] sm:$0xf] %vm3307, %v3216
        %3311 = vst.msk [vmem:[#allocation3 + $0x24] sm:$0xf] %vm3307, %v3218
        %3312 = vst.msk [vmem:[#allocation3 + $0x30] sm:$0xf] %vm3307, %v3220
        %3313 = vst.msk [vmem:[#allocation3 + $0x3c] sm:$0xf] %vm3307, %v3222
        %3314 = vst.msk [vmem:[#allocation3 + $0x48] sm:$0xf] %vm3307, %v3224
        %3315 = vst.msk [vmem:[#allocation3 + $0x54] sm:$0xf] %vm3307, %v3226
        %3316 = vst.msk [vmem:[#allocation3 + $0x60] sm:$0xf] %vm3307, %v3228
        %3317 = vst.msk [vmem:[#allocation3 + $0x6c] sm:$0xf] %vm3307, %v3230
        %3318 = vst.msk [vmem:[#allocation3 + $0x78] sm:$0xf] %vm3307, %v3232
        %3319 = vst.msk [vmem:[#allocation3 + $0x84] sm:$0xf] %vm3307, %v3234
        %3320 = vst.msk [vmem:[#allocation3 + $0x90] sm:$0xf] %vm3307, %v3236
        %3321 = vst.msk [vmem:[#allocation3 + $0x9c] sm:$0xf] %vm3307, %v3238
        %3322 = vst.msk [vmem:[#allocation3 + $0xa8] sm:$0xf] %vm3307, %v3240
        %3323 = vst.msk [vmem:[#allocation3 + $0xb4] sm:$0xf] %vm3307, %v3242
        %3324 = vst.msk [vmem:[#allocation3 + $0xc0] sm:$0xf] %vm3307, %v3244
        %3325 = vst.msk [vmem:[#allocation3 + $0xcc] sm:$0xf] %vm3307, %v3246
        %3326 = vst.msk [vmem:[#allocation3 + $0xd8] sm:$0xf] %vm3307, %v3248
        %3327 = vst.msk [vmem:[#allocation3 + $0xe4] sm:$0xf] %vm3307, %v3250
        %3328 = vst.msk [vmem:[#allocation3 + $0xf0] sm:$0xf] %vm3307, %v3252
        %3329 = vst.msk [vmem:[#allocation3 + $0xfc] sm:$0xf] %vm3307, %v3254
        %3330 = vst.msk [vmem:[#allocation3 + $0x108] sm:$0xf] %vm3307, %v3256
        %3331 = vst.msk [vmem:[#allocation3 + $0x114] sm:$0xf] %vm3307, %v3258
        %3332 = vst.msk [vmem:[#allocation3 + $0x120] sm:$0xf] %vm3307, %v3260
        %3333 = vst.msk [vmem:[#allocation3 + $0x12c] sm:$0xf] %vm3307, %v3262
        %3334 = vst.msk [vmem:[#allocation3 + $0x138] sm:$0xf] %vm3307, %v3264
        %3335 = vst.msk [vmem:[#allocation3 + $0x144] sm:$0xf] %vm3307, %v3266
        %3336 = vst.msk [vmem:[#allocation3 + $0x150] sm:$0xf] %vm3307, %v3268
        %3337 = vst.msk [vmem:[#allocation3 + $0x15c] sm:$0xf] %vm3307, %v3270
        %3338 = vst.msk [vmem:[#allocation3 + $0x168] sm:$0xf] %vm3307, %v3272
        %3339 = vst.msk [vmem:[#allocation3 + $0x174] sm:$0xf] %vm3307, %v3274
        %v3340 = vld [vmem:[#allocation2 + $0xc] sm:$0xf]
        %v3341 = vld [vmem:[#allocation2 + $0x10] sm:$0xf]
        %v3342 = vld [vmem:[#allocation2 + $0x14] sm:$0xf]
        %v3343 = vld [vmem:[#allocation2 + $0x18] sm:$0xf]
        %v3344 = vld [vmem:[#allocation2 + $0x1c] sm:$0xf]
        %v3345 = vld [vmem:[#allocation2 + $0x20] sm:$0xf]
        %v3346 = vld [vmem:[#allocation2 + $0x24] sm:$0xf]
        %v3347 = vld [vmem:[#allocation2 + $0x28] sm:$0xf]
        %v3348 = vld [vmem:[#allocation2 + $0x2c] sm:$0xf]
        %v3349 = vld [vmem:[#allocation2 + $0x30] sm:$0xf]
        %v3350 = vld [vmem:[#allocation2 + $0x34] sm:$0xf]
        %v3351 = vld [vmem:[#allocation2 + $0x38] sm:$0xf]
        %v3352 = vld [vmem:[#allocation2 + $0x3c] sm:$0xf]
        %v3353 = vld [vmem:[#allocation2 + $0x40] sm:$0xf]
        %v3354 = vld [vmem:[#allocation2 + $0x44] sm:$0xf]
        %v3355 = vld [vmem:[#allocation2 + $0x48] sm:$0xf]
        %v3356 = vld [vmem:[#allocation2 + $0x4c] sm:$0xf]
        %v3357 = vld [vmem:[#allocation2 + $0x50] sm:$0xf]
        %v3358 = vld [vmem:[#allocation2 + $0x54] sm:$0xf]
        %v3359 = vld [vmem:[#allocation2 + $0x58] sm:$0xf]
        %v3360 = vld [vmem:[#allocation2 + $0x5c] sm:$0xf]
        %v3361 = vld [vmem:[#allocation2 + $0x60] sm:$0xf]
        %v3362 = vld [vmem:[#allocation2 + $0x64] sm:$0xf]
        %v3363 = vld [vmem:[#allocation2 + $0x68] sm:$0xf]
        %v3364 = vld [vmem:[#allocation2 + $0x6c] sm:$0xf]
        %v3365 = vld [vmem:[#allocation2 + $0x70] sm:$0xf]
        %v3366 = vld [vmem:[#allocation2 + $0x74] sm:$0xf]
        %v3367 = vld [vmem:[#allocation2 + $0x78] sm:$0xf]
        %v3368 = vld [vmem:[#allocation2 + $0x7c] sm:$0xf]
        %v3369 = vld [vmem:[#allocation2 + $0x80] sm:$0xf]
        %v3370 = vld [vmem:[#allocation2 + $0x84] sm:$0xf]
        %v3371 = vld [vmem:[#allocation2 + $0x88] sm:$0xf]
        %3372 = vst.msk [vmem:[#allocation3 + $0x4] sm:$0xf] %vm226, %v3340
        %3373 = vst.msk [vmem:[#allocation3 + $0x10] sm:$0xf] %vm226, %v3341
        %3374 = vst.msk [vmem:[#allocation3 + $0x1c] sm:$0xf] %vm226, %v3342
        %3375 = vst.msk [vmem:[#allocation3 + $0x28] sm:$0xf] %vm226, %v3343
        %3376 = vst.msk [vmem:[#allocation3 + $0x34] sm:$0xf] %vm226, %v3344
        %3377 = vst.msk [vmem:[#allocation3 + $0x40] sm:$0xf] %vm226, %v3345
        %3378 = vst.msk [vmem:[#allocation3 + $0x4c] sm:$0xf] %vm226, %v3346
        %3379 = vst.msk [vmem:[#allocation3 + $0x58] sm:$0xf] %vm226, %v3347
        %3380 = vst.msk [vmem:[#allocation3 + $0x64] sm:$0xf] %vm226, %v3348
        %3381 = vst.msk [vmem:[#allocation3 + $0x70] sm:$0xf] %vm226, %v3349
        %3382 = vst.msk [vmem:[#allocation3 + $0x7c] sm:$0xf] %vm226, %v3350
        %3383 = vst.msk [vmem:[#allocation3 + $0x88] sm:$0xf] %vm226, %v3351
        %3384 = vst.msk [vmem:[#allocation3 + $0x94] sm:$0xf] %vm226, %v3352
        %3385 = vst.msk [vmem:[#allocation3 + $0xa0] sm:$0xf] %vm226, %v3353
        %3386 = vst.msk [vmem:[#allocation3 + $0xac] sm:$0xf] %vm226, %v3354
        %3387 = vst.msk [vmem:[#allocation3 + $0xb8] sm:$0xf] %vm226, %v3355
        %3388 = vst.msk [vmem:[#allocation3 + $0xc4] sm:$0xf] %vm226, %v3356
        %3389 = vst.msk [vmem:[#allocation3 + $0xd0] sm:$0xf] %vm226, %v3357
        %3390 = vst.msk [vmem:[#allocation3 + $0xdc] sm:$0xf] %vm226, %v3358
        %3391 = vst.msk [vmem:[#allocation3 + $0xe8] sm:$0xf] %vm226, %v3359
        %3392 = vst.msk [vmem:[#allocation3 + $0xf4] sm:$0xf] %vm226, %v3360
        %3393 = vst.msk [vmem:[#allocation3 + $0x100] sm:$0xf] %vm226, %v3361
        %3394 = vst.msk [vmem:[#allocation3 + $0x10c] sm:$0xf] %vm226, %v3362
        %3395 = vst.msk [vmem:[#allocation3 + $0x118] sm:$0xf] %vm226, %v3363
        %3396 = vst.msk [vmem:[#allocation3 + $0x124] sm:$0xf] %vm226, %v3364
        %3397 = vst.msk [vmem:[#allocation3 + $0x130] sm:$0xf] %vm226, %v3365
        %3398 = vst.msk [vmem:[#allocation3 + $0x13c] sm:$0xf] %vm226, %v3366
        %3399 = vst.msk [vmem:[#allocation3 + $0x148] sm:$0xf] %vm226, %v3367
        %3400 = vst.msk [vmem:[#allocation3 + $0x154] sm:$0xf] %vm226, %v3368
        %3401 = vst.msk [vmem:[#allocation3 + $0x160] sm:$0xf] %vm226, %v3369
        %3402 = vst.msk [vmem:[#allocation3 + $0x16c] sm:$0xf] %vm226, %v3370
        %3403 = vst.msk [vmem:[#allocation3 + $0x178] sm:$0xf] %vm226, %v3371
        %v3404 = vld [vmem:[#allocation2 + $0xc] sm:$0xf]
        %v3405 = vld [vmem:[#allocation2 + $0x10] sm:$0xf]
        %v3406 = vld [vmem:[#allocation2 + $0x14] sm:$0xf]
        %v3407 = vld [vmem:[#allocation2 + $0x18] sm:$0xf]
        %v3408 = vld [vmem:[#allocation2 + $0x1c] sm:$0xf]
        %v3409 = vld [vmem:[#allocation2 + $0x20] sm:$0xf]
        %v3410 = vld [vmem:[#allocation2 + $0x24] sm:$0xf]
        %v3411 = vld [vmem:[#allocation2 + $0x28] sm:$0xf]
        %v3412 = vld [vmem:[#allocation2 + $0x2c] sm:$0xf]
        %v3413 = vld [vmem:[#allocation2 + $0x30] sm:$0xf]
        %v3414 = vld [vmem:[#allocation2 + $0x34] sm:$0xf]
        %v3415 = vld [vmem:[#allocation2 + $0x38] sm:$0xf]
        %v3416 = vld [vmem:[#allocation2 + $0x3c] sm:$0xf]
        %v3417 = vld [vmem:[#allocation2 + $0x40] sm:$0xf]
        %v3418 = vld [vmem:[#allocation2 + $0x44] sm:$0xf]
        %v3419 = vld [vmem:[#allocation2 + $0x48] sm:$0xf]
        %v3420 = vld [vmem:[#allocation2 + $0x4c] sm:$0xf]
        %v3421 = vld [vmem:[#allocation2 + $0x50] sm:$0xf]
        %v3422 = vld [vmem:[#allocation2 + $0x54] sm:$0xf]
        %v3423 = vld [vmem:[#allocation2 + $0x58] sm:$0xf]
        %v3424 = vld [vmem:[#allocation2 + $0x5c] sm:$0xf]
        %v3425 = vld [vmem:[#allocation2 + $0x60] sm:$0xf]
        %v3426 = vld [vmem:[#allocation2 + $0x64] sm:$0xf]
        %v3427 = vld [vmem:[#allocation2 + $0x68] sm:$0xf]
        %v3428 = vld [vmem:[#allocation2 + $0x6c] sm:$0xf]
        %v3429 = vld [vmem:[#allocation2 + $0x70] sm:$0xf]
        %v3430 = vld [vmem:[#allocation2 + $0x74] sm:$0xf]
        %v3431 = vld [vmem:[#allocation2 + $0x78] sm:$0xf]
        %v3432 = vld [vmem:[#allocation2 + $0x7c] sm:$0xf]
        %v3433 = vld [vmem:[#allocation2 + $0x80] sm:$0xf]
        %v3434 = vld [vmem:[#allocation2 + $0x84] sm:$0xf]
        %v3435 = vld [vmem:[#allocation2 + $0x88] sm:$0xf]
        %v3436 = vld [vmem:[#allocation2 + $0x8c] sm:$0x1]
        %v3437 = vsel %vm2334, %v3404, 0
        %v3438 = vsel %vm2335, %v3405, 0
        %v3439 = vsel %vm2336, %v3406, 0
        %v3440 = vsel %vm2337, %v3407, 0
        %v3441 = vsel %vm2338, %v3408, 0
        %v3442 = vsel %vm2339, %v3409, 0
        %v3443 = vsel %vm2340, %v3410, 0
        %v3444 = vsel %vm2341, %v3411, 0
        %v3445 = vsel %vm2342, %v3412, 0
        %v3446 = vsel %vm2343, %v3413, 0
        %v3447 = vsel %vm2344, %v3414, 0
        %v3448 = vsel %vm2345, %v3415, 0
        %v3449 = vsel %vm2346, %v3416, 0
        %v3450 = vsel %vm2347, %v3417, 0
        %v3451 = vsel %vm2348, %v3418, 0
        %v3452 = vsel %vm2349, %v3419, 0
        %v3453 = vsel %vm2350, %v3420, 0
        %v3454 = vsel %vm2351, %v3421, 0
        %v3455 = vsel %vm2352, %v3422, 0
        %v3456 = vsel %vm2353, %v3423, 0
        %v3457 = vsel %vm2354, %v3424, 0
        %v3458 = vsel %vm2355, %v3425, 0
        %v3459 = vsel %vm2356, %v3426, 0
        %v3460 = vsel %vm2357, %v3427, 0
        %v3461 = vsel %vm2358, %v3428, 0
        %v3462 = vsel %vm2359, %v3429, 0
        %v3463 = vsel %vm2360, %v3430, 0
        %v3464 = vsel %vm2361, %v3431, 0
        %v3465 = vsel %vm2362, %v3432, 0
        %v3466 = vsel %vm2363, %v3433, 0
        %v3467 = vsel %vm2364, %v3434, 0
        %v3468 = vsel %vm2365, %v3435, 0
        %v3469 = vsel %vm2366, %v3436, 0
        %v3471 = vshrl.u32 %v3437, 16
        %v3473 = vrot.slane %v3471, 4
        %v3474 = vshll.u32 %v3437, 16
        %v3476 = vrot.slane %v3474, 5
        %v3477 = vor.u32 %v3473, %v3476
        %v3478 = vrot.slane %v3477, 4
        %v3480 = vshll.u32 %v3438, 16
        %v3482 = vrot.slane %v3480, 5
        %v3483 = vsel %vm948, %v3478, %v3482
        %v3484 = vshrl.u32 %v3438, 16
        %v3486 = vrot.slane %v3484, 4
        %v3487 = vor.u32 %v3486, %v3482
        %v3488 = vrot.slane %v3487, 4
        %v3490 = vshll.u32 %v3439, 16
        %v3492 = vrot.slane %v3490, 5
        %v3493 = vsel %vm948, %v3488, %v3492
        %v3494 = vshrl.u32 %v3439, 16
        %v3496 = vrot.slane %v3494, 4
        %v3497 = vor.u32 %v3496, %v3492
        %v3498 = vrot.slane %v3497, 4
        %v3500 = vshll.u32 %v3440, 16
        %v3502 = vrot.slane %v3500, 5
        %v3503 = vsel %vm948, %v3498, %v3502
        %v3504 = vshrl.u32 %v3440, 16
        %v3506 = vrot.slane %v3504, 4
        %v3507 = vor.u32 %v3506, %v3502
        %v3508 = vrot.slane %v3507, 4
        %v3510 = vshll.u32 %v3441, 16
        %v3512 = vrot.slane %v3510, 5
        %v3513 = vsel %vm948, %v3508, %v3512
        %v3514 = vshrl.u32 %v3441, 16
        %v3516 = vrot.slane %v3514, 4
        %v3517 = vor.u32 %v3516, %v3512
        %v3518 = vrot.slane %v3517, 4
        %v3520 = vshll.u32 %v3442, 16
        %v3522 = vrot.slane %v3520, 5
        %v3523 = vsel %vm948, %v3518, %v3522
        %v3524 = vshrl.u32 %v3442, 16
        %v3526 = vrot.slane %v3524, 4
        %v3527 = vor.u32 %v3526, %v3522
        %v3528 = vrot.slane %v3527, 4
        %v3530 = vshll.u32 %v3443, 16
        %v3532 = vrot.slane %v3530, 5
        %v3533 = vsel %vm948, %v3528, %v3532
        %v3534 = vshrl.u32 %v3443, 16
        %v3536 = vrot.slane %v3534, 4
        %v3537 = vor.u32 %v3536, %v3532
        %v3538 = vrot.slane %v3537, 4
        %v3540 = vshll.u32 %v3444, 16
        %v3542 = vrot.slane %v3540, 5
        %v3543 = vsel %vm948, %v3538, %v3542
        %v3544 = vshrl.u32 %v3444, 16
        %v3546 = vrot.slane %v3544, 4
        %v3547 = vor.u32 %v3546, %v3542
        %v3548 = vrot.slane %v3547, 4
        %v3550 = vshll.u32 %v3445, 16
        %v3552 = vrot.slane %v3550, 5
        %v3553 = vsel %vm948, %v3548, %v3552
        %v3554 = vshrl.u32 %v3445, 16
        %v3556 = vrot.slane %v3554, 4
        %v3557 = vor.u32 %v3556, %v3552
        %v3558 = vrot.slane %v3557, 4
        %v3560 = vshll.u32 %v3446, 16
        %v3562 = vrot.slane %v3560, 5
        %v3563 = vsel %vm948, %v3558, %v3562
        %v3564 = vshrl.u32 %v3446, 16
        %v3566 = vrot.slane %v3564, 4
        %v3567 = vor.u32 %v3566, %v3562
        %v3568 = vrot.slane %v3567, 4
        %v3570 = vshll.u32 %v3447, 16
        %v3572 = vrot.slane %v3570, 5
        %v3573 = vsel %vm948, %v3568, %v3572
        %v3574 = vshrl.u32 %v3447, 16
        %v3576 = vrot.slane %v3574, 4
        %v3577 = vor.u32 %v3576, %v3572
        %v3578 = vrot.slane %v3577, 4
        %v3580 = vshll.u32 %v3448, 16
        %v3582 = vrot.slane %v3580, 5
        %v3583 = vsel %vm948, %v3578, %v3582
        %v3584 = vshrl.u32 %v3448, 16
        %v3586 = vrot.slane %v3584, 4
        %v3587 = vor.u32 %v3586, %v3582
        %v3588 = vrot.slane %v3587, 4
        %v3590 = vshll.u32 %v3449, 16
        %v3592 = vrot.slane %v3590, 5
        %v3593 = vsel %vm948, %v3588, %v3592
        %v3594 = vshrl.u32 %v3449, 16
        %v3596 = vrot.slane %v3594, 4
        %v3597 = vor.u32 %v3596, %v3592
        %v3598 = vrot.slane %v3597, 4
        %v3600 = vshll.u32 %v3450, 16
        %v3602 = vrot.slane %v3600, 5
        %v3603 = vsel %vm948, %v3598, %v3602
        %v3604 = vshrl.u32 %v3450, 16
        %v3606 = vrot.slane %v3604, 4
        %v3607 = vor.u32 %v3606, %v3602
        %v3608 = vrot.slane %v3607, 4
        %v3610 = vshll.u32 %v3451, 16
        %v3612 = vrot.slane %v3610, 5
        %v3613 = vsel %vm948, %v3608, %v3612
        %v3614 = vshrl.u32 %v3451, 16
        %v3616 = vrot.slane %v3614, 4
        %v3617 = vor.u32 %v3616, %v3612
        %v3618 = vrot.slane %v3617, 4
        %v3620 = vshll.u32 %v3452, 16
        %v3622 = vrot.slane %v3620, 5
        %v3623 = vsel %vm948, %v3618, %v3622
        %v3624 = vshrl.u32 %v3452, 16
        %v3626 = vrot.slane %v3624, 4
        %v3627 = vor.u32 %v3626, %v3622
        %v3628 = vrot.slane %v3627, 4
        %v3630 = vshll.u32 %v3453, 16
        %v3632 = vrot.slane %v3630, 5
        %v3633 = vsel %vm948, %v3628, %v3632
        %v3634 = vshrl.u32 %v3453, 16
        %v3636 = vrot.slane %v3634, 4
        %v3637 = vor.u32 %v3636, %v3632
        %v3638 = vrot.slane %v3637, 4
        %v3640 = vshll.u32 %v3454, 16
        %v3642 = vrot.slane %v3640, 5
        %v3643 = vsel %vm948, %v3638, %v3642
        %v3644 = vshrl.u32 %v3454, 16
        %v3646 = vrot.slane %v3644, 4
        %v3647 = vor.u32 %v3646, %v3642
        %v3648 = vrot.slane %v3647, 4
        %v3650 = vshll.u32 %v3455, 16
        %v3652 = vrot.slane %v3650, 5
        %v3653 = vsel %vm948, %v3648, %v3652
        %v3654 = vshrl.u32 %v3455, 16
        %v3656 = vrot.slane %v3654, 4
        %v3657 = vor.u32 %v3656, %v3652
        %v3658 = vrot.slane %v3657, 4
        %v3660 = vshll.u32 %v3456, 16
        %v3662 = vrot.slane %v3660, 5
        %v3663 = vsel %vm948, %v3658, %v3662
        %v3664 = vshrl.u32 %v3456, 16
        %v3666 = vrot.slane %v3664, 4
        %v3667 = vor.u32 %v3666, %v3662
        %v3668 = vrot.slane %v3667, 4
        %v3670 = vshll.u32 %v3457, 16
        %v3672 = vrot.slane %v3670, 5
        %v3673 = vsel %vm948, %v3668, %v3672
        %v3674 = vshrl.u32 %v3457, 16
        %v3676 = vrot.slane %v3674, 4
        %v3677 = vor.u32 %v3676, %v3672
        %v3678 = vrot.slane %v3677, 4
        %v3680 = vshll.u32 %v3458, 16
        %v3682 = vrot.slane %v3680, 5
        %v3683 = vsel %vm948, %v3678, %v3682
        %v3684 = vshrl.u32 %v3458, 16
        %v3686 = vrot.slane %v3684, 4
        %v3687 = vor.u32 %v3686, %v3682
        %v3688 = vrot.slane %v3687, 4
        %v3690 = vshll.u32 %v3459, 16
        %v3692 = vrot.slane %v3690, 5
        %v3693 = vsel %vm948, %v3688, %v3692
        %v3694 = vshrl.u32 %v3459, 16
        %v3696 = vrot.slane %v3694, 4
        %v3697 = vor.u32 %v3696, %v3692
        %v3698 = vrot.slane %v3697, 4
        %v3700 = vshll.u32 %v3460, 16
        %v3702 = vrot.slane %v3700, 5
        %v3703 = vsel %vm948, %v3698, %v3702
        %v3704 = vshrl.u32 %v3460, 16
        %v3706 = vrot.slane %v3704, 4
        %v3707 = vor.u32 %v3706, %v3702
        %v3708 = vrot.slane %v3707, 4
        %v3710 = vshll.u32 %v3461, 16
        %v3712 = vrot.slane %v3710, 5
        %v3713 = vsel %vm948, %v3708, %v3712
        %v3714 = vshrl.u32 %v3461, 16
        %v3716 = vrot.slane %v3714, 4
        %v3717 = vor.u32 %v3716, %v3712
        %v3718 = vrot.slane %v3717, 4
        %v3720 = vshll.u32 %v3462, 16
        %v3722 = vrot.slane %v3720, 5
        %v3723 = vsel %vm948, %v3718, %v3722
        %v3724 = vshrl.u32 %v3462, 16
        %v3726 = vrot.slane %v3724, 4
        %v3727 = vor.u32 %v3726, %v3722
        %v3728 = vrot.slane %v3727, 4
        %v3730 = vshll.u32 %v3463, 16
        %v3732 = vrot.slane %v3730, 5
        %v3733 = vsel %vm948, %v3728, %v3732
        %v3734 = vshrl.u32 %v3463, 16
        %v3736 = vrot.slane %v3734, 4
        %v3737 = vor.u32 %v3736, %v3732
        %v3738 = vrot.slane %v3737, 4
        %v3740 = vshll.u32 %v3464, 16
        %v3742 = vrot.slane %v3740, 5
        %v3743 = vsel %vm948, %v3738, %v3742
        %v3744 = vshrl.u32 %v3464, 16
        %v3746 = vrot.slane %v3744, 4
        %v3747 = vor.u32 %v3746, %v3742
        %v3748 = vrot.slane %v3747, 4
        %v3750 = vshll.u32 %v3465, 16
        %v3752 = vrot.slane %v3750, 5
        %v3753 = vsel %vm948, %v3748, %v3752
        %v3754 = vshrl.u32 %v3465, 16
        %v3756 = vrot.slane %v3754, 4
        %v3757 = vor.u32 %v3756, %v3752
        %v3758 = vrot.slane %v3757, 4
        %v3760 = vshll.u32 %v3466, 16
        %v3762 = vrot.slane %v3760, 5
        %v3763 = vsel %vm948, %v3758, %v3762
        %v3764 = vshrl.u32 %v3466, 16
        %v3766 = vrot.slane %v3764, 4
        %v3767 = vor.u32 %v3766, %v3762
        %v3768 = vrot.slane %v3767, 4
        %v3770 = vshll.u32 %v3467, 16
        %v3772 = vrot.slane %v3770, 5
        %v3773 = vsel %vm948, %v3768, %v3772
        %v3774 = vshrl.u32 %v3467, 16
        %v3776 = vrot.slane %v3774, 4
        %v3777 = vor.u32 %v3776, %v3772
        %v3778 = vrot.slane %v3777, 4
        %v3780 = vshll.u32 %v3468, 16
        %v3782 = vrot.slane %v3780, 5
        %v3783 = vsel %vm948, %v3778, %v3782
        %v3784 = vshrl.u32 %v3468, 16
        %v3786 = vrot.slane %v3784, 4
        %v3787 = vor.u32 %v3786, %v3782
        %v3788 = vrot.slane %v3787, 4
        %v3790 = vshll.u32 %v3469, 16
        %v3792 = vrot.slane %v3790, 5
        %v3793 = vsel %vm948, %v3788, %v3792
        %3794 = vrot.lane.b32.xlu0 %v3483, 32
        %v3795 = vpop.permute.xlu0 %3794
        %3796 = vrot.lane.b32.xlu0 %v3493, 32
        %v3797 = vpop.permute.xlu0 %3796
        %3798 = vrot.lane.b32.xlu0 %v3503, 32
        %v3799 = vpop.permute.xlu0 %3798
        %3800 = vrot.lane.b32.xlu0 %v3513, 32
        %v3801 = vpop.permute.xlu0 %3800
        %3802 = vrot.lane.b32.xlu0 %v3523, 32
        %v3803 = vpop.permute.xlu0 %3802
        %3804 = vrot.lane.b32.xlu0 %v3533, 32
        %v3805 = vpop.permute.xlu0 %3804
        %3806 = vrot.lane.b32.xlu0 %v3543, 32
        %v3807 = vpop.permute.xlu0 %3806
        %3808 = vrot.lane.b32.xlu0 %v3553, 32
        %v3809 = vpop.permute.xlu0 %3808
        %3810 = vrot.lane.b32.xlu0 %v3563, 32
        %v3811 = vpop.permute.xlu0 %3810
        %3812 = vrot.lane.b32.xlu0 %v3573, 32
        %v3813 = vpop.permute.xlu0 %3812
        %3814 = vrot.lane.b32.xlu0 %v3583, 32
        %v3815 = vpop.permute.xlu0 %3814
        %3816 = vrot.lane.b32.xlu0 %v3593, 32
        %v3817 = vpop.permute.xlu0 %3816
        %3818 = vrot.lane.b32.xlu0 %v3603, 32
        %v3819 = vpop.permute.xlu0 %3818
        %3820 = vrot.lane.b32.xlu0 %v3613, 32
        %v3821 = vpop.permute.xlu0 %3820
        %3822 = vrot.lane.b32.xlu0 %v3623, 32
        %v3823 = vpop.permute.xlu0 %3822
        %3824 = vrot.lane.b32.xlu0 %v3633, 32
        %v3825 = vpop.permute.xlu0 %3824
        %3826 = vrot.lane.b32.xlu0 %v3643, 32
        %v3827 = vpop.permute.xlu0 %3826
        %3828 = vrot.lane.b32.xlu0 %v3653, 32
        %v3829 = vpop.permute.xlu0 %3828
        %3830 = vrot.lane.b32.xlu0 %v3663, 32
        %v3831 = vpop.permute.xlu0 %3830
        %3832 = vrot.lane.b32.xlu0 %v3673, 32
        %v3833 = vpop.permute.xlu0 %3832
        %3834 = vrot.lane.b32.xlu0 %v3683, 32
        %v3835 = vpop.permute.xlu0 %3834
        %3836 = vrot.lane.b32.xlu0 %v3693, 32
        %v3837 = vpop.permute.xlu0 %3836
        %3838 = vrot.lane.b32.xlu0 %v3703, 32
        %v3839 = vpop.permute.xlu0 %3838
        %3840 = vrot.lane.b32.xlu0 %v3713, 32
        %v3841 = vpop.permute.xlu0 %3840
        %3842 = vrot.lane.b32.xlu0 %v3723, 32
        %v3843 = vpop.permute.xlu0 %3842
        %3844 = vrot.lane.b32.xlu0 %v3733, 32
        %v3845 = vpop.permute.xlu0 %3844
        %3846 = vrot.lane.b32.xlu0 %v3743, 32
        %v3847 = vpop.permute.xlu0 %3846
        %3848 = vrot.lane.b32.xlu0 %v3753, 32
        %v3849 = vpop.permute.xlu0 %3848
        %3850 = vrot.lane.b32.xlu0 %v3763, 32
        %v3851 = vpop.permute.xlu0 %3850
        %3852 = vrot.lane.b32.xlu0 %v3773, 32
        %v3853 = vpop.permute.xlu0 %3852
        %3854 = vrot.lane.b32.xlu0 %v3783, 32
        %v3855 = vpop.permute.xlu0 %3854
        %3856 = vrot.lane.b32.xlu0 %v3793, 32
        %v3857 = vpop.permute.xlu0 %3856
        %3890 = vst.msk [vmem:[#allocation3 + $0x4] sm:$0xf] %vm1853, %v3795
        %3891 = vst.msk [vmem:[#allocation3 + $0x10] sm:$0xf] %vm1853, %v3797
        %3892 = vst.msk [vmem:[#allocation3 + $0x1c] sm:$0xf] %vm1853, %v3799
        %3893 = vst.msk [vmem:[#allocation3 + $0x28] sm:$0xf] %vm1853, %v3801
        %3894 = vst.msk [vmem:[#allocation3 + $0x34] sm:$0xf] %vm1853, %v3803
        %3895 = vst.msk [vmem:[#allocation3 + $0x40] sm:$0xf] %vm1853, %v3805
        %3896 = vst.msk [vmem:[#allocation3 + $0x4c] sm:$0xf] %vm1853, %v3807
        %3897 = vst.msk [vmem:[#allocation3 + $0x58] sm:$0xf] %vm1853, %v3809
        %3898 = vst.msk [vmem:[#allocation3 + $0x64] sm:$0xf] %vm1853, %v3811
        %3899 = vst.msk [vmem:[#allocation3 + $0x70] sm:$0xf] %vm1853, %v3813
        %3900 = vst.msk [vmem:[#allocation3 + $0x7c] sm:$0xf] %vm1853, %v3815
        %3901 = vst.msk [vmem:[#allocation3 + $0x88] sm:$0xf] %vm1853, %v3817
        %3902 = vst.msk [vmem:[#allocation3 + $0x94] sm:$0xf] %vm1853, %v3819
        %3903 = vst.msk [vmem:[#allocation3 + $0xa0] sm:$0xf] %vm1853, %v3821
        %3904 = vst.msk [vmem:[#allocation3 + $0xac] sm:$0xf] %vm1853, %v3823
        %3905 = vst.msk [vmem:[#allocation3 + $0xb8] sm:$0xf] %vm1853, %v3825
        %3906 = vst.msk [vmem:[#allocation3 + $0xc4] sm:$0xf] %vm1853, %v3827
        %3907 = vst.msk [vmem:[#allocation3 + $0xd0] sm:$0xf] %vm1853, %v3829
        %3908 = vst.msk [vmem:[#allocation3 + $0xdc] sm:$0xf] %vm1853, %v3831
        %3909 = vst.msk [vmem:[#allocation3 + $0xe8] sm:$0xf] %vm1853, %v3833
        %3910 = vst.msk [vmem:[#allocation3 + $0xf4] sm:$0xf] %vm1853, %v3835
        %3911 = vst.msk [vmem:[#allocation3 + $0x100] sm:$0xf] %vm1853, %v3837
        %3912 = vst.msk [vmem:[#allocation3 + $0x10c] sm:$0xf] %vm1853, %v3839
        %3913 = vst.msk [vmem:[#allocation3 + $0x118] sm:$0xf] %vm1853, %v3841
        %3914 = vst.msk [vmem:[#allocation3 + $0x124] sm:$0xf] %vm1853, %v3843
        %3915 = vst.msk [vmem:[#allocation3 + $0x130] sm:$0xf] %vm1853, %v3845
        %3916 = vst.msk [vmem:[#allocation3 + $0x13c] sm:$0xf] %vm1853, %v3847
        %3917 = vst.msk [vmem:[#allocation3 + $0x148] sm:$0xf] %vm1853, %v3849
        %3918 = vst.msk [vmem:[#allocation3 + $0x154] sm:$0xf] %vm1853, %v3851
        %3919 = vst.msk [vmem:[#allocation3 + $0x160] sm:$0xf] %vm1853, %v3853
        %3920 = vst.msk [vmem:[#allocation3 + $0x16c] sm:$0xf] %vm1853, %v3855
        %3921 = vst.msk [vmem:[#allocation3 + $0x178] sm:$0xf] %vm1853, %v3857
        %v3922 = vld [vmem:[#allocation2 + $0x10] sm:$0x8]
        %v3923 = vld [vmem:[#allocation2 + $0x14] sm:$0xf]
        %v3924 = vld [vmem:[#allocation2 + $0x18] sm:$0xf]
        %v3925 = vld [vmem:[#allocation2 + $0x1c] sm:$0xf]
        %v3926 = vld [vmem:[#allocation2 + $0x20] sm:$0xf]
        %v3927 = vld [vmem:[#allocation2 + $0x24] sm:$0xf]
        %v3928 = vld [vmem:[#allocation2 + $0x28] sm:$0xf]
        %v3929 = vld [vmem:[#allocation2 + $0x2c] sm:$0xf]
        %v3930 = vld [vmem:[#allocation2 + $0x30] sm:$0xf]
        %v3931 = vld [vmem:[#allocation2 + $0x34] sm:$0xf]
        %v3932 = vld [vmem:[#allocation2 + $0x38] sm:$0xf]
        %v3933 = vld [vmem:[#allocation2 + $0x3c] sm:$0xf]
        %v3934 = vld [vmem:[#allocation2 + $0x40] sm:$0xf]
        %v3935 = vld [vmem:[#allocation2 + $0x44] sm:$0xf]
        %v3936 = vld [vmem:[#allocation2 + $0x48] sm:$0xf]
        %v3937 = vld [vmem:[#allocation2 + $0x4c] sm:$0xf]
        %v3938 = vld [vmem:[#allocation2 + $0x50] sm:$0xf]
        %v3939 = vld [vmem:[#allocation2 + $0x54] sm:$0xf]
        %v3940 = vld [vmem:[#allocation2 + $0x58] sm:$0xf]
        %v3941 = vld [vmem:[#allocation2 + $0x5c] sm:$0xf]
        %v3942 = vld [vmem:[#allocation2 + $0x60] sm:$0xf]
        %v3943 = vld [vmem:[#allocation2 + $0x64] sm:$0xf]
        %v3944 = vld [vmem:[#allocation2 + $0x68] sm:$0xf]
        %v3945 = vld [vmem:[#allocation2 + $0x6c] sm:$0xf]
        %v3946 = vld [vmem:[#allocation2 + $0x70] sm:$0xf]
        %v3947 = vld [vmem:[#allocation2 + $0x74] sm:$0xf]
        %v3948 = vld [vmem:[#allocation2 + $0x78] sm:$0xf]
        %v3949 = vld [vmem:[#allocation2 + $0x7c] sm:$0xf]
        %v3950 = vld [vmem:[#allocation2 + $0x80] sm:$0xf]
        %v3951 = vld [vmem:[#allocation2 + $0x84] sm:$0xf]
        %v3952 = vld [vmem:[#allocation2 + $0x88] sm:$0xf]
        %v3953 = vld [vmem:[#allocation2 + $0x8c] sm:$0xf]
        %v3954 = vld [vmem:[#allocation2 + $0x90] sm:$0xf]
        %v3955 = vsel %vm1268, %v3922, 0
        %v3956 = vsel %vm1269, %v3923, 0
        %v3957 = vsel %vm1270, %v3924, 0
        %v3958 = vsel %vm1271, %v3925, 0
        %v3959 = vsel %vm1272, %v3926, 0
        %v3960 = vsel %vm1273, %v3927, 0
        %v3961 = vsel %vm1274, %v3928, 0
        %v3962 = vsel %vm1275, %v3929, 0
        %v3963 = vsel %vm1276, %v3930, 0
        %v3964 = vsel %vm1277, %v3931, 0
        %v3965 = vsel %vm1278, %v3932, 0
        %v3966 = vsel %vm1279, %v3933, 0
        %v3967 = vsel %vm1280, %v3934, 0
        %v3968 = vsel %vm1281, %v3935, 0
        %v3969 = vsel %vm1282, %v3936, 0
        %v3970 = vsel %vm1283, %v3937, 0
        %v3971 = vsel %vm1284, %v3938, 0
        %v3972 = vsel %vm1285, %v3939, 0
        %v3973 = vsel %vm1286, %v3940, 0
        %v3974 = vsel %vm1287, %v3941, 0
        %v3975 = vsel %vm1288, %v3942, 0
        %v3976 = vsel %vm1289, %v3943, 0
        %v3977 = vsel %vm1290, %v3944, 0
        %v3978 = vsel %vm1291, %v3945, 0
        %v3979 = vsel %vm1292, %v3946, 0
        %v3980 = vsel %vm1293, %v3947, 0
        %v3981 = vsel %vm1294, %v3948, 0
        %v3982 = vsel %vm1295, %v3949, 0
        %v3983 = vsel %vm1296, %v3950, 0
        %v3984 = vsel %vm1297, %v3951, 0
        %v3985 = vsel %vm1298, %v3952, 0
        %v3986 = vsel %vm1299, %v3953, 0
        %v3987 = vsel %vm1300, %v3954, 0
        %v3989 = vshrl.u32 %v3955, 16
        %v3991 = vrot.slane %v3989, 7
        %v3992 = vrot.slane %v3991, 4
        %v3994 = vshrl.u32 %v3956, 16
        %v3996 = vrot.slane %v3994, 7
        %v3997 = vshll.u32 %v3956, 16
        %v3999 = vor.u32 %v3996, %v3997
        %v4000 = vsel %vm1336, %v3992, %v3999
        %v4001 = vrot.slane %v3996, 4
        %v4003 = vshrl.u32 %v3957, 16
        %v4005 = vrot.slane %v4003, 7
        %v4006 = vshll.u32 %v3957, 16
        %v4008 = vor.u32 %v4005, %v4006
        %v4009 = vsel %vm1336, %v4001, %v4008
        %v4010 = vrot.slane %v4005, 4
        %v4012 = vshrl.u32 %v3958, 16
        %v4014 = vrot.slane %v4012, 7
        %v4015 = vshll.u32 %v3958, 16
        %v4017 = vor.u32 %v4014, %v4015
        %v4018 = vsel %vm1336, %v4010, %v4017
        %v4019 = vrot.slane %v4014, 4
        %v4021 = vshrl.u32 %v3959, 16
        %v4023 = vrot.slane %v4021, 7
        %v4024 = vshll.u32 %v3959, 16
        %v4026 = vor.u32 %v4023, %v4024
        %v4027 = vsel %vm1336, %v4019, %v4026
        %v4028 = vrot.slane %v4023, 4
        %v4030 = vshrl.u32 %v3960, 16
        %v4032 = vrot.slane %v4030, 7
        %v4033 = vshll.u32 %v3960, 16
        %v4035 = vor.u32 %v4032, %v4033
        %v4036 = vsel %vm1336, %v4028, %v4035
        %v4037 = vrot.slane %v4032, 4
        %v4039 = vshrl.u32 %v3961, 16
        %v4041 = vrot.slane %v4039, 7
        %v4042 = vshll.u32 %v3961, 16
        %v4044 = vor.u32 %v4041, %v4042
        %v4045 = vsel %vm1336, %v4037, %v4044
        %v4046 = vrot.slane %v4041, 4
        %v4048 = vshrl.u32 %v3962, 16
        %v4050 = vrot.slane %v4048, 7
        %v4051 = vshll.u32 %v3962, 16
        %v4053 = vor.u32 %v4050, %v4051
        %v4054 = vsel %vm1336, %v4046, %v4053
        %v4055 = vrot.slane %v4050, 4
        %v4057 = vshrl.u32 %v3963, 16
        %v4059 = vrot.slane %v4057, 7
        %v4060 = vshll.u32 %v3963, 16
        %v4062 = vor.u32 %v4059, %v4060
        %v4063 = vsel %vm1336, %v4055, %v4062
        %v4064 = vrot.slane %v4059, 4
        %v4066 = vshrl.u32 %v3964, 16
        %v4068 = vrot.slane %v4066, 7
        %v4069 = vshll.u32 %v3964, 16
        %v4071 = vor.u32 %v4068, %v4069
        %v4072 = vsel %vm1336, %v4064, %v4071
        %v4073 = vrot.slane %v4068, 4
        %v4075 = vshrl.u32 %v3965, 16
        %v4077 = vrot.slane %v4075, 7
        %v4078 = vshll.u32 %v3965, 16
        %v4080 = vor.u32 %v4077, %v4078
        %v4081 = vsel %vm1336, %v4073, %v4080
        %v4082 = vrot.slane %v4077, 4
        %v4084 = vshrl.u32 %v3966, 16
        %v4086 = vrot.slane %v4084, 7
        %v4087 = vshll.u32 %v3966, 16
        %v4089 = vor.u32 %v4086, %v4087
        %v4090 = vsel %vm1336, %v4082, %v4089
        %v4091 = vrot.slane %v4086, 4
        %v4093 = vshrl.u32 %v3967, 16
        %v4095 = vrot.slane %v4093, 7
        %v4096 = vshll.u32 %v3967, 16
        %v4098 = vor.u32 %v4095, %v4096
        %v4099 = vsel %vm1336, %v4091, %v4098
        %v4100 = vrot.slane %v4095, 4
        %v4102 = vshrl.u32 %v3968, 16
        %v4104 = vrot.slane %v4102, 7
        %v4105 = vshll.u32 %v3968, 16
        %v4107 = vor.u32 %v4104, %v4105
        %v4108 = vsel %vm1336, %v4100, %v4107
        %v4109 = vrot.slane %v4104, 4
        %v4111 = vshrl.u32 %v3969, 16
        %v4113 = vrot.slane %v4111, 7
        %v4114 = vshll.u32 %v3969, 16
        %v4116 = vor.u32 %v4113, %v4114
        %v4117 = vsel %vm1336, %v4109, %v4116
        %v4118 = vrot.slane %v4113, 4
        %v4120 = vshrl.u32 %v3970, 16
        %v4122 = vrot.slane %v4120, 7
        %v4123 = vshll.u32 %v3970, 16
        %v4125 = vor.u32 %v4122, %v4123
        %v4126 = vsel %vm1336, %v4118, %v4125
        %v4127 = vrot.slane %v4122, 4
        %v4129 = vshrl.u32 %v3971, 16
        %v4131 = vrot.slane %v4129, 7
        %v4132 = vshll.u32 %v3971, 16
        %v4134 = vor.u32 %v4131, %v4132
        %v4135 = vsel %vm1336, %v4127, %v4134
        %v4136 = vrot.slane %v4131, 4
        %v4138 = vshrl.u32 %v3972, 16
        %v4140 = vrot.slane %v4138, 7
        %v4141 = vshll.u32 %v3972, 16
        %v4143 = vor.u32 %v4140, %v4141
        %v4144 = vsel %vm1336, %v4136, %v4143
        %v4145 = vrot.slane %v4140, 4
        %v4147 = vshrl.u32 %v3973, 16
        %v4149 = vrot.slane %v4147, 7
        %v4150 = vshll.u32 %v3973, 16
        %v4152 = vor.u32 %v4149, %v4150
        %v4153 = vsel %vm1336, %v4145, %v4152
        %v4154 = vrot.slane %v4149, 4
        %v4156 = vshrl.u32 %v3974, 16
        %v4158 = vrot.slane %v4156, 7
        %v4159 = vshll.u32 %v3974, 16
        %v4161 = vor.u32 %v4158, %v4159
        %v4162 = vsel %vm1336, %v4154, %v4161
        %v4163 = vrot.slane %v4158, 4
        %v4165 = vshrl.u32 %v3975, 16
        %v4167 = vrot.slane %v4165, 7
        %v4168 = vshll.u32 %v3975, 16
        %v4170 = vor.u32 %v4167, %v4168
        %v4171 = vsel %vm1336, %v4163, %v4170
        %v4172 = vrot.slane %v4167, 4
        %v4174 = vshrl.u32 %v3976, 16
        %v4176 = vrot.slane %v4174, 7
        %v4177 = vshll.u32 %v3976, 16
        %v4179 = vor.u32 %v4176, %v4177
        %v4180 = vsel %vm1336, %v4172, %v4179
        %v4181 = vrot.slane %v4176, 4
        %v4183 = vshrl.u32 %v3977, 16
        %v4185 = vrot.slane %v4183, 7
        %v4186 = vshll.u32 %v3977, 16
        %v4188 = vor.u32 %v4185, %v4186
        %v4189 = vsel %vm1336, %v4181, %v4188
        %v4190 = vrot.slane %v4185, 4
        %v4192 = vshrl.u32 %v3978, 16
        %v4194 = vrot.slane %v4192, 7
        %v4195 = vshll.u32 %v3978, 16
        %v4197 = vor.u32 %v4194, %v4195
        %v4198 = vsel %vm1336, %v4190, %v4197
        %v4199 = vrot.slane %v4194, 4
        %v4201 = vshrl.u32 %v3979, 16
        %v4203 = vrot.slane %v4201, 7
        %v4204 = vshll.u32 %v3979, 16
        %v4206 = vor.u32 %v4203, %v4204
        %v4207 = vsel %vm1336, %v4199, %v4206
        %v4208 = vrot.slane %v4203, 4
        %v4210 = vshrl.u32 %v3980, 16
        %v4212 = vrot.slane %v4210, 7
        %v4213 = vshll.u32 %v3980, 16
        %v4215 = vor.u32 %v4212, %v4213
        %v4216 = vsel %vm1336, %v4208, %v4215
        %v4217 = vrot.slane %v4212, 4
        %v4219 = vshrl.u32 %v3981, 16
        %v4221 = vrot.slane %v4219, 7
        %v4222 = vshll.u32 %v3981, 16
        %v4224 = vor.u32 %v4221, %v4222
        %v4225 = vsel %vm1336, %v4217, %v4224
        %v4226 = vrot.slane %v4221, 4
        %v4228 = vshrl.u32 %v3982, 16
        %v4230 = vrot.slane %v4228, 7
        %v4231 = vshll.u32 %v3982, 16
        %v4233 = vor.u32 %v4230, %v4231
        %v4234 = vsel %vm1336, %v4226, %v4233
        %v4235 = vrot.slane %v4230, 4
        %v4237 = vshrl.u32 %v3983, 16
        %v4239 = vrot.slane %v4237, 7
        %v4240 = vshll.u32 %v3983, 16
        %v4242 = vor.u32 %v4239, %v4240
        %v4243 = vsel %vm1336, %v4235, %v4242
        %v4244 = vrot.slane %v4239, 4
        %v4246 = vshrl.u32 %v3984, 16
        %v4248 = vrot.slane %v4246, 7
        %v4249 = vshll.u32 %v3984, 16
        %v4251 = vor.u32 %v4248, %v4249
        %v4252 = vsel %vm1336, %v4244, %v4251
        %v4253 = vrot.slane %v4248, 4
        %v4255 = vshrl.u32 %v3985, 16
        %v4257 = vrot.slane %v4255, 7
        %v4258 = vshll.u32 %v3985, 16
        %v4260 = vor.u32 %v4257, %v4258
        %v4261 = vsel %vm1336, %v4253, %v4260
        %v4262 = vrot.slane %v4257, 4
        %v4264 = vshrl.u32 %v3986, 16
        %v4266 = vrot.slane %v4264, 7
        %v4267 = vshll.u32 %v3986, 16
        %v4269 = vor.u32 %v4266, %v4267
        %v4270 = vsel %vm1336, %v4262, %v4269
        %v4271 = vrot.slane %v4266, 4
        %v4273 = vshrl.u32 %v3987, 16
        %v4275 = vrot.slane %v4273, 7
        %v4276 = vshll.u32 %v3987, 16
        %v4278 = vor.u32 %v4275, %v4276
        %v4279 = vsel %vm1336, %v4271, %v4278
        %4280 = vrot.lane.b32.xlu0 %v4000, 64
        %v4281 = vpop.permute.xlu0 %4280
        %4282 = vrot.lane.b32.xlu0 %v4009, 64
        %v4283 = vpop.permute.xlu0 %4282
        %4284 = vrot.lane.b32.xlu0 %v4018, 64
        %v4285 = vpop.permute.xlu0 %4284
        %4286 = vrot.lane.b32.xlu0 %v4027, 64
        %v4287 = vpop.permute.xlu0 %4286
        %4288 = vrot.lane.b32.xlu0 %v4036, 64
        %v4289 = vpop.permute.xlu0 %4288
        %4290 = vrot.lane.b32.xlu0 %v4045, 64
        %v4291 = vpop.permute.xlu0 %4290
        %4292 = vrot.lane.b32.xlu0 %v4054, 64
        %v4293 = vpop.permute.xlu0 %4292
        %4294 = vrot.lane.b32.xlu0 %v4063, 64
        %v4295 = vpop.permute.xlu0 %4294
        %4296 = vrot.lane.b32.xlu0 %v4072, 64
        %v4297 = vpop.permute.xlu0 %4296
        %4298 = vrot.lane.b32.xlu0 %v4081, 64
        %v4299 = vpop.permute.xlu0 %4298
        %4300 = vrot.lane.b32.xlu0 %v4090, 64
        %v4301 = vpop.permute.xlu0 %4300
        %4302 = vrot.lane.b32.xlu0 %v4099, 64
        %v4303 = vpop.permute.xlu0 %4302
        %4304 = vrot.lane.b32.xlu0 %v4108, 64
        %v4305 = vpop.permute.xlu0 %4304
        %4306 = vrot.lane.b32.xlu0 %v4117, 64
        %v4307 = vpop.permute.xlu0 %4306
        %4308 = vrot.lane.b32.xlu0 %v4126, 64
        %v4309 = vpop.permute.xlu0 %4308
        %4310 = vrot.lane.b32.xlu0 %v4135, 64
        %v4311 = vpop.permute.xlu0 %4310
        %4312 = vrot.lane.b32.xlu0 %v4144, 64
        %v4313 = vpop.permute.xlu0 %4312
        %4314 = vrot.lane.b32.xlu0 %v4153, 64
        %v4315 = vpop.permute.xlu0 %4314
        %4316 = vrot.lane.b32.xlu0 %v4162, 64
        %v4317 = vpop.permute.xlu0 %4316
        %4318 = vrot.lane.b32.xlu0 %v4171, 64
        %v4319 = vpop.permute.xlu0 %4318
        %4320 = vrot.lane.b32.xlu0 %v4180, 64
        %v4321 = vpop.permute.xlu0 %4320
        %4322 = vrot.lane.b32.xlu0 %v4189, 64
        %v4323 = vpop.permute.xlu0 %4322
        %4324 = vrot.lane.b32.xlu0 %v4198, 64
        %v4325 = vpop.permute.xlu0 %4324
        %4326 = vrot.lane.b32.xlu0 %v4207, 64
        %v4327 = vpop.permute.xlu0 %4326
        %4328 = vrot.lane.b32.xlu0 %v4216, 64
        %v4329 = vpop.permute.xlu0 %4328
        %4330 = vrot.lane.b32.xlu0 %v4225, 64
        %v4331 = vpop.permute.xlu0 %4330
        %4332 = vrot.lane.b32.xlu0 %v4234, 64
        %v4333 = vpop.permute.xlu0 %4332
        %4334 = vrot.lane.b32.xlu0 %v4243, 64
        %v4335 = vpop.permute.xlu0 %4334
        %4336 = vrot.lane.b32.xlu0 %v4252, 64
        %v4337 = vpop.permute.xlu0 %4336
        %4338 = vrot.lane.b32.xlu0 %v4261, 64
        %v4339 = vpop.permute.xlu0 %4338
        %4340 = vrot.lane.b32.xlu0 %v4270, 64
        %v4341 = vpop.permute.xlu0 %4340
        %4342 = vrot.lane.b32.xlu0 %v4279, 64
        %v4343 = vpop.permute.xlu0 %4342
        %4376 = vst.msk [vmem:[#allocation3 + $0x4] sm:$0xf] %vm2820, %v4281
        %4377 = vst.msk [vmem:[#allocation3 + $0x10] sm:$0xf] %vm2820, %v4283
        %4378 = vst.msk [vmem:[#allocation3 + $0x1c] sm:$0xf] %vm2820, %v4285
        %4379 = vst.msk [vmem:[#allocation3 + $0x28] sm:$0xf] %vm2820, %v4287
        %4380 = vst.msk [vmem:[#allocation3 + $0x34] sm:$0xf] %vm2820, %v4289
        %4381 = vst.msk [vmem:[#allocation3 + $0x40] sm:$0xf] %vm2820, %v4291
        %4382 = vst.msk [vmem:[#allocation3 + $0x4c] sm:$0xf] %vm2820, %v4293
        %4383 = vst.msk [vmem:[#allocation3 + $0x58] sm:$0xf] %vm2820, %v4295
        %4384 = vst.msk [vmem:[#allocation3 + $0x64] sm:$0xf] %vm2820, %v4297
        %4385 = vst.msk [vmem:[#allocation3 + $0x70] sm:$0xf] %vm2820, %v4299
        %4386 = vst.msk [vmem:[#allocation3 + $0x7c] sm:$0xf] %vm2820, %v4301
        %4387 = vst.msk [vmem:[#allocation3 + $0x88] sm:$0xf] %vm2820, %v4303
        %4388 = vst.msk [vmem:[#allocation3 + $0x94] sm:$0xf] %vm2820, %v4305
        %4389 = vst.msk [vmem:[#allocation3 + $0xa0] sm:$0xf] %vm2820, %v4307
        %4390 = vst.msk [vmem:[#allocation3 + $0xac] sm:$0xf] %vm2820, %v4309
        %4391 = vst.msk [vmem:[#allocation3 + $0xb8] sm:$0xf] %vm2820, %v4311
        %4392 = vst.msk [vmem:[#allocation3 + $0xc4] sm:$0xf] %vm2820, %v4313
        %4393 = vst.msk [vmem:[#allocation3 + $0xd0] sm:$0xf] %vm2820, %v4315
        %4394 = vst.msk [vmem:[#allocation3 + $0xdc] sm:$0xf] %vm2820, %v4317
        %4395 = vst.msk [vmem:[#allocation3 + $0xe8] sm:$0xf] %vm2820, %v4319
        %4396 = vst.msk [vmem:[#allocation3 + $0xf4] sm:$0xf] %vm2820, %v4321
        %4397 = vst.msk [vmem:[#allocation3 + $0x100] sm:$0xf] %vm2820, %v4323
        %4398 = vst.msk [vmem:[#allocation3 + $0x10c] sm:$0xf] %vm2820, %v4325
        %4399 = vst.msk [vmem:[#allocation3 + $0x118] sm:$0xf] %vm2820, %v4327
        %4400 = vst.msk [vmem:[#allocation3 + $0x124] sm:$0xf] %vm2820, %v4329
        %4401 = vst.msk [vmem:[#allocation3 + $0x130] sm:$0xf] %vm2820, %v4331
        %4402 = vst.msk [vmem:[#allocation3 + $0x13c] sm:$0xf] %vm2820, %v4333
        %4403 = vst.msk [vmem:[#allocation3 + $0x148] sm:$0xf] %vm2820, %v4335
        %4404 = vst.msk [vmem:[#allocation3 + $0x154] sm:$0xf] %vm2820, %v4337
        %4405 = vst.msk [vmem:[#allocation3 + $0x160] sm:$0xf] %vm2820, %v4339
        %4406 = vst.msk [vmem:[#allocation3 + $0x16c] sm:$0xf] %vm2820, %v4341
        %4407 = vst.msk [vmem:[#allocation3 + $0x178] sm:$0xf] %vm2820, %v4343
        %v4408 = vld [vmem:[#allocation2 + $0x14] sm:$0xf]
        %v4409 = vld [vmem:[#allocation2 + $0x18] sm:$0xf]
        %v4410 = vld [vmem:[#allocation2 + $0x1c] sm:$0xf]
        %v4411 = vld [vmem:[#allocation2 + $0x20] sm:$0xf]
        %v4412 = vld [vmem:[#allocation2 + $0x24] sm:$0xf]
        %v4413 = vld [vmem:[#allocation2 + $0x28] sm:$0xf]
        %v4414 = vld [vmem:[#allocation2 + $0x2c] sm:$0xf]
        %v4415 = vld [vmem:[#allocation2 + $0x30] sm:$0xf]
        %v4416 = vld [vmem:[#allocation2 + $0x34] sm:$0xf]
        %v4417 = vld [vmem:[#allocation2 + $0x38] sm:$0xf]
        %v4418 = vld [vmem:[#allocation2 + $0x3c] sm:$0xf]
        %v4419 = vld [vmem:[#allocation2 + $0x40] sm:$0xf]
        %v4420 = vld [vmem:[#allocation2 + $0x44] sm:$0xf]
        %v4421 = vld [vmem:[#allocation2 + $0x48] sm:$0xf]
        %v4422 = vld [vmem:[#allocation2 + $0x4c] sm:$0xf]
        %v4423 = vld [vmem:[#allocation2 + $0x50] sm:$0xf]
        %v4424 = vld [vmem:[#allocation2 + $0x54] sm:$0xf]
        %v4425 = vld [vmem:[#allocation2 + $0x58] sm:$0xf]
        %v4426 = vld [vmem:[#allocation2 + $0x5c] sm:$0xf]
        %v4427 = vld [vmem:[#allocation2 + $0x60] sm:$0xf]
        %v4428 = vld [vmem:[#allocation2 + $0x64] sm:$0xf]
        %v4429 = vld [vmem:[#allocation2 + $0x68] sm:$0xf]
        %v4430 = vld [vmem:[#allocation2 + $0x6c] sm:$0xf]
        %v4431 = vld [vmem:[#allocation2 + $0x70] sm:$0xf]
        %v4432 = vld [vmem:[#allocation2 + $0x74] sm:$0xf]
        %v4433 = vld [vmem:[#allocation2 + $0x78] sm:$0xf]
        %v4434 = vld [vmem:[#allocation2 + $0x7c] sm:$0xf]
        %v4435 = vld [vmem:[#allocation2 + $0x80] sm:$0xf]
        %v4436 = vld [vmem:[#allocation2 + $0x84] sm:$0xf]
        %v4437 = vld [vmem:[#allocation2 + $0x88] sm:$0xf]
        %v4438 = vld [vmem:[#allocation2 + $0x8c] sm:$0xf]
        %v4439 = vld [vmem:[#allocation2 + $0x90] sm:$0xf]
        %4472 = vrot.lane.b32.xlu0 %v4408, 96
        %v4473 = vpop.permute.xlu0 %4472
        %4474 = vrot.lane.b32.xlu0 %v4409, 96
        %v4475 = vpop.permute.xlu0 %4474
        %4476 = vrot.lane.b32.xlu0 %v4410, 96
        %v4477 = vpop.permute.xlu0 %4476
        %4478 = vrot.lane.b32.xlu0 %v4411, 96
        %v4479 = vpop.permute.xlu0 %4478
        %4480 = vrot.lane.b32.xlu0 %v4412, 96
        %v4481 = vpop.permute.xlu0 %4480
        %4482 = vrot.lane.b32.xlu0 %v4413, 96
        %v4483 = vpop.permute.xlu0 %4482
        %4484 = vrot.lane.b32.xlu0 %v4414, 96
        %v4485 = vpop.permute.xlu0 %4484
        %4486 = vrot.lane.b32.xlu0 %v4415, 96
        %v4487 = vpop.permute.xlu0 %4486
        %4488 = vrot.lane.b32.xlu0 %v4416, 96
        %v4489 = vpop.permute.xlu0 %4488
        %4490 = vrot.lane.b32.xlu0 %v4417, 96
        %v4491 = vpop.permute.xlu0 %4490
        %4492 = vrot.lane.b32.xlu0 %v4418, 96
        %v4493 = vpop.permute.xlu0 %4492
        %4494 = vrot.lane.b32.xlu0 %v4419, 96
        %v4495 = vpop.permute.xlu0 %4494
        %4496 = vrot.lane.b32.xlu0 %v4420, 96
        %v4497 = vpop.permute.xlu0 %4496
        %4498 = vrot.lane.b32.xlu0 %v4421, 96
        %v4499 = vpop.permute.xlu0 %4498
        %4500 = vrot.lane.b32.xlu0 %v4422, 96
        %v4501 = vpop.permute.xlu0 %4500
        %4502 = vrot.lane.b32.xlu0 %v4423, 96
        %v4503 = vpop.permute.xlu0 %4502
        %4504 = vrot.lane.b32.xlu0 %v4424, 96
        %v4505 = vpop.permute.xlu0 %4504
        %4506 = vrot.lane.b32.xlu0 %v4425, 96
        %v4507 = vpop.permute.xlu0 %4506
        %4508 = vrot.lane.b32.xlu0 %v4426, 96
        %v4509 = vpop.permute.xlu0 %4508
        %4510 = vrot.lane.b32.xlu0 %v4427, 96
        %v4511 = vpop.permute.xlu0 %4510
        %4512 = vrot.lane.b32.xlu0 %v4428, 96
        %v4513 = vpop.permute.xlu0 %4512
        %4514 = vrot.lane.b32.xlu0 %v4429, 96
        %v4515 = vpop.permute.xlu0 %4514
        %4516 = vrot.lane.b32.xlu0 %v4430, 96
        %v4517 = vpop.permute.xlu0 %4516
        %4518 = vrot.lane.b32.xlu0 %v4431, 96
        %v4519 = vpop.permute.xlu0 %4518
        %4520 = vrot.lane.b32.xlu0 %v4432, 96
        %v4521 = vpop.permute.xlu0 %4520
        %4522 = vrot.lane.b32.xlu0 %v4433, 96
        %v4523 = vpop.permute.xlu0 %4522
        %4524 = vrot.lane.b32.xlu0 %v4434, 96
        %v4525 = vpop.permute.xlu0 %4524
        %4526 = vrot.lane.b32.xlu0 %v4435, 96
        %v4527 = vpop.permute.xlu0 %4526
        %4528 = vrot.lane.b32.xlu0 %v4436, 96
        %v4529 = vpop.permute.xlu0 %4528
        %4530 = vrot.lane.b32.xlu0 %v4437, 96
        %v4531 = vpop.permute.xlu0 %4530
        %4532 = vrot.lane.b32.xlu0 %v4438, 96
        %v4533 = vpop.permute.xlu0 %4532
        %4534 = vrot.lane.b32.xlu0 %v4439, 96
        %v4535 = vpop.permute.xlu0 %4534
        %4568 = vst.msk [vmem:[#allocation3 + $0x4] sm:$0xf] %vm3307, %v4473
        %4569 = vst.msk [vmem:[#allocation3 + $0x10] sm:$0xf] %vm3307, %v4475
        %4570 = vst.msk [vmem:[#allocation3 + $0x1c] sm:$0xf] %vm3307, %v4477
        %4571 = vst.msk [vmem:[#allocation3 + $0x28] sm:$0xf] %vm3307, %v4479
        %4572 = vst.msk [vmem:[#allocation3 + $0x34] sm:$0xf] %vm3307, %v4481
        %4573 = vst.msk [vmem:[#allocation3 + $0x40] sm:$0xf] %vm3307, %v4483
        %4574 = vst.msk [vmem:[#allocation3 + $0x4c] sm:$0xf] %vm3307, %v4485
        %4575 = vst.msk [vmem:[#allocation3 + $0x58] sm:$0xf] %vm3307, %v4487
        %4576 = vst.msk [vmem:[#allocation3 + $0x64] sm:$0xf] %vm3307, %v4489
        %4577 = vst.msk [vmem:[#allocation3 + $0x70] sm:$0xf] %vm3307, %v4491
        %4578 = vst.msk [vmem:[#allocation3 + $0x7c] sm:$0xf] %vm3307, %v4493
        %4579 = vst.msk [vmem:[#allocation3 + $0x88] sm:$0xf] %vm3307, %v4495
        %4580 = vst.msk [vmem:[#allocation3 + $0x94] sm:$0xf] %vm3307, %v4497
        %4581 = vst.msk [vmem:[#allocation3 + $0xa0] sm:$0xf] %vm3307, %v4499
        %4582 = vst.msk [vmem:[#allocation3 + $0xac] sm:$0xf] %vm3307, %v4501
        %4583 = vst.msk [vmem:[#allocation3 + $0xb8] sm:$0xf] %vm3307, %v4503
        %4584 = vst.msk [vmem:[#allocation3 + $0xc4] sm:$0xf] %vm3307, %v4505
        %4585 = vst.msk [vmem:[#allocation3 + $0xd0] sm:$0xf] %vm3307, %v4507
        %4586 = vst.msk [vmem:[#allocation3 + $0xdc] sm:$0xf] %vm3307, %v4509
        %4587 = vst.msk [vmem:[#allocation3 + $0xe8] sm:$0xf] %vm3307, %v4511
        %4588 = vst.msk [vmem:[#allocation3 + $0xf4] sm:$0xf] %vm3307, %v4513
        %4589 = vst.msk [vmem:[#allocation3 + $0x100] sm:$0xf] %vm3307, %v4515
        %4590 = vst.msk [vmem:[#allocation3 + $0x10c] sm:$0xf] %vm3307, %v4517
        %4591 = vst.msk [vmem:[#allocation3 + $0x118] sm:$0xf] %vm3307, %v4519
        %4592 = vst.msk [vmem:[#allocation3 + $0x124] sm:$0xf] %vm3307, %v4521
        %4593 = vst.msk [vmem:[#allocation3 + $0x130] sm:$0xf] %vm3307, %v4523
        %4594 = vst.msk [vmem:[#allocation3 + $0x13c] sm:$0xf] %vm3307, %v4525
        %4595 = vst.msk [vmem:[#allocation3 + $0x148] sm:$0xf] %vm3307, %v4527
        %4596 = vst.msk [vmem:[#allocation3 + $0x154] sm:$0xf] %vm3307, %v4529
        %4597 = vst.msk [vmem:[#allocation3 + $0x160] sm:$0xf] %vm3307, %v4531
        %4598 = vst.msk [vmem:[#allocation3 + $0x16c] sm:$0xf] %vm3307, %v4533
        %4599 = vst.msk [vmem:[#allocation3 + $0x178] sm:$0xf] %vm3307, %v4535
        %v4600 = vld [vmem:[#allocation2 + $0x14] sm:$0xf]
        %v4601 = vld [vmem:[#allocation2 + $0x18] sm:$0xf]
        %v4602 = vld [vmem:[#allocation2 + $0x1c] sm:$0xf]
        %v4603 = vld [vmem:[#allocation2 + $0x20] sm:$0xf]
        %v4604 = vld [vmem:[#allocation2 + $0x24] sm:$0xf]
        %v4605 = vld [vmem:[#allocation2 + $0x28] sm:$0xf]
        %v4606 = vld [vmem:[#allocation2 + $0x2c] sm:$0xf]
        %v4607 = vld [vmem:[#allocation2 + $0x30] sm:$0xf]
        %v4608 = vld [vmem:[#allocation2 + $0x34] sm:$0xf]
        %v4609 = vld [vmem:[#allocation2 + $0x38] sm:$0xf]
        %v4610 = vld [vmem:[#allocation2 + $0x3c] sm:$0xf]
        %v4611 = vld [vmem:[#allocation2 + $0x40] sm:$0xf]
        %v4612 = vld [vmem:[#allocation2 + $0x44] sm:$0xf]
        %v4613 = vld [vmem:[#allocation2 + $0x48] sm:$0xf]
        %v4614 = vld [vmem:[#allocation2 + $0x4c] sm:$0xf]
        %v4615 = vld [vmem:[#allocation2 + $0x50] sm:$0xf]
        %v4616 = vld [vmem:[#allocation2 + $0x54] sm:$0xf]
        %v4617 = vld [vmem:[#allocation2 + $0x58] sm:$0xf]
        %v4618 = vld [vmem:[#allocation2 + $0x5c] sm:$0xf]
        %v4619 = vld [vmem:[#allocation2 + $0x60] sm:$0xf]
        %v4620 = vld [vmem:[#allocation2 + $0x64] sm:$0xf]
        %v4621 = vld [vmem:[#allocation2 + $0x68] sm:$0xf]
        %v4622 = vld [vmem:[#allocation2 + $0x6c] sm:$0xf]
        %v4623 = vld [vmem:[#allocation2 + $0x70] sm:$0xf]
        %v4624 = vld [vmem:[#allocation2 + $0x74] sm:$0xf]
        %v4625 = vld [vmem:[#allocation2 + $0x78] sm:$0xf]
        %v4626 = vld [vmem:[#allocation2 + $0x7c] sm:$0xf]
        %v4627 = vld [vmem:[#allocation2 + $0x80] sm:$0xf]
        %v4628 = vld [vmem:[#allocation2 + $0x84] sm:$0xf]
        %v4629 = vld [vmem:[#allocation2 + $0x88] sm:$0xf]
        %v4630 = vld [vmem:[#allocation2 + $0x8c] sm:$0xf]
        %v4631 = vld [vmem:[#allocation2 + $0x90] sm:$0xf]
        %v4632 = vld [vmem:[#allocation2 + $0x94] sm:$0x1]
        %v4633 = vsel %vm2334, %v4600, 0
        %v4634 = vsel %vm2335, %v4601, 0
        %v4635 = vsel %vm2336, %v4602, 0
        %v4636 = vsel %vm2337, %v4603, 0
        %v4637 = vsel %vm2338, %v4604, 0
        %v4638 = vsel %vm2339, %v4605, 0
        %v4639 = vsel %vm2340, %v4606, 0
        %v4640 = vsel %vm2341, %v4607, 0
        %v4641 = vsel %vm2342, %v4608, 0
        %v4642 = vsel %vm2343, %v4609, 0
        %v4643 = vsel %vm2344, %v4610, 0
        %v4644 = vsel %vm2345, %v4611, 0
        %v4645 = vsel %vm2346, %v4612, 0
        %v4646 = vsel %vm2347, %v4613, 0
        %v4647 = vsel %vm2348, %v4614, 0
        %v4648 = vsel %vm2349, %v4615, 0
        %v4649 = vsel %vm2350, %v4616, 0
        %v4650 = vsel %vm2351, %v4617, 0
        %v4651 = vsel %vm2352, %v4618, 0
        %v4652 = vsel %vm2353, %v4619, 0
        %v4653 = vsel %vm2354, %v4620, 0
        %v4654 = vsel %vm2355, %v4621, 0
        %v4655 = vsel %vm2356, %v4622, 0
        %v4656 = vsel %vm2357, %v4623, 0
        %v4657 = vsel %vm2358, %v4624, 0
        %v4658 = vsel %vm2359, %v4625, 0
        %v4659 = vsel %vm2360, %v4626, 0
        %v4660 = vsel %vm2361, %v4627, 0
        %v4661 = vsel %vm2362, %v4628, 0
        %v4662 = vsel %vm2363, %v4629, 0
        %v4663 = vsel %vm2364, %v4630, 0
        %v4664 = vsel %vm2365, %v4631, 0
        %v4665 = vsel %vm2366, %v4632, 0
        %v4667 = vshrl.u32 %v4633, 16
        %v4669 = vrot.slane %v4667, 4
        %v4670 = vshll.u32 %v4633, 16
        %v4672 = vrot.slane %v4670, 5
        %v4673 = vor.u32 %v4669, %v4672
        %v4674 = vrot.slane %v4673, 4
        %v4676 = vshll.u32 %v4634, 16
        %v4678 = vrot.slane %v4676, 5
        %v4679 = vsel %vm948, %v4674, %v4678
        %v4680 = vshrl.u32 %v4634, 16
        %v4682 = vrot.slane %v4680, 4
        %v4683 = vor.u32 %v4682, %v4678
        %v4684 = vrot.slane %v4683, 4
        %v4686 = vshll.u32 %v4635, 16
        %v4688 = vrot.slane %v4686, 5
        %v4689 = vsel %vm948, %v4684, %v4688
        %v4690 = vshrl.u32 %v4635, 16
        %v4692 = vrot.slane %v4690, 4
        %v4693 = vor.u32 %v4692, %v4688
        %v4694 = vrot.slane %v4693, 4
        %v4696 = vshll.u32 %v4636, 16
        %v4698 = vrot.slane %v4696, 5
        %v4699 = vsel %vm948, %v4694, %v4698
        %v4700 = vshrl.u32 %v4636, 16
        %v4702 = vrot.slane %v4700, 4
        %v4703 = vor.u32 %v4702, %v4698
        %v4704 = vrot.slane %v4703, 4
        %v4706 = vshll.u32 %v4637, 16
        %v4708 = vrot.slane %v4706, 5
        %v4709 = vsel %vm948, %v4704, %v4708
        %v4710 = vshrl.u32 %v4637, 16
        %v4712 = vrot.slane %v4710, 4
        %v4713 = vor.u32 %v4712, %v4708
        %v4714 = vrot.slane %v4713, 4
        %v4716 = vshll.u32 %v4638, 16
        %v4718 = vrot.slane %v4716, 5
        %v4719 = vsel %vm948, %v4714, %v4718
        %v4720 = vshrl.u32 %v4638, 16
        %v4722 = vrot.slane %v4720, 4
        %v4723 = vor.u32 %v4722, %v4718
        %v4724 = vrot.slane %v4723, 4
        %v4726 = vshll.u32 %v4639, 16
        %v4728 = vrot.slane %v4726, 5
        %v4729 = vsel %vm948, %v4724, %v4728
        %v4730 = vshrl.u32 %v4639, 16
        %v4732 = vrot.slane %v4730, 4
        %v4733 = vor.u32 %v4732, %v4728
        %v4734 = vrot.slane %v4733, 4
        %v4736 = vshll.u32 %v4640, 16
        %v4738 = vrot.slane %v4736, 5
        %v4739 = vsel %vm948, %v4734, %v4738
        %v4740 = vshrl.u32 %v4640, 16
        %v4742 = vrot.slane %v4740, 4
        %v4743 = vor.u32 %v4742, %v4738
        %v4744 = vrot.slane %v4743, 4
        %v4746 = vshll.u32 %v4641, 16
        %v4748 = vrot.slane %v4746, 5
        %v4749 = vsel %vm948, %v4744, %v4748
        %v4750 = vshrl.u32 %v4641, 16
        %v4752 = vrot.slane %v4750, 4
        %v4753 = vor.u32 %v4752, %v4748
        %v4754 = vrot.slane %v4753, 4
        %v4756 = vshll.u32 %v4642, 16
        %v4758 = vrot.slane %v4756, 5
        %v4759 = vsel %vm948, %v4754, %v4758
        %v4760 = vshrl.u32 %v4642, 16
        %v4762 = vrot.slane %v4760, 4
        %v4763 = vor.u32 %v4762, %v4758
        %v4764 = vrot.slane %v4763, 4
        %v4766 = vshll.u32 %v4643, 16
        %v4768 = vrot.slane %v4766, 5
        %v4769 = vsel %vm948, %v4764, %v4768
        %v4770 = vshrl.u32 %v4643, 16
        %v4772 = vrot.slane %v4770, 4
        %v4773 = vor.u32 %v4772, %v4768
        %v4774 = vrot.slane %v4773, 4
        %v4776 = vshll.u32 %v4644, 16
        %v4778 = vrot.slane %v4776, 5
        %v4779 = vsel %vm948, %v4774, %v4778
        %v4780 = vshrl.u32 %v4644, 16
        %v4782 = vrot.slane %v4780, 4
        %v4783 = vor.u32 %v4782, %v4778
        %v4784 = vrot.slane %v4783, 4
        %v4786 = vshll.u32 %v4645, 16
        %v4788 = vrot.slane %v4786, 5
        %v4789 = vsel %vm948, %v4784, %v4788
        %v4790 = vshrl.u32 %v4645, 16
        %v4792 = vrot.slane %v4790, 4
        %v4793 = vor.u32 %v4792, %v4788
        %v4794 = vrot.slane %v4793, 4
        %v4796 = vshll.u32 %v4646, 16
        %v4798 = vrot.slane %v4796, 5
        %v4799 = vsel %vm948, %v4794, %v4798
        %v4800 = vshrl.u32 %v4646, 16
        %v4802 = vrot.slane %v4800, 4
        %v4803 = vor.u32 %v4802, %v4798
        %v4804 = vrot.slane %v4803, 4
        %v4806 = vshll.u32 %v4647, 16
        %v4808 = vrot.slane %v4806, 5
        %v4809 = vsel %vm948, %v4804, %v4808
        %v4810 = vshrl.u32 %v4647, 16
        %v4812 = vrot.slane %v4810, 4
        %v4813 = vor.u32 %v4812, %v4808
        %v4814 = vrot.slane %v4813, 4
        %v4816 = vshll.u32 %v4648, 16
        %v4818 = vrot.slane %v4816, 5
        %v4819 = vsel %vm948, %v4814, %v4818
        %v4820 = vshrl.u32 %v4648, 16
        %v4822 = vrot.slane %v4820, 4
        %v4823 = vor.u32 %v4822, %v4818
        %v4824 = vrot.slane %v4823, 4
        %v4826 = vshll.u32 %v4649, 16
        %v4828 = vrot.slane %v4826, 5
        %v4829 = vsel %vm948, %v4824, %v4828
        %v4830 = vshrl.u32 %v4649, 16
        %v4832 = vrot.slane %v4830, 4
        %v4833 = vor.u32 %v4832, %v4828
        %v4834 = vrot.slane %v4833, 4
        %v4836 = vshll.u32 %v4650, 16
        %v4838 = vrot.slane %v4836, 5
        %v4839 = vsel %vm948, %v4834, %v4838
        %v4840 = vshrl.u32 %v4650, 16
        %v4842 = vrot.slane %v4840, 4
        %v4843 = vor.u32 %v4842, %v4838
        %v4844 = vrot.slane %v4843, 4
        %v4846 = vshll.u32 %v4651, 16
        %v4848 = vrot.slane %v4846, 5
        %v4849 = vsel %vm948, %v4844, %v4848
        %v4850 = vshrl.u32 %v4651, 16
        %v4852 = vrot.slane %v4850, 4
        %v4853 = vor.u32 %v4852, %v4848
        %v4854 = vrot.slane %v4853, 4
        %v4856 = vshll.u32 %v4652, 16
        %v4858 = vrot.slane %v4856, 5
        %v4859 = vsel %vm948, %v4854, %v4858
        %v4860 = vshrl.u32 %v4652, 16
        %v4862 = vrot.slane %v4860, 4
        %v4863 = vor.u32 %v4862, %v4858
        %v4864 = vrot.slane %v4863, 4
        %v4866 = vshll.u32 %v4653, 16
        %v4868 = vrot.slane %v4866, 5
        %v4869 = vsel %vm948, %v4864, %v4868
        %v4870 = vshrl.u32 %v4653, 16
        %v4872 = vrot.slane %v4870, 4
        %v4873 = vor.u32 %v4872, %v4868
        %v4874 = vrot.slane %v4873, 4
        %v4876 = vshll.u32 %v4654, 16
        %v4878 = vrot.slane %v4876, 5
        %v4879 = vsel %vm948, %v4874, %v4878
        %v4880 = vshrl.u32 %v4654, 16
        %v4882 = vrot.slane %v4880, 4
        %v4883 = vor.u32 %v4882, %v4878
        %v4884 = vrot.slane %v4883, 4
        %v4886 = vshll.u32 %v4655, 16
        %v4888 = vrot.slane %v4886, 5
        %v4889 = vsel %vm948, %v4884, %v4888
        %v4890 = vshrl.u32 %v4655, 16
        %v4892 = vrot.slane %v4890, 4
        %v4893 = vor.u32 %v4892, %v4888
        %v4894 = vrot.slane %v4893, 4
        %v4896 = vshll.u32 %v4656, 16
        %v4898 = vrot.slane %v4896, 5
        %v4899 = vsel %vm948, %v4894, %v4898
        %v4900 = vshrl.u32 %v4656, 16
        %v4902 = vrot.slane %v4900, 4
        %v4903 = vor.u32 %v4902, %v4898
        %v4904 = vrot.slane %v4903, 4
        %v4906 = vshll.u32 %v4657, 16
        %v4908 = vrot.slane %v4906, 5
        %v4909 = vsel %vm948, %v4904, %v4908
        %v4910 = vshrl.u32 %v4657, 16
        %v4912 = vrot.slane %v4910, 4
        %v4913 = vor.u32 %v4912, %v4908
        %v4914 = vrot.slane %v4913, 4
        %v4916 = vshll.u32 %v4658, 16
        %v4918 = vrot.slane %v4916, 5
        %v4919 = vsel %vm948, %v4914, %v4918
        %v4920 = vshrl.u32 %v4658, 16
        %v4922 = vrot.slane %v4920, 4
        %v4923 = vor.u32 %v4922, %v4918
        %v4924 = vrot.slane %v4923, 4
        %v4926 = vshll.u32 %v4659, 16
        %v4928 = vrot.slane %v4926, 5
        %v4929 = vsel %vm948, %v4924, %v4928
        %v4930 = vshrl.u32 %v4659, 16
        %v4932 = vrot.slane %v4930, 4
        %v4933 = vor.u32 %v4932, %v4928
        %v4934 = vrot.slane %v4933, 4
        %v4936 = vshll.u32 %v4660, 16
        %v4938 = vrot.slane %v4936, 5
        %v4939 = vsel %vm948, %v4934, %v4938
        %v4940 = vshrl.u32 %v4660, 16
        %v4942 = vrot.slane %v4940, 4
        %v4943 = vor.u32 %v4942, %v4938
        %v4944 = vrot.slane %v4943, 4
        %v4946 = vshll.u32 %v4661, 16
        %v4948 = vrot.slane %v4946, 5
        %v4949 = vsel %vm948, %v4944, %v4948
        %v4950 = vshrl.u32 %v4661, 16
        %v4952 = vrot.slane %v4950, 4
        %v4953 = vor.u32 %v4952, %v4948
        %v4954 = vrot.slane %v4953, 4
        %v4956 = vshll.u32 %v4662, 16
        %v4958 = vrot.slane %v4956, 5
        %v4959 = vsel %vm948, %v4954, %v4958
        %v4960 = vshrl.u32 %v4662, 16
        %v4962 = vrot.slane %v4960, 4
        %v4963 = vor.u32 %v4962, %v4958
        %v4964 = vrot.slane %v4963, 4
        %v4966 = vshll.u32 %v4663, 16
        %v4968 = vrot.slane %v4966, 5
        %v4969 = vsel %vm948, %v4964, %v4968
        %v4970 = vshrl.u32 %v4663, 16
        %v4972 = vrot.slane %v4970, 4
        %v4973 = vor.u32 %v4972, %v4968
        %v4974 = vrot.slane %v4973, 4
        %v4976 = vshll.u32 %v4664, 16
        %v4978 = vrot.slane %v4976, 5
        %v4979 = vsel %vm948, %v4974, %v4978
        %v4980 = vshrl.u32 %v4664, 16
        %v4982 = vrot.slane %v4980, 4
        %v4983 = vor.u32 %v4982, %v4978
        %v4984 = vrot.slane %v4983, 4
        %v4986 = vshll.u32 %v4665, 16
        %v4988 = vrot.slane %v4986, 5
        %v4989 = vsel %vm948, %v4984, %v4988
        %5022 = vst.msk [vmem:[#allocation3 + $0x8] sm:$0xf] %vm226, %v4679
        %5023 = vst.msk [vmem:[#allocation3 + $0x14] sm:$0xf] %vm226, %v4689
        %5024 = vst.msk [vmem:[#allocation3 + $0x20] sm:$0xf] %vm226, %v4699
        %5025 = vst.msk [vmem:[#allocation3 + $0x2c] sm:$0xf] %vm226, %v4709
        %5026 = vst.msk [vmem:[#allocation3 + $0x38] sm:$0xf] %vm226, %v4719
        %5027 = vst.msk [vmem:[#allocation3 + $0x44] sm:$0xf] %vm226, %v4729
        %5028 = vst.msk [vmem:[#allocation3 + $0x50] sm:$0xf] %vm226, %v4739
        %5029 = vst.msk [vmem:[#allocation3 + $0x5c] sm:$0xf] %vm226, %v4749
        %5030 = vst.msk [vmem:[#allocation3 + $0x68] sm:$0xf] %vm226, %v4759
        %5031 = vst.msk [vmem:[#allocation3 + $0x74] sm:$0xf] %vm226, %v4769
        %5032 = vst.msk [vmem:[#allocation3 + $0x80] sm:$0xf] %vm226, %v4779
        %5033 = vst.msk [vmem:[#allocation3 + $0x8c] sm:$0xf] %vm226, %v4789
        %5034 = vst.msk [vmem:[#allocation3 + $0x98] sm:$0xf] %vm226, %v4799
        %5035 = vst.msk [vmem:[#allocation3 + $0xa4] sm:$0xf] %vm226, %v4809
        %5036 = vst.msk [vmem:[#allocation3 + $0xb0] sm:$0xf] %vm226, %v4819
        %5037 = vst.msk [vmem:[#allocation3 + $0xbc] sm:$0xf] %vm226, %v4829
        %5038 = vst.msk [vmem:[#allocation3 + $0xc8] sm:$0xf] %vm226, %v4839
        %5039 = vst.msk [vmem:[#allocation3 + $0xd4] sm:$0xf] %vm226, %v4849
        %5040 = vst.msk [vmem:[#allocation3 + $0xe0] sm:$0xf] %vm226, %v4859
        %5041 = vst.msk [vmem:[#allocation3 + $0xec] sm:$0xf] %vm226, %v4869
        %5042 = vst.msk [vmem:[#allocation3 + $0xf8] sm:$0xf] %vm226, %v4879
        %5043 = vst.msk [vmem:[#allocation3 + $0x104] sm:$0xf] %vm226, %v4889
        %5044 = vst.msk [vmem:[#allocation3 + $0x110] sm:$0xf] %vm226, %v4899
        %5045 = vst.msk [vmem:[#allocation3 + $0x11c] sm:$0xf] %vm226, %v4909
        %5046 = vst.msk [vmem:[#allocation3 + $0x128] sm:$0xf] %vm226, %v4919
        %5047 = vst.msk [vmem:[#allocation3 + $0x134] sm:$0xf] %vm226, %v4929
        %5048 = vst.msk [vmem:[#allocation3 + $0x140] sm:$0xf] %vm226, %v4939
        %5049 = vst.msk [vmem:[#allocation3 + $0x14c] sm:$0xf] %vm226, %v4949
        %5050 = vst.msk [vmem:[#allocation3 + $0x158] sm:$0xf] %vm226, %v4959
        %5051 = vst.msk [vmem:[#allocation3 + $0x164] sm:$0xf] %vm226, %v4969
        %5052 = vst.msk [vmem:[#allocation3 + $0x170] sm:$0xf] %vm226, %v4979
        %5053 = vst.msk [vmem:[#allocation3 + $0x17c] sm:$0xf] %vm226, %v4989
        %v5054 = vld [vmem:[%s2] sm:$0x1]
        %v5055 = vld [vmem:[#allocation3] sm:$0xff]
        %v5056 = vld [vmem:[#allocation3 + $0x8] sm:$0xf]
        %v5057 = vld [vmem:[#allocation3 + $0xc] sm:$0xff]
        %v5058 = vld [vmem:[#allocation3 + $0x14] sm:$0xf]
        %v5059 = vld [vmem:[#allocation3 + $0x18] sm:$0xff]
        %v5060 = vld [vmem:[#allocation3 + $0x20] sm:$0xf]
        %v5061 = vld [vmem:[#allocation3 + $0x24] sm:$0xff]
        %v5062 = vld [vmem:[#allocation3 + $0x2c] sm:$0xf]
        %v5063 = vld [vmem:[#allocation3 + $0x30] sm:$0xff]
        %v5064 = vld [vmem:[#allocation3 + $0x38] sm:$0xf]
        %v5065 = vld [vmem:[#allocation3 + $0x3c] sm:$0xff]
        %v5066 = vld [vmem:[#allocation3 + $0x44] sm:$0xf]
        %v5067 = vld [vmem:[#allocation3 + $0x48] sm:$0xff]
        %v5068 = vld [vmem:[#allocation3 + $0x50] sm:$0xf]
        %v5069 = vld [vmem:[#allocation3 + $0x54] sm:$0xff]
        %v5070 = vld [vmem:[#allocation3 + $0x5c] sm:$0xf]
        %v5071 = vld [vmem:[#allocation3 + $0x60] sm:$0xff]
        %v5072 = vld [vmem:[#allocation3 + $0x68] sm:$0xf]
        %v5073 = vld [vmem:[#allocation3 + $0x6c] sm:$0xff]
        %v5074 = vld [vmem:[#allocation3 + $0x74] sm:$0xf]
        %v5075 = vld [vmem:[#allocation3 + $0x78] sm:$0xff]
        %v5076 = vld [vmem:[#allocation3 + $0x80] sm:$0xf]
        %v5077 = vld [vmem:[#allocation3 + $0x84] sm:$0xff]
        %v5078 = vld [vmem:[#allocation3 + $0x8c] sm:$0xf]
        %v5079 = vld [vmem:[#allocation3 + $0x90] sm:$0xff]
        %v5080 = vld [vmem:[#allocation3 + $0x98] sm:$0xf]
        %v5081 = vld [vmem:[#allocation3 + $0x9c] sm:$0xff]
        %v5082 = vld [vmem:[#allocation3 + $0xa4] sm:$0xf]
        %v5083 = vld [vmem:[#allocation3 + $0xa8] sm:$0xff]
        %v5084 = vld [vmem:[#allocation3 + $0xb0] sm:$0xf]
        %v5085 = vld [vmem:[#allocation3 + $0xb4] sm:$0xff]
        %v5086 = vld [vmem:[#allocation3 + $0xbc] sm:$0xf]
        %v5087 = vld [vmem:[%s1] sm:$0xf]
        %v5088 = vld [vmem:[%s1 + $0x4] sm:$0xf]
        %v5089 = vld [vmem:[%s1 + $0x8] sm:$0xf]
        %v5090 = vld [vmem:[%s1 + $0xc] sm:$0xf]
        %v5091 = vld [vmem:[%s1 + $0x10] sm:$0xf]
        %v5092 = vld [vmem:[%s1 + $0x14] sm:$0xf]
        %v5093 = vld [vmem:[%s1 + $0x18] sm:$0xf]
        %v5094 = vld [vmem:[%s1 + $0x1c] sm:$0xf]
        %v5095 = vld [vmem:[%s1 + $0x20] sm:$0xf]
        %v5096 = vld [vmem:[%s1 + $0x24] sm:$0xf]
        %v5097 = vld [vmem:[%s1 + $0x28] sm:$0xf]
        %v5098 = vld [vmem:[%s1 + $0x2c] sm:$0xf]
        %v5099 = vld [vmem:[%s1 + $0x30] sm:$0xf]
        %v5100 = vld [vmem:[%s1 + $0x34] sm:$0xf]
        %v5101 = vld [vmem:[%s1 + $0x38] sm:$0xf]
        %v5102 = vld [vmem:[%s1 + $0x3c] sm:$0xf]
        %v5103 = vld [vmem:[%s1 + $0x40] sm:$0xf]
        %v5104 = vld [vmem:[%s1 + $0x44] sm:$0xf]
        %v5105 = vld [vmem:[%s1 + $0x48] sm:$0xf]
        %v5106 = vld [vmem:[%s1 + $0x4c] sm:$0xf]
        %v5107 = vld [vmem:[%s1 + $0x50] sm:$0xf]
        %v5108 = vld [vmem:[%s1 + $0x54] sm:$0xf]
        %v5109 = vld [vmem:[%s1 + $0x58] sm:$0xf]
        %v5110 = vld [vmem:[%s1 + $0x5c] sm:$0xf]
        %v5111 = vld [vmem:[%s1 + $0x60] sm:$0xf]
        %v5112 = vld [vmem:[%s1 + $0x64] sm:$0xf]
        %v5113 = vld [vmem:[%s1 + $0x68] sm:$0xf]
        %v5114 = vld [vmem:[%s1 + $0x6c] sm:$0xf]
        %v5115 = vld [vmem:[%s1 + $0x70] sm:$0xf]
        %v5116 = vld [vmem:[%s1 + $0x74] sm:$0xf]
        %v5117 = vld [vmem:[%s1 + $0x78] sm:$0xf]
        %v5118 = vld [vmem:[%s1 + $0x7c] sm:$0xf]
        %v5119 = vld [vmem:[%s1 + $0x80] sm:$0xf]
        %v5120 = vld [vmem:[%s1 + $0x84] sm:$0xf]
        %v5121 = vld [vmem:[%s1 + $0x88] sm:$0xf]
        %v5122 = vld [vmem:[%s1 + $0x8c] sm:$0xf]
        %v5124 = vlaneseq
        %v5125 = vshrl.u32 %v5124, 7
        %v5126 = vsub.s32 0, %v5125
        %v5127 = vrot.slane %v5054, %v5126
        %v5161 = vunpack.c.l.b16 %v5055
        %v5162 = vunpack.c.h.b16 %v5055
        %v5163 = vunpack.c.l.b16 %v5056
        %v5164 = vunpack.c.l.b16 %v5057
        %v5165 = vunpack.c.h.b16 %v5057
        %v5166 = vunpack.c.l.b16 %v5058
        %v5167 = vunpack.c.l.b16 %v5059
        %v5168 = vunpack.c.h.b16 %v5059
        %v5169 = vunpack.c.l.b16 %v5060
        %v5170 = vunpack.c.l.b16 %v5061
        %v5171 = vunpack.c.h.b16 %v5061
        %v5172 = vunpack.c.l.b16 %v5062
        %v5173 = vunpack.c.l.b16 %v5063
        %v5174 = vunpack.c.h.b16 %v5063
        %v5175 = vunpack.c.l.b16 %v5064
        %v5176 = vunpack.c.l.b16 %v5065
        %v5177 = vunpack.c.h.b16 %v5065
        %v5178 = vunpack.c.l.b16 %v5066
        %v5179 = vunpack.c.l.b16 %v5067
        %v5180 = vunpack.c.h.b16 %v5067
        %v5181 = vunpack.c.l.b16 %v5068
        %v5182 = vunpack.c.l.b16 %v5069
        %v5183 = vunpack.c.h.b16 %v5069
        %v5184 = vunpack.c.l.b16 %v5070
        %v5185 = vunpack.c.l.b16 %v5071
        %v5186 = vunpack.c.h.b16 %v5071
        %v5187 = vunpack.c.l.b16 %v5072
        %v5188 = vunpack.c.l.b16 %v5073
        %v5189 = vunpack.c.h.b16 %v5073
        %v5190 = vunpack.c.l.b16 %v5074
        %v5191 = vunpack.c.l.b16 %v5075
        %v5192 = vunpack.c.h.b16 %v5075
        %v5193 = vunpack.c.l.b16 %v5076
        %v5194 = vunpack.c.l.b16 %v5077
        %v5195 = vunpack.c.h.b16 %v5077
        %v5196 = vunpack.c.l.b16 %v5078
        %v5197 = vunpack.c.l.b16 %v5079
        %v5198 = vunpack.c.h.b16 %v5079
        %v5199 = vunpack.c.l.b16 %v5080
        %v5200 = vunpack.c.l.b16 %v5081
        %v5201 = vunpack.c.h.b16 %v5081
        %v5202 = vunpack.c.l.b16 %v5082
        %v5203 = vunpack.c.l.b16 %v5083
        %v5204 = vunpack.c.h.b16 %v5083
        %v5205 = vunpack.c.l.b16 %v5084
        %v5206 = vunpack.c.l.b16 %v5085
        %v5207 = vunpack.c.h.b16 %v5085
        %v5208 = vunpack.c.l.b16 %v5086
        %v5209 = vpack.c.b16 %v5164, %v5161
        %v5210 = vpack.c.b16 %v5165, %v5162
        %v5211 = vpack.c.b16 %v5166, %v5163
        %v5212 = vpack.c.b16 %v5170, %v5167
        %v5213 = vpack.c.b16 %v5171, %v5168
        %v5214 = vpack.c.b16 %v5172, %v5169
        %v5215 = vpack.c.b16 %v5176, %v5173
        %v5216 = vpack.c.b16 %v5177, %v5174
        %v5217 = vpack.c.b16 %v5178, %v5175
        %v5218 = vpack.c.b16 %v5182, %v5179
        %v5219 = vpack.c.b16 %v5183, %v5180
        %v5220 = vpack.c.b16 %v5184, %v5181
        %v5221 = vpack.c.b16 %v5188, %v5185
        %v5222 = vpack.c.b16 %v5189, %v5186
        %v5223 = vpack.c.b16 %v5190, %v5187
        %v5224 = vpack.c.b16 %v5194, %v5191
        %v5225 = vpack.c.b16 %v5195, %v5192
        %v5226 = vpack.c.b16 %v5196, %v5193
        %v5227 = vpack.c.b16 %v5200, %v5197
        %v5228 = vpack.c.b16 %v5201, %v5198
        %v5229 = vpack.c.b16 %v5202, %v5199
        %v5230 = vpack.c.b16 %v5206, %v5203
        %v5231 = vpack.c.b16 %v5207, %v5204
        %v5232 = vpack.c.b16 %v5208, %v5205
        %v5285 = vunpack.c.l.b16 %v5087
        %v5286 = vunpack.c.l.b16 %v5088
        %v5287 = vunpack.c.l.b16 %v5089
        %v5288 = vunpack.c.l.b16 %v5090
        %v5289 = vunpack.c.l.b16 %v5091
        %v5290 = vunpack.c.l.b16 %v5092
        %v5291 = vunpack.c.l.b16 %v5093
        %v5292 = vunpack.c.l.b16 %v5094
        %v5293 = vunpack.c.l.b16 %v5095
        %v5294 = vunpack.c.l.b16 %v5096
        %v5295 = vunpack.c.l.b16 %v5097
        %v5296 = vunpack.c.l.b16 %v5098
        %v5297 = vunpack.c.l.b16 %v5099
        %v5298 = vunpack.c.l.b16 %v5100
        %v5299 = vunpack.c.l.b16 %v5101
        %v5300 = vunpack.c.l.b16 %v5102
        %v5301 = vunpack.c.l.b16 %v5103
        %v5302 = vunpack.c.l.b16 %v5104
        %v5303 = vunpack.c.l.b16 %v5105
        %v5304 = vunpack.c.l.b16 %v5106
        %v5305 = vunpack.c.l.b16 %v5107
        %v5306 = vunpack.c.l.b16 %v5108
        %v5307 = vunpack.c.l.b16 %v5109
        %v5308 = vunpack.c.l.b16 %v5110
        %v5309 = vunpack.c.l.b16 %v5111
        %v5310 = vunpack.c.l.b16 %v5112
        %v5311 = vunpack.c.l.b16 %v5113
        %v5312 = vunpack.c.l.b16 %v5114
        %v5313 = vunpack.c.l.b16 %v5115
        %v5314 = vunpack.c.l.b16 %v5116
        %v5315 = vunpack.c.l.b16 %v5117
        %v5316 = vunpack.c.l.b16 %v5118
        %v5317 = vunpack.c.l.b16 %v5119
        %v5318 = vunpack.c.l.b16 %v5120
        %v5319 = vunpack.c.l.b16 %v5121
        %v5320 = vunpack.c.l.b16 %v5122
        %v5321 = vpack.c.b16 %v5286, %v5285
        %v5322 = vpack.c.b16 %v5288, %v5287
        %v5323 = vpack.c.b16 %v5290, %v5289
        %v5324 = vpack.c.b16 %v5292, %v5291
        %v5325 = vpack.c.b16 %v5294, %v5293
        %v5326 = vpack.c.b16 %v5296, %v5295
        %v5327 = vpack.c.b16 %v5298, %v5297
        %v5328 = vpack.c.b16 %v5300, %v5299
        %v5329 = vpack.c.b16 %v5302, %v5301
        %v5330 = vpack.c.b16 %v5304, %v5303
        %v5331 = vpack.c.b16 %v5306, %v5305
        %v5332 = vpack.c.b16 %v5308, %v5307
        %v5333 = vpack.c.b16 %v5310, %v5309
        %v5334 = vpack.c.b16 %v5312, %v5311
        %v5335 = vpack.c.b16 %v5314, %v5313
        %v5336 = vpack.c.b16 %v5316, %v5315
        %v5337 = vpack.c.b16 %v5318, %v5317
        %v5338 = vpack.c.b16 %v5320, %v5319
        %vm5357 = vcmask 261120
        %v5359 = vsel %vm5357, %v5211, 0
        %v5362 = vsel %vm5357, %v5214, 0
        %v5365 = vsel %vm5357, %v5217, 0
        %v5368 = vsel %vm5357, %v5220, 0
        %v5371 = vsel %vm5357, %v5223, 0
        %v5374 = vsel %vm5357, %v5226, 0
        %v5377 = vsel %vm5357, %v5229, 0
        %v5380 = vsel %vm5357, %v5232, 0
        %5382 = vmatprep.subr.bf16.mxu0 0
        %5383 = vmatpush1.bf16.msra.mxu0 %v5328
        %5384 = vmatprep.subr.bf16.mxu0 0
        %5385 = vmatpush1.bf16.msra.mxu0 %v5327
        %5386 = vmatprep.subr.bf16.mxu0 0
        %5387 = vmatpush1.bf16.msra.mxu0 %v5326
        %5388 = vmatprep.subr.bf16.mxu0 0
        %5389 = vmatpush1.bf16.msra.mxu0 %v5325
        %5390 = vmatprep.subr.bf16.mxu0 0
        %5391 = vmatpush1.bf16.msra.mxu0 %v5324
        %5392 = vmatprep.subr.bf16.mxu0 0
        %5393 = vmatpush1.bf16.msra.mxu0 %v5323
        %5394 = vmatprep.subr.bf16.mxu0 0
        %5395 = vmatpush1.bf16.msra.mxu0 %v5322
        %5396 = vmatprep.subr.bf16.mxu0 0
        %5397 = vmatpush1.bf16.msra.mxu0 %v5321
        %5398 = vmatprep.subr.bf16.mxu0 0
        %5399 = vmatpush2.bf16.msra.mxu0 %v5336
        %5400 = vmatprep.subr.bf16.mxu0 0
        %5401 = vmatpush2.bf16.msra.mxu0 %v5335
        %5402 = vmatprep.subr.bf16.mxu0 0
        %5403 = vmatpush2.bf16.msra.mxu0 %v5334
        %5404 = vmatprep.subr.bf16.mxu0 0
        %5405 = vmatpush2.bf16.msra.mxu0 %v5333
        %5406 = vmatprep.subr.bf16.mxu0 0
        %5407 = vmatpush2.bf16.msra.mxu0 %v5332
        %5408 = vmatprep.subr.bf16.mxu0 0
        %5409 = vmatpush2.bf16.msra.mxu0 %v5331
        %5410 = vmatprep.subr.bf16.mxu0 0
        %5411 = vmatpush2.bf16.msra.mxu0 %v5330
        %5412 = vmatprep.subr.bf16.mxu0 0
        %5413 = vmatpush2.bf16.msra.mxu0 %v5329
        %5414 = vmatprep.mubr.bf16.mxu0 %v5210
        %5415 = vmatmul.mubr.bf16.gmra.mxu0 %v5209
        %v5416 = vpop.f32.mrf.mxu0
        %v5417 = vadd.f32 %v5127, %v5416
        %v5418 = vpop.f32.mrf.mxu0
        %v5419 = vpop.f32.mrf.mxu0
        %v5420 = vadd.f32 %v5127, %v5419
        %v5421 = vpop.f32.mrf.mxu0
        %5422 = vmatprep.mubr.bf16.mxu0 %v5213
        %5423 = vmatmul.mubr.bf16.gmra.mxu0 %v5212
        %v5424 = vpop.f32.mrf.mxu0
        %v5425 = vadd.f32 %v5127, %v5424
        %v5426 = vpop.f32.mrf.mxu0
        %v5427 = vpop.f32.mrf.mxu0
        %v5428 = vadd.f32 %v5127, %v5427
        %v5429 = vpop.f32.mrf.mxu0
        %5430 = vmatprep.mubr.bf16.mxu0 %v5216
        %5431 = vmatmul.mubr.bf16.gmra.mxu0 %v5215
        %v5432 = vpop.f32.mrf.mxu0
        %v5433 = vadd.f32 %v5127, %v5432
        %v5434 = vpop.f32.mrf.mxu0
        %v5435 = vpop.f32.mrf.mxu0
        %v5436 = vadd.f32 %v5127, %v5435
        %v5437 = vpop.f32.mrf.mxu0
        %5438 = vmatprep.mubr.bf16.mxu0 %v5219
        %5439 = vmatmul.mubr.bf16.gmra.mxu0 %v5218
        %v5440 = vpop.f32.mrf.mxu0
        %v5441 = vadd.f32 %v5127, %v5440
        %v5442 = vpop.f32.mrf.mxu0
        %v5443 = vpop.f32.mrf.mxu0
        %v5444 = vadd.f32 %v5127, %v5443
        %v5445 = vpop.f32.mrf.mxu0
        %5446 = vmatprep.mubr.bf16.mxu0 %v5222
        %5447 = vmatmul.mubr.bf16.gmra.mxu0 %v5221
        %v5448 = vpop.f32.mrf.mxu0
        %v5449 = vadd.f32 %v5127, %v5448
        %v5450 = vpop.f32.mrf.mxu0
        %v5451 = vpop.f32.mrf.mxu0
        %v5452 = vadd.f32 %v5127, %v5451
        %v5453 = vpop.f32.mrf.mxu0
        %5454 = vmatprep.mubr.bf16.mxu0 %v5225
        %5455 = vmatmul.mubr.bf16.gmra.mxu0 %v5224
        %v5456 = vpop.f32.mrf.mxu0
        %v5457 = vadd.f32 %v5127, %v5456
        %v5458 = vpop.f32.mrf.mxu0
        %v5459 = vpop.f32.mrf.mxu0
        %v5460 = vadd.f32 %v5127, %v5459
        %v5461 = vpop.f32.mrf.mxu0
        %5462 = vmatprep.mubr.bf16.mxu0 %v5228
        %5463 = vmatmul.mubr.bf16.gmra.mxu0 %v5227
        %v5464 = vpop.f32.mrf.mxu0
        %v5465 = vadd.f32 %v5127, %v5464
        %v5466 = vpop.f32.mrf.mxu0
        %v5467 = vpop.f32.mrf.mxu0
        %v5468 = vadd.f32 %v5127, %v5467
        %v5469 = vpop.f32.mrf.mxu0
        %5470 = vmatprep.mubr.bf16.mxu0 %v5231
        %5471 = vmatmul.mubr.bf16.gmra.mxu0 %v5230
        %v5472 = vpop.f32.mrf.mxu0
        %v5473 = vadd.f32 %v5127, %v5472
        %v5474 = vpop.f32.mrf.mxu0
        %v5475 = vpop.f32.mrf.mxu0
        %v5476 = vadd.f32 %v5127, %v5475
        %v5477 = vpop.f32.mrf.mxu0
        %5478 = vdwg.mxu0
        %5479 = vmatprep.subr.bf16.mxu0 0
        %5480 = vmatpush1.bf16.msra.mxu0 0
        %5481 = vmatprep.subr.bf16.mxu0 0
        %5482 = vmatpush1.bf16.msra.mxu0 0
        %5483 = vmatprep.subr.bf16.mxu0 0
        %5484 = vmatpush1.bf16.msra.mxu0 0
        %5485 = vmatprep.subr.bf16.mxu0 0
        %5486 = vmatpush1.bf16.msra.mxu0 0
        %5487 = vmatprep.subr.bf16.mxu0 0
        %5488 = vmatpush1.bf16.msra.mxu0 0
        %5489 = vmatprep.subr.bf16.mxu0 0
        %5490 = vmatpush1.bf16.msra.mxu0 0
        %5491 = vmatprep.subr.bf16.mxu0 0
        %5492 = vmatpush1.bf16.msra.mxu0 %v5338
        %5493 = vmatprep.subr.bf16.mxu0 0
        %5494 = vmatpush1.bf16.msra.mxu0 %v5337
        %5495 = vmatprep.subr.bf16.mxu0 0
        %5496 = vmatpush2.bf16.msra.mxu0 0
        %5497 = vmatprep.subr.bf16.mxu0 0
        %5498 = vmatpush2.bf16.msra.mxu0 0
        %5499 = vmatprep.subr.bf16.mxu0 0
        %5500 = vmatpush2.bf16.msra.mxu0 0
        %5501 = vmatprep.subr.bf16.mxu0 0
        %5502 = vmatpush2.bf16.msra.mxu0 0
        %5503 = vmatprep.subr.bf16.mxu0 0
        %5504 = vmatpush2.bf16.msra.mxu0 0
        %5505 = vmatprep.subr.bf16.mxu0 0
        %5506 = vmatpush2.bf16.msra.mxu0 0
        %5507 = vmatprep.subr.bf16.mxu0 0
        %5508 = vmatpush2.bf16.msra.mxu0 0
        %5509 = vmatprep.subr.bf16.mxu0 0
        %5510 = vmatpush2.bf16.msra.mxu0 0
        %5511 = vmatprep.mubr.bf16.mxu0 0
        %5512 = vmatmul.mubr.bf16.gmra.mxu0 %v5359
        %v5513 = vpop.f32.mrf.mxu0
        %v5514 = vadd.f32 %v5417, %v5513
        %v5515 = vpop.f32.mrf.mxu0
        %v5516 = vpop.f32.mrf.mxu0
        %v5517 = vadd.f32 %v5420, %v5516
        %v5518 = vpop.f32.mrf.mxu0
        %5519 = vmatprep.mubr.bf16.mxu0 0
        %5520 = vmatmul.mubr.bf16.gmra.mxu0 %v5362
        %v5521 = vpop.f32.mrf.mxu0
        %v5522 = vadd.f32 %v5425, %v5521
        %v5523 = vpop.f32.mrf.mxu0
        %v5524 = vpop.f32.mrf.mxu0
        %v5525 = vadd.f32 %v5428, %v5524
        %v5526 = vpop.f32.mrf.mxu0
        %5527 = vmatprep.mubr.bf16.mxu0 0
        %5528 = vmatmul.mubr.bf16.gmra.mxu0 %v5365
        %v5529 = vpop.f32.mrf.mxu0
        %v5530 = vadd.f32 %v5433, %v5529
        %v5531 = vpop.f32.mrf.mxu0
        %v5532 = vpop.f32.mrf.mxu0
        %v5533 = vadd.f32 %v5436, %v5532
        %v5534 = vpop.f32.mrf.mxu0
        %5535 = vmatprep.mubr.bf16.mxu0 0
        %5536 = vmatmul.mubr.bf16.gmra.mxu0 %v5368
        %v5537 = vpop.f32.mrf.mxu0
        %v5538 = vadd.f32 %v5441, %v5537
        %v5539 = vpop.f32.mrf.mxu0
        %v5540 = vpop.f32.mrf.mxu0
        %v5541 = vadd.f32 %v5444, %v5540
        %v5542 = vpop.f32.mrf.mxu0
        %5543 = vmatprep.mubr.bf16.mxu0 0
        %5544 = vmatmul.mubr.bf16.gmra.mxu0 %v5371
        %v5545 = vpop.f32.mrf.mxu0
        %v5546 = vadd.f32 %v5449, %v5545
        %v5547 = vpop.f32.mrf.mxu0
        %v5548 = vpop.f32.mrf.mxu0
        %v5549 = vadd.f32 %v5452, %v5548
        %v5550 = vpop.f32.mrf.mxu0
        %5551 = vmatprep.mubr.bf16.mxu0 0
        %5552 = vmatmul.mubr.bf16.gmra.mxu0 %v5374
        %v5553 = vpop.f32.mrf.mxu0
        %v5554 = vadd.f32 %v5457, %v5553
        %v5555 = vpop.f32.mrf.mxu0
        %v5556 = vpop.f32.mrf.mxu0
        %v5557 = vadd.f32 %v5460, %v5556
        %v5558 = vpop.f32.mrf.mxu0
        %5559 = vmatprep.mubr.bf16.mxu0 0
        %5560 = vmatmul.mubr.bf16.gmra.mxu0 %v5377
        %v5561 = vpop.f32.mrf.mxu0
        %v5562 = vadd.f32 %v5465, %v5561
        %v5563 = vpop.f32.mrf.mxu0
        %v5564 = vpop.f32.mrf.mxu0
        %v5565 = vadd.f32 %v5468, %v5564
        %v5566 = vpop.f32.mrf.mxu0
        %5567 = vmatprep.mubr.bf16.mxu0 0
        %5568 = vmatmul.mubr.bf16.gmra.mxu0 %v5380
        %v5569 = vpop.f32.mrf.mxu0
        %v5570 = vadd.f32 %v5473, %v5569
        %v5571 = vpop.f32.mrf.mxu0
        %v5572 = vpop.f32.mrf.mxu0
        %v5573 = vadd.f32 %v5476, %v5572
        %v5574 = vpop.f32.mrf.mxu0
        %5575 = vdwg.mxu0
        %v5576 = vmax.f32 %v5514, 0.0
        %v5577 = vmax.f32 %v5517, 0.0
        %v5578 = vmax.f32 %v5522, 0.0
        %v5579 = vmax.f32 %v5525, 0.0
        %v5580 = vmax.f32 %v5530, 0.0
        %v5581 = vmax.f32 %v5533, 0.0
        %v5582 = vmax.f32 %v5538, 0.0
        %v5583 = vmax.f32 %v5541, 0.0
        %v5584 = vmax.f32 %v5546, 0.0
        %v5585 = vmax.f32 %v5549, 0.0
        %v5586 = vmax.f32 %v5554, 0.0
        %v5587 = vmax.f32 %v5557, 0.0
        %v5588 = vmax.f32 %v5562, 0.0
        %v5589 = vmax.f32 %v5565, 0.0
        %v5590 = vmax.f32 %v5570, 0.0
        %v5591 = vmax.f32 %v5573, 0.0
        %v5592 = vpack.c.bf16 %v5577, %v5576
        %v5593 = vpack.c.bf16 %v5579, %v5578
        %v5594 = vpack.c.bf16 %v5581, %v5580
        %v5595 = vpack.c.bf16 %v5583, %v5582
        %v5596 = vpack.c.bf16 %v5585, %v5584
        %v5597 = vpack.c.bf16 %v5587, %v5586
        %v5598 = vpack.c.bf16 %v5589, %v5588
        %v5599 = vpack.c.bf16 %v5591, %v5590
        %v5608 = vunpack.c.l.b16 %v5592
        %v5609 = vunpack.c.h.b16 %v5592
        %v5610 = vunpack.c.l.b16 %v5593
        %v5611 = vunpack.c.h.b16 %v5593
        %v5612 = vunpack.c.l.b16 %v5594
        %v5613 = vunpack.c.h.b16 %v5594
        %v5614 = vunpack.c.l.b16 %v5595
        %v5615 = vunpack.c.h.b16 %v5595
        %v5616 = vunpack.c.l.b16 %v5596
        %v5617 = vunpack.c.h.b16 %v5596
        %v5618 = vunpack.c.l.b16 %v5597
        %v5619 = vunpack.c.h.b16 %v5597
        %v5620 = vunpack.c.l.b16 %v5598
        %v5621 = vunpack.c.h.b16 %v5598
        %v5622 = vunpack.c.l.b16 %v5599
        %v5623 = vunpack.c.h.b16 %v5599
        %v5624 = vpack.c.b16 %v5608, %v5608
        %v5625 = vpack.c.b16 %v5609, %v5609
        %v5626 = vpack.c.b16 %v5610, %v5610
        %v5627 = vpack.c.b16 %v5611, %v5611
        %v5628 = vpack.c.b16 %v5612, %v5612
        %v5629 = vpack.c.b16 %v5613, %v5613
        %v5630 = vpack.c.b16 %v5614, %v5614
        %v5631 = vpack.c.b16 %v5615, %v5615
        %v5632 = vpack.c.b16 %v5616, %v5616
        %v5633 = vpack.c.b16 %v5617, %v5617
        %v5634 = vpack.c.b16 %v5618, %v5618
        %v5635 = vpack.c.b16 %v5619, %v5619
        %v5636 = vpack.c.b16 %v5620, %v5620
        %v5637 = vpack.c.b16 %v5621, %v5621
        %v5638 = vpack.c.b16 %v5622, %v5622
        %v5639 = vpack.c.b16 %v5623, %v5623
        %5656 = vst.msk [vmem:[#allocation4 + $0xc] sm:$0xf] %vm233, %v5624
        %5657 = vst.msk [vmem:[#allocation4 + $0x10] sm:$0xf] %vm233, %v5625
        %5658 = vst.msk [vmem:[#allocation4 + $0x14] sm:$0xf] %vm233, %v5626
        %5659 = vst.msk [vmem:[#allocation4 + $0x18] sm:$0xf] %vm233, %v5627
        %5660 = vst.msk [vmem:[#allocation4 + $0x1c] sm:$0xf] %vm233, %v5628
        %5661 = vst.msk [vmem:[#allocation4 + $0x20] sm:$0xf] %vm233, %v5629
        %5662 = vst.msk [vmem:[#allocation4 + $0x24] sm:$0xf] %vm233, %v5630
        %5663 = vst.msk [vmem:[#allocation4 + $0x28] sm:$0xf] %vm233, %v5631
        %5664 = vst.msk [vmem:[#allocation4 + $0x2c] sm:$0xf] %vm233, %v5632
        %5665 = vst.msk [vmem:[#allocation4 + $0x30] sm:$0xf] %vm233, %v5633
        %5666 = vst.msk [vmem:[#allocation4 + $0x34] sm:$0xf] %vm233, %v5634
        %5667 = vst.msk [vmem:[#allocation4 + $0x38] sm:$0xf] %vm233, %v5635
        %5668 = vst.msk [vmem:[#allocation4 + $0x3c] sm:$0xf] %vm233, %v5636
        %5669 = vst.msk [vmem:[#allocation4 + $0x40] sm:$0xf] %vm233, %v5637
        %5670 = vst.msk [vmem:[#allocation4 + $0x44] sm:$0xf] %vm233, %v5638
        %5671 = vst.msk [vmem:[#allocation4 + $0x48] sm:$0xf] %vm233, %v5639
        %v5672 = vld [vmem:[#allocation3 + $0xc0] sm:$0xff]
        %v5673 = vld [vmem:[#allocation3 + $0xc8] sm:$0xf]
        %v5674 = vld [vmem:[#allocation3 + $0xcc] sm:$0xff]
        %v5675 = vld [vmem:[#allocation3 + $0xd4] sm:$0xf]
        %v5676 = vld [vmem:[#allocation3 + $0xd8] sm:$0xff]
        %v5677 = vld [vmem:[#allocation3 + $0xe0] sm:$0xf]
        %v5678 = vld [vmem:[#allocation3 + $0xe4] sm:$0xff]
        %v5679 = vld [vmem:[#allocation3 + $0xec] sm:$0xf]
        %v5680 = vld [vmem:[#allocation3 + $0xf0] sm:$0xff]
        %v5681 = vld [vmem:[#allocation3 + $0xf8] sm:$0xf]
        %v5682 = vld [vmem:[#allocation3 + $0xfc] sm:$0xff]
        %v5683 = vld [vmem:[#allocation3 + $0x104] sm:$0xf]
        %v5684 = vld [vmem:[#allocation3 + $0x108] sm:$0xff]
        %v5685 = vld [vmem:[#allocation3 + $0x110] sm:$0xf]
        %v5686 = vld [vmem:[#allocation3 + $0x114] sm:$0xff]
        %v5687 = vld [vmem:[#allocation3 + $0x11c] sm:$0xf]
        %v5688 = vld [vmem:[#allocation3 + $0x120] sm:$0xff]
        %v5689 = vld [vmem:[#allocation3 + $0x128] sm:$0xf]
        %v5690 = vld [vmem:[#allocation3 + $0x12c] sm:$0xff]
        %v5691 = vld [vmem:[#allocation3 + $0x134] sm:$0xf]
        %v5692 = vld [vmem:[#allocation3 + $0x138] sm:$0xff]
        %v5693 = vld [vmem:[#allocation3 + $0x140] sm:$0xf]
        %v5694 = vld [vmem:[#allocation3 + $0x144] sm:$0xff]
        %v5695 = vld [vmem:[#allocation3 + $0x14c] sm:$0xf]
        %v5696 = vld [vmem:[#allocation3 + $0x150] sm:$0xff]
        %v5697 = vld [vmem:[#allocation3 + $0x158] sm:$0xf]
        %v5698 = vld [vmem:[#allocation3 + $0x15c] sm:$0xff]
        %v5699 = vld [vmem:[#allocation3 + $0x164] sm:$0xf]
        %v5700 = vld [vmem:[#allocation3 + $0x168] sm:$0xff]
        %v5701 = vld [vmem:[#allocation3 + $0x170] sm:$0xf]
        %v5702 = vld [vmem:[#allocation3 + $0x174] sm:$0xff]
        %v5703 = vld [vmem:[#allocation3 + $0x17c] sm:$0xf]
        %v5704 = vld [vmem:[%s1] sm:$0xf]
        %v5705 = vld [vmem:[%s1 + $0x4] sm:$0xf]
        %v5706 = vld [vmem:[%s1 + $0x8] sm:$0xf]
        %v5707 = vld [vmem:[%s1 + $0xc] sm:$0xf]
        %v5708 = vld [vmem:[%s1 + $0x10] sm:$0xf]
        %v5709 = vld [vmem:[%s1 + $0x14] sm:$0xf]
        %v5710 = vld [vmem:[%s1 + $0x18] sm:$0xf]
        %v5711 = vld [vmem:[%s1 + $0x1c] sm:$0xf]
        %v5712 = vld [vmem:[%s1 + $0x20] sm:$0xf]
        %v5713 = vld [vmem:[%s1 + $0x24] sm:$0xf]
        %v5714 = vld [vmem:[%s1 + $0x28] sm:$0xf]
        %v5715 = vld [vmem:[%s1 + $0x2c] sm:$0xf]
        %v5716 = vld [vmem:[%s1 + $0x30] sm:$0xf]
        %v5717 = vld [vmem:[%s1 + $0x34] sm:$0xf]
        %v5718 = vld [vmem:[%s1 + $0x38] sm:$0xf]
        %v5719 = vld [vmem:[%s1 + $0x3c] sm:$0xf]
        %v5720 = vld [vmem:[%s1 + $0x40] sm:$0xf]
        %v5721 = vld [vmem:[%s1 + $0x44] sm:$0xf]
        %v5722 = vld [vmem:[%s1 + $0x48] sm:$0xf]
        %v5723 = vld [vmem:[%s1 + $0x4c] sm:$0xf]
        %v5724 = vld [vmem:[%s1 + $0x50] sm:$0xf]
        %v5725 = vld [vmem:[%s1 + $0x54] sm:$0xf]
        %v5726 = vld [vmem:[%s1 + $0x58] sm:$0xf]
        %v5727 = vld [vmem:[%s1 + $0x5c] sm:$0xf]
        %v5728 = vld [vmem:[%s1 + $0x60] sm:$0xf]
        %v5729 = vld [vmem:[%s1 + $0x64] sm:$0xf]
        %v5730 = vld [vmem:[%s1 + $0x68] sm:$0xf]
        %v5731 = vld [vmem:[%s1 + $0x6c] sm:$0xf]
        %v5732 = vld [vmem:[%s1 + $0x70] sm:$0xf]
        %v5733 = vld [vmem:[%s1 + $0x74] sm:$0xf]
        %v5734 = vld [vmem:[%s1 + $0x78] sm:$0xf]
        %v5735 = vld [vmem:[%s1 + $0x7c] sm:$0xf]
        %v5736 = vld [vmem:[%s1 + $0x80] sm:$0xf]
        %v5737 = vld [vmem:[%s1 + $0x84] sm:$0xf]
        %v5738 = vld [vmem:[%s1 + $0x88] sm:$0xf]
        %v5739 = vld [vmem:[%s1 + $0x8c] sm:$0xf]
        %v5772 = vunpack.c.l.b16 %v5672
        %v5773 = vunpack.c.h.b16 %v5672
        %v5774 = vunpack.c.l.b16 %v5673
        %v5775 = vunpack.c.l.b16 %v5674
        %v5776 = vunpack.c.h.b16 %v5674
        %v5777 = vunpack.c.l.b16 %v5675
        %v5778 = vunpack.c.l.b16 %v5676
        %v5779 = vunpack.c.h.b16 %v5676
        %v5780 = vunpack.c.l.b16 %v5677
        %v5781 = vunpack.c.l.b16 %v5678
        %v5782 = vunpack.c.h.b16 %v5678
        %v5783 = vunpack.c.l.b16 %v5679
        %v5784 = vunpack.c.l.b16 %v5680
        %v5785 = vunpack.c.h.b16 %v5680
        %v5786 = vunpack.c.l.b16 %v5681
        %v5787 = vunpack.c.l.b16 %v5682
        %v5788 = vunpack.c.h.b16 %v5682
        %v5789 = vunpack.c.l.b16 %v5683
        %v5790 = vunpack.c.l.b16 %v5684
        %v5791 = vunpack.c.h.b16 %v5684
        %v5792 = vunpack.c.l.b16 %v5685
        %v5793 = vunpack.c.l.b16 %v5686
        %v5794 = vunpack.c.h.b16 %v5686
        %v5795 = vunpack.c.l.b16 %v5687
        %v5796 = vunpack.c.l.b16 %v5688
        %v5797 = vunpack.c.h.b16 %v5688
        %v5798 = vunpack.c.l.b16 %v5689
        %v5799 = vunpack.c.l.b16 %v5690
        %v5800 = vunpack.c.h.b16 %v5690
        %v5801 = vunpack.c.l.b16 %v5691
        %v5802 = vunpack.c.l.b16 %v5692
        %v5803 = vunpack.c.h.b16 %v5692
        %v5804 = vunpack.c.l.b16 %v5693
        %v5805 = vunpack.c.l.b16 %v5694
        %v5806 = vunpack.c.h.b16 %v5694
        %v5807 = vunpack.c.l.b16 %v5695
        %v5808 = vunpack.c.l.b16 %v5696
        %v5809 = vunpack.c.h.b16 %v5696
        %v5810 = vunpack.c.l.b16 %v5697
        %v5811 = vunpack.c.l.b16 %v5698
        %v5812 = vunpack.c.h.b16 %v5698
        %v5813 = vunpack.c.l.b16 %v5699
        %v5814 = vunpack.c.l.b16 %v5700
        %v5815 = vunpack.c.h.b16 %v5700
        %v5816 = vunpack.c.l.b16 %v5701
        %v5817 = vunpack.c.l.b16 %v5702
        %v5818 = vunpack.c.h.b16 %v5702
        %v5819 = vunpack.c.l.b16 %v5703
        %v5820 = vpack.c.b16 %v5775, %v5772
        %v5821 = vpack.c.b16 %v5776, %v5773
        %v5822 = vpack.c.b16 %v5777, %v5774
        %v5823 = vpack.c.b16 %v5781, %v5778
        %v5824 = vpack.c.b16 %v5782, %v5779
        %v5825 = vpack.c.b16 %v5783, %v5780
        %v5826 = vpack.c.b16 %v5787, %v5784
        %v5827 = vpack.c.b16 %v5788, %v5785
        %v5828 = vpack.c.b16 %v5789, %v5786
        %v5829 = vpack.c.b16 %v5793, %v5790
        %v5830 = vpack.c.b16 %v5794, %v5791
        %v5831 = vpack.c.b16 %v5795, %v5792
        %v5832 = vpack.c.b16 %v5799, %v5796
        %v5833 = vpack.c.b16 %v5800, %v5797
        %v5834 = vpack.c.b16 %v5801, %v5798
        %v5835 = vpack.c.b16 %v5805, %v5802
        %v5836 = vpack.c.b16 %v5806, %v5803
        %v5837 = vpack.c.b16 %v5807, %v5804
        %v5838 = vpack.c.b16 %v5811, %v5808
        %v5839 = vpack.c.b16 %v5812, %v5809
        %v5840 = vpack.c.b16 %v5813, %v5810
        %v5841 = vpack.c.b16 %v5817, %v5814
        %v5842 = vpack.c.b16 %v5818, %v5815
        %v5843 = vpack.c.b16 %v5819, %v5816
        %v5896 = vunpack.c.l.b16 %v5704
        %v5897 = vunpack.c.l.b16 %v5705
        %v5898 = vunpack.c.l.b16 %v5706
        %v5899 = vunpack.c.l.b16 %v5707
        %v5900 = vunpack.c.l.b16 %v5708
        %v5901 = vunpack.c.l.b16 %v5709
        %v5902 = vunpack.c.l.b16 %v5710
        %v5903 = vunpack.c.l.b16 %v5711
        %v5904 = vunpack.c.l.b16 %v5712
        %v5905 = vunpack.c.l.b16 %v5713
        %v5906 = vunpack.c.l.b16 %v5714
        %v5907 = vunpack.c.l.b16 %v5715
        %v5908 = vunpack.c.l.b16 %v5716
        %v5909 = vunpack.c.l.b16 %v5717
        %v5910 = vunpack.c.l.b16 %v5718
        %v5911 = vunpack.c.l.b16 %v5719
        %v5912 = vunpack.c.l.b16 %v5720
        %v5913 = vunpack.c.l.b16 %v5721
        %v5914 = vunpack.c.l.b16 %v5722
        %v5915 = vunpack.c.l.b16 %v5723
        %v5916 = vunpack.c.l.b16 %v5724
        %v5917 = vunpack.c.l.b16 %v5725
        %v5918 = vunpack.c.l.b16 %v5726
        %v5919 = vunpack.c.l.b16 %v5727
        %v5920 = vunpack.c.l.b16 %v5728
        %v5921 = vunpack.c.l.b16 %v5729
        %v5922 = vunpack.c.l.b16 %v5730
        %v5923 = vunpack.c.l.b16 %v5731
        %v5924 = vunpack.c.l.b16 %v5732
        %v5925 = vunpack.c.l.b16 %v5733
        %v5926 = vunpack.c.l.b16 %v5734
        %v5927 = vunpack.c.l.b16 %v5735
        %v5928 = vunpack.c.l.b16 %v5736
        %v5929 = vunpack.c.l.b16 %v5737
        %v5930 = vunpack.c.l.b16 %v5738
        %v5931 = vunpack.c.l.b16 %v5739
        %v5932 = vpack.c.b16 %v5897, %v5896
        %v5933 = vpack.c.b16 %v5899, %v5898
        %v5934 = vpack.c.b16 %v5901, %v5900
        %v5935 = vpack.c.b16 %v5903, %v5902
        %v5936 = vpack.c.b16 %v5905, %v5904
        %v5937 = vpack.c.b16 %v5907, %v5906
        %v5938 = vpack.c.b16 %v5909, %v5908
        %v5939 = vpack.c.b16 %v5911, %v5910
        %v5940 = vpack.c.b16 %v5913, %v5912
        %v5941 = vpack.c.b16 %v5915, %v5914
        %v5942 = vpack.c.b16 %v5917, %v5916
        %v5943 = vpack.c.b16 %v5919, %v5918
        %v5944 = vpack.c.b16 %v5921, %v5920
        %v5945 = vpack.c.b16 %v5923, %v5922
        %v5946 = vpack.c.b16 %v5925, %v5924
        %v5947 = vpack.c.b16 %v5927, %v5926
        %v5948 = vpack.c.b16 %v5929, %v5928
        %v5949 = vpack.c.b16 %v5931, %v5930
        %v5969 = vsel %vm5357, %v5822, 0
        %v5972 = vsel %vm5357, %v5825, 0
        %v5975 = vsel %vm5357, %v5828, 0
        %v5978 = vsel %vm5357, %v5831, 0
        %v5981 = vsel %vm5357, %v5834, 0
        %v5984 = vsel %vm5357, %v5837, 0
        %v5987 = vsel %vm5357, %v5840, 0
        %v5990 = vsel %vm5357, %v5843, 0
        %5992 = vmatprep.subr.bf16.mxu0 0
        %5993 = vmatpush1.bf16.msra.mxu0 %v5939
        %5994 = vmatprep.subr.bf16.mxu0 0
        %5995 = vmatpush1.bf16.msra.mxu0 %v5938
        %5996 = vmatprep.subr.bf16.mxu0 0
        %5997 = vmatpush1.bf16.msra.mxu0 %v5937
        %5998 = vmatprep.subr.bf16.mxu0 0
        %5999 = vmatpush1.bf16.msra.mxu0 %v5936
        %6000 = vmatprep.subr.bf16.mxu0 0
        %6001 = vmatpush1.bf16.msra.mxu0 %v5935
        %6002 = vmatprep.subr.bf16.mxu0 0
        %6003 = vmatpush1.bf16.msra.mxu0 %v5934
        %6004 = vmatprep.subr.bf16.mxu0 0
        %6005 = vmatpush1.bf16.msra.mxu0 %v5933
        %6006 = vmatprep.subr.bf16.mxu0 0
        %6007 = vmatpush1.bf16.msra.mxu0 %v5932
        %6008 = vmatprep.subr.bf16.mxu0 0
        %6009 = vmatpush2.bf16.msra.mxu0 %v5947
        %6010 = vmatprep.subr.bf16.mxu0 0
        %6011 = vmatpush2.bf16.msra.mxu0 %v5946
        %6012 = vmatprep.subr.bf16.mxu0 0
        %6013 = vmatpush2.bf16.msra.mxu0 %v5945
        %6014 = vmatprep.subr.bf16.mxu0 0
        %6015 = vmatpush2.bf16.msra.mxu0 %v5944
        %6016 = vmatprep.subr.bf16.mxu0 0
        %6017 = vmatpush2.bf16.msra.mxu0 %v5943
        %6018 = vmatprep.subr.bf16.mxu0 0
        %6019 = vmatpush2.bf16.msra.mxu0 %v5942
        %6020 = vmatprep.subr.bf16.mxu0 0
        %6021 = vmatpush2.bf16.msra.mxu0 %v5941
        %6022 = vmatprep.subr.bf16.mxu0 0
        %6023 = vmatpush2.bf16.msra.mxu0 %v5940
        %6024 = vmatprep.mubr.bf16.mxu0 %v5821
        %6025 = vmatmul.mubr.bf16.gmra.mxu0 %v5820
        %v6026 = vpop.f32.mrf.mxu0
        %v6027 = vadd.f32 %v5127, %v6026
        %v6028 = vpop.f32.mrf.mxu0
        %v6029 = vpop.f32.mrf.mxu0
        %v6030 = vadd.f32 %v5127, %v6029
        %v6031 = vpop.f32.mrf.mxu0
        %6032 = vmatprep.mubr.bf16.mxu0 %v5824
        %6033 = vmatmul.mubr.bf16.gmra.mxu0 %v5823
        %v6034 = vpop.f32.mrf.mxu0
        %v6035 = vadd.f32 %v5127, %v6034
        %v6036 = vpop.f32.mrf.mxu0
        %v6037 = vpop.f32.mrf.mxu0
        %v6038 = vadd.f32 %v5127, %v6037
        %v6039 = vpop.f32.mrf.mxu0
        %6040 = vmatprep.mubr.bf16.mxu0 %v5827
        %6041 = vmatmul.mubr.bf16.gmra.mxu0 %v5826
        %v6042 = vpop.f32.mrf.mxu0
        %v6043 = vadd.f32 %v5127, %v6042
        %v6044 = vpop.f32.mrf.mxu0
        %v6045 = vpop.f32.mrf.mxu0
        %v6046 = vadd.f32 %v5127, %v6045
        %v6047 = vpop.f32.mrf.mxu0
        %6048 = vmatprep.mubr.bf16.mxu0 %v5830
        %6049 = vmatmul.mubr.bf16.gmra.mxu0 %v5829
        %v6050 = vpop.f32.mrf.mxu0
        %v6051 = vadd.f32 %v5127, %v6050
        %v6052 = vpop.f32.mrf.mxu0
        %v6053 = vpop.f32.mrf.mxu0
        %v6054 = vadd.f32 %v5127, %v6053
        %v6055 = vpop.f32.mrf.mxu0
        %6056 = vmatprep.mubr.bf16.mxu0 %v5833
        %6057 = vmatmul.mubr.bf16.gmra.mxu0 %v5832
        %v6058 = vpop.f32.mrf.mxu0
        %v6059 = vadd.f32 %v5127, %v6058
        %v6060 = vpop.f32.mrf.mxu0
        %v6061 = vpop.f32.mrf.mxu0
        %v6062 = vadd.f32 %v5127, %v6061
        %v6063 = vpop.f32.mrf.mxu0
        %6064 = vmatprep.mubr.bf16.mxu0 %v5836
        %6065 = vmatmul.mubr.bf16.gmra.mxu0 %v5835
        %v6066 = vpop.f32.mrf.mxu0
        %v6067 = vadd.f32 %v5127, %v6066
        %v6068 = vpop.f32.mrf.mxu0
        %v6069 = vpop.f32.mrf.mxu0
        %v6070 = vadd.f32 %v5127, %v6069
        %v6071 = vpop.f32.mrf.mxu0
        %6072 = vmatprep.mubr.bf16.mxu0 %v5839
        %6073 = vmatmul.mubr.bf16.gmra.mxu0 %v5838
        %v6074 = vpop.f32.mrf.mxu0
        %v6075 = vadd.f32 %v5127, %v6074
        %v6076 = vpop.f32.mrf.mxu0
        %v6077 = vpop.f32.mrf.mxu0
        %v6078 = vadd.f32 %v5127, %v6077
        %v6079 = vpop.f32.mrf.mxu0
        %6080 = vmatprep.mubr.bf16.mxu0 %v5842
        %6081 = vmatmul.mubr.bf16.gmra.mxu0 %v5841
        %v6082 = vpop.f32.mrf.mxu0
        %v6083 = vadd.f32 %v5127, %v6082
        %v6084 = vpop.f32.mrf.mxu0
        %v6085 = vpop.f32.mrf.mxu0
        %v6086 = vadd.f32 %v5127, %v6085
        %v6087 = vpop.f32.mrf.mxu0
        %6088 = vdwg.mxu0
        %6089 = vmatprep.subr.bf16.mxu0 0
        %6090 = vmatpush1.bf16.msra.mxu0 0
        %6091 = vmatprep.subr.bf16.mxu0 0
        %6092 = vmatpush1.bf16.msra.mxu0 0
        %6093 = vmatprep.subr.bf16.mxu0 0
        %6094 = vmatpush1.bf16.msra.mxu0 0
        %6095 = vmatprep.subr.bf16.mxu0 0
        %6096 = vmatpush1.bf16.msra.mxu0 0
        %6097 = vmatprep.subr.bf16.mxu0 0
        %6098 = vmatpush1.bf16.msra.mxu0 0
        %6099 = vmatprep.subr.bf16.mxu0 0
        %6100 = vmatpush1.bf16.msra.mxu0 0
        %6101 = vmatprep.subr.bf16.mxu0 0
        %6102 = vmatpush1.bf16.msra.mxu0 %v5949
        %6103 = vmatprep.subr.bf16.mxu0 0
        %6104 = vmatpush1.bf16.msra.mxu0 %v5948
        %6105 = vmatprep.subr.bf16.mxu0 0
        %6106 = vmatpush2.bf16.msra.mxu0 0
        %6107 = vmatprep.subr.bf16.mxu0 0
        %6108 = vmatpush2.bf16.msra.mxu0 0
        %6109 = vmatprep.subr.bf16.mxu0 0
        %6110 = vmatpush2.bf16.msra.mxu0 0
        %6111 = vmatprep.subr.bf16.mxu0 0
        %6112 = vmatpush2.bf16.msra.mxu0 0
        %6113 = vmatprep.subr.bf16.mxu0 0
        %6114 = vmatpush2.bf16.msra.mxu0 0
        %6115 = vmatprep.subr.bf16.mxu0 0
        %6116 = vmatpush2.bf16.msra.mxu0 0
        %6117 = vmatprep.subr.bf16.mxu0 0
        %6118 = vmatpush2.bf16.msra.mxu0 0
        %6119 = vmatprep.subr.bf16.mxu0 0
        %6120 = vmatpush2.bf16.msra.mxu0 0
        %6121 = vmatprep.mubr.bf16.mxu0 0
        %6122 = vmatmul.mubr.bf16.gmra.mxu0 %v5969
        %v6123 = vpop.f32.mrf.mxu0
        %v6124 = vadd.f32 %v6027, %v6123
        %v6125 = vpop.f32.mrf.mxu0
        %v6126 = vpop.f32.mrf.mxu0
        %v6127 = vadd.f32 %v6030, %v6126
        %v6128 = vpop.f32.mrf.mxu0
        %6129 = vmatprep.mubr.bf16.mxu0 0
        %6130 = vmatmul.mubr.bf16.gmra.mxu0 %v5972
        %v6131 = vpop.f32.mrf.mxu0
        %v6132 = vadd.f32 %v6035, %v6131
        %v6133 = vpop.f32.mrf.mxu0
        %v6134 = vpop.f32.mrf.mxu0
        %v6135 = vadd.f32 %v6038, %v6134
        %v6136 = vpop.f32.mrf.mxu0
        %6137 = vmatprep.mubr.bf16.mxu0 0
        %6138 = vmatmul.mubr.bf16.gmra.mxu0 %v5975
        %v6139 = vpop.f32.mrf.mxu0
        %v6140 = vadd.f32 %v6043, %v6139
        %v6141 = vpop.f32.mrf.mxu0
        %v6142 = vpop.f32.mrf.mxu0
        %v6143 = vadd.f32 %v6046, %v6142
        %v6144 = vpop.f32.mrf.mxu0
        %6145 = vmatprep.mubr.bf16.mxu0 0
        %6146 = vmatmul.mubr.bf16.gmra.mxu0 %v5978
        %v6147 = vpop.f32.mrf.mxu0
        %v6148 = vadd.f32 %v6051, %v6147
        %v6149 = vpop.f32.mrf.mxu0
        %v6150 = vpop.f32.mrf.mxu0
        %v6151 = vadd.f32 %v6054, %v6150
        %v6152 = vpop.f32.mrf.mxu0
        %6153 = vmatprep.mubr.bf16.mxu0 0
        %6154 = vmatmul.mubr.bf16.gmra.mxu0 %v5981
        %v6155 = vpop.f32.mrf.mxu0
        %v6156 = vadd.f32 %v6059, %v6155
        %v6157 = vpop.f32.mrf.mxu0
        %v6158 = vpop.f32.mrf.mxu0
        %v6159 = vadd.f32 %v6062, %v6158
        %v6160 = vpop.f32.mrf.mxu0
        %6161 = vmatprep.mubr.bf16.mxu0 0
        %6162 = vmatmul.mubr.bf16.gmra.mxu0 %v5984
        %v6163 = vpop.f32.mrf.mxu0
        %v6164 = vadd.f32 %v6067, %v6163
        %v6165 = vpop.f32.mrf.mxu0
        %v6166 = vpop.f32.mrf.mxu0
        %v6167 = vadd.f32 %v6070, %v6166
        %v6168 = vpop.f32.mrf.mxu0
        %6169 = vmatprep.mubr.bf16.mxu0 0
        %6170 = vmatmul.mubr.bf16.gmra.mxu0 %v5987
        %v6171 = vpop.f32.mrf.mxu0
        %v6172 = vadd.f32 %v6075, %v6171
        %v6173 = vpop.f32.mrf.mxu0
        %v6174 = vpop.f32.mrf.mxu0
        %v6175 = vadd.f32 %v6078, %v6174
        %v6176 = vpop.f32.mrf.mxu0
        %6177 = vmatprep.mubr.bf16.mxu0 0
        %6178 = vmatmul.mubr.bf16.gmra.mxu0 %v5990
        %v6179 = vpop.f32.mrf.mxu0
        %v6180 = vadd.f32 %v6083, %v6179
        %v6181 = vpop.f32.mrf.mxu0
        %v6182 = vpop.f32.mrf.mxu0
        %v6183 = vadd.f32 %v6086, %v6182
        %v6184 = vpop.f32.mrf.mxu0
        %6185 = vdwg.mxu0
        %v6186 = vmax.f32 %v6124, 0.0
        %v6187 = vmax.f32 %v6127, 0.0
        %v6188 = vmax.f32 %v6132, 0.0
        %v6189 = vmax.f32 %v6135, 0.0
        %v6190 = vmax.f32 %v6140, 0.0
        %v6191 = vmax.f32 %v6143, 0.0
        %v6192 = vmax.f32 %v6148, 0.0
        %v6193 = vmax.f32 %v6151, 0.0
        %v6194 = vmax.f32 %v6156, 0.0
        %v6195 = vmax.f32 %v6159, 0.0
        %v6196 = vmax.f32 %v6164, 0.0
        %v6197 = vmax.f32 %v6167, 0.0
        %v6198 = vmax.f32 %v6172, 0.0
        %v6199 = vmax.f32 %v6175, 0.0
        %v6200 = vmax.f32 %v6180, 0.0
        %v6201 = vmax.f32 %v6183, 0.0
        %v6202 = vpack.c.bf16 %v6187, %v6186
        %v6203 = vpack.c.bf16 %v6189, %v6188
        %v6204 = vpack.c.bf16 %v6191, %v6190
        %v6205 = vpack.c.bf16 %v6193, %v6192
        %v6206 = vpack.c.bf16 %v6195, %v6194
        %v6207 = vpack.c.bf16 %v6197, %v6196
        %v6208 = vpack.c.bf16 %v6199, %v6198
        %v6209 = vpack.c.bf16 %v6201, %v6200
        %v6218 = vunpack.c.l.b16 %v6202
        %v6219 = vunpack.c.h.b16 %v6202
        %v6220 = vunpack.c.l.b16 %v6203
        %v6221 = vunpack.c.h.b16 %v6203
        %v6222 = vunpack.c.l.b16 %v6204
        %v6223 = vunpack.c.h.b16 %v6204
        %v6224 = vunpack.c.l.b16 %v6205
        %v6225 = vunpack.c.h.b16 %v6205
        %v6226 = vunpack.c.l.b16 %v6206
        %v6227 = vunpack.c.h.b16 %v6206
        %v6228 = vunpack.c.l.b16 %v6207
        %v6229 = vunpack.c.h.b16 %v6207
        %v6230 = vunpack.c.l.b16 %v6208
        %v6231 = vunpack.c.h.b16 %v6208
        %v6232 = vunpack.c.l.b16 %v6209
        %v6233 = vunpack.c.h.b16 %v6209
        %v6234 = vpack.c.b16 %v6218, %v6218
        %v6235 = vpack.c.b16 %v6219, %v6219
        %v6236 = vpack.c.b16 %v6220, %v6220
        %v6237 = vpack.c.b16 %v6221, %v6221
        %v6238 = vpack.c.b16 %v6222, %v6222
        %v6239 = vpack.c.b16 %v6223, %v6223
        %v6240 = vpack.c.b16 %v6224, %v6224
        %v6241 = vpack.c.b16 %v6225, %v6225
        %v6242 = vpack.c.b16 %v6226, %v6226
        %v6243 = vpack.c.b16 %v6227, %v6227
        %v6244 = vpack.c.b16 %v6228, %v6228
        %v6245 = vpack.c.b16 %v6229, %v6229
        %v6246 = vpack.c.b16 %v6230, %v6230
        %v6247 = vpack.c.b16 %v6231, %v6231
        %v6248 = vpack.c.b16 %v6232, %v6232
        %v6249 = vpack.c.b16 %v6233, %v6233
        %6266 = vst.msk [vmem:[#allocation4 + $0x4c] sm:$0xf] %vm233, %v6234
        %6267 = vst.msk [vmem:[#allocation4 + $0x50] sm:$0xf] %vm233, %v6235
        %6268 = vst.msk [vmem:[#allocation4 + $0x54] sm:$0xf] %vm233, %v6236
        %6269 = vst.msk [vmem:[#allocation4 + $0x58] sm:$0xf] %vm233, %v6237
        %6270 = vst.msk [vmem:[#allocation4 + $0x5c] sm:$0xf] %vm233, %v6238
        %6271 = vst.msk [vmem:[#allocation4 + $0x60] sm:$0xf] %vm233, %v6239
        %6272 = vst.msk [vmem:[#allocation4 + $0x64] sm:$0xf] %vm233, %v6240
        %6273 = vst.msk [vmem:[#allocation4 + $0x68] sm:$0xf] %vm233, %v6241
        %6274 = vst.msk [vmem:[#allocation4 + $0x6c] sm:$0xf] %vm233, %v6242
        %6275 = vst.msk [vmem:[#allocation4 + $0x70] sm:$0xf] %vm233, %v6243
        %6276 = vst.msk [vmem:[#allocation4 + $0x74] sm:$0xf] %vm233, %v6244
        %6277 = vst.msk [vmem:[#allocation4 + $0x78] sm:$0xf] %vm233, %v6245
        %6278 = vst.msk [vmem:[#allocation4 + $0x7c] sm:$0xf] %vm233, %v6246
        %6279 = vst.msk [vmem:[#allocation4 + $0x80] sm:$0xf] %vm233, %v6247
        %6280 = vst.msk [vmem:[#allocation4 + $0x84] sm:$0xf] %vm233, %v6248
        %6281 = vst.msk [vmem:[#allocation4 + $0x88] sm:$0xf] %vm233, %v6249
        %v6282 = vld [vmem:[#allocation4] sm:$0x8]
        %v6283 = vld [vmem:[#allocation4 + $0x4] sm:$0xf]
        %v6284 = vld [vmem:[#allocation4 + $0x8] sm:$0xf]
        %v6285 = vld [vmem:[#allocation4 + $0xc] sm:$0xf]
        %v6286 = vld [vmem:[#allocation4 + $0x10] sm:$0xf]
        %v6287 = vld [vmem:[#allocation4 + $0x14] sm:$0xf]
        %v6288 = vld [vmem:[#allocation4 + $0x18] sm:$0xf]
        %v6289 = vld [vmem:[#allocation4 + $0x1c] sm:$0xf]
        %v6290 = vld [vmem:[#allocation4 + $0x20] sm:$0xf]
        %v6291 = vld [vmem:[#allocation4 + $0x24] sm:$0xf]
        %v6292 = vld [vmem:[#allocation4 + $0x28] sm:$0xf]
        %v6293 = vld [vmem:[#allocation4 + $0x2c] sm:$0xf]
        %v6294 = vld [vmem:[#allocation4 + $0x30] sm:$0xf]
        %v6295 = vld [vmem:[#allocation4 + $0x34] sm:$0xf]
        %v6296 = vld [vmem:[#allocation4 + $0x38] sm:$0xf]
        %v6297 = vld [vmem:[#allocation4 + $0x3c] sm:$0xf]
        %v6298 = vld [vmem:[#allocation4 + $0x40] sm:$0xf]
        %v6299 = vld [vmem:[#allocation4 + $0x44] sm:$0xf]
        %v6300 = vld [vmem:[#allocation4 + $0x48] sm:$0xf]
        %v6301 = vld [vmem:[#allocation4 + $0x4c] sm:$0xf]
        %v6302 = vld [vmem:[#allocation4 + $0x50] sm:$0xf]
        %v6303 = vld [vmem:[#allocation4 + $0x54] sm:$0xf]
        %v6304 = vld [vmem:[#allocation4 + $0x58] sm:$0xf]
        %v6305 = vld [vmem:[#allocation4 + $0x5c] sm:$0xf]
        %v6306 = vld [vmem:[#allocation4 + $0x60] sm:$0xf]
        %v6307 = vld [vmem:[#allocation4 + $0x64] sm:$0xf]
        %v6308 = vld [vmem:[#allocation4 + $0x68] sm:$0xf]
        %v6309 = vld [vmem:[#allocation4 + $0x6c] sm:$0xf]
        %v6310 = vld [vmem:[#allocation4 + $0x70] sm:$0xf]
        %v6311 = vld [vmem:[#allocation4 + $0x74] sm:$0xf]
        %v6312 = vld [vmem:[#allocation4 + $0x78] sm:$0xf]
        %v6313 = vld [vmem:[#allocation4 + $0x7c] sm:$0xf]
        %v6314 = vld [vmem:[#allocation4 + $0x80] sm:$0xf]
        %v6315 = vsel %vm1268, %v6282, 0
        %v6316 = vsel %vm1269, %v6283, 0
        %v6317 = vsel %vm1270, %v6284, 0
        %v6318 = vsel %vm1271, %v6285, 0
        %v6319 = vsel %vm1272, %v6286, 0
        %v6320 = vsel %vm1273, %v6287, 0
        %v6321 = vsel %vm1274, %v6288, 0
        %v6322 = vsel %vm1275, %v6289, 0
        %v6323 = vsel %vm1276, %v6290, 0
        %v6324 = vsel %vm1277, %v6291, 0
        %v6325 = vsel %vm1278, %v6292, 0
        %v6326 = vsel %vm1279, %v6293, 0
        %v6327 = vsel %vm1280, %v6294, 0
        %v6328 = vsel %vm1281, %v6295, 0
        %v6329 = vsel %vm1282, %v6296, 0
        %v6330 = vsel %vm1283, %v6297, 0
        %v6331 = vsel %vm1284, %v6298, 0
        %v6332 = vsel %vm1285, %v6299, 0
        %v6333 = vsel %vm1286, %v6300, 0
        %v6334 = vsel %vm1287, %v6301, 0
        %v6335 = vsel %vm1288, %v6302, 0
        %v6336 = vsel %vm1289, %v6303, 0
        %v6337 = vsel %vm1290, %v6304, 0
        %v6338 = vsel %vm1291, %v6305, 0
        %v6339 = vsel %vm1292, %v6306, 0
        %v6340 = vsel %vm1293, %v6307, 0
        %v6341 = vsel %vm1294, %v6308, 0
        %v6342 = vsel %vm1295, %v6309, 0
        %v6343 = vsel %vm1296, %v6310, 0
        %v6344 = vsel %vm1297, %v6311, 0
        %v6345 = vsel %vm1298, %v6312, 0
        %v6346 = vsel %vm1299, %v6313, 0
        %v6347 = vsel %vm1300, %v6314, 0
        %v6349 = vshrl.u32 %v6315, 16
        %v6351 = vrot.slane %v6349, 7
        %v6352 = vrot.slane %v6351, 4
        %v6354 = vshrl.u32 %v6316, 16
        %v6356 = vrot.slane %v6354, 7
        %v6357 = vshll.u32 %v6316, 16
        %v6359 = vor.u32 %v6356, %v6357
        %v6360 = vsel %vm1336, %v6352, %v6359
        %v6361 = vrot.slane %v6356, 4
        %v6363 = vshrl.u32 %v6317, 16
        %v6365 = vrot.slane %v6363, 7
        %v6366 = vshll.u32 %v6317, 16
        %v6368 = vor.u32 %v6365, %v6366
        %v6369 = vsel %vm1336, %v6361, %v6368
        %v6370 = vrot.slane %v6365, 4
        %v6372 = vshrl.u32 %v6318, 16
        %v6374 = vrot.slane %v6372, 7
        %v6375 = vshll.u32 %v6318, 16
        %v6377 = vor.u32 %v6374, %v6375
        %v6378 = vsel %vm1336, %v6370, %v6377
        %v6379 = vrot.slane %v6374, 4
        %v6381 = vshrl.u32 %v6319, 16
        %v6383 = vrot.slane %v6381, 7
        %v6384 = vshll.u32 %v6319, 16
        %v6386 = vor.u32 %v6383, %v6384
        %v6387 = vsel %vm1336, %v6379, %v6386
        %v6388 = vrot.slane %v6383, 4
        %v6390 = vshrl.u32 %v6320, 16
        %v6392 = vrot.slane %v6390, 7
        %v6393 = vshll.u32 %v6320, 16
        %v6395 = vor.u32 %v6392, %v6393
        %v6396 = vsel %vm1336, %v6388, %v6395
        %v6397 = vrot.slane %v6392, 4
        %v6399 = vshrl.u32 %v6321, 16
        %v6401 = vrot.slane %v6399, 7
        %v6402 = vshll.u32 %v6321, 16
        %v6404 = vor.u32 %v6401, %v6402
        %v6405 = vsel %vm1336, %v6397, %v6404
        %v6406 = vrot.slane %v6401, 4
        %v6408 = vshrl.u32 %v6322, 16
        %v6410 = vrot.slane %v6408, 7
        %v6411 = vshll.u32 %v6322, 16
        %v6413 = vor.u32 %v6410, %v6411
        %v6414 = vsel %vm1336, %v6406, %v6413
        %v6415 = vrot.slane %v6410, 4
        %v6417 = vshrl.u32 %v6323, 16
        %v6419 = vrot.slane %v6417, 7
        %v6420 = vshll.u32 %v6323, 16
        %v6422 = vor.u32 %v6419, %v6420
        %v6423 = vsel %vm1336, %v6415, %v6422
        %v6424 = vrot.slane %v6419, 4
        %v6426 = vshrl.u32 %v6324, 16
        %v6428 = vrot.slane %v6426, 7
        %v6429 = vshll.u32 %v6324, 16
        %v6431 = vor.u32 %v6428, %v6429
        %v6432 = vsel %vm1336, %v6424, %v6431
        %v6433 = vrot.slane %v6428, 4
        %v6435 = vshrl.u32 %v6325, 16
        %v6437 = vrot.slane %v6435, 7
        %v6438 = vshll.u32 %v6325, 16
        %v6440 = vor.u32 %v6437, %v6438
        %v6441 = vsel %vm1336, %v6433, %v6440
        %v6442 = vrot.slane %v6437, 4
        %v6444 = vshrl.u32 %v6326, 16
        %v6446 = vrot.slane %v6444, 7
        %v6447 = vshll.u32 %v6326, 16
        %v6449 = vor.u32 %v6446, %v6447
        %v6450 = vsel %vm1336, %v6442, %v6449
        %v6451 = vrot.slane %v6446, 4
        %v6453 = vshrl.u32 %v6327, 16
        %v6455 = vrot.slane %v6453, 7
        %v6456 = vshll.u32 %v6327, 16
        %v6458 = vor.u32 %v6455, %v6456
        %v6459 = vsel %vm1336, %v6451, %v6458
        %v6460 = vrot.slane %v6455, 4
        %v6462 = vshrl.u32 %v6328, 16
        %v6464 = vrot.slane %v6462, 7
        %v6465 = vshll.u32 %v6328, 16
        %v6467 = vor.u32 %v6464, %v6465
        %v6468 = vsel %vm1336, %v6460, %v6467
        %v6469 = vrot.slane %v6464, 4
        %v6471 = vshrl.u32 %v6329, 16
        %v6473 = vrot.slane %v6471, 7
        %v6474 = vshll.u32 %v6329, 16
        %v6476 = vor.u32 %v6473, %v6474
        %v6477 = vsel %vm1336, %v6469, %v6476
        %v6478 = vrot.slane %v6473, 4
        %v6480 = vshrl.u32 %v6330, 16
        %v6482 = vrot.slane %v6480, 7
        %v6483 = vshll.u32 %v6330, 16
        %v6485 = vor.u32 %v6482, %v6483
        %v6486 = vsel %vm1336, %v6478, %v6485
        %v6487 = vrot.slane %v6482, 4
        %v6489 = vshrl.u32 %v6331, 16
        %v6491 = vrot.slane %v6489, 7
        %v6492 = vshll.u32 %v6331, 16
        %v6494 = vor.u32 %v6491, %v6492
        %v6495 = vsel %vm1336, %v6487, %v6494
        %v6496 = vrot.slane %v6491, 4
        %v6498 = vshrl.u32 %v6332, 16
        %v6500 = vrot.slane %v6498, 7
        %v6501 = vshll.u32 %v6332, 16
        %v6503 = vor.u32 %v6500, %v6501
        %v6504 = vsel %vm1336, %v6496, %v6503
        %v6505 = vrot.slane %v6500, 4
        %v6507 = vshrl.u32 %v6333, 16
        %v6509 = vrot.slane %v6507, 7
        %v6510 = vshll.u32 %v6333, 16
        %v6512 = vor.u32 %v6509, %v6510
        %v6513 = vsel %vm1336, %v6505, %v6512
        %v6514 = vrot.slane %v6509, 4
        %v6516 = vshrl.u32 %v6334, 16
        %v6518 = vrot.slane %v6516, 7
        %v6519 = vshll.u32 %v6334, 16
        %v6521 = vor.u32 %v6518, %v6519
        %v6522 = vsel %vm1336, %v6514, %v6521
        %v6523 = vrot.slane %v6518, 4
        %v6525 = vshrl.u32 %v6335, 16
        %v6527 = vrot.slane %v6525, 7
        %v6528 = vshll.u32 %v6335, 16
        %v6530 = vor.u32 %v6527, %v6528
        %v6531 = vsel %vm1336, %v6523, %v6530
        %v6532 = vrot.slane %v6527, 4
        %v6534 = vshrl.u32 %v6336, 16
        %v6536 = vrot.slane %v6534, 7
        %v6537 = vshll.u32 %v6336, 16
        %v6539 = vor.u32 %v6536, %v6537
        %v6540 = vsel %vm1336, %v6532, %v6539
        %v6541 = vrot.slane %v6536, 4
        %v6543 = vshrl.u32 %v6337, 16
        %v6545 = vrot.slane %v6543, 7
        %v6546 = vshll.u32 %v6337, 16
        %v6548 = vor.u32 %v6545, %v6546
        %v6549 = vsel %vm1336, %v6541, %v6548
        %v6550 = vrot.slane %v6545, 4
        %v6552 = vshrl.u32 %v6338, 16
        %v6554 = vrot.slane %v6552, 7
        %v6555 = vshll.u32 %v6338, 16
        %v6557 = vor.u32 %v6554, %v6555
        %v6558 = vsel %vm1336, %v6550, %v6557
        %v6559 = vrot.slane %v6554, 4
        %v6561 = vshrl.u32 %v6339, 16
        %v6563 = vrot.slane %v6561, 7
        %v6564 = vshll.u32 %v6339, 16
        %v6566 = vor.u32 %v6563, %v6564
        %v6567 = vsel %vm1336, %v6559, %v6566
        %v6568 = vrot.slane %v6563, 4
        %v6570 = vshrl.u32 %v6340, 16
        %v6572 = vrot.slane %v6570, 7
        %v6573 = vshll.u32 %v6340, 16
        %v6575 = vor.u32 %v6572, %v6573
        %v6576 = vsel %vm1336, %v6568, %v6575
        %v6577 = vrot.slane %v6572, 4
        %v6579 = vshrl.u32 %v6341, 16
        %v6581 = vrot.slane %v6579, 7
        %v6582 = vshll.u32 %v6341, 16
        %v6584 = vor.u32 %v6581, %v6582
        %v6585 = vsel %vm1336, %v6577, %v6584
        %v6586 = vrot.slane %v6581, 4
        %v6588 = vshrl.u32 %v6342, 16
        %v6590 = vrot.slane %v6588, 7
        %v6591 = vshll.u32 %v6342, 16
        %v6593 = vor.u32 %v6590, %v6591
        %v6594 = vsel %vm1336, %v6586, %v6593
        %v6595 = vrot.slane %v6590, 4
        %v6597 = vshrl.u32 %v6343, 16
        %v6599 = vrot.slane %v6597, 7
        %v6600 = vshll.u32 %v6343, 16
        %v6602 = vor.u32 %v6599, %v6600
        %v6603 = vsel %vm1336, %v6595, %v6602
        %v6604 = vrot.slane %v6599, 4
        %v6606 = vshrl.u32 %v6344, 16
        %v6608 = vrot.slane %v6606, 7
        %v6609 = vshll.u32 %v6344, 16
        %v6611 = vor.u32 %v6608, %v6609
        %v6612 = vsel %vm1336, %v6604, %v6611
        %v6613 = vrot.slane %v6608, 4
        %v6615 = vshrl.u32 %v6345, 16
        %v6617 = vrot.slane %v6615, 7
        %v6618 = vshll.u32 %v6345, 16
        %v6620 = vor.u32 %v6617, %v6618
        %v6621 = vsel %vm1336, %v6613, %v6620
        %v6622 = vrot.slane %v6617, 4
        %v6624 = vshrl.u32 %v6346, 16
        %v6626 = vrot.slane %v6624, 7
        %v6627 = vshll.u32 %v6346, 16
        %v6629 = vor.u32 %v6626, %v6627
        %v6630 = vsel %vm1336, %v6622, %v6629
        %v6631 = vrot.slane %v6626, 4
        %v6633 = vshrl.u32 %v6347, 16
        %v6635 = vrot.slane %v6633, 7
        %v6636 = vshll.u32 %v6347, 16
        %v6638 = vor.u32 %v6635, %v6636
        %v6639 = vsel %vm1336, %v6631, %v6638
        %6672 = vst.msk [vmem:[#allocation5] sm:$0xf] %vm233, %v6360
        %6673 = vst.msk [vmem:[#allocation5 + $0x14] sm:$0xf] %vm233, %v6369
        %6674 = vst.msk [vmem:[#allocation5 + $0x28] sm:$0xf] %vm233, %v6378
        %6675 = vst.msk [vmem:[#allocation5 + $0x3c] sm:$0xf] %vm233, %v6387
        %6676 = vst.msk [vmem:[#allocation5 + $0x50] sm:$0xf] %vm233, %v6396
        %6677 = vst.msk [vmem:[#allocation5 + $0x64] sm:$0xf] %vm233, %v6405
        %6678 = vst.msk [vmem:[#allocation5 + $0x78] sm:$0xf] %vm233, %v6414
        %6679 = vst.msk [vmem:[#allocation5 + $0x8c] sm:$0xf] %vm233, %v6423
        %6680 = vst.msk [vmem:[#allocation5 + $0xa0] sm:$0xf] %vm233, %v6432
        %6681 = vst.msk [vmem:[#allocation5 + $0xb4] sm:$0xf] %vm233, %v6441
        %6682 = vst.msk [vmem:[#allocation5 + $0xc8] sm:$0xf] %vm233, %v6450
        %6683 = vst.msk [vmem:[#allocation5 + $0xdc] sm:$0xf] %vm233, %v6459
        %6684 = vst.msk [vmem:[#allocation5 + $0xf0] sm:$0xf] %vm233, %v6468
        %6685 = vst.msk [vmem:[#allocation5 + $0x104] sm:$0xf] %vm233, %v6477
        %6686 = vst.msk [vmem:[#allocation5 + $0x118] sm:$0xf] %vm233, %v6486
        %6687 = vst.msk [vmem:[#allocation5 + $0x12c] sm:$0xf] %vm233, %v6495
        %6688 = vst.msk [vmem:[#allocation5 + $0x140] sm:$0xf] %vm233, %v6504
        %6689 = vst.msk [vmem:[#allocation5 + $0x154] sm:$0xf] %vm233, %v6513
        %6690 = vst.msk [vmem:[#allocation5 + $0x168] sm:$0xf] %vm233, %v6522
        %6691 = vst.msk [vmem:[#allocation5 + $0x17c] sm:$0xf] %vm233, %v6531
        %6692 = vst.msk [vmem:[#allocation5 + $0x190] sm:$0xf] %vm233, %v6540
        %6693 = vst.msk [vmem:[#allocation5 + $0x1a4] sm:$0xf] %vm233, %v6549
        %6694 = vst.msk [vmem:[#allocation5 + $0x1b8] sm:$0xf] %vm233, %v6558
        %6695 = vst.msk [vmem:[#allocation5 + $0x1cc] sm:$0xf] %vm233, %v6567
        %6696 = vst.msk [vmem:[#allocation5 + $0x1e0] sm:$0xf] %vm233, %v6576
        %6697 = vst.msk [vmem:[#allocation5 + $0x1f4] sm:$0xf] %vm233, %v6585
        %6698 = vst.msk [vmem:[#allocation5 + $0x208] sm:$0xf] %vm233, %v6594
        %6699 = vst.msk [vmem:[#allocation5 + $0x21c] sm:$0xf] %vm233, %v6603
        %6700 = vst.msk [vmem:[#allocation5 + $0x230] sm:$0xf] %vm233, %v6612
        %6701 = vst.msk [vmem:[#allocation5 + $0x244] sm:$0xf] %vm233, %v6621
        %6702 = vst.msk [vmem:[#allocation5 + $0x258] sm:$0xf] %vm233, %v6630
        %6703 = vst.msk [vmem:[#allocation5 + $0x26c] sm:$0xf] %vm233, %v6639
        %v6704 = vld [vmem:[#allocation4 + $0x4] sm:$0xf]
        %v6705 = vld [vmem:[#allocation4 + $0x8] sm:$0xf]
        %v6706 = vld [vmem:[#allocation4 + $0xc] sm:$0xf]
        %v6707 = vld [vmem:[#allocation4 + $0x10] sm:$0xf]
        %v6708 = vld [vmem:[#allocation4 + $0x14] sm:$0xf]
        %v6709 = vld [vmem:[#allocation4 + $0x18] sm:$0xf]
        %v6710 = vld [vmem:[#allocation4 + $0x1c] sm:$0xf]
        %v6711 = vld [vmem:[#allocation4 + $0x20] sm:$0xf]
        %v6712 = vld [vmem:[#allocation4 + $0x24] sm:$0xf]
        %v6713 = vld [vmem:[#allocation4 + $0x28] sm:$0xf]
        %v6714 = vld [vmem:[#allocation4 + $0x2c] sm:$0xf]
        %v6715 = vld [vmem:[#allocation4 + $0x30] sm:$0xf]
        %v6716 = vld [vmem:[#allocation4 + $0x34] sm:$0xf]
        %v6717 = vld [vmem:[#allocation4 + $0x38] sm:$0xf]
        %v6718 = vld [vmem:[#allocation4 + $0x3c] sm:$0xf]
        %v6719 = vld [vmem:[#allocation4 + $0x40] sm:$0xf]
        %v6720 = vld [vmem:[#allocation4 + $0x44] sm:$0xf]
        %v6721 = vld [vmem:[#allocation4 + $0x48] sm:$0xf]
        %v6722 = vld [vmem:[#allocation4 + $0x4c] sm:$0xf]
        %v6723 = vld [vmem:[#allocation4 + $0x50] sm:$0xf]
        %v6724 = vld [vmem:[#allocation4 + $0x54] sm:$0xf]
        %v6725 = vld [vmem:[#allocation4 + $0x58] sm:$0xf]
        %v6726 = vld [vmem:[#allocation4 + $0x5c] sm:$0xf]
        %v6727 = vld [vmem:[#allocation4 + $0x60] sm:$0xf]
        %v6728 = vld [vmem:[#allocation4 + $0x64] sm:$0xf]
        %v6729 = vld [vmem:[#allocation4 + $0x68] sm:$0xf]
        %v6730 = vld [vmem:[#allocation4 + $0x6c] sm:$0xf]
        %v6731 = vld [vmem:[#allocation4 + $0x70] sm:$0xf]
        %v6732 = vld [vmem:[#allocation4 + $0x74] sm:$0xf]
        %v6733 = vld [vmem:[#allocation4 + $0x78] sm:$0xf]
        %v6734 = vld [vmem:[#allocation4 + $0x7c] sm:$0xf]
        %v6735 = vld [vmem:[#allocation4 + $0x80] sm:$0xf]
        %6768 = vrot.lane.b32.xlu0 %v6704, 64
        %v6769 = vpop.permute.xlu0 %6768
        %6770 = vrot.lane.b32.xlu0 %v6705, 64
        %v6771 = vpop.permute.xlu0 %6770
        %6772 = vrot.lane.b32.xlu0 %v6706, 64
        %v6773 = vpop.permute.xlu0 %6772
        %6774 = vrot.lane.b32.xlu0 %v6707, 64
        %v6775 = vpop.permute.xlu0 %6774
        %6776 = vrot.lane.b32.xlu0 %v6708, 64
        %v6777 = vpop.permute.xlu0 %6776
        %6778 = vrot.lane.b32.xlu0 %v6709, 64
        %v6779 = vpop.permute.xlu0 %6778
        %6780 = vrot.lane.b32.xlu0 %v6710, 64
        %v6781 = vpop.permute.xlu0 %6780
        %6782 = vrot.lane.b32.xlu0 %v6711, 64
        %v6783 = vpop.permute.xlu0 %6782
        %6784 = vrot.lane.b32.xlu0 %v6712, 64
        %v6785 = vpop.permute.xlu0 %6784
        %6786 = vrot.lane.b32.xlu0 %v6713, 64
        %v6787 = vpop.permute.xlu0 %6786
        %6788 = vrot.lane.b32.xlu0 %v6714, 64
        %v6789 = vpop.permute.xlu0 %6788
        %6790 = vrot.lane.b32.xlu0 %v6715, 64
        %v6791 = vpop.permute.xlu0 %6790
        %6792 = vrot.lane.b32.xlu0 %v6716, 64
        %v6793 = vpop.permute.xlu0 %6792
        %6794 = vrot.lane.b32.xlu0 %v6717, 64
        %v6795 = vpop.permute.xlu0 %6794
        %6796 = vrot.lane.b32.xlu0 %v6718, 64
        %v6797 = vpop.permute.xlu0 %6796
        %6798 = vrot.lane.b32.xlu0 %v6719, 64
        %v6799 = vpop.permute.xlu0 %6798
        %6800 = vrot.lane.b32.xlu0 %v6720, 64
        %v6801 = vpop.permute.xlu0 %6800
        %6802 = vrot.lane.b32.xlu0 %v6721, 64
        %v6803 = vpop.permute.xlu0 %6802
        %6804 = vrot.lane.b32.xlu0 %v6722, 64
        %v6805 = vpop.permute.xlu0 %6804
        %6806 = vrot.lane.b32.xlu0 %v6723, 64
        %v6807 = vpop.permute.xlu0 %6806
        %6808 = vrot.lane.b32.xlu0 %v6724, 64
        %v6809 = vpop.permute.xlu0 %6808
        %6810 = vrot.lane.b32.xlu0 %v6725, 64
        %v6811 = vpop.permute.xlu0 %6810
        %6812 = vrot.lane.b32.xlu0 %v6726, 64
        %v6813 = vpop.permute.xlu0 %6812
        %6814 = vrot.lane.b32.xlu0 %v6727, 64
        %v6815 = vpop.permute.xlu0 %6814
        %6816 = vrot.lane.b32.xlu0 %v6728, 64
        %v6817 = vpop.permute.xlu0 %6816
        %6818 = vrot.lane.b32.xlu0 %v6729, 64
        %v6819 = vpop.permute.xlu0 %6818
        %6820 = vrot.lane.b32.xlu0 %v6730, 64
        %v6821 = vpop.permute.xlu0 %6820
        %6822 = vrot.lane.b32.xlu0 %v6731, 64
        %v6823 = vpop.permute.xlu0 %6822
        %6824 = vrot.lane.b32.xlu0 %v6732, 64
        %v6825 = vpop.permute.xlu0 %6824
        %6826 = vrot.lane.b32.xlu0 %v6733, 64
        %v6827 = vpop.permute.xlu0 %6826
        %6828 = vrot.lane.b32.xlu0 %v6734, 64
        %v6829 = vpop.permute.xlu0 %6828
        %6830 = vrot.lane.b32.xlu0 %v6735, 64
        %v6831 = vpop.permute.xlu0 %6830
        %vm6864 = vcmask 1043968
        %6865 = vst.msk [vmem:[#allocation5] sm:$0xf] %vm6864, %v6769
        %6866 = vst.msk [vmem:[#allocation5 + $0x14] sm:$0xf] %vm6864, %v6771
        %6867 = vst.msk [vmem:[#allocation5 + $0x28] sm:$0xf] %vm6864, %v6773
        %6868 = vst.msk [vmem:[#allocation5 + $0x3c] sm:$0xf] %vm6864, %v6775
        %6869 = vst.msk [vmem:[#allocation5 + $0x50] sm:$0xf] %vm6864, %v6777
        %6870 = vst.msk [vmem:[#allocation5 + $0x64] sm:$0xf] %vm6864, %v6779
        %6871 = vst.msk [vmem:[#allocation5 + $0x78] sm:$0xf] %vm6864, %v6781
        %6872 = vst.msk [vmem:[#allocation5 + $0x8c] sm:$0xf] %vm6864, %v6783
        %6873 = vst.msk [vmem:[#allocation5 + $0xa0] sm:$0xf] %vm6864, %v6785
        %6874 = vst.msk [vmem:[#allocation5 + $0xb4] sm:$0xf] %vm6864, %v6787
        %6875 = vst.msk [vmem:[#allocation5 + $0xc8] sm:$0xf] %vm6864, %v6789
        %6876 = vst.msk [vmem:[#allocation5 + $0xdc] sm:$0xf] %vm6864, %v6791
        %6877 = vst.msk [vmem:[#allocation5 + $0xf0] sm:$0xf] %vm6864, %v6793
        %6878 = vst.msk [vmem:[#allocation5 + $0x104] sm:$0xf] %vm6864, %v6795
        %6879 = vst.msk [vmem:[#allocation5 + $0x118] sm:$0xf] %vm6864, %v6797
        %6880 = vst.msk [vmem:[#allocation5 + $0x12c] sm:$0xf] %vm6864, %v6799
        %6881 = vst.msk [vmem:[#allocation5 + $0x140] sm:$0xf] %vm6864, %v6801
        %6882 = vst.msk [vmem:[#allocation5 + $0x154] sm:$0xf] %vm6864, %v6803
        %6883 = vst.msk [vmem:[#allocation5 + $0x168] sm:$0xf] %vm6864, %v6805
        %6884 = vst.msk [vmem:[#allocation5 + $0x17c] sm:$0xf] %vm6864, %v6807
        %6885 = vst.msk [vmem:[#allocation5 + $0x190] sm:$0xf] %vm6864, %v6809
        %6886 = vst.msk [vmem:[#allocation5 + $0x1a4] sm:$0xf] %vm6864, %v6811
        %6887 = vst.msk [vmem:[#allocation5 + $0x1b8] sm:$0xf] %vm6864, %v6813
        %6888 = vst.msk [vmem:[#allocation5 + $0x1cc] sm:$0xf] %vm6864, %v6815
        %6889 = vst.msk [vmem:[#allocation5 + $0x1e0] sm:$0xf] %vm6864, %v6817
        %6890 = vst.msk [vmem:[#allocation5 + $0x1f4] sm:$0xf] %vm6864, %v6819
        %6891 = vst.msk [vmem:[#allocation5 + $0x208] sm:$0xf] %vm6864, %v6821
        %6892 = vst.msk [vmem:[#allocation5 + $0x21c] sm:$0xf] %vm6864, %v6823
        %6893 = vst.msk [vmem:[#allocation5 + $0x230] sm:$0xf] %vm6864, %v6825
        %6894 = vst.msk [vmem:[#allocation5 + $0x244] sm:$0xf] %vm6864, %v6827
        %6895 = vst.msk [vmem:[#allocation5 + $0x258] sm:$0xf] %vm6864, %v6829
        %6896 = vst.msk [vmem:[#allocation5 + $0x26c] sm:$0xf] %vm6864, %v6831
        %v6897 = vld [vmem:[#allocation4 + $0x4] sm:$0xf]
        %v6898 = vld [vmem:[#allocation4 + $0x8] sm:$0xf]
        %v6899 = vld [vmem:[#allocation4 + $0xc] sm:$0xf]
        %v6900 = vld [vmem:[#allocation4 + $0x10] sm:$0xf]
        %v6901 = vld [vmem:[#allocation4 + $0x14] sm:$0xf]
        %v6902 = vld [vmem:[#allocation4 + $0x18] sm:$0xf]
        %v6903 = vld [vmem:[#allocation4 + $0x1c] sm:$0xf]
        %v6904 = vld [vmem:[#allocation4 + $0x20] sm:$0xf]
        %v6905 = vld [vmem:[#allocation4 + $0x24] sm:$0xf]
        %v6906 = vld [vmem:[#allocation4 + $0x28] sm:$0xf]
        %v6907 = vld [vmem:[#allocation4 + $0x2c] sm:$0xf]
        %v6908 = vld [vmem:[#allocation4 + $0x30] sm:$0xf]
        %v6909 = vld [vmem:[#allocation4 + $0x34] sm:$0xf]
        %v6910 = vld [vmem:[#allocation4 + $0x38] sm:$0xf]
        %v6911 = vld [vmem:[#allocation4 + $0x3c] sm:$0xf]
        %v6912 = vld [vmem:[#allocation4 + $0x40] sm:$0xf]
        %v6913 = vld [vmem:[#allocation4 + $0x44] sm:$0xf]
        %v6914 = vld [vmem:[#allocation4 + $0x48] sm:$0xf]
        %v6915 = vld [vmem:[#allocation4 + $0x4c] sm:$0xf]
        %v6916 = vld [vmem:[#allocation4 + $0x50] sm:$0xf]
        %v6917 = vld [vmem:[#allocation4 + $0x54] sm:$0xf]
        %v6918 = vld [vmem:[#allocation4 + $0x58] sm:$0xf]
        %v6919 = vld [vmem:[#allocation4 + $0x5c] sm:$0xf]
        %v6920 = vld [vmem:[#allocation4 + $0x60] sm:$0xf]
        %v6921 = vld [vmem:[#allocation4 + $0x64] sm:$0xf]
        %v6922 = vld [vmem:[#allocation4 + $0x68] sm:$0xf]
        %v6923 = vld [vmem:[#allocation4 + $0x6c] sm:$0xf]
        %v6924 = vld [vmem:[#allocation4 + $0x70] sm:$0xf]
        %v6925 = vld [vmem:[#allocation4 + $0x74] sm:$0xf]
        %v6926 = vld [vmem:[#allocation4 + $0x78] sm:$0xf]
        %v6927 = vld [vmem:[#allocation4 + $0x7c] sm:$0xf]
        %v6928 = vld [vmem:[#allocation4 + $0x80] sm:$0xf]
        %v6929 = vld [vmem:[#allocation4 + $0x84] sm:$0x1]
        %v6930 = vsel %vm2334, %v6897, 0
        %v6931 = vsel %vm2335, %v6898, 0
        %v6932 = vsel %vm2336, %v6899, 0
        %v6933 = vsel %vm2337, %v6900, 0
        %v6934 = vsel %vm2338, %v6901, 0
        %v6935 = vsel %vm2339, %v6902, 0
        %v6936 = vsel %vm2340, %v6903, 0
        %v6937 = vsel %vm2341, %v6904, 0
        %v6938 = vsel %vm2342, %v6905, 0
        %v6939 = vsel %vm2343, %v6906, 0
        %v6940 = vsel %vm2344, %v6907, 0
        %v6941 = vsel %vm2345, %v6908, 0
        %v6942 = vsel %vm2346, %v6909, 0
        %v6943 = vsel %vm2347, %v6910, 0
        %v6944 = vsel %vm2348, %v6911, 0
        %v6945 = vsel %vm2349, %v6912, 0
        %v6946 = vsel %vm2350, %v6913, 0
        %v6947 = vsel %vm2351, %v6914, 0
        %v6948 = vsel %vm2352, %v6915, 0
        %v6949 = vsel %vm2353, %v6916, 0
        %v6950 = vsel %vm2354, %v6917, 0
        %v6951 = vsel %vm2355, %v6918, 0
        %v6952 = vsel %vm2356, %v6919, 0
        %v6953 = vsel %vm2357, %v6920, 0
        %v6954 = vsel %vm2358, %v6921, 0
        %v6955 = vsel %vm2359, %v6922, 0
        %v6956 = vsel %vm2360, %v6923, 0
        %v6957 = vsel %vm2361, %v6924, 0
        %v6958 = vsel %vm2362, %v6925, 0
        %v6959 = vsel %vm2363, %v6926, 0
        %v6960 = vsel %vm2364, %v6927, 0
        %v6961 = vsel %vm2365, %v6928, 0
        %v6962 = vsel %vm2366, %v6929, 0
        %v6964 = vshrl.u32 %v6930, 16
        %v6966 = vrot.slane %v6964, 4
        %v6967 = vshll.u32 %v6930, 16
        %v6969 = vrot.slane %v6967, 5
        %v6970 = vor.u32 %v6966, %v6969
        %v6971 = vrot.slane %v6970, 4
        %v6973 = vshll.u32 %v6931, 16
        %v6975 = vrot.slane %v6973, 5
        %v6976 = vsel %vm948, %v6971, %v6975
        %v6977 = vshrl.u32 %v6931, 16
        %v6979 = vrot.slane %v6977, 4
        %v6980 = vor.u32 %v6979, %v6975
        %v6981 = vrot.slane %v6980, 4
        %v6983 = vshll.u32 %v6932, 16
        %v6985 = vrot.slane %v6983, 5
        %v6986 = vsel %vm948, %v6981, %v6985
        %v6987 = vshrl.u32 %v6932, 16
        %v6989 = vrot.slane %v6987, 4
        %v6990 = vor.u32 %v6989, %v6985
        %v6991 = vrot.slane %v6990, 4
        %v6993 = vshll.u32 %v6933, 16
        %v6995 = vrot.slane %v6993, 5
        %v6996 = vsel %vm948, %v6991, %v6995
        %v6997 = vshrl.u32 %v6933, 16
        %v6999 = vrot.slane %v6997, 4
        %v7000 = vor.u32 %v6999, %v6995
        %v7001 = vrot.slane %v7000, 4
        %v7003 = vshll.u32 %v6934, 16
        %v7005 = vrot.slane %v7003, 5
        %v7006 = vsel %vm948, %v7001, %v7005
        %v7007 = vshrl.u32 %v6934, 16
        %v7009 = vrot.slane %v7007, 4
        %v7010 = vor.u32 %v7009, %v7005
        %v7011 = vrot.slane %v7010, 4
        %v7013 = vshll.u32 %v6935, 16
        %v7015 = vrot.slane %v7013, 5
        %v7016 = vsel %vm948, %v7011, %v7015
        %v7017 = vshrl.u32 %v6935, 16
        %v7019 = vrot.slane %v7017, 4
        %v7020 = vor.u32 %v7019, %v7015
        %v7021 = vrot.slane %v7020, 4
        %v7023 = vshll.u32 %v6936, 16
        %v7025 = vrot.slane %v7023, 5
        %v7026 = vsel %vm948, %v7021, %v7025
        %v7027 = vshrl.u32 %v6936, 16
        %v7029 = vrot.slane %v7027, 4
        %v7030 = vor.u32 %v7029, %v7025
        %v7031 = vrot.slane %v7030, 4
        %v7033 = vshll.u32 %v6937, 16
        %v7035 = vrot.slane %v7033, 5
        %v7036 = vsel %vm948, %v7031, %v7035
        %v7037 = vshrl.u32 %v6937, 16
        %v7039 = vrot.slane %v7037, 4
        %v7040 = vor.u32 %v7039, %v7035
        %v7041 = vrot.slane %v7040, 4
        %v7043 = vshll.u32 %v6938, 16
        %v7045 = vrot.slane %v7043, 5
        %v7046 = vsel %vm948, %v7041, %v7045
        %v7047 = vshrl.u32 %v6938, 16
        %v7049 = vrot.slane %v7047, 4
        %v7050 = vor.u32 %v7049, %v7045
        %v7051 = vrot.slane %v7050, 4
        %v7053 = vshll.u32 %v6939, 16
        %v7055 = vrot.slane %v7053, 5
        %v7056 = vsel %vm948, %v7051, %v7055
        %v7057 = vshrl.u32 %v6939, 16
        %v7059 = vrot.slane %v7057, 4
        %v7060 = vor.u32 %v7059, %v7055
        %v7061 = vrot.slane %v7060, 4
        %v7063 = vshll.u32 %v6940, 16
        %v7065 = vrot.slane %v7063, 5
        %v7066 = vsel %vm948, %v7061, %v7065
        %v7067 = vshrl.u32 %v6940, 16
        %v7069 = vrot.slane %v7067, 4
        %v7070 = vor.u32 %v7069, %v7065
        %v7071 = vrot.slane %v7070, 4
        %v7073 = vshll.u32 %v6941, 16
        %v7075 = vrot.slane %v7073, 5
        %v7076 = vsel %vm948, %v7071, %v7075
        %v7077 = vshrl.u32 %v6941, 16
        %v7079 = vrot.slane %v7077, 4
        %v7080 = vor.u32 %v7079, %v7075
        %v7081 = vrot.slane %v7080, 4
        %v7083 = vshll.u32 %v6942, 16
        %v7085 = vrot.slane %v7083, 5
        %v7086 = vsel %vm948, %v7081, %v7085
        %v7087 = vshrl.u32 %v6942, 16
        %v7089 = vrot.slane %v7087, 4
        %v7090 = vor.u32 %v7089, %v7085
        %v7091 = vrot.slane %v7090, 4
        %v7093 = vshll.u32 %v6943, 16
        %v7095 = vrot.slane %v7093, 5
        %v7096 = vsel %vm948, %v7091, %v7095
        %v7097 = vshrl.u32 %v6943, 16
        %v7099 = vrot.slane %v7097, 4
        %v7100 = vor.u32 %v7099, %v7095
        %v7101 = vrot.slane %v7100, 4
        %v7103 = vshll.u32 %v6944, 16
        %v7105 = vrot.slane %v7103, 5
        %v7106 = vsel %vm948, %v7101, %v7105
        %v7107 = vshrl.u32 %v6944, 16
        %v7109 = vrot.slane %v7107, 4
        %v7110 = vor.u32 %v7109, %v7105
        %v7111 = vrot.slane %v7110, 4
        %v7113 = vshll.u32 %v6945, 16
        %v7115 = vrot.slane %v7113, 5
        %v7116 = vsel %vm948, %v7111, %v7115
        %v7117 = vshrl.u32 %v6945, 16
        %v7119 = vrot.slane %v7117, 4
        %v7120 = vor.u32 %v7119, %v7115
        %v7121 = vrot.slane %v7120, 4
        %v7123 = vshll.u32 %v6946, 16
        %v7125 = vrot.slane %v7123, 5
        %v7126 = vsel %vm948, %v7121, %v7125
        %v7127 = vshrl.u32 %v6946, 16
        %v7129 = vrot.slane %v7127, 4
        %v7130 = vor.u32 %v7129, %v7125
        %v7131 = vrot.slane %v7130, 4
        %v7133 = vshll.u32 %v6947, 16
        %v7135 = vrot.slane %v7133, 5
        %v7136 = vsel %vm948, %v7131, %v7135
        %v7137 = vshrl.u32 %v6947, 16
        %v7139 = vrot.slane %v7137, 4
        %v7140 = vor.u32 %v7139, %v7135
        %v7141 = vrot.slane %v7140, 4
        %v7143 = vshll.u32 %v6948, 16
        %v7145 = vrot.slane %v7143, 5
        %v7146 = vsel %vm948, %v7141, %v7145
        %v7147 = vshrl.u32 %v6948, 16
        %v7149 = vrot.slane %v7147, 4
        %v7150 = vor.u32 %v7149, %v7145
        %v7151 = vrot.slane %v7150, 4
        %v7153 = vshll.u32 %v6949, 16
        %v7155 = vrot.slane %v7153, 5
        %v7156 = vsel %vm948, %v7151, %v7155
        %v7157 = vshrl.u32 %v6949, 16
        %v7159 = vrot.slane %v7157, 4
        %v7160 = vor.u32 %v7159, %v7155
        %v7161 = vrot.slane %v7160, 4
        %v7163 = vshll.u32 %v6950, 16
        %v7165 = vrot.slane %v7163, 5
        %v7166 = vsel %vm948, %v7161, %v7165
        %v7167 = vshrl.u32 %v6950, 16
        %v7169 = vrot.slane %v7167, 4
        %v7170 = vor.u32 %v7169, %v7165
        %v7171 = vrot.slane %v7170, 4
        %v7173 = vshll.u32 %v6951, 16
        %v7175 = vrot.slane %v7173, 5
        %v7176 = vsel %vm948, %v7171, %v7175
        %v7177 = vshrl.u32 %v6951, 16
        %v7179 = vrot.slane %v7177, 4
        %v7180 = vor.u32 %v7179, %v7175
        %v7181 = vrot.slane %v7180, 4
        %v7183 = vshll.u32 %v6952, 16
        %v7185 = vrot.slane %v7183, 5
        %v7186 = vsel %vm948, %v7181, %v7185
        %v7187 = vshrl.u32 %v6952, 16
        %v7189 = vrot.slane %v7187, 4
        %v7190 = vor.u32 %v7189, %v7185
        %v7191 = vrot.slane %v7190, 4
        %v7193 = vshll.u32 %v6953, 16
        %v7195 = vrot.slane %v7193, 5
        %v7196 = vsel %vm948, %v7191, %v7195
        %v7197 = vshrl.u32 %v6953, 16
        %v7199 = vrot.slane %v7197, 4
        %v7200 = vor.u32 %v7199, %v7195
        %v7201 = vrot.slane %v7200, 4
        %v7203 = vshll.u32 %v6954, 16
        %v7205 = vrot.slane %v7203, 5
        %v7206 = vsel %vm948, %v7201, %v7205
        %v7207 = vshrl.u32 %v6954, 16
        %v7209 = vrot.slane %v7207, 4
        %v7210 = vor.u32 %v7209, %v7205
        %v7211 = vrot.slane %v7210, 4
        %v7213 = vshll.u32 %v6955, 16
        %v7215 = vrot.slane %v7213, 5
        %v7216 = vsel %vm948, %v7211, %v7215
        %v7217 = vshrl.u32 %v6955, 16
        %v7219 = vrot.slane %v7217, 4
        %v7220 = vor.u32 %v7219, %v7215
        %v7221 = vrot.slane %v7220, 4
        %v7223 = vshll.u32 %v6956, 16
        %v7225 = vrot.slane %v7223, 5
        %v7226 = vsel %vm948, %v7221, %v7225
        %v7227 = vshrl.u32 %v6956, 16
        %v7229 = vrot.slane %v7227, 4
        %v7230 = vor.u32 %v7229, %v7225
        %v7231 = vrot.slane %v7230, 4
        %v7233 = vshll.u32 %v6957, 16
        %v7235 = vrot.slane %v7233, 5
        %v7236 = vsel %vm948, %v7231, %v7235
        %v7237 = vshrl.u32 %v6957, 16
        %v7239 = vrot.slane %v7237, 4
        %v7240 = vor.u32 %v7239, %v7235
        %v7241 = vrot.slane %v7240, 4
        %v7243 = vshll.u32 %v6958, 16
        %v7245 = vrot.slane %v7243, 5
        %v7246 = vsel %vm948, %v7241, %v7245
        %v7247 = vshrl.u32 %v6958, 16
        %v7249 = vrot.slane %v7247, 4
        %v7250 = vor.u32 %v7249, %v7245
        %v7251 = vrot.slane %v7250, 4
        %v7253 = vshll.u32 %v6959, 16
        %v7255 = vrot.slane %v7253, 5
        %v7256 = vsel %vm948, %v7251, %v7255
        %v7257 = vshrl.u32 %v6959, 16
        %v7259 = vrot.slane %v7257, 4
        %v7260 = vor.u32 %v7259, %v7255
        %v7261 = vrot.slane %v7260, 4
        %v7263 = vshll.u32 %v6960, 16
        %v7265 = vrot.slane %v7263, 5
        %v7266 = vsel %vm948, %v7261, %v7265
        %v7267 = vshrl.u32 %v6960, 16
        %v7269 = vrot.slane %v7267, 4
        %v7270 = vor.u32 %v7269, %v7265
        %v7271 = vrot.slane %v7270, 4
        %v7273 = vshll.u32 %v6961, 16
        %v7275 = vrot.slane %v7273, 5
        %v7276 = vsel %vm948, %v7271, %v7275
        %v7277 = vshrl.u32 %v6961, 16
        %v7279 = vrot.slane %v7277, 4
        %v7280 = vor.u32 %v7279, %v7275
        %v7281 = vrot.slane %v7280, 4
        %v7283 = vshll.u32 %v6962, 16
        %v7285 = vrot.slane %v7283, 5
        %v7286 = vsel %vm948, %v7281, %v7285
        %7319 = vst.msk [vmem:[#allocation5 + $0x4] sm:$0xf] %vm233, %v6976
        %7320 = vst.msk [vmem:[#allocation5 + $0x18] sm:$0xf] %vm233, %v6986
        %7321 = vst.msk [vmem:[#allocation5 + $0x2c] sm:$0xf] %vm233, %v6996
        %7322 = vst.msk [vmem:[#allocation5 + $0x40] sm:$0xf] %vm233, %v7006
        %7323 = vst.msk [vmem:[#allocation5 + $0x54] sm:$0xf] %vm233, %v7016
        %7324 = vst.msk [vmem:[#allocation5 + $0x68] sm:$0xf] %vm233, %v7026
        %7325 = vst.msk [vmem:[#allocation5 + $0x7c] sm:$0xf] %vm233, %v7036
        %7326 = vst.msk [vmem:[#allocation5 + $0x90] sm:$0xf] %vm233, %v7046
        %7327 = vst.msk [vmem:[#allocation5 + $0xa4] sm:$0xf] %vm233, %v7056
        %7328 = vst.msk [vmem:[#allocation5 + $0xb8] sm:$0xf] %vm233, %v7066
        %7329 = vst.msk [vmem:[#allocation5 + $0xcc] sm:$0xf] %vm233, %v7076
        %7330 = vst.msk [vmem:[#allocation5 + $0xe0] sm:$0xf] %vm233, %v7086
        %7331 = vst.msk [vmem:[#allocation5 + $0xf4] sm:$0xf] %vm233, %v7096
        %7332 = vst.msk [vmem:[#allocation5 + $0x108] sm:$0xf] %vm233, %v7106
        %7333 = vst.msk [vmem:[#allocation5 + $0x11c] sm:$0xf] %vm233, %v7116
        %7334 = vst.msk [vmem:[#allocation5 + $0x130] sm:$0xf] %vm233, %v7126
        %7335 = vst.msk [vmem:[#allocation5 + $0x144] sm:$0xf] %vm233, %v7136
        %7336 = vst.msk [vmem:[#allocation5 + $0x158] sm:$0xf] %vm233, %v7146
        %7337 = vst.msk [vmem:[#allocation5 + $0x16c] sm:$0xf] %vm233, %v7156
        %7338 = vst.msk [vmem:[#allocation5 + $0x180] sm:$0xf] %vm233, %v7166
        %7339 = vst.msk [vmem:[#allocation5 + $0x194] sm:$0xf] %vm233, %v7176
        %7340 = vst.msk [vmem:[#allocation5 + $0x1a8] sm:$0xf] %vm233, %v7186
        %7341 = vst.msk [vmem:[#allocation5 + $0x1bc] sm:$0xf] %vm233, %v7196
        %7342 = vst.msk [vmem:[#allocation5 + $0x1d0] sm:$0xf] %vm233, %v7206
        %7343 = vst.msk [vmem:[#allocation5 + $0x1e4] sm:$0xf] %vm233, %v7216
        %7344 = vst.msk [vmem:[#allocation5 + $0x1f8] sm:$0xf] %vm233, %v7226
        %7345 = vst.msk [vmem:[#allocation5 + $0x20c] sm:$0xf] %vm233, %v7236
        %7346 = vst.msk [vmem:[#allocation5 + $0x220] sm:$0xf] %vm233, %v7246
        %7347 = vst.msk [vmem:[#allocation5 + $0x234] sm:$0xf] %vm233, %v7256
        %7348 = vst.msk [vmem:[#allocation5 + $0x248] sm:$0xf] %vm233, %v7266
        %7349 = vst.msk [vmem:[#allocation5 + $0x25c] sm:$0xf] %vm233, %v7276
        %7350 = vst.msk [vmem:[#allocation5 + $0x270] sm:$0xf] %vm233, %v7286
        %v7351 = vld [vmem:[#allocation4 + $0x8] sm:$0x8]
        %v7352 = vld [vmem:[#allocation4 + $0xc] sm:$0xf]
        %v7353 = vld [vmem:[#allocation4 + $0x10] sm:$0xf]
        %v7354 = vld [vmem:[#allocation4 + $0x14] sm:$0xf]
        %v7355 = vld [vmem:[#allocation4 + $0x18] sm:$0xf]
        %v7356 = vld [vmem:[#allocation4 + $0x1c] sm:$0xf]
        %v7357 = vld [vmem:[#allocation4 + $0x20] sm:$0xf]
        %v7358 = vld [vmem:[#allocation4 + $0x24] sm:$0xf]
        %v7359 = vld [vmem:[#allocation4 + $0x28] sm:$0xf]
        %v7360 = vld [vmem:[#allocation4 + $0x2c] sm:$0xf]
        %v7361 = vld [vmem:[#allocation4 + $0x30] sm:$0xf]
        %v7362 = vld [vmem:[#allocation4 + $0x34] sm:$0xf]
        %v7363 = vld [vmem:[#allocation4 + $0x38] sm:$0xf]
        %v7364 = vld [vmem:[#allocation4 + $0x3c] sm:$0xf]
        %v7365 = vld [vmem:[#allocation4 + $0x40] sm:$0xf]
        %v7366 = vld [vmem:[#allocation4 + $0x44] sm:$0xf]
        %v7367 = vld [vmem:[#allocation4 + $0x48] sm:$0xf]
        %v7368 = vld [vmem:[#allocation4 + $0x4c] sm:$0xf]
        %v7369 = vld [vmem:[#allocation4 + $0x50] sm:$0xf]
        %v7370 = vld [vmem:[#allocation4 + $0x54] sm:$0xf]
        %v7371 = vld [vmem:[#allocation4 + $0x58] sm:$0xf]
        %v7372 = vld [vmem:[#allocation4 + $0x5c] sm:$0xf]
        %v7373 = vld [vmem:[#allocation4 + $0x60] sm:$0xf]
        %v7374 = vld [vmem:[#allocation4 + $0x64] sm:$0xf]
        %v7375 = vld [vmem:[#allocation4 + $0x68] sm:$0xf]
        %v7376 = vld [vmem:[#allocation4 + $0x6c] sm:$0xf]
        %v7377 = vld [vmem:[#allocation4 + $0x70] sm:$0xf]
        %v7378 = vld [vmem:[#allocation4 + $0x74] sm:$0xf]
        %v7379 = vld [vmem:[#allocation4 + $0x78] sm:$0xf]
        %v7380 = vld [vmem:[#allocation4 + $0x7c] sm:$0xf]
        %v7381 = vld [vmem:[#allocation4 + $0x80] sm:$0xf]
        %v7382 = vld [vmem:[#allocation4 + $0x84] sm:$0xf]
        %v7383 = vld [vmem:[#allocation4 + $0x88] sm:$0xf]
        %v7384 = vsel %vm1268, %v7351, 0
        %v7385 = vsel %vm1269, %v7352, 0
        %v7386 = vsel %vm1270, %v7353, 0
        %v7387 = vsel %vm1271, %v7354, 0
        %v7388 = vsel %vm1272, %v7355, 0
        %v7389 = vsel %vm1273, %v7356, 0
        %v7390 = vsel %vm1274, %v7357, 0
        %v7391 = vsel %vm1275, %v7358, 0
        %v7392 = vsel %vm1276, %v7359, 0
        %v7393 = vsel %vm1277, %v7360, 0
        %v7394 = vsel %vm1278, %v7361, 0
        %v7395 = vsel %vm1279, %v7362, 0
        %v7396 = vsel %vm1280, %v7363, 0
        %v7397 = vsel %vm1281, %v7364, 0
        %v7398 = vsel %vm1282, %v7365, 0
        %v7399 = vsel %vm1283, %v7366, 0
        %v7400 = vsel %vm1284, %v7367, 0
        %v7401 = vsel %vm1285, %v7368, 0
        %v7402 = vsel %vm1286, %v7369, 0
        %v7403 = vsel %vm1287, %v7370, 0
        %v7404 = vsel %vm1288, %v7371, 0
        %v7405 = vsel %vm1289, %v7372, 0
        %v7406 = vsel %vm1290, %v7373, 0
        %v7407 = vsel %vm1291, %v7374, 0
        %v7408 = vsel %vm1292, %v7375, 0
        %v7409 = vsel %vm1293, %v7376, 0
        %v7410 = vsel %vm1294, %v7377, 0
        %v7411 = vsel %vm1295, %v7378, 0
        %v7412 = vsel %vm1296, %v7379, 0
        %v7413 = vsel %vm1297, %v7380, 0
        %v7414 = vsel %vm1298, %v7381, 0
        %v7415 = vsel %vm1299, %v7382, 0
        %v7416 = vsel %vm1300, %v7383, 0
        %v7418 = vshrl.u32 %v7384, 16
        %v7420 = vrot.slane %v7418, 7
        %v7421 = vrot.slane %v7420, 4
        %v7423 = vshrl.u32 %v7385, 16
        %v7425 = vrot.slane %v7423, 7
        %v7426 = vshll.u32 %v7385, 16
        %v7428 = vor.u32 %v7425, %v7426
        %v7429 = vsel %vm1336, %v7421, %v7428
        %v7430 = vrot.slane %v7425, 4
        %v7432 = vshrl.u32 %v7386, 16
        %v7434 = vrot.slane %v7432, 7
        %v7435 = vshll.u32 %v7386, 16
        %v7437 = vor.u32 %v7434, %v7435
        %v7438 = vsel %vm1336, %v7430, %v7437
        %v7439 = vrot.slane %v7434, 4
        %v7441 = vshrl.u32 %v7387, 16
        %v7443 = vrot.slane %v7441, 7
        %v7444 = vshll.u32 %v7387, 16
        %v7446 = vor.u32 %v7443, %v7444
        %v7447 = vsel %vm1336, %v7439, %v7446
        %v7448 = vrot.slane %v7443, 4
        %v7450 = vshrl.u32 %v7388, 16
        %v7452 = vrot.slane %v7450, 7
        %v7453 = vshll.u32 %v7388, 16
        %v7455 = vor.u32 %v7452, %v7453
        %v7456 = vsel %vm1336, %v7448, %v7455
        %v7457 = vrot.slane %v7452, 4
        %v7459 = vshrl.u32 %v7389, 16
        %v7461 = vrot.slane %v7459, 7
        %v7462 = vshll.u32 %v7389, 16
        %v7464 = vor.u32 %v7461, %v7462
        %v7465 = vsel %vm1336, %v7457, %v7464
        %v7466 = vrot.slane %v7461, 4
        %v7468 = vshrl.u32 %v7390, 16
        %v7470 = vrot.slane %v7468, 7
        %v7471 = vshll.u32 %v7390, 16
        %v7473 = vor.u32 %v7470, %v7471
        %v7474 = vsel %vm1336, %v7466, %v7473
        %v7475 = vrot.slane %v7470, 4
        %v7477 = vshrl.u32 %v7391, 16
        %v7479 = vrot.slane %v7477, 7
        %v7480 = vshll.u32 %v7391, 16
        %v7482 = vor.u32 %v7479, %v7480
        %v7483 = vsel %vm1336, %v7475, %v7482
        %v7484 = vrot.slane %v7479, 4
        %v7486 = vshrl.u32 %v7392, 16
        %v7488 = vrot.slane %v7486, 7
        %v7489 = vshll.u32 %v7392, 16
        %v7491 = vor.u32 %v7488, %v7489
        %v7492 = vsel %vm1336, %v7484, %v7491
        %v7493 = vrot.slane %v7488, 4
        %v7495 = vshrl.u32 %v7393, 16
        %v7497 = vrot.slane %v7495, 7
        %v7498 = vshll.u32 %v7393, 16
        %v7500 = vor.u32 %v7497, %v7498
        %v7501 = vsel %vm1336, %v7493, %v7500
        %v7502 = vrot.slane %v7497, 4
        %v7504 = vshrl.u32 %v7394, 16
        %v7506 = vrot.slane %v7504, 7
        %v7507 = vshll.u32 %v7394, 16
        %v7509 = vor.u32 %v7506, %v7507
        %v7510 = vsel %vm1336, %v7502, %v7509
        %v7511 = vrot.slane %v7506, 4
        %v7513 = vshrl.u32 %v7395, 16
        %v7515 = vrot.slane %v7513, 7
        %v7516 = vshll.u32 %v7395, 16
        %v7518 = vor.u32 %v7515, %v7516
        %v7519 = vsel %vm1336, %v7511, %v7518
        %v7520 = vrot.slane %v7515, 4
        %v7522 = vshrl.u32 %v7396, 16
        %v7524 = vrot.slane %v7522, 7
        %v7525 = vshll.u32 %v7396, 16
        %v7527 = vor.u32 %v7524, %v7525
        %v7528 = vsel %vm1336, %v7520, %v7527
        %v7529 = vrot.slane %v7524, 4
        %v7531 = vshrl.u32 %v7397, 16
        %v7533 = vrot.slane %v7531, 7
        %v7534 = vshll.u32 %v7397, 16
        %v7536 = vor.u32 %v7533, %v7534
        %v7537 = vsel %vm1336, %v7529, %v7536
        %v7538 = vrot.slane %v7533, 4
        %v7540 = vshrl.u32 %v7398, 16
        %v7542 = vrot.slane %v7540, 7
        %v7543 = vshll.u32 %v7398, 16
        %v7545 = vor.u32 %v7542, %v7543
        %v7546 = vsel %vm1336, %v7538, %v7545
        %v7547 = vrot.slane %v7542, 4
        %v7549 = vshrl.u32 %v7399, 16
        %v7551 = vrot.slane %v7549, 7
        %v7552 = vshll.u32 %v7399, 16
        %v7554 = vor.u32 %v7551, %v7552
        %v7555 = vsel %vm1336, %v7547, %v7554
        %v7556 = vrot.slane %v7551, 4
        %v7558 = vshrl.u32 %v7400, 16
        %v7560 = vrot.slane %v7558, 7
        %v7561 = vshll.u32 %v7400, 16
        %v7563 = vor.u32 %v7560, %v7561
        %v7564 = vsel %vm1336, %v7556, %v7563
        %v7565 = vrot.slane %v7560, 4
        %v7567 = vshrl.u32 %v7401, 16
        %v7569 = vrot.slane %v7567, 7
        %v7570 = vshll.u32 %v7401, 16
        %v7572 = vor.u32 %v7569, %v7570
        %v7573 = vsel %vm1336, %v7565, %v7572
        %v7574 = vrot.slane %v7569, 4
        %v7576 = vshrl.u32 %v7402, 16
        %v7578 = vrot.slane %v7576, 7
        %v7579 = vshll.u32 %v7402, 16
        %v7581 = vor.u32 %v7578, %v7579
        %v7582 = vsel %vm1336, %v7574, %v7581
        %v7583 = vrot.slane %v7578, 4
        %v7585 = vshrl.u32 %v7403, 16
        %v7587 = vrot.slane %v7585, 7
        %v7588 = vshll.u32 %v7403, 16
        %v7590 = vor.u32 %v7587, %v7588
        %v7591 = vsel %vm1336, %v7583, %v7590
        %v7592 = vrot.slane %v7587, 4
        %v7594 = vshrl.u32 %v7404, 16
        %v7596 = vrot.slane %v7594, 7
        %v7597 = vshll.u32 %v7404, 16
        %v7599 = vor.u32 %v7596, %v7597
        %v7600 = vsel %vm1336, %v7592, %v7599
        %v7601 = vrot.slane %v7596, 4
        %v7603 = vshrl.u32 %v7405, 16
        %v7605 = vrot.slane %v7603, 7
        %v7606 = vshll.u32 %v7405, 16
        %v7608 = vor.u32 %v7605, %v7606
        %v7609 = vsel %vm1336, %v7601, %v7608
        %v7610 = vrot.slane %v7605, 4
        %v7612 = vshrl.u32 %v7406, 16
        %v7614 = vrot.slane %v7612, 7
        %v7615 = vshll.u32 %v7406, 16
        %v7617 = vor.u32 %v7614, %v7615
        %v7618 = vsel %vm1336, %v7610, %v7617
        %v7619 = vrot.slane %v7614, 4
        %v7621 = vshrl.u32 %v7407, 16
        %v7623 = vrot.slane %v7621, 7
        %v7624 = vshll.u32 %v7407, 16
        %v7626 = vor.u32 %v7623, %v7624
        %v7627 = vsel %vm1336, %v7619, %v7626
        %v7628 = vrot.slane %v7623, 4
        %v7630 = vshrl.u32 %v7408, 16
        %v7632 = vrot.slane %v7630, 7
        %v7633 = vshll.u32 %v7408, 16
        %v7635 = vor.u32 %v7632, %v7633
        %v7636 = vsel %vm1336, %v7628, %v7635
        %v7637 = vrot.slane %v7632, 4
        %v7639 = vshrl.u32 %v7409, 16
        %v7641 = vrot.slane %v7639, 7
        %v7642 = vshll.u32 %v7409, 16
        %v7644 = vor.u32 %v7641, %v7642
        %v7645 = vsel %vm1336, %v7637, %v7644
        %v7646 = vrot.slane %v7641, 4
        %v7648 = vshrl.u32 %v7410, 16
        %v7650 = vrot.slane %v7648, 7
        %v7651 = vshll.u32 %v7410, 16
        %v7653 = vor.u32 %v7650, %v7651
        %v7654 = vsel %vm1336, %v7646, %v7653
        %v7655 = vrot.slane %v7650, 4
        %v7657 = vshrl.u32 %v7411, 16
        %v7659 = vrot.slane %v7657, 7
        %v7660 = vshll.u32 %v7411, 16
        %v7662 = vor.u32 %v7659, %v7660
        %v7663 = vsel %vm1336, %v7655, %v7662
        %v7664 = vrot.slane %v7659, 4
        %v7666 = vshrl.u32 %v7412, 16
        %v7668 = vrot.slane %v7666, 7
        %v7669 = vshll.u32 %v7412, 16
        %v7671 = vor.u32 %v7668, %v7669
        %v7672 = vsel %vm1336, %v7664, %v7671
        %v7673 = vrot.slane %v7668, 4
        %v7675 = vshrl.u32 %v7413, 16
        %v7677 = vrot.slane %v7675, 7
        %v7678 = vshll.u32 %v7413, 16
        %v7680 = vor.u32 %v7677, %v7678
        %v7681 = vsel %vm1336, %v7673, %v7680
        %v7682 = vrot.slane %v7677, 4
        %v7684 = vshrl.u32 %v7414, 16
        %v7686 = vrot.slane %v7684, 7
        %v7687 = vshll.u32 %v7414, 16
        %v7689 = vor.u32 %v7686, %v7687
        %v7690 = vsel %vm1336, %v7682, %v7689
        %v7691 = vrot.slane %v7686, 4
        %v7693 = vshrl.u32 %v7415, 16
        %v7695 = vrot.slane %v7693, 7
        %v7696 = vshll.u32 %v7415, 16
        %v7698 = vor.u32 %v7695, %v7696
        %v7699 = vsel %vm1336, %v7691, %v7698
        %v7700 = vrot.slane %v7695, 4
        %v7702 = vshrl.u32 %v7416, 16
        %v7704 = vrot.slane %v7702, 7
        %v7705 = vshll.u32 %v7416, 16
        %v7707 = vor.u32 %v7704, %v7705
        %v7708 = vsel %vm1336, %v7700, %v7707
        %7709 = vrot.lane.b32.xlu0 %v7429, 64
        %v7710 = vpop.permute.xlu0 %7709
        %7711 = vrot.lane.b32.xlu0 %v7438, 64
        %v7712 = vpop.permute.xlu0 %7711
        %7713 = vrot.lane.b32.xlu0 %v7447, 64
        %v7714 = vpop.permute.xlu0 %7713
        %7715 = vrot.lane.b32.xlu0 %v7456, 64
        %v7716 = vpop.permute.xlu0 %7715
        %7717 = vrot.lane.b32.xlu0 %v7465, 64
        %v7718 = vpop.permute.xlu0 %7717
        %7719 = vrot.lane.b32.xlu0 %v7474, 64
        %v7720 = vpop.permute.xlu0 %7719
        %7721 = vrot.lane.b32.xlu0 %v7483, 64
        %v7722 = vpop.permute.xlu0 %7721
        %7723 = vrot.lane.b32.xlu0 %v7492, 64
        %v7724 = vpop.permute.xlu0 %7723
        %7725 = vrot.lane.b32.xlu0 %v7501, 64
        %v7726 = vpop.permute.xlu0 %7725
        %7727 = vrot.lane.b32.xlu0 %v7510, 64
        %v7728 = vpop.permute.xlu0 %7727
        %7729 = vrot.lane.b32.xlu0 %v7519, 64
        %v7730 = vpop.permute.xlu0 %7729
        %7731 = vrot.lane.b32.xlu0 %v7528, 64
        %v7732 = vpop.permute.xlu0 %7731
        %7733 = vrot.lane.b32.xlu0 %v7537, 64
        %v7734 = vpop.permute.xlu0 %7733
        %7735 = vrot.lane.b32.xlu0 %v7546, 64
        %v7736 = vpop.permute.xlu0 %7735
        %7737 = vrot.lane.b32.xlu0 %v7555, 64
        %v7738 = vpop.permute.xlu0 %7737
        %7739 = vrot.lane.b32.xlu0 %v7564, 64
        %v7740 = vpop.permute.xlu0 %7739
        %7741 = vrot.lane.b32.xlu0 %v7573, 64
        %v7742 = vpop.permute.xlu0 %7741
        %7743 = vrot.lane.b32.xlu0 %v7582, 64
        %v7744 = vpop.permute.xlu0 %7743
        %7745 = vrot.lane.b32.xlu0 %v7591, 64
        %v7746 = vpop.permute.xlu0 %7745
        %7747 = vrot.lane.b32.xlu0 %v7600, 64
        %v7748 = vpop.permute.xlu0 %7747
        %7749 = vrot.lane.b32.xlu0 %v7609, 64
        %v7750 = vpop.permute.xlu0 %7749
        %7751 = vrot.lane.b32.xlu0 %v7618, 64
        %v7752 = vpop.permute.xlu0 %7751
        %7753 = vrot.lane.b32.xlu0 %v7627, 64
        %v7754 = vpop.permute.xlu0 %7753
        %7755 = vrot.lane.b32.xlu0 %v7636, 64
        %v7756 = vpop.permute.xlu0 %7755
        %7757 = vrot.lane.b32.xlu0 %v7645, 64
        %v7758 = vpop.permute.xlu0 %7757
        %7759 = vrot.lane.b32.xlu0 %v7654, 64
        %v7760 = vpop.permute.xlu0 %7759
        %7761 = vrot.lane.b32.xlu0 %v7663, 64
        %v7762 = vpop.permute.xlu0 %7761
        %7763 = vrot.lane.b32.xlu0 %v7672, 64
        %v7764 = vpop.permute.xlu0 %7763
        %7765 = vrot.lane.b32.xlu0 %v7681, 64
        %v7766 = vpop.permute.xlu0 %7765
        %7767 = vrot.lane.b32.xlu0 %v7690, 64
        %v7768 = vpop.permute.xlu0 %7767
        %7769 = vrot.lane.b32.xlu0 %v7699, 64
        %v7770 = vpop.permute.xlu0 %7769
        %7771 = vrot.lane.b32.xlu0 %v7708, 64
        %v7772 = vpop.permute.xlu0 %7771
        %7805 = vst.msk [vmem:[#allocation5 + $0x4] sm:$0xf] %vm6864, %v7710
        %7806 = vst.msk [vmem:[#allocation5 + $0x18] sm:$0xf] %vm6864, %v7712
        %7807 = vst.msk [vmem:[#allocation5 + $0x2c] sm:$0xf] %vm6864, %v7714
        %7808 = vst.msk [vmem:[#allocation5 + $0x40] sm:$0xf] %vm6864, %v7716
        %7809 = vst.msk [vmem:[#allocation5 + $0x54] sm:$0xf] %vm6864, %v7718
        %7810 = vst.msk [vmem:[#allocation5 + $0x68] sm:$0xf] %vm6864, %v7720
        %7811 = vst.msk [vmem:[#allocation5 + $0x7c] sm:$0xf] %vm6864, %v7722
        %7812 = vst.msk [vmem:[#allocation5 + $0x90] sm:$0xf] %vm6864, %v7724
        %7813 = vst.msk [vmem:[#allocation5 + $0xa4] sm:$0xf] %vm6864, %v7726
        %7814 = vst.msk [vmem:[#allocation5 + $0xb8] sm:$0xf] %vm6864, %v7728
        %7815 = vst.msk [vmem:[#allocation5 + $0xcc] sm:$0xf] %vm6864, %v7730
        %7816 = vst.msk [vmem:[#allocation5 + $0xe0] sm:$0xf] %vm6864, %v7732
        %7817 = vst.msk [vmem:[#allocation5 + $0xf4] sm:$0xf] %vm6864, %v7734
        %7818 = vst.msk [vmem:[#allocation5 + $0x108] sm:$0xf] %vm6864, %v7736
        %7819 = vst.msk [vmem:[#allocation5 + $0x11c] sm:$0xf] %vm6864, %v7738
        %7820 = vst.msk [vmem:[#allocation5 + $0x130] sm:$0xf] %vm6864, %v7740
        %7821 = vst.msk [vmem:[#allocation5 + $0x144] sm:$0xf] %vm6864, %v7742
        %7822 = vst.msk [vmem:[#allocation5 + $0x158] sm:$0xf] %vm6864, %v7744
        %7823 = vst.msk [vmem:[#allocation5 + $0x16c] sm:$0xf] %vm6864, %v7746
        %7824 = vst.msk [vmem:[#allocation5 + $0x180] sm:$0xf] %vm6864, %v7748
        %7825 = vst.msk [vmem:[#allocation5 + $0x194] sm:$0xf] %vm6864, %v7750
        %7826 = vst.msk [vmem:[#allocation5 + $0x1a8] sm:$0xf] %vm6864, %v7752
        %7827 = vst.msk [vmem:[#allocation5 + $0x1bc] sm:$0xf] %vm6864, %v7754
        %7828 = vst.msk [vmem:[#allocation5 + $0x1d0] sm:$0xf] %vm6864, %v7756
        %7829 = vst.msk [vmem:[#allocation5 + $0x1e4] sm:$0xf] %vm6864, %v7758
        %7830 = vst.msk [vmem:[#allocation5 + $0x1f8] sm:$0xf] %vm6864, %v7760
        %7831 = vst.msk [vmem:[#allocation5 + $0x20c] sm:$0xf] %vm6864, %v7762
        %7832 = vst.msk [vmem:[#allocation5 + $0x220] sm:$0xf] %vm6864, %v7764
        %7833 = vst.msk [vmem:[#allocation5 + $0x234] sm:$0xf] %vm6864, %v7766
        %7834 = vst.msk [vmem:[#allocation5 + $0x248] sm:$0xf] %vm6864, %v7768
        %7835 = vst.msk [vmem:[#allocation5 + $0x25c] sm:$0xf] %vm6864, %v7770
        %7836 = vst.msk [vmem:[#allocation5 + $0x270] sm:$0xf] %vm6864, %v7772
        %v7837 = vld [vmem:[#allocation4 + $0xc] sm:$0xf]
        %v7838 = vld [vmem:[#allocation4 + $0x10] sm:$0xf]
        %v7839 = vld [vmem:[#allocation4 + $0x14] sm:$0xf]
        %v7840 = vld [vmem:[#allocation4 + $0x18] sm:$0xf]
        %v7841 = vld [vmem:[#allocation4 + $0x1c] sm:$0xf]
        %v7842 = vld [vmem:[#allocation4 + $0x20] sm:$0xf]
        %v7843 = vld [vmem:[#allocation4 + $0x24] sm:$0xf]
        %v7844 = vld [vmem:[#allocation4 + $0x28] sm:$0xf]
        %v7845 = vld [vmem:[#allocation4 + $0x2c] sm:$0xf]
        %v7846 = vld [vmem:[#allocation4 + $0x30] sm:$0xf]
        %v7847 = vld [vmem:[#allocation4 + $0x34] sm:$0xf]
        %v7848 = vld [vmem:[#allocation4 + $0x38] sm:$0xf]
        %v7849 = vld [vmem:[#allocation4 + $0x3c] sm:$0xf]
        %v7850 = vld [vmem:[#allocation4 + $0x40] sm:$0xf]
        %v7851 = vld [vmem:[#allocation4 + $0x44] sm:$0xf]
        %v7852 = vld [vmem:[#allocation4 + $0x48] sm:$0xf]
        %v7853 = vld [vmem:[#allocation4 + $0x4c] sm:$0xf]
        %v7854 = vld [vmem:[#allocation4 + $0x50] sm:$0xf]
        %v7855 = vld [vmem:[#allocation4 + $0x54] sm:$0xf]
        %v7856 = vld [vmem:[#allocation4 + $0x58] sm:$0xf]
        %v7857 = vld [vmem:[#allocation4 + $0x5c] sm:$0xf]
        %v7858 = vld [vmem:[#allocation4 + $0x60] sm:$0xf]
        %v7859 = vld [vmem:[#allocation4 + $0x64] sm:$0xf]
        %v7860 = vld [vmem:[#allocation4 + $0x68] sm:$0xf]
        %v7861 = vld [vmem:[#allocation4 + $0x6c] sm:$0xf]
        %v7862 = vld [vmem:[#allocation4 + $0x70] sm:$0xf]
        %v7863 = vld [vmem:[#allocation4 + $0x74] sm:$0xf]
        %v7864 = vld [vmem:[#allocation4 + $0x78] sm:$0xf]
        %v7865 = vld [vmem:[#allocation4 + $0x7c] sm:$0xf]
        %v7866 = vld [vmem:[#allocation4 + $0x80] sm:$0xf]
        %v7867 = vld [vmem:[#allocation4 + $0x84] sm:$0xf]
        %v7868 = vld [vmem:[#allocation4 + $0x88] sm:$0xf]
        %7869 = vst.msk [vmem:[#allocation5 + $0x8] sm:$0xf] %vm233, %v7837
        %7870 = vst.msk [vmem:[#allocation5 + $0x1c] sm:$0xf] %vm233, %v7838
        %7871 = vst.msk [vmem:[#allocation5 + $0x30] sm:$0xf] %vm233, %v7839
        %7872 = vst.msk [vmem:[#allocation5 + $0x44] sm:$0xf] %vm233, %v7840
        %7873 = vst.msk [vmem:[#allocation5 + $0x58] sm:$0xf] %vm233, %v7841
        %7874 = vst.msk [vmem:[#allocation5 + $0x6c] sm:$0xf] %vm233, %v7842
        %7875 = vst.msk [vmem:[#allocation5 + $0x80] sm:$0xf] %vm233, %v7843
        %7876 = vst.msk [vmem:[#allocation5 + $0x94] sm:$0xf] %vm233, %v7844
        %7877 = vst.msk [vmem:[#allocation5 + $0xa8] sm:$0xf] %vm233, %v7845
        %7878 = vst.msk [vmem:[#allocation5 + $0xbc] sm:$0xf] %vm233, %v7846
        %7879 = vst.msk [vmem:[#allocation5 + $0xd0] sm:$0xf] %vm233, %v7847
        %7880 = vst.msk [vmem:[#allocation5 + $0xe4] sm:$0xf] %vm233, %v7848
        %7881 = vst.msk [vmem:[#allocation5 + $0xf8] sm:$0xf] %vm233, %v7849
        %7882 = vst.msk [vmem:[#allocation5 + $0x10c] sm:$0xf] %vm233, %v7850
        %7883 = vst.msk [vmem:[#allocation5 + $0x120] sm:$0xf] %vm233, %v7851
        %7884 = vst.msk [vmem:[#allocation5 + $0x134] sm:$0xf] %vm233, %v7852
        %7885 = vst.msk [vmem:[#allocation5 + $0x148] sm:$0xf] %vm233, %v7853
        %7886 = vst.msk [vmem:[#allocation5 + $0x15c] sm:$0xf] %vm233, %v7854
        %7887 = vst.msk [vmem:[#allocation5 + $0x170] sm:$0xf] %vm233, %v7855
        %7888 = vst.msk [vmem:[#allocation5 + $0x184] sm:$0xf] %vm233, %v7856
        %7889 = vst.msk [vmem:[#allocation5 + $0x198] sm:$0xf] %vm233, %v7857
        %7890 = vst.msk [vmem:[#allocation5 + $0x1ac] sm:$0xf] %vm233, %v7858
        %7891 = vst.msk [vmem:[#allocation5 + $0x1c0] sm:$0xf] %vm233, %v7859
        %7892 = vst.msk [vmem:[#allocation5 + $0x1d4] sm:$0xf] %vm233, %v7860
        %7893 = vst.msk [vmem:[#allocation5 + $0x1e8] sm:$0xf] %vm233, %v7861
        %7894 = vst.msk [vmem:[#allocation5 + $0x1fc] sm:$0xf] %vm233, %v7862
        %7895 = vst.msk [vmem:[#allocation5 + $0x210] sm:$0xf] %vm233, %v7863
        %7896 = vst.msk [vmem:[#allocation5 + $0x224] sm:$0xf] %vm233, %v7864
        %7897 = vst.msk [vmem:[#allocation5 + $0x238] sm:$0xf] %vm233, %v7865
        %7898 = vst.msk [vmem:[#allocation5 + $0x24c] sm:$0xf] %vm233, %v7866
        %7899 = vst.msk [vmem:[#allocation5 + $0x260] sm:$0xf] %vm233, %v7867
        %7900 = vst.msk [vmem:[#allocation5 + $0x274] sm:$0xf] %vm233, %v7868
        %v7901 = vld [vmem:[#allocation4 + $0xc] sm:$0xf]
        %v7902 = vld [vmem:[#allocation4 + $0x10] sm:$0xf]
        %v7903 = vld [vmem:[#allocation4 + $0x14] sm:$0xf]
        %v7904 = vld [vmem:[#allocation4 + $0x18] sm:$0xf]
        %v7905 = vld [vmem:[#allocation4 + $0x1c] sm:$0xf]
        %v7906 = vld [vmem:[#allocation4 + $0x20] sm:$0xf]
        %v7907 = vld [vmem:[#allocation4 + $0x24] sm:$0xf]
        %v7908 = vld [vmem:[#allocation4 + $0x28] sm:$0xf]
        %v7909 = vld [vmem:[#allocation4 + $0x2c] sm:$0xf]
        %v7910 = vld [vmem:[#allocation4 + $0x30] sm:$0xf]
        %v7911 = vld [vmem:[#allocation4 + $0x34] sm:$0xf]
        %v7912 = vld [vmem:[#allocation4 + $0x38] sm:$0xf]
        %v7913 = vld [vmem:[#allocation4 + $0x3c] sm:$0xf]
        %v7914 = vld [vmem:[#allocation4 + $0x40] sm:$0xf]
        %v7915 = vld [vmem:[#allocation4 + $0x44] sm:$0xf]
        %v7916 = vld [vmem:[#allocation4 + $0x48] sm:$0xf]
        %v7917 = vld [vmem:[#allocation4 + $0x4c] sm:$0xf]
        %v7918 = vld [vmem:[#allocation4 + $0x50] sm:$0xf]
        %v7919 = vld [vmem:[#allocation4 + $0x54] sm:$0xf]
        %v7920 = vld [vmem:[#allocation4 + $0x58] sm:$0xf]
        %v7921 = vld [vmem:[#allocation4 + $0x5c] sm:$0xf]
        %v7922 = vld [vmem:[#allocation4 + $0x60] sm:$0xf]
        %v7923 = vld [vmem:[#allocation4 + $0x64] sm:$0xf]
        %v7924 = vld [vmem:[#allocation4 + $0x68] sm:$0xf]
        %v7925 = vld [vmem:[#allocation4 + $0x6c] sm:$0xf]
        %v7926 = vld [vmem:[#allocation4 + $0x70] sm:$0xf]
        %v7927 = vld [vmem:[#allocation4 + $0x74] sm:$0xf]
        %v7928 = vld [vmem:[#allocation4 + $0x78] sm:$0xf]
        %v7929 = vld [vmem:[#allocation4 + $0x7c] sm:$0xf]
        %v7930 = vld [vmem:[#allocation4 + $0x80] sm:$0xf]
        %v7931 = vld [vmem:[#allocation4 + $0x84] sm:$0xf]
        %v7932 = vld [vmem:[#allocation4 + $0x88] sm:$0xf]
        %v7933 = vld [vmem:[#allocation4 + $0x8c] sm:$0x1]
        %v7934 = vsel %vm2334, %v7901, 0
        %v7935 = vsel %vm2335, %v7902, 0
        %v7936 = vsel %vm2336, %v7903, 0
        %v7937 = vsel %vm2337, %v7904, 0
        %v7938 = vsel %vm2338, %v7905, 0
        %v7939 = vsel %vm2339, %v7906, 0
        %v7940 = vsel %vm2340, %v7907, 0
        %v7941 = vsel %vm2341, %v7908, 0
        %v7942 = vsel %vm2342, %v7909, 0
        %v7943 = vsel %vm2343, %v7910, 0
        %v7944 = vsel %vm2344, %v7911, 0
        %v7945 = vsel %vm2345, %v7912, 0
        %v7946 = vsel %vm2346, %v7913, 0
        %v7947 = vsel %vm2347, %v7914, 0
        %v7948 = vsel %vm2348, %v7915, 0
        %v7949 = vsel %vm2349, %v7916, 0
        %v7950 = vsel %vm2350, %v7917, 0
        %v7951 = vsel %vm2351, %v7918, 0
        %v7952 = vsel %vm2352, %v7919, 0
        %v7953 = vsel %vm2353, %v7920, 0
        %v7954 = vsel %vm2354, %v7921, 0
        %v7955 = vsel %vm2355, %v7922, 0
        %v7956 = vsel %vm2356, %v7923, 0
        %v7957 = vsel %vm2357, %v7924, 0
        %v7958 = vsel %vm2358, %v7925, 0
        %v7959 = vsel %vm2359, %v7926, 0
        %v7960 = vsel %vm2360, %v7927, 0
        %v7961 = vsel %vm2361, %v7928, 0
        %v7962 = vsel %vm2362, %v7929, 0
        %v7963 = vsel %vm2363, %v7930, 0
        %v7964 = vsel %vm2364, %v7931, 0
        %v7965 = vsel %vm2365, %v7932, 0
        %v7966 = vsel %vm2366, %v7933, 0
        %v7968 = vshrl.u32 %v7934, 16
        %v7970 = vrot.slane %v7968, 4
        %v7971 = vshll.u32 %v7934, 16
        %v7973 = vrot.slane %v7971, 5
        %v7974 = vor.u32 %v7970, %v7973
        %v7975 = vrot.slane %v7974, 4
        %v7977 = vshll.u32 %v7935, 16
        %v7979 = vrot.slane %v7977, 5
        %v7980 = vsel %vm948, %v7975, %v7979
        %v7981 = vshrl.u32 %v7935, 16
        %v7983 = vrot.slane %v7981, 4
        %v7984 = vor.u32 %v7983, %v7979
        %v7985 = vrot.slane %v7984, 4
        %v7987 = vshll.u32 %v7936, 16
        %v7989 = vrot.slane %v7987, 5
        %v7990 = vsel %vm948, %v7985, %v7989
        %v7991 = vshrl.u32 %v7936, 16
        %v7993 = vrot.slane %v7991, 4
        %v7994 = vor.u32 %v7993, %v7989
        %v7995 = vrot.slane %v7994, 4
        %v7997 = vshll.u32 %v7937, 16
        %v7999 = vrot.slane %v7997, 5
        %v8000 = vsel %vm948, %v7995, %v7999
        %v8001 = vshrl.u32 %v7937, 16
        %v8003 = vrot.slane %v8001, 4
        %v8004 = vor.u32 %v8003, %v7999
        %v8005 = vrot.slane %v8004, 4
        %v8007 = vshll.u32 %v7938, 16
        %v8009 = vrot.slane %v8007, 5
        %v8010 = vsel %vm948, %v8005, %v8009
        %v8011 = vshrl.u32 %v7938, 16
        %v8013 = vrot.slane %v8011, 4
        %v8014 = vor.u32 %v8013, %v8009
        %v8015 = vrot.slane %v8014, 4
        %v8017 = vshll.u32 %v7939, 16
        %v8019 = vrot.slane %v8017, 5
        %v8020 = vsel %vm948, %v8015, %v8019
        %v8021 = vshrl.u32 %v7939, 16
        %v8023 = vrot.slane %v8021, 4
        %v8024 = vor.u32 %v8023, %v8019
        %v8025 = vrot.slane %v8024, 4
        %v8027 = vshll.u32 %v7940, 16
        %v8029 = vrot.slane %v8027, 5
        %v8030 = vsel %vm948, %v8025, %v8029
        %v8031 = vshrl.u32 %v7940, 16
        %v8033 = vrot.slane %v8031, 4
        %v8034 = vor.u32 %v8033, %v8029
        %v8035 = vrot.slane %v8034, 4
        %v8037 = vshll.u32 %v7941, 16
        %v8039 = vrot.slane %v8037, 5
        %v8040 = vsel %vm948, %v8035, %v8039
        %v8041 = vshrl.u32 %v7941, 16
        %v8043 = vrot.slane %v8041, 4
        %v8044 = vor.u32 %v8043, %v8039
        %v8045 = vrot.slane %v8044, 4
        %v8047 = vshll.u32 %v7942, 16
        %v8049 = vrot.slane %v8047, 5
        %v8050 = vsel %vm948, %v8045, %v8049
        %v8051 = vshrl.u32 %v7942, 16
        %v8053 = vrot.slane %v8051, 4
        %v8054 = vor.u32 %v8053, %v8049
        %v8055 = vrot.slane %v8054, 4
        %v8057 = vshll.u32 %v7943, 16
        %v8059 = vrot.slane %v8057, 5
        %v8060 = vsel %vm948, %v8055, %v8059
        %v8061 = vshrl.u32 %v7943, 16
        %v8063 = vrot.slane %v8061, 4
        %v8064 = vor.u32 %v8063, %v8059
        %v8065 = vrot.slane %v8064, 4
        %v8067 = vshll.u32 %v7944, 16
        %v8069 = vrot.slane %v8067, 5
        %v8070 = vsel %vm948, %v8065, %v8069
        %v8071 = vshrl.u32 %v7944, 16
        %v8073 = vrot.slane %v8071, 4
        %v8074 = vor.u32 %v8073, %v8069
        %v8075 = vrot.slane %v8074, 4
        %v8077 = vshll.u32 %v7945, 16
        %v8079 = vrot.slane %v8077, 5
        %v8080 = vsel %vm948, %v8075, %v8079
        %v8081 = vshrl.u32 %v7945, 16
        %v8083 = vrot.slane %v8081, 4
        %v8084 = vor.u32 %v8083, %v8079
        %v8085 = vrot.slane %v8084, 4
        %v8087 = vshll.u32 %v7946, 16
        %v8089 = vrot.slane %v8087, 5
        %v8090 = vsel %vm948, %v8085, %v8089
        %v8091 = vshrl.u32 %v7946, 16
        %v8093 = vrot.slane %v8091, 4
        %v8094 = vor.u32 %v8093, %v8089
        %v8095 = vrot.slane %v8094, 4
        %v8097 = vshll.u32 %v7947, 16
        %v8099 = vrot.slane %v8097, 5
        %v8100 = vsel %vm948, %v8095, %v8099
        %v8101 = vshrl.u32 %v7947, 16
        %v8103 = vrot.slane %v8101, 4
        %v8104 = vor.u32 %v8103, %v8099
        %v8105 = vrot.slane %v8104, 4
        %v8107 = vshll.u32 %v7948, 16
        %v8109 = vrot.slane %v8107, 5
        %v8110 = vsel %vm948, %v8105, %v8109
        %v8111 = vshrl.u32 %v7948, 16
        %v8113 = vrot.slane %v8111, 4
        %v8114 = vor.u32 %v8113, %v8109
        %v8115 = vrot.slane %v8114, 4
        %v8117 = vshll.u32 %v7949, 16
        %v8119 = vrot.slane %v8117, 5
        %v8120 = vsel %vm948, %v8115, %v8119
        %v8121 = vshrl.u32 %v7949, 16
        %v8123 = vrot.slane %v8121, 4
        %v8124 = vor.u32 %v8123, %v8119
        %v8125 = vrot.slane %v8124, 4
        %v8127 = vshll.u32 %v7950, 16
        %v8129 = vrot.slane %v8127, 5
        %v8130 = vsel %vm948, %v8125, %v8129
        %v8131 = vshrl.u32 %v7950, 16
        %v8133 = vrot.slane %v8131, 4
        %v8134 = vor.u32 %v8133, %v8129
        %v8135 = vrot.slane %v8134, 4
        %v8137 = vshll.u32 %v7951, 16
        %v8139 = vrot.slane %v8137, 5
        %v8140 = vsel %vm948, %v8135, %v8139
        %v8141 = vshrl.u32 %v7951, 16
        %v8143 = vrot.slane %v8141, 4
        %v8144 = vor.u32 %v8143, %v8139
        %v8145 = vrot.slane %v8144, 4
        %v8147 = vshll.u32 %v7952, 16
        %v8149 = vrot.slane %v8147, 5
        %v8150 = vsel %vm948, %v8145, %v8149
        %v8151 = vshrl.u32 %v7952, 16
        %v8153 = vrot.slane %v8151, 4
        %v8154 = vor.u32 %v8153, %v8149
        %v8155 = vrot.slane %v8154, 4
        %v8157 = vshll.u32 %v7953, 16
        %v8159 = vrot.slane %v8157, 5
        %v8160 = vsel %vm948, %v8155, %v8159
        %v8161 = vshrl.u32 %v7953, 16
        %v8163 = vrot.slane %v8161, 4
        %v8164 = vor.u32 %v8163, %v8159
        %v8165 = vrot.slane %v8164, 4
        %v8167 = vshll.u32 %v7954, 16
        %v8169 = vrot.slane %v8167, 5
        %v8170 = vsel %vm948, %v8165, %v8169
        %v8171 = vshrl.u32 %v7954, 16
        %v8173 = vrot.slane %v8171, 4
        %v8174 = vor.u32 %v8173, %v8169
        %v8175 = vrot.slane %v8174, 4
        %v8177 = vshll.u32 %v7955, 16
        %v8179 = vrot.slane %v8177, 5
        %v8180 = vsel %vm948, %v8175, %v8179
        %v8181 = vshrl.u32 %v7955, 16
        %v8183 = vrot.slane %v8181, 4
        %v8184 = vor.u32 %v8183, %v8179
        %v8185 = vrot.slane %v8184, 4
        %v8187 = vshll.u32 %v7956, 16
        %v8189 = vrot.slane %v8187, 5
        %v8190 = vsel %vm948, %v8185, %v8189
        %v8191 = vshrl.u32 %v7956, 16
        %v8193 = vrot.slane %v8191, 4
        %v8194 = vor.u32 %v8193, %v8189
        %v8195 = vrot.slane %v8194, 4
        %v8197 = vshll.u32 %v7957, 16
        %v8199 = vrot.slane %v8197, 5
        %v8200 = vsel %vm948, %v8195, %v8199
        %v8201 = vshrl.u32 %v7957, 16
        %v8203 = vrot.slane %v8201, 4
        %v8204 = vor.u32 %v8203, %v8199
        %v8205 = vrot.slane %v8204, 4
        %v8207 = vshll.u32 %v7958, 16
        %v8209 = vrot.slane %v8207, 5
        %v8210 = vsel %vm948, %v8205, %v8209
        %v8211 = vshrl.u32 %v7958, 16
        %v8213 = vrot.slane %v8211, 4
        %v8214 = vor.u32 %v8213, %v8209
        %v8215 = vrot.slane %v8214, 4
        %v8217 = vshll.u32 %v7959, 16
        %v8219 = vrot.slane %v8217, 5
        %v8220 = vsel %vm948, %v8215, %v8219
        %v8221 = vshrl.u32 %v7959, 16
        %v8223 = vrot.slane %v8221, 4
        %v8224 = vor.u32 %v8223, %v8219
        %v8225 = vrot.slane %v8224, 4
        %v8227 = vshll.u32 %v7960, 16
        %v8229 = vrot.slane %v8227, 5
        %v8230 = vsel %vm948, %v8225, %v8229
        %v8231 = vshrl.u32 %v7960, 16
        %v8233 = vrot.slane %v8231, 4
        %v8234 = vor.u32 %v8233, %v8229
        %v8235 = vrot.slane %v8234, 4
        %v8237 = vshll.u32 %v7961, 16
        %v8239 = vrot.slane %v8237, 5
        %v8240 = vsel %vm948, %v8235, %v8239
        %v8241 = vshrl.u32 %v7961, 16
        %v8243 = vrot.slane %v8241, 4
        %v8244 = vor.u32 %v8243, %v8239
        %v8245 = vrot.slane %v8244, 4
        %v8247 = vshll.u32 %v7962, 16
        %v8249 = vrot.slane %v8247, 5
        %v8250 = vsel %vm948, %v8245, %v8249
        %v8251 = vshrl.u32 %v7962, 16
        %v8253 = vrot.slane %v8251, 4
        %v8254 = vor.u32 %v8253, %v8249
        %v8255 = vrot.slane %v8254, 4
        %v8257 = vshll.u32 %v7963, 16
        %v8259 = vrot.slane %v8257, 5
        %v8260 = vsel %vm948, %v8255, %v8259
        %v8261 = vshrl.u32 %v7963, 16
        %v8263 = vrot.slane %v8261, 4
        %v8264 = vor.u32 %v8263, %v8259
        %v8265 = vrot.slane %v8264, 4
        %v8267 = vshll.u32 %v7964, 16
        %v8269 = vrot.slane %v8267, 5
        %v8270 = vsel %vm948, %v8265, %v8269
        %v8271 = vshrl.u32 %v7964, 16
        %v8273 = vrot.slane %v8271, 4
        %v8274 = vor.u32 %v8273, %v8269
        %v8275 = vrot.slane %v8274, 4
        %v8277 = vshll.u32 %v7965, 16
        %v8279 = vrot.slane %v8277, 5
        %v8280 = vsel %vm948, %v8275, %v8279
        %v8281 = vshrl.u32 %v7965, 16
        %v8283 = vrot.slane %v8281, 4
        %v8284 = vor.u32 %v8283, %v8279
        %v8285 = vrot.slane %v8284, 4
        %v8287 = vshll.u32 %v7966, 16
        %v8289 = vrot.slane %v8287, 5
        %v8290 = vsel %vm948, %v8285, %v8289
        %8291 = vrot.lane.b32.xlu0 %v7980, 64
        %v8292 = vpop.permute.xlu0 %8291
        %8293 = vrot.lane.b32.xlu0 %v7990, 64
        %v8294 = vpop.permute.xlu0 %8293
        %8295 = vrot.lane.b32.xlu0 %v8000, 64
        %v8296 = vpop.permute.xlu0 %8295
        %8297 = vrot.lane.b32.xlu0 %v8010, 64
        %v8298 = vpop.permute.xlu0 %8297
        %8299 = vrot.lane.b32.xlu0 %v8020, 64
        %v8300 = vpop.permute.xlu0 %8299
        %8301 = vrot.lane.b32.xlu0 %v8030, 64
        %v8302 = vpop.permute.xlu0 %8301
        %8303 = vrot.lane.b32.xlu0 %v8040, 64
        %v8304 = vpop.permute.xlu0 %8303
        %8305 = vrot.lane.b32.xlu0 %v8050, 64
        %v8306 = vpop.permute.xlu0 %8305
        %8307 = vrot.lane.b32.xlu0 %v8060, 64
        %v8308 = vpop.permute.xlu0 %8307
        %8309 = vrot.lane.b32.xlu0 %v8070, 64
        %v8310 = vpop.permute.xlu0 %8309
        %8311 = vrot.lane.b32.xlu0 %v8080, 64
        %v8312 = vpop.permute.xlu0 %8311
        %8313 = vrot.lane.b32.xlu0 %v8090, 64
        %v8314 = vpop.permute.xlu0 %8313
        %8315 = vrot.lane.b32.xlu0 %v8100, 64
        %v8316 = vpop.permute.xlu0 %8315
        %8317 = vrot.lane.b32.xlu0 %v8110, 64
        %v8318 = vpop.permute.xlu0 %8317
        %8319 = vrot.lane.b32.xlu0 %v8120, 64
        %v8320 = vpop.permute.xlu0 %8319
        %8321 = vrot.lane.b32.xlu0 %v8130, 64
        %v8322 = vpop.permute.xlu0 %8321
        %8323 = vrot.lane.b32.xlu0 %v8140, 64
        %v8324 = vpop.permute.xlu0 %8323
        %8325 = vrot.lane.b32.xlu0 %v8150, 64
        %v8326 = vpop.permute.xlu0 %8325
        %8327 = vrot.lane.b32.xlu0 %v8160, 64
        %v8328 = vpop.permute.xlu0 %8327
        %8329 = vrot.lane.b32.xlu0 %v8170, 64
        %v8330 = vpop.permute.xlu0 %8329
        %8331 = vrot.lane.b32.xlu0 %v8180, 64
        %v8332 = vpop.permute.xlu0 %8331
        %8333 = vrot.lane.b32.xlu0 %v8190, 64
        %v8334 = vpop.permute.xlu0 %8333
        %8335 = vrot.lane.b32.xlu0 %v8200, 64
        %v8336 = vpop.permute.xlu0 %8335
        %8337 = vrot.lane.b32.xlu0 %v8210, 64
        %v8338 = vpop.permute.xlu0 %8337
        %8339 = vrot.lane.b32.xlu0 %v8220, 64
        %v8340 = vpop.permute.xlu0 %8339
        %8341 = vrot.lane.b32.xlu0 %v8230, 64
        %v8342 = vpop.permute.xlu0 %8341
        %8343 = vrot.lane.b32.xlu0 %v8240, 64
        %v8344 = vpop.permute.xlu0 %8343
        %8345 = vrot.lane.b32.xlu0 %v8250, 64
        %v8346 = vpop.permute.xlu0 %8345
        %8347 = vrot.lane.b32.xlu0 %v8260, 64
        %v8348 = vpop.permute.xlu0 %8347
        %8349 = vrot.lane.b32.xlu0 %v8270, 64
        %v8350 = vpop.permute.xlu0 %8349
        %8351 = vrot.lane.b32.xlu0 %v8280, 64
        %v8352 = vpop.permute.xlu0 %8351
        %8353 = vrot.lane.b32.xlu0 %v8290, 64
        %v8354 = vpop.permute.xlu0 %8353
        %8387 = vst.msk [vmem:[#allocation5 + $0x8] sm:$0xf] %vm6864, %v8292
        %8388 = vst.msk [vmem:[#allocation5 + $0x1c] sm:$0xf] %vm6864, %v8294
        %8389 = vst.msk [vmem:[#allocation5 + $0x30] sm:$0xf] %vm6864, %v8296
        %8390 = vst.msk [vmem:[#allocation5 + $0x44] sm:$0xf] %vm6864, %v8298
        %8391 = vst.msk [vmem:[#allocation5 + $0x58] sm:$0xf] %vm6864, %v8300
        %8392 = vst.msk [vmem:[#allocation5 + $0x6c] sm:$0xf] %vm6864, %v8302
        %8393 = vst.msk [vmem:[#allocation5 + $0x80] sm:$0xf] %vm6864, %v8304
        %8394 = vst.msk [vmem:[#allocation5 + $0x94] sm:$0xf] %vm6864, %v8306
        %8395 = vst.msk [vmem:[#allocation5 + $0xa8] sm:$0xf] %vm6864, %v8308
        %8396 = vst.msk [vmem:[#allocation5 + $0xbc] sm:$0xf] %vm6864, %v8310
        %8397 = vst.msk [vmem:[#allocation5 + $0xd0] sm:$0xf] %vm6864, %v8312
        %8398 = vst.msk [vmem:[#allocation5 + $0xe4] sm:$0xf] %vm6864, %v8314
        %8399 = vst.msk [vmem:[#allocation5 + $0xf8] sm:$0xf] %vm6864, %v8316
        %8400 = vst.msk [vmem:[#allocation5 + $0x10c] sm:$0xf] %vm6864, %v8318
        %8401 = vst.msk [vmem:[#allocation5 + $0x120] sm:$0xf] %vm6864, %v8320
        %8402 = vst.msk [vmem:[#allocation5 + $0x134] sm:$0xf] %vm6864, %v8322
        %8403 = vst.msk [vmem:[#allocation5 + $0x148] sm:$0xf] %vm6864, %v8324
        %8404 = vst.msk [vmem:[#allocation5 + $0x15c] sm:$0xf] %vm6864, %v8326
        %8405 = vst.msk [vmem:[#allocation5 + $0x170] sm:$0xf] %vm6864, %v8328
        %8406 = vst.msk [vmem:[#allocation5 + $0x184] sm:$0xf] %vm6864, %v8330
        %8407 = vst.msk [vmem:[#allocation5 + $0x198] sm:$0xf] %vm6864, %v8332
        %8408 = vst.msk [vmem:[#allocation5 + $0x1ac] sm:$0xf] %vm6864, %v8334
        %8409 = vst.msk [vmem:[#allocation5 + $0x1c0] sm:$0xf] %vm6864, %v8336
        %8410 = vst.msk [vmem:[#allocation5 + $0x1d4] sm:$0xf] %vm6864, %v8338
        %8411 = vst.msk [vmem:[#allocation5 + $0x1e8] sm:$0xf] %vm6864, %v8340
        %8412 = vst.msk [vmem:[#allocation5 + $0x1fc] sm:$0xf] %vm6864, %v8342
        %8413 = vst.msk [vmem:[#allocation5 + $0x210] sm:$0xf] %vm6864, %v8344
        %8414 = vst.msk [vmem:[#allocation5 + $0x224] sm:$0xf] %vm6864, %v8346
        %8415 = vst.msk [vmem:[#allocation5 + $0x238] sm:$0xf] %vm6864, %v8348
        %8416 = vst.msk [vmem:[#allocation5 + $0x24c] sm:$0xf] %vm6864, %v8350
        %8417 = vst.msk [vmem:[#allocation5 + $0x260] sm:$0xf] %vm6864, %v8352
        %8418 = vst.msk [vmem:[#allocation5 + $0x274] sm:$0xf] %vm6864, %v8354
        %v8419 = vld [vmem:[#allocation4 + $0x10] sm:$0x8]
        %v8420 = vld [vmem:[#allocation4 + $0x14] sm:$0xf]
        %v8421 = vld [vmem:[#allocation4 + $0x18] sm:$0xf]
        %v8422 = vld [vmem:[#allocation4 + $0x1c] sm:$0xf]
        %v8423 = vld [vmem:[#allocation4 + $0x20] sm:$0xf]
        %v8424 = vld [vmem:[#allocation4 + $0x24] sm:$0xf]
        %v8425 = vld [vmem:[#allocation4 + $0x28] sm:$0xf]
        %v8426 = vld [vmem:[#allocation4 + $0x2c] sm:$0xf]
        %v8427 = vld [vmem:[#allocation4 + $0x30] sm:$0xf]
        %v8428 = vld [vmem:[#allocation4 + $0x34] sm:$0xf]
        %v8429 = vld [vmem:[#allocation4 + $0x38] sm:$0xf]
        %v8430 = vld [vmem:[#allocation4 + $0x3c] sm:$0xf]
        %v8431 = vld [vmem:[#allocation4 + $0x40] sm:$0xf]
        %v8432 = vld [vmem:[#allocation4 + $0x44] sm:$0xf]
        %v8433 = vld [vmem:[#allocation4 + $0x48] sm:$0xf]
        %v8434 = vld [vmem:[#allocation4 + $0x4c] sm:$0xf]
        %v8435 = vld [vmem:[#allocation4 + $0x50] sm:$0xf]
        %v8436 = vld [vmem:[#allocation4 + $0x54] sm:$0xf]
        %v8437 = vld [vmem:[#allocation4 + $0x58] sm:$0xf]
        %v8438 = vld [vmem:[#allocation4 + $0x5c] sm:$0xf]
        %v8439 = vld [vmem:[#allocation4 + $0x60] sm:$0xf]
        %v8440 = vld [vmem:[#allocation4 + $0x64] sm:$0xf]
        %v8441 = vld [vmem:[#allocation4 + $0x68] sm:$0xf]
        %v8442 = vld [vmem:[#allocation4 + $0x6c] sm:$0xf]
        %v8443 = vld [vmem:[#allocation4 + $0x70] sm:$0xf]
        %v8444 = vld [vmem:[#allocation4 + $0x74] sm:$0xf]
        %v8445 = vld [vmem:[#allocation4 + $0x78] sm:$0xf]
        %v8446 = vld [vmem:[#allocation4 + $0x7c] sm:$0xf]
        %v8447 = vld [vmem:[#allocation4 + $0x80] sm:$0xf]
        %v8448 = vld [vmem:[#allocation4 + $0x84] sm:$0xf]
        %v8449 = vld [vmem:[#allocation4 + $0x88] sm:$0xf]
        %v8450 = vld [vmem:[#allocation4 + $0x8c] sm:$0xf]
        %v8451 = vld [vmem:[#allocation4 + $0x90] sm:$0xf]
        %v8452 = vsel %vm1268, %v8419, 0
        %v8453 = vsel %vm1269, %v8420, 0
        %v8454 = vsel %vm1270, %v8421, 0
        %v8455 = vsel %vm1271, %v8422, 0
        %v8456 = vsel %vm1272, %v8423, 0
        %v8457 = vsel %vm1273, %v8424, 0
        %v8458 = vsel %vm1274, %v8425, 0
        %v8459 = vsel %vm1275, %v8426, 0
        %v8460 = vsel %vm1276, %v8427, 0
        %v8461 = vsel %vm1277, %v8428, 0
        %v8462 = vsel %vm1278, %v8429, 0
        %v8463 = vsel %vm1279, %v8430, 0
        %v8464 = vsel %vm1280, %v8431, 0
        %v8465 = vsel %vm1281, %v8432, 0
        %v8466 = vsel %vm1282, %v8433, 0
        %v8467 = vsel %vm1283, %v8434, 0
        %v8468 = vsel %vm1284, %v8435, 0
        %v8469 = vsel %vm1285, %v8436, 0
        %v8470 = vsel %vm1286, %v8437, 0
        %v8471 = vsel %vm1287, %v8438, 0
        %v8472 = vsel %vm1288, %v8439, 0
        %v8473 = vsel %vm1289, %v8440, 0
        %v8474 = vsel %vm1290, %v8441, 0
        %v8475 = vsel %vm1291, %v8442, 0
        %v8476 = vsel %vm1292, %v8443, 0
        %v8477 = vsel %vm1293, %v8444, 0
        %v8478 = vsel %vm1294, %v8445, 0
        %v8479 = vsel %vm1295, %v8446, 0
        %v8480 = vsel %vm1296, %v8447, 0
        %v8481 = vsel %vm1297, %v8448, 0
        %v8482 = vsel %vm1298, %v8449, 0
        %v8483 = vsel %vm1299, %v8450, 0
        %v8484 = vsel %vm1300, %v8451, 0
        %v8486 = vshrl.u32 %v8452, 16
        %v8488 = vrot.slane %v8486, 7
        %v8489 = vrot.slane %v8488, 4
        %v8491 = vshrl.u32 %v8453, 16
        %v8493 = vrot.slane %v8491, 7
        %v8494 = vshll.u32 %v8453, 16
        %v8496 = vor.u32 %v8493, %v8494
        %v8497 = vsel %vm1336, %v8489, %v8496
        %v8498 = vrot.slane %v8493, 4
        %v8500 = vshrl.u32 %v8454, 16
        %v8502 = vrot.slane %v8500, 7
        %v8503 = vshll.u32 %v8454, 16
        %v8505 = vor.u32 %v8502, %v8503
        %v8506 = vsel %vm1336, %v8498, %v8505
        %v8507 = vrot.slane %v8502, 4
        %v8509 = vshrl.u32 %v8455, 16
        %v8511 = vrot.slane %v8509, 7
        %v8512 = vshll.u32 %v8455, 16
        %v8514 = vor.u32 %v8511, %v8512
        %v8515 = vsel %vm1336, %v8507, %v8514
        %v8516 = vrot.slane %v8511, 4
        %v8518 = vshrl.u32 %v8456, 16
        %v8520 = vrot.slane %v8518, 7
        %v8521 = vshll.u32 %v8456, 16
        %v8523 = vor.u32 %v8520, %v8521
        %v8524 = vsel %vm1336, %v8516, %v8523
        %v8525 = vrot.slane %v8520, 4
        %v8527 = vshrl.u32 %v8457, 16
        %v8529 = vrot.slane %v8527, 7
        %v8530 = vshll.u32 %v8457, 16
        %v8532 = vor.u32 %v8529, %v8530
        %v8533 = vsel %vm1336, %v8525, %v8532
        %v8534 = vrot.slane %v8529, 4
        %v8536 = vshrl.u32 %v8458, 16
        %v8538 = vrot.slane %v8536, 7
        %v8539 = vshll.u32 %v8458, 16
        %v8541 = vor.u32 %v8538, %v8539
        %v8542 = vsel %vm1336, %v8534, %v8541
        %v8543 = vrot.slane %v8538, 4
        %v8545 = vshrl.u32 %v8459, 16
        %v8547 = vrot.slane %v8545, 7
        %v8548 = vshll.u32 %v8459, 16
        %v8550 = vor.u32 %v8547, %v8548
        %v8551 = vsel %vm1336, %v8543, %v8550
        %v8552 = vrot.slane %v8547, 4
        %v8554 = vshrl.u32 %v8460, 16
        %v8556 = vrot.slane %v8554, 7
        %v8557 = vshll.u32 %v8460, 16
        %v8559 = vor.u32 %v8556, %v8557
        %v8560 = vsel %vm1336, %v8552, %v8559
        %v8561 = vrot.slane %v8556, 4
        %v8563 = vshrl.u32 %v8461, 16
        %v8565 = vrot.slane %v8563, 7
        %v8566 = vshll.u32 %v8461, 16
        %v8568 = vor.u32 %v8565, %v8566
        %v8569 = vsel %vm1336, %v8561, %v8568
        %v8570 = vrot.slane %v8565, 4
        %v8572 = vshrl.u32 %v8462, 16
        %v8574 = vrot.slane %v8572, 7
        %v8575 = vshll.u32 %v8462, 16
        %v8577 = vor.u32 %v8574, %v8575
        %v8578 = vsel %vm1336, %v8570, %v8577
        %v8579 = vrot.slane %v8574, 4
        %v8581 = vshrl.u32 %v8463, 16
        %v8583 = vrot.slane %v8581, 7
        %v8584 = vshll.u32 %v8463, 16
        %v8586 = vor.u32 %v8583, %v8584
        %v8587 = vsel %vm1336, %v8579, %v8586
        %v8588 = vrot.slane %v8583, 4
        %v8590 = vshrl.u32 %v8464, 16
        %v8592 = vrot.slane %v8590, 7
        %v8593 = vshll.u32 %v8464, 16
        %v8595 = vor.u32 %v8592, %v8593
        %v8596 = vsel %vm1336, %v8588, %v8595
        %v8597 = vrot.slane %v8592, 4
        %v8599 = vshrl.u32 %v8465, 16
        %v8601 = vrot.slane %v8599, 7
        %v8602 = vshll.u32 %v8465, 16
        %v8604 = vor.u32 %v8601, %v8602
        %v8605 = vsel %vm1336, %v8597, %v8604
        %v8606 = vrot.slane %v8601, 4
        %v8608 = vshrl.u32 %v8466, 16
        %v8610 = vrot.slane %v8608, 7
        %v8611 = vshll.u32 %v8466, 16
        %v8613 = vor.u32 %v8610, %v8611
        %v8614 = vsel %vm1336, %v8606, %v8613
        %v8615 = vrot.slane %v8610, 4
        %v8617 = vshrl.u32 %v8467, 16
        %v8619 = vrot.slane %v8617, 7
        %v8620 = vshll.u32 %v8467, 16
        %v8622 = vor.u32 %v8619, %v8620
        %v8623 = vsel %vm1336, %v8615, %v8622
        %v8624 = vrot.slane %v8619, 4
        %v8626 = vshrl.u32 %v8468, 16
        %v8628 = vrot.slane %v8626, 7
        %v8629 = vshll.u32 %v8468, 16
        %v8631 = vor.u32 %v8628, %v8629
        %v8632 = vsel %vm1336, %v8624, %v8631
        %v8633 = vrot.slane %v8628, 4
        %v8635 = vshrl.u32 %v8469, 16
        %v8637 = vrot.slane %v8635, 7
        %v8638 = vshll.u32 %v8469, 16
        %v8640 = vor.u32 %v8637, %v8638
        %v8641 = vsel %vm1336, %v8633, %v8640
        %v8642 = vrot.slane %v8637, 4
        %v8644 = vshrl.u32 %v8470, 16
        %v8646 = vrot.slane %v8644, 7
        %v8647 = vshll.u32 %v8470, 16
        %v8649 = vor.u32 %v8646, %v8647
        %v8650 = vsel %vm1336, %v8642, %v8649
        %v8651 = vrot.slane %v8646, 4
        %v8653 = vshrl.u32 %v8471, 16
        %v8655 = vrot.slane %v8653, 7
        %v8656 = vshll.u32 %v8471, 16
        %v8658 = vor.u32 %v8655, %v8656
        %v8659 = vsel %vm1336, %v8651, %v8658
        %v8660 = vrot.slane %v8655, 4
        %v8662 = vshrl.u32 %v8472, 16
        %v8664 = vrot.slane %v8662, 7
        %v8665 = vshll.u32 %v8472, 16
        %v8667 = vor.u32 %v8664, %v8665
        %v8668 = vsel %vm1336, %v8660, %v8667
        %v8669 = vrot.slane %v8664, 4
        %v8671 = vshrl.u32 %v8473, 16
        %v8673 = vrot.slane %v8671, 7
        %v8674 = vshll.u32 %v8473, 16
        %v8676 = vor.u32 %v8673, %v8674
        %v8677 = vsel %vm1336, %v8669, %v8676
        %v8678 = vrot.slane %v8673, 4
        %v8680 = vshrl.u32 %v8474, 16
        %v8682 = vrot.slane %v8680, 7
        %v8683 = vshll.u32 %v8474, 16
        %v8685 = vor.u32 %v8682, %v8683
        %v8686 = vsel %vm1336, %v8678, %v8685
        %v8687 = vrot.slane %v8682, 4
        %v8689 = vshrl.u32 %v8475, 16
        %v8691 = vrot.slane %v8689, 7
        %v8692 = vshll.u32 %v8475, 16
        %v8694 = vor.u32 %v8691, %v8692
        %v8695 = vsel %vm1336, %v8687, %v8694
        %v8696 = vrot.slane %v8691, 4
        %v8698 = vshrl.u32 %v8476, 16
        %v8700 = vrot.slane %v8698, 7
        %v8701 = vshll.u32 %v8476, 16
        %v8703 = vor.u32 %v8700, %v8701
        %v8704 = vsel %vm1336, %v8696, %v8703
        %v8705 = vrot.slane %v8700, 4
        %v8707 = vshrl.u32 %v8477, 16
        %v8709 = vrot.slane %v8707, 7
        %v8710 = vshll.u32 %v8477, 16
        %v8712 = vor.u32 %v8709, %v8710
        %v8713 = vsel %vm1336, %v8705, %v8712
        %v8714 = vrot.slane %v8709, 4
        %v8716 = vshrl.u32 %v8478, 16
        %v8718 = vrot.slane %v8716, 7
        %v8719 = vshll.u32 %v8478, 16
        %v8721 = vor.u32 %v8718, %v8719
        %v8722 = vsel %vm1336, %v8714, %v8721
        %v8723 = vrot.slane %v8718, 4
        %v8725 = vshrl.u32 %v8479, 16
        %v8727 = vrot.slane %v8725, 7
        %v8728 = vshll.u32 %v8479, 16
        %v8730 = vor.u32 %v8727, %v8728
        %v8731 = vsel %vm1336, %v8723, %v8730
        %v8732 = vrot.slane %v8727, 4
        %v8734 = vshrl.u32 %v8480, 16
        %v8736 = vrot.slane %v8734, 7
        %v8737 = vshll.u32 %v8480, 16
        %v8739 = vor.u32 %v8736, %v8737
        %v8740 = vsel %vm1336, %v8732, %v8739
        %v8741 = vrot.slane %v8736, 4
        %v8743 = vshrl.u32 %v8481, 16
        %v8745 = vrot.slane %v8743, 7
        %v8746 = vshll.u32 %v8481, 16
        %v8748 = vor.u32 %v8745, %v8746
        %v8749 = vsel %vm1336, %v8741, %v8748
        %v8750 = vrot.slane %v8745, 4
        %v8752 = vshrl.u32 %v8482, 16
        %v8754 = vrot.slane %v8752, 7
        %v8755 = vshll.u32 %v8482, 16
        %v8757 = vor.u32 %v8754, %v8755
        %v8758 = vsel %vm1336, %v8750, %v8757
        %v8759 = vrot.slane %v8754, 4
        %v8761 = vshrl.u32 %v8483, 16
        %v8763 = vrot.slane %v8761, 7
        %v8764 = vshll.u32 %v8483, 16
        %v8766 = vor.u32 %v8763, %v8764
        %v8767 = vsel %vm1336, %v8759, %v8766
        %v8768 = vrot.slane %v8763, 4
        %v8770 = vshrl.u32 %v8484, 16
        %v8772 = vrot.slane %v8770, 7
        %v8773 = vshll.u32 %v8484, 16
        %v8775 = vor.u32 %v8772, %v8773
        %v8776 = vsel %vm1336, %v8768, %v8775
        %8809 = vst.msk [vmem:[#allocation5 + $0xc] sm:$0xf] %vm233, %v8497
        %8810 = vst.msk [vmem:[#allocation5 + $0x20] sm:$0xf] %vm233, %v8506
        %8811 = vst.msk [vmem:[#allocation5 + $0x34] sm:$0xf] %vm233, %v8515
        %8812 = vst.msk [vmem:[#allocation5 + $0x48] sm:$0xf] %vm233, %v8524
        %8813 = vst.msk [vmem:[#allocation5 + $0x5c] sm:$0xf] %vm233, %v8533
        %8814 = vst.msk [vmem:[#allocation5 + $0x70] sm:$0xf] %vm233, %v8542
        %8815 = vst.msk [vmem:[#allocation5 + $0x84] sm:$0xf] %vm233, %v8551
        %8816 = vst.msk [vmem:[#allocation5 + $0x98] sm:$0xf] %vm233, %v8560
        %8817 = vst.msk [vmem:[#allocation5 + $0xac] sm:$0xf] %vm233, %v8569
        %8818 = vst.msk [vmem:[#allocation5 + $0xc0] sm:$0xf] %vm233, %v8578
        %8819 = vst.msk [vmem:[#allocation5 + $0xd4] sm:$0xf] %vm233, %v8587
        %8820 = vst.msk [vmem:[#allocation5 + $0xe8] sm:$0xf] %vm233, %v8596
        %8821 = vst.msk [vmem:[#allocation5 + $0xfc] sm:$0xf] %vm233, %v8605
        %8822 = vst.msk [vmem:[#allocation5 + $0x110] sm:$0xf] %vm233, %v8614
        %8823 = vst.msk [vmem:[#allocation5 + $0x124] sm:$0xf] %vm233, %v8623
        %8824 = vst.msk [vmem:[#allocation5 + $0x138] sm:$0xf] %vm233, %v8632
        %8825 = vst.msk [vmem:[#allocation5 + $0x14c] sm:$0xf] %vm233, %v8641
        %8826 = vst.msk [vmem:[#allocation5 + $0x160] sm:$0xf] %vm233, %v8650
        %8827 = vst.msk [vmem:[#allocation5 + $0x174] sm:$0xf] %vm233, %v8659
        %8828 = vst.msk [vmem:[#allocation5 + $0x188] sm:$0xf] %vm233, %v8668
        %8829 = vst.msk [vmem:[#allocation5 + $0x19c] sm:$0xf] %vm233, %v8677
        %8830 = vst.msk [vmem:[#allocation5 + $0x1b0] sm:$0xf] %vm233, %v8686
        %8831 = vst.msk [vmem:[#allocation5 + $0x1c4] sm:$0xf] %vm233, %v8695
        %8832 = vst.msk [vmem:[#allocation5 + $0x1d8] sm:$0xf] %vm233, %v8704
        %8833 = vst.msk [vmem:[#allocation5 + $0x1ec] sm:$0xf] %vm233, %v8713
        %8834 = vst.msk [vmem:[#allocation5 + $0x200] sm:$0xf] %vm233, %v8722
        %8835 = vst.msk [vmem:[#allocation5 + $0x214] sm:$0xf] %vm233, %v8731
        %8836 = vst.msk [vmem:[#allocation5 + $0x228] sm:$0xf] %vm233, %v8740
        %8837 = vst.msk [vmem:[#allocation5 + $0x23c] sm:$0xf] %vm233, %v8749
        %8838 = vst.msk [vmem:[#allocation5 + $0x250] sm:$0xf] %vm233, %v8758
        %8839 = vst.msk [vmem:[#allocation5 + $0x264] sm:$0xf] %vm233, %v8767
        %8840 = vst.msk [vmem:[#allocation5 + $0x278] sm:$0xf] %vm233, %v8776
        %v8841 = vld [vmem:[#allocation4 + $0x14] sm:$0xf]
        %v8842 = vld [vmem:[#allocation4 + $0x18] sm:$0xf]
        %v8843 = vld [vmem:[#allocation4 + $0x1c] sm:$0xf]
        %v8844 = vld [vmem:[#allocation4 + $0x20] sm:$0xf]
        %v8845 = vld [vmem:[#allocation4 + $0x24] sm:$0xf]
        %v8846 = vld [vmem:[#allocation4 + $0x28] sm:$0xf]
        %v8847 = vld [vmem:[#allocation4 + $0x2c] sm:$0xf]
        %v8848 = vld [vmem:[#allocation4 + $0x30] sm:$0xf]
        %v8849 = vld [vmem:[#allocation4 + $0x34] sm:$0xf]
        %v8850 = vld [vmem:[#allocation4 + $0x38] sm:$0xf]
        %v8851 = vld [vmem:[#allocation4 + $0x3c] sm:$0xf]
        %v8852 = vld [vmem:[#allocation4 + $0x40] sm:$0xf]
        %v8853 = vld [vmem:[#allocation4 + $0x44] sm:$0xf]
        %v8854 = vld [vmem:[#allocation4 + $0x48] sm:$0xf]
        %v8855 = vld [vmem:[#allocation4 + $0x4c] sm:$0xf]
        %v8856 = vld [vmem:[#allocation4 + $0x50] sm:$0xf]
        %v8857 = vld [vmem:[#allocation4 + $0x54] sm:$0xf]
        %v8858 = vld [vmem:[#allocation4 + $0x58] sm:$0xf]
        %v8859 = vld [vmem:[#allocation4 + $0x5c] sm:$0xf]
        %v8860 = vld [vmem:[#allocation4 + $0x60] sm:$0xf]
        %v8861 = vld [vmem:[#allocation4 + $0x64] sm:$0xf]
        %v8862 = vld [vmem:[#allocation4 + $0x68] sm:$0xf]
        %v8863 = vld [vmem:[#allocation4 + $0x6c] sm:$0xf]
        %v8864 = vld [vmem:[#allocation4 + $0x70] sm:$0xf]
        %v8865 = vld [vmem:[#allocation4 + $0x74] sm:$0xf]
        %v8866 = vld [vmem:[#allocation4 + $0x78] sm:$0xf]
        %v8867 = vld [vmem:[#allocation4 + $0x7c] sm:$0xf]
        %v8868 = vld [vmem:[#allocation4 + $0x80] sm:$0xf]
        %v8869 = vld [vmem:[#allocation4 + $0x84] sm:$0xf]
        %v8870 = vld [vmem:[#allocation4 + $0x88] sm:$0xf]
        %v8871 = vld [vmem:[#allocation4 + $0x8c] sm:$0xf]
        %v8872 = vld [vmem:[#allocation4 + $0x90] sm:$0xf]
        %8905 = vrot.lane.b32.xlu0 %v8841, 64
        %v8906 = vpop.permute.xlu0 %8905
        %8907 = vrot.lane.b32.xlu0 %v8842, 64
        %v8908 = vpop.permute.xlu0 %8907
        %8909 = vrot.lane.b32.xlu0 %v8843, 64
        %v8910 = vpop.permute.xlu0 %8909
        %8911 = vrot.lane.b32.xlu0 %v8844, 64
        %v8912 = vpop.permute.xlu0 %8911
        %8913 = vrot.lane.b32.xlu0 %v8845, 64
        %v8914 = vpop.permute.xlu0 %8913
        %8915 = vrot.lane.b32.xlu0 %v8846, 64
        %v8916 = vpop.permute.xlu0 %8915
        %8917 = vrot.lane.b32.xlu0 %v8847, 64
        %v8918 = vpop.permute.xlu0 %8917
        %8919 = vrot.lane.b32.xlu0 %v8848, 64
        %v8920 = vpop.permute.xlu0 %8919
        %8921 = vrot.lane.b32.xlu0 %v8849, 64
        %v8922 = vpop.permute.xlu0 %8921
        %8923 = vrot.lane.b32.xlu0 %v8850, 64
        %v8924 = vpop.permute.xlu0 %8923
        %8925 = vrot.lane.b32.xlu0 %v8851, 64
        %v8926 = vpop.permute.xlu0 %8925
        %8927 = vrot.lane.b32.xlu0 %v8852, 64
        %v8928 = vpop.permute.xlu0 %8927
        %8929 = vrot.lane.b32.xlu0 %v8853, 64
        %v8930 = vpop.permute.xlu0 %8929
        %8931 = vrot.lane.b32.xlu0 %v8854, 64
        %v8932 = vpop.permute.xlu0 %8931
        %8933 = vrot.lane.b32.xlu0 %v8855, 64
        %v8934 = vpop.permute.xlu0 %8933
        %8935 = vrot.lane.b32.xlu0 %v8856, 64
        %v8936 = vpop.permute.xlu0 %8935
        %8937 = vrot.lane.b32.xlu0 %v8857, 64
        %v8938 = vpop.permute.xlu0 %8937
        %8939 = vrot.lane.b32.xlu0 %v8858, 64
        %v8940 = vpop.permute.xlu0 %8939
        %8941 = vrot.lane.b32.xlu0 %v8859, 64
        %v8942 = vpop.permute.xlu0 %8941
        %8943 = vrot.lane.b32.xlu0 %v8860, 64
        %v8944 = vpop.permute.xlu0 %8943
        %8945 = vrot.lane.b32.xlu0 %v8861, 64
        %v8946 = vpop.permute.xlu0 %8945
        %8947 = vrot.lane.b32.xlu0 %v8862, 64
        %v8948 = vpop.permute.xlu0 %8947
        %8949 = vrot.lane.b32.xlu0 %v8863, 64
        %v8950 = vpop.permute.xlu0 %8949
        %8951 = vrot.lane.b32.xlu0 %v8864, 64
        %v8952 = vpop.permute.xlu0 %8951
        %8953 = vrot.lane.b32.xlu0 %v8865, 64
        %v8954 = vpop.permute.xlu0 %8953
        %8955 = vrot.lane.b32.xlu0 %v8866, 64
        %v8956 = vpop.permute.xlu0 %8955
        %8957 = vrot.lane.b32.xlu0 %v8867, 64
        %v8958 = vpop.permute.xlu0 %8957
        %8959 = vrot.lane.b32.xlu0 %v8868, 64
        %v8960 = vpop.permute.xlu0 %8959
        %8961 = vrot.lane.b32.xlu0 %v8869, 64
        %v8962 = vpop.permute.xlu0 %8961
        %8963 = vrot.lane.b32.xlu0 %v8870, 64
        %v8964 = vpop.permute.xlu0 %8963
        %8965 = vrot.lane.b32.xlu0 %v8871, 64
        %v8966 = vpop.permute.xlu0 %8965
        %8967 = vrot.lane.b32.xlu0 %v8872, 64
        %v8968 = vpop.permute.xlu0 %8967
        %9001 = vst.msk [vmem:[#allocation5 + $0xc] sm:$0xf] %vm6864, %v8906
        %9002 = vst.msk [vmem:[#allocation5 + $0x20] sm:$0xf] %vm6864, %v8908
        %9003 = vst.msk [vmem:[#allocation5 + $0x34] sm:$0xf] %vm6864, %v8910
        %9004 = vst.msk [vmem:[#allocation5 + $0x48] sm:$0xf] %vm6864, %v8912
        %9005 = vst.msk [vmem:[#allocation5 + $0x5c] sm:$0xf] %vm6864, %v8914
        %9006 = vst.msk [vmem:[#allocation5 + $0x70] sm:$0xf] %vm6864, %v8916
        %9007 = vst.msk [vmem:[#allocation5 + $0x84] sm:$0xf] %vm6864, %v8918
        %9008 = vst.msk [vmem:[#allocation5 + $0x98] sm:$0xf] %vm6864, %v8920
        %9009 = vst.msk [vmem:[#allocation5 + $0xac] sm:$0xf] %vm6864, %v8922
        %9010 = vst.msk [vmem:[#allocation5 + $0xc0] sm:$0xf] %vm6864, %v8924
        %9011 = vst.msk [vmem:[#allocation5 + $0xd4] sm:$0xf] %vm6864, %v8926
        %9012 = vst.msk [vmem:[#allocation5 + $0xe8] sm:$0xf] %vm6864, %v8928
        %9013 = vst.msk [vmem:[#allocation5 + $0xfc] sm:$0xf] %vm6864, %v8930
        %9014 = vst.msk [vmem:[#allocation5 + $0x110] sm:$0xf] %vm6864, %v8932
        %9015 = vst.msk [vmem:[#allocation5 + $0x124] sm:$0xf] %vm6864, %v8934
        %9016 = vst.msk [vmem:[#allocation5 + $0x138] sm:$0xf] %vm6864, %v8936
        %9017 = vst.msk [vmem:[#allocation5 + $0x14c] sm:$0xf] %vm6864, %v8938
        %9018 = vst.msk [vmem:[#allocation5 + $0x160] sm:$0xf] %vm6864, %v8940
        %9019 = vst.msk [vmem:[#allocation5 + $0x174] sm:$0xf] %vm6864, %v8942
        %9020 = vst.msk [vmem:[#allocation5 + $0x188] sm:$0xf] %vm6864, %v8944
        %9021 = vst.msk [vmem:[#allocation5 + $0x19c] sm:$0xf] %vm6864, %v8946
        %9022 = vst.msk [vmem:[#allocation5 + $0x1b0] sm:$0xf] %vm6864, %v8948
        %9023 = vst.msk [vmem:[#allocation5 + $0x1c4] sm:$0xf] %vm6864, %v8950
        %9024 = vst.msk [vmem:[#allocation5 + $0x1d8] sm:$0xf] %vm6864, %v8952
        %9025 = vst.msk [vmem:[#allocation5 + $0x1ec] sm:$0xf] %vm6864, %v8954
        %9026 = vst.msk [vmem:[#allocation5 + $0x200] sm:$0xf] %vm6864, %v8956
        %9027 = vst.msk [vmem:[#allocation5 + $0x214] sm:$0xf] %vm6864, %v8958
        %9028 = vst.msk [vmem:[#allocation5 + $0x228] sm:$0xf] %vm6864, %v8960
        %9029 = vst.msk [vmem:[#allocation5 + $0x23c] sm:$0xf] %vm6864, %v8962
        %9030 = vst.msk [vmem:[#allocation5 + $0x250] sm:$0xf] %vm6864, %v8964
        %9031 = vst.msk [vmem:[#allocation5 + $0x264] sm:$0xf] %vm6864, %v8966
        %9032 = vst.msk [vmem:[#allocation5 + $0x278] sm:$0xf] %vm6864, %v8968
        %v9033 = vld [vmem:[#allocation4 + $0x14] sm:$0xf]
        %v9034 = vld [vmem:[#allocation4 + $0x18] sm:$0xf]
        %v9035 = vld [vmem:[#allocation4 + $0x1c] sm:$0xf]
        %v9036 = vld [vmem:[#allocation4 + $0x20] sm:$0xf]
        %v9037 = vld [vmem:[#allocation4 + $0x24] sm:$0xf]
        %v9038 = vld [vmem:[#allocation4 + $0x28] sm:$0xf]
        %v9039 = vld [vmem:[#allocation4 + $0x2c] sm:$0xf]
        %v9040 = vld [vmem:[#allocation4 + $0x30] sm:$0xf]
        %v9041 = vld [vmem:[#allocation4 + $0x34] sm:$0xf]
        %v9042 = vld [vmem:[#allocation4 + $0x38] sm:$0xf]
        %v9043 = vld [vmem:[#allocation4 + $0x3c] sm:$0xf]
        %v9044 = vld [vmem:[#allocation4 + $0x40] sm:$0xf]
        %v9045 = vld [vmem:[#allocation4 + $0x44] sm:$0xf]
        %v9046 = vld [vmem:[#allocation4 + $0x48] sm:$0xf]
        %v9047 = vld [vmem:[#allocation4 + $0x4c] sm:$0xf]
        %v9048 = vld [vmem:[#allocation4 + $0x50] sm:$0xf]
        %v9049 = vld [vmem:[#allocation4 + $0x54] sm:$0xf]
        %v9050 = vld [vmem:[#allocation4 + $0x58] sm:$0xf]
        %v9051 = vld [vmem:[#allocation4 + $0x5c] sm:$0xf]
        %v9052 = vld [vmem:[#allocation4 + $0x60] sm:$0xf]
        %v9053 = vld [vmem:[#allocation4 + $0x64] sm:$0xf]
        %v9054 = vld [vmem:[#allocation4 + $0x68] sm:$0xf]
        %v9055 = vld [vmem:[#allocation4 + $0x6c] sm:$0xf]
        %v9056 = vld [vmem:[#allocation4 + $0x70] sm:$0xf]
        %v9057 = vld [vmem:[#allocation4 + $0x74] sm:$0xf]
        %v9058 = vld [vmem:[#allocation4 + $0x78] sm:$0xf]
        %v9059 = vld [vmem:[#allocation4 + $0x7c] sm:$0xf]
        %v9060 = vld [vmem:[#allocation4 + $0x80] sm:$0xf]
        %v9061 = vld [vmem:[#allocation4 + $0x84] sm:$0xf]
        %v9062 = vld [vmem:[#allocation4 + $0x88] sm:$0xf]
        %v9063 = vld [vmem:[#allocation4 + $0x8c] sm:$0xf]
        %v9064 = vld [vmem:[#allocation4 + $0x90] sm:$0xf]
        %v9065 = vld [vmem:[#allocation4 + $0x94] sm:$0x1]
        %v9066 = vsel %vm2334, %v9033, 0
        %v9067 = vsel %vm2335, %v9034, 0
        %v9068 = vsel %vm2336, %v9035, 0
        %v9069 = vsel %vm2337, %v9036, 0
        %v9070 = vsel %vm2338, %v9037, 0
        %v9071 = vsel %vm2339, %v9038, 0
        %v9072 = vsel %vm2340, %v9039, 0
        %v9073 = vsel %vm2341, %v9040, 0
        %v9074 = vsel %vm2342, %v9041, 0
        %v9075 = vsel %vm2343, %v9042, 0
        %v9076 = vsel %vm2344, %v9043, 0
        %v9077 = vsel %vm2345, %v9044, 0
        %v9078 = vsel %vm2346, %v9045, 0
        %v9079 = vsel %vm2347, %v9046, 0
        %v9080 = vsel %vm2348, %v9047, 0
        %v9081 = vsel %vm2349, %v9048, 0
        %v9082 = vsel %vm2350, %v9049, 0
        %v9083 = vsel %vm2351, %v9050, 0
        %v9084 = vsel %vm2352, %v9051, 0
        %v9085 = vsel %vm2353, %v9052, 0
        %v9086 = vsel %vm2354, %v9053, 0
        %v9087 = vsel %vm2355, %v9054, 0
        %v9088 = vsel %vm2356, %v9055, 0
        %v9089 = vsel %vm2357, %v9056, 0
        %v9090 = vsel %vm2358, %v9057, 0
        %v9091 = vsel %vm2359, %v9058, 0
        %v9092 = vsel %vm2360, %v9059, 0
        %v9093 = vsel %vm2361, %v9060, 0
        %v9094 = vsel %vm2362, %v9061, 0
        %v9095 = vsel %vm2363, %v9062, 0
        %v9096 = vsel %vm2364, %v9063, 0
        %v9097 = vsel %vm2365, %v9064, 0
        %v9098 = vsel %vm2366, %v9065, 0
        %v9100 = vshrl.u32 %v9066, 16
        %v9102 = vrot.slane %v9100, 4
        %v9103 = vshll.u32 %v9066, 16
        %v9105 = vrot.slane %v9103, 5
        %v9106 = vor.u32 %v9102, %v9105
        %v9107 = vrot.slane %v9106, 4
        %v9109 = vshll.u32 %v9067, 16
        %v9111 = vrot.slane %v9109, 5
        %v9112 = vsel %vm948, %v9107, %v9111
        %v9113 = vshrl.u32 %v9067, 16
        %v9115 = vrot.slane %v9113, 4
        %v9116 = vor.u32 %v9115, %v9111
        %v9117 = vrot.slane %v9116, 4
        %v9119 = vshll.u32 %v9068, 16
        %v9121 = vrot.slane %v9119, 5
        %v9122 = vsel %vm948, %v9117, %v9121
        %v9123 = vshrl.u32 %v9068, 16
        %v9125 = vrot.slane %v9123, 4
        %v9126 = vor.u32 %v9125, %v9121
        %v9127 = vrot.slane %v9126, 4
        %v9129 = vshll.u32 %v9069, 16
        %v9131 = vrot.slane %v9129, 5
        %v9132 = vsel %vm948, %v9127, %v9131
        %v9133 = vshrl.u32 %v9069, 16
        %v9135 = vrot.slane %v9133, 4
        %v9136 = vor.u32 %v9135, %v9131
        %v9137 = vrot.slane %v9136, 4
        %v9139 = vshll.u32 %v9070, 16
        %v9141 = vrot.slane %v9139, 5
        %v9142 = vsel %vm948, %v9137, %v9141
        %v9143 = vshrl.u32 %v9070, 16
        %v9145 = vrot.slane %v9143, 4
        %v9146 = vor.u32 %v9145, %v9141
        %v9147 = vrot.slane %v9146, 4
        %v9149 = vshll.u32 %v9071, 16
        %v9151 = vrot.slane %v9149, 5
        %v9152 = vsel %vm948, %v9147, %v9151
        %v9153 = vshrl.u32 %v9071, 16
        %v9155 = vrot.slane %v9153, 4
        %v9156 = vor.u32 %v9155, %v9151
        %v9157 = vrot.slane %v9156, 4
        %v9159 = vshll.u32 %v9072, 16
        %v9161 = vrot.slane %v9159, 5
        %v9162 = vsel %vm948, %v9157, %v9161
        %v9163 = vshrl.u32 %v9072, 16
        %v9165 = vrot.slane %v9163, 4
        %v9166 = vor.u32 %v9165, %v9161
        %v9167 = vrot.slane %v9166, 4
        %v9169 = vshll.u32 %v9073, 16
        %v9171 = vrot.slane %v9169, 5
        %v9172 = vsel %vm948, %v9167, %v9171
        %v9173 = vshrl.u32 %v9073, 16
        %v9175 = vrot.slane %v9173, 4
        %v9176 = vor.u32 %v9175, %v9171
        %v9177 = vrot.slane %v9176, 4
        %v9179 = vshll.u32 %v9074, 16
        %v9181 = vrot.slane %v9179, 5
        %v9182 = vsel %vm948, %v9177, %v9181
        %v9183 = vshrl.u32 %v9074, 16
        %v9185 = vrot.slane %v9183, 4
        %v9186 = vor.u32 %v9185, %v9181
        %v9187 = vrot.slane %v9186, 4
        %v9189 = vshll.u32 %v9075, 16
        %v9191 = vrot.slane %v9189, 5
        %v9192 = vsel %vm948, %v9187, %v9191
        %v9193 = vshrl.u32 %v9075, 16
        %v9195 = vrot.slane %v9193, 4
        %v9196 = vor.u32 %v9195, %v9191
        %v9197 = vrot.slane %v9196, 4
        %v9199 = vshll.u32 %v9076, 16
        %v9201 = vrot.slane %v9199, 5
        %v9202 = vsel %vm948, %v9197, %v9201
        %v9203 = vshrl.u32 %v9076, 16
        %v9205 = vrot.slane %v9203, 4
        %v9206 = vor.u32 %v9205, %v9201
        %v9207 = vrot.slane %v9206, 4
        %v9209 = vshll.u32 %v9077, 16
        %v9211 = vrot.slane %v9209, 5
        %v9212 = vsel %vm948, %v9207, %v9211
        %v9213 = vshrl.u32 %v9077, 16
        %v9215 = vrot.slane %v9213, 4
        %v9216 = vor.u32 %v9215, %v9211
        %v9217 = vrot.slane %v9216, 4
        %v9219 = vshll.u32 %v9078, 16
        %v9221 = vrot.slane %v9219, 5
        %v9222 = vsel %vm948, %v9217, %v9221
        %v9223 = vshrl.u32 %v9078, 16
        %v9225 = vrot.slane %v9223, 4
        %v9226 = vor.u32 %v9225, %v9221
        %v9227 = vrot.slane %v9226, 4
        %v9229 = vshll.u32 %v9079, 16
        %v9231 = vrot.slane %v9229, 5
        %v9232 = vsel %vm948, %v9227, %v9231
        %v9233 = vshrl.u32 %v9079, 16
        %v9235 = vrot.slane %v9233, 4
        %v9236 = vor.u32 %v9235, %v9231
        %v9237 = vrot.slane %v9236, 4
        %v9239 = vshll.u32 %v9080, 16
        %v9241 = vrot.slane %v9239, 5
        %v9242 = vsel %vm948, %v9237, %v9241
        %v9243 = vshrl.u32 %v9080, 16
        %v9245 = vrot.slane %v9243, 4
        %v9246 = vor.u32 %v9245, %v9241
        %v9247 = vrot.slane %v9246, 4
        %v9249 = vshll.u32 %v9081, 16
        %v9251 = vrot.slane %v9249, 5
        %v9252 = vsel %vm948, %v9247, %v9251
        %v9253 = vshrl.u32 %v9081, 16
        %v9255 = vrot.slane %v9253, 4
        %v9256 = vor.u32 %v9255, %v9251
        %v9257 = vrot.slane %v9256, 4
        %v9259 = vshll.u32 %v9082, 16
        %v9261 = vrot.slane %v9259, 5
        %v9262 = vsel %vm948, %v9257, %v9261
        %v9263 = vshrl.u32 %v9082, 16
        %v9265 = vrot.slane %v9263, 4
        %v9266 = vor.u32 %v9265, %v9261
        %v9267 = vrot.slane %v9266, 4
        %v9269 = vshll.u32 %v9083, 16
        %v9271 = vrot.slane %v9269, 5
        %v9272 = vsel %vm948, %v9267, %v9271
        %v9273 = vshrl.u32 %v9083, 16
        %v9275 = vrot.slane %v9273, 4
        %v9276 = vor.u32 %v9275, %v9271
        %v9277 = vrot.slane %v9276, 4
        %v9279 = vshll.u32 %v9084, 16
        %v9281 = vrot.slane %v9279, 5
        %v9282 = vsel %vm948, %v9277, %v9281
        %v9283 = vshrl.u32 %v9084, 16
        %v9285 = vrot.slane %v9283, 4
        %v9286 = vor.u32 %v9285, %v9281
        %v9287 = vrot.slane %v9286, 4
        %v9289 = vshll.u32 %v9085, 16
        %v9291 = vrot.slane %v9289, 5
        %v9292 = vsel %vm948, %v9287, %v9291
        %v9293 = vshrl.u32 %v9085, 16
        %v9295 = vrot.slane %v9293, 4
        %v9296 = vor.u32 %v9295, %v9291
        %v9297 = vrot.slane %v9296, 4
        %v9299 = vshll.u32 %v9086, 16
        %v9301 = vrot.slane %v9299, 5
        %v9302 = vsel %vm948, %v9297, %v9301
        %v9303 = vshrl.u32 %v9086, 16
        %v9305 = vrot.slane %v9303, 4
        %v9306 = vor.u32 %v9305, %v9301
        %v9307 = vrot.slane %v9306, 4
        %v9309 = vshll.u32 %v9087, 16
        %v9311 = vrot.slane %v9309, 5
        %v9312 = vsel %vm948, %v9307, %v9311
        %v9313 = vshrl.u32 %v9087, 16
        %v9315 = vrot.slane %v9313, 4
        %v9316 = vor.u32 %v9315, %v9311
        %v9317 = vrot.slane %v9316, 4
        %v9319 = vshll.u32 %v9088, 16
        %v9321 = vrot.slane %v9319, 5
        %v9322 = vsel %vm948, %v9317, %v9321
        %v9323 = vshrl.u32 %v9088, 16
        %v9325 = vrot.slane %v9323, 4
        %v9326 = vor.u32 %v9325, %v9321
        %v9327 = vrot.slane %v9326, 4
        %v9329 = vshll.u32 %v9089, 16
        %v9331 = vrot.slane %v9329, 5
        %v9332 = vsel %vm948, %v9327, %v9331
        %v9333 = vshrl.u32 %v9089, 16
        %v9335 = vrot.slane %v9333, 4
        %v9336 = vor.u32 %v9335, %v9331
        %v9337 = vrot.slane %v9336, 4
        %v9339 = vshll.u32 %v9090, 16
        %v9341 = vrot.slane %v9339, 5
        %v9342 = vsel %vm948, %v9337, %v9341
        %v9343 = vshrl.u32 %v9090, 16
        %v9345 = vrot.slane %v9343, 4
        %v9346 = vor.u32 %v9345, %v9341
        %v9347 = vrot.slane %v9346, 4
        %v9349 = vshll.u32 %v9091, 16
        %v9351 = vrot.slane %v9349, 5
        %v9352 = vsel %vm948, %v9347, %v9351
        %v9353 = vshrl.u32 %v9091, 16
        %v9355 = vrot.slane %v9353, 4
        %v9356 = vor.u32 %v9355, %v9351
        %v9357 = vrot.slane %v9356, 4
        %v9359 = vshll.u32 %v9092, 16
        %v9361 = vrot.slane %v9359, 5
        %v9362 = vsel %vm948, %v9357, %v9361
        %v9363 = vshrl.u32 %v9092, 16
        %v9365 = vrot.slane %v9363, 4
        %v9366 = vor.u32 %v9365, %v9361
        %v9367 = vrot.slane %v9366, 4
        %v9369 = vshll.u32 %v9093, 16
        %v9371 = vrot.slane %v9369, 5
        %v9372 = vsel %vm948, %v9367, %v9371
        %v9373 = vshrl.u32 %v9093, 16
        %v9375 = vrot.slane %v9373, 4
        %v9376 = vor.u32 %v9375, %v9371
        %v9377 = vrot.slane %v9376, 4
        %v9379 = vshll.u32 %v9094, 16
        %v9381 = vrot.slane %v9379, 5
        %v9382 = vsel %vm948, %v9377, %v9381
        %v9383 = vshrl.u32 %v9094, 16
        %v9385 = vrot.slane %v9383, 4
        %v9386 = vor.u32 %v9385, %v9381
        %v9387 = vrot.slane %v9386, 4
        %v9389 = vshll.u32 %v9095, 16
        %v9391 = vrot.slane %v9389, 5
        %v9392 = vsel %vm948, %v9387, %v9391
        %v9393 = vshrl.u32 %v9095, 16
        %v9395 = vrot.slane %v9393, 4
        %v9396 = vor.u32 %v9395, %v9391
        %v9397 = vrot.slane %v9396, 4
        %v9399 = vshll.u32 %v9096, 16
        %v9401 = vrot.slane %v9399, 5
        %v9402 = vsel %vm948, %v9397, %v9401
        %v9403 = vshrl.u32 %v9096, 16
        %v9405 = vrot.slane %v9403, 4
        %v9406 = vor.u32 %v9405, %v9401
        %v9407 = vrot.slane %v9406, 4
        %v9409 = vshll.u32 %v9097, 16
        %v9411 = vrot.slane %v9409, 5
        %v9412 = vsel %vm948, %v9407, %v9411
        %v9413 = vshrl.u32 %v9097, 16
        %v9415 = vrot.slane %v9413, 4
        %v9416 = vor.u32 %v9415, %v9411
        %v9417 = vrot.slane %v9416, 4
        %v9419 = vshll.u32 %v9098, 16
        %v9421 = vrot.slane %v9419, 5
        %v9422 = vsel %vm948, %v9417, %v9421
        %9455 = vst.msk [vmem:[#allocation5 + $0x10] sm:$0xf] %vm233, %v9112
        %9456 = vst.msk [vmem:[#allocation5 + $0x24] sm:$0xf] %vm233, %v9122
        %9457 = vst.msk [vmem:[#allocation5 + $0x38] sm:$0xf] %vm233, %v9132
        %9458 = vst.msk [vmem:[#allocation5 + $0x4c] sm:$0xf] %vm233, %v9142
        %9459 = vst.msk [vmem:[#allocation5 + $0x60] sm:$0xf] %vm233, %v9152
        %9460 = vst.msk [vmem:[#allocation5 + $0x74] sm:$0xf] %vm233, %v9162
        %9461 = vst.msk [vmem:[#allocation5 + $0x88] sm:$0xf] %vm233, %v9172
        %9462 = vst.msk [vmem:[#allocation5 + $0x9c] sm:$0xf] %vm233, %v9182
        %9463 = vst.msk [vmem:[#allocation5 + $0xb0] sm:$0xf] %vm233, %v9192
        %9464 = vst.msk [vmem:[#allocation5 + $0xc4] sm:$0xf] %vm233, %v9202
        %9465 = vst.msk [vmem:[#allocation5 + $0xd8] sm:$0xf] %vm233, %v9212
        %9466 = vst.msk [vmem:[#allocation5 + $0xec] sm:$0xf] %vm233, %v9222
        %9467 = vst.msk [vmem:[#allocation5 + $0x100] sm:$0xf] %vm233, %v9232
        %9468 = vst.msk [vmem:[#allocation5 + $0x114] sm:$0xf] %vm233, %v9242
        %9469 = vst.msk [vmem:[#allocation5 + $0x128] sm:$0xf] %vm233, %v9252
        %9470 = vst.msk [vmem:[#allocation5 + $0x13c] sm:$0xf] %vm233, %v9262
        %9471 = vst.msk [vmem:[#allocation5 + $0x150] sm:$0xf] %vm233, %v9272
        %9472 = vst.msk [vmem:[#allocation5 + $0x164] sm:$0xf] %vm233, %v9282
        %9473 = vst.msk [vmem:[#allocation5 + $0x178] sm:$0xf] %vm233, %v9292
        %9474 = vst.msk [vmem:[#allocation5 + $0x18c] sm:$0xf] %vm233, %v9302
        %9475 = vst.msk [vmem:[#allocation5 + $0x1a0] sm:$0xf] %vm233, %v9312
        %9476 = vst.msk [vmem:[#allocation5 + $0x1b4] sm:$0xf] %vm233, %v9322
        %9477 = vst.msk [vmem:[#allocation5 + $0x1c8] sm:$0xf] %vm233, %v9332
        %9478 = vst.msk [vmem:[#allocation5 + $0x1dc] sm:$0xf] %vm233, %v9342
        %9479 = vst.msk [vmem:[#allocation5 + $0x1f0] sm:$0xf] %vm233, %v9352
        %9480 = vst.msk [vmem:[#allocation5 + $0x204] sm:$0xf] %vm233, %v9362
        %9481 = vst.msk [vmem:[#allocation5 + $0x218] sm:$0xf] %vm233, %v9372
        %9482 = vst.msk [vmem:[#allocation5 + $0x22c] sm:$0xf] %vm233, %v9382
        %9483 = vst.msk [vmem:[#allocation5 + $0x240] sm:$0xf] %vm233, %v9392
        %9484 = vst.msk [vmem:[#allocation5 + $0x254] sm:$0xf] %vm233, %v9402
        %9485 = vst.msk [vmem:[#allocation5 + $0x268] sm:$0xf] %vm233, %v9412
        %9486 = vst.msk [vmem:[#allocation5 + $0x27c] sm:$0xf] %vm233, %v9422
        %v9487 = vld [vmem:[%s4] sm:$0x1]
        %v9488 = vld [vmem:[#allocation5] sm:$0xff]
        %v9489 = vld [vmem:[#allocation5 + $0x8] sm:$0xff]
        %v9490 = vld [vmem:[#allocation5 + $0x10] sm:$0xf]
        %v9491 = vld [vmem:[#allocation5 + $0x14] sm:$0xff]
        %v9492 = vld [vmem:[#allocation5 + $0x1c] sm:$0xff]
        %v9493 = vld [vmem:[#allocation5 + $0x24] sm:$0xf]
        %v9494 = vld [vmem:[#allocation5 + $0x28] sm:$0xff]
        %v9495 = vld [vmem:[#allocation5 + $0x30] sm:$0xff]
        %v9496 = vld [vmem:[#allocation5 + $0x38] sm:$0xf]
        %v9497 = vld [vmem:[#allocation5 + $0x3c] sm:$0xff]
        %v9498 = vld [vmem:[#allocation5 + $0x44] sm:$0xff]
        %v9499 = vld [vmem:[#allocation5 + $0x4c] sm:$0xf]
        %v9500 = vld [vmem:[#allocation5 + $0x50] sm:$0xff]
        %v9501 = vld [vmem:[#allocation5 + $0x58] sm:$0xff]
        %v9502 = vld [vmem:[#allocation5 + $0x60] sm:$0xf]
        %v9503 = vld [vmem:[#allocation5 + $0x64] sm:$0xff]
        %v9504 = vld [vmem:[#allocation5 + $0x6c] sm:$0xff]
        %v9505 = vld [vmem:[#allocation5 + $0x74] sm:$0xf]
        %v9506 = vld [vmem:[#allocation5 + $0x78] sm:$0xff]
        %v9507 = vld [vmem:[#allocation5 + $0x80] sm:$0xff]
        %v9508 = vld [vmem:[#allocation5 + $0x88] sm:$0xf]
        %v9509 = vld [vmem:[#allocation5 + $0x8c] sm:$0xff]
        %v9510 = vld [vmem:[#allocation5 + $0x94] sm:$0xff]
        %v9511 = vld [vmem:[#allocation5 + $0x9c] sm:$0xf]
        %v9512 = vld [vmem:[#allocation5 + $0xa0] sm:$0xff]
        %v9513 = vld [vmem:[#allocation5 + $0xa8] sm:$0xff]
        %v9514 = vld [vmem:[#allocation5 + $0xb0] sm:$0xf]
        %v9515 = vld [vmem:[#allocation5 + $0xb4] sm:$0xff]
        %v9516 = vld [vmem:[#allocation5 + $0xbc] sm:$0xff]
        %v9517 = vld [vmem:[#allocation5 + $0xc4] sm:$0xf]
        %v9518 = vld [vmem:[#allocation5 + $0xc8] sm:$0xff]
        %v9519 = vld [vmem:[#allocation5 + $0xd0] sm:$0xff]
        %v9520 = vld [vmem:[#allocation5 + $0xd8] sm:$0xf]
        %v9521 = vld [vmem:[#allocation5 + $0xdc] sm:$0xff]
        %v9522 = vld [vmem:[#allocation5 + $0xe4] sm:$0xff]
        %v9523 = vld [vmem:[#allocation5 + $0xec] sm:$0xf]
        %v9524 = vld [vmem:[#allocation5 + $0xf0] sm:$0xff]
        %v9525 = vld [vmem:[#allocation5 + $0xf8] sm:$0xff]
        %v9526 = vld [vmem:[#allocation5 + $0x100] sm:$0xf]
        %v9527 = vld [vmem:[#allocation5 + $0x104] sm:$0xff]
        %v9528 = vld [vmem:[#allocation5 + $0x10c] sm:$0xff]
        %v9529 = vld [vmem:[#allocation5 + $0x114] sm:$0xf]
        %v9530 = vld [vmem:[#allocation5 + $0x118] sm:$0xff]
        %v9531 = vld [vmem:[#allocation5 + $0x120] sm:$0xff]
        %v9532 = vld [vmem:[#allocation5 + $0x128] sm:$0xf]
        %v9533 = vld [vmem:[#allocation5 + $0x12c] sm:$0xff]
        %v9534 = vld [vmem:[#allocation5 + $0x134] sm:$0xff]
        %v9535 = vld [vmem:[#allocation5 + $0x13c] sm:$0xf]
        %v9536 = vld [vmem:[%s3] sm:$0xf]
        %v9537 = vld [vmem:[%s3 + $0x4] sm:$0xf]
        %v9538 = vld [vmem:[%s3 + $0x8] sm:$0xf]
        %v9539 = vld [vmem:[%s3 + $0xc] sm:$0xf]
        %v9540 = vld [vmem:[%s3 + $0x10] sm:$0xf]
        %v9541 = vld [vmem:[%s3 + $0x14] sm:$0xf]
        %v9542 = vld [vmem:[%s3 + $0x18] sm:$0xf]
        %v9543 = vld [vmem:[%s3 + $0x1c] sm:$0xf]
        %v9544 = vld [vmem:[%s3 + $0x20] sm:$0xf]
        %v9545 = vld [vmem:[%s3 + $0x24] sm:$0xf]
        %v9546 = vld [vmem:[%s3 + $0x28] sm:$0xf]
        %v9547 = vld [vmem:[%s3 + $0x2c] sm:$0xf]
        %v9548 = vld [vmem:[%s3 + $0x30] sm:$0xf]
        %v9549 = vld [vmem:[%s3 + $0x34] sm:$0xf]
        %v9550 = vld [vmem:[%s3 + $0x38] sm:$0xf]
        %v9551 = vld [vmem:[%s3 + $0x3c] sm:$0xf]
        %v9552 = vld [vmem:[%s3 + $0x40] sm:$0xf]
        %v9553 = vld [vmem:[%s3 + $0x44] sm:$0xf]
        %v9554 = vld [vmem:[%s3 + $0x48] sm:$0xf]
        %v9555 = vld [vmem:[%s3 + $0x4c] sm:$0xf]
        %v9556 = vld [vmem:[%s3 + $0x50] sm:$0xf]
        %v9557 = vld [vmem:[%s3 + $0x54] sm:$0xf]
        %v9558 = vld [vmem:[%s3 + $0x58] sm:$0xf]
        %v9559 = vld [vmem:[%s3 + $0x5c] sm:$0xf]
        %v9560 = vld [vmem:[%s3 + $0x60] sm:$0xf]
        %v9561 = vld [vmem:[%s3 + $0x64] sm:$0xf]
        %v9562 = vld [vmem:[%s3 + $0x68] sm:$0xf]
        %v9563 = vld [vmem:[%s3 + $0x6c] sm:$0xf]
        %v9564 = vld [vmem:[%s3 + $0x70] sm:$0xf]
        %v9565 = vld [vmem:[%s3 + $0x74] sm:$0xf]
        %v9566 = vld [vmem:[%s3 + $0x78] sm:$0xf]
        %v9567 = vld [vmem:[%s3 + $0x7c] sm:$0xf]
        %v9568 = vld [vmem:[%s3 + $0x80] sm:$0xf]
        %v9569 = vld [vmem:[%s3 + $0x84] sm:$0xf]
        %v9570 = vld [vmem:[%s3 + $0x88] sm:$0xf]
        %v9571 = vld [vmem:[%s3 + $0x8c] sm:$0xf]
        %v9572 = vld [vmem:[%s3 + $0x90] sm:$0xf]
        %v9573 = vld [vmem:[%s3 + $0x94] sm:$0xf]
        %v9574 = vld [vmem:[%s3 + $0x98] sm:$0xf]
        %v9575 = vld [vmem:[%s3 + $0x9c] sm:$0xf]
        %v9576 = vld [vmem:[%s3 + $0xa0] sm:$0xf]
        %v9577 = vld [vmem:[%s3 + $0xa4] sm:$0xf]
        %v9578 = vld [vmem:[%s3 + $0xa8] sm:$0xf]
        %v9579 = vld [vmem:[%s3 + $0xac] sm:$0xf]
        %v9580 = vld [vmem:[%s3 + $0xb0] sm:$0xf]
        %v9581 = vld [vmem:[%s3 + $0xb4] sm:$0xf]
        %v9582 = vld [vmem:[%s3 + $0xb8] sm:$0xf]
        %v9583 = vld [vmem:[%s3 + $0xbc] sm:$0xf]
        %v9584 = vld [vmem:[%s3 + $0xc0] sm:$0xf]
        %v9585 = vld [vmem:[%s3 + $0xc4] sm:$0xf]
        %v9586 = vld [vmem:[%s3 + $0xc8] sm:$0xf]
        %v9587 = vld [vmem:[%s3 + $0xcc] sm:$0xf]
        %v9588 = vld [vmem:[%s3 + $0xd0] sm:$0xf]
        %v9589 = vld [vmem:[%s3 + $0xd4] sm:$0xf]
        %v9590 = vld [vmem:[%s3 + $0xd8] sm:$0xf]
        %v9591 = vld [vmem:[%s3 + $0xdc] sm:$0xf]
        %v9592 = vld [vmem:[%s3 + $0xe0] sm:$0xf]
        %v9593 = vld [vmem:[%s3 + $0xe4] sm:$0xf]
        %v9594 = vld [vmem:[%s3 + $0xe8] sm:$0xf]
        %v9595 = vld [vmem:[%s3 + $0xec] sm:$0xf]
        %v9596 = vld [vmem:[%s3 + $0xf0] sm:$0xf]
        %v9597 = vld [vmem:[%s3 + $0xf4] sm:$0xf]
        %v9598 = vld [vmem:[%s3 + $0xf8] sm:$0xf]
        %v9599 = vld [vmem:[%s3 + $0xfc] sm:$0xf]
        %v9600 = vld [vmem:[%s3 + $0x100] sm:$0xf]
        %v9601 = vld [vmem:[%s3 + $0x104] sm:$0xf]
        %v9602 = vld [vmem:[%s3 + $0x108] sm:$0xf]
        %v9603 = vld [vmem:[%s3 + $0x10c] sm:$0xf]
        %v9604 = vld [vmem:[%s3 + $0x110] sm:$0xf]
        %v9605 = vld [vmem:[%s3 + $0x114] sm:$0xf]
        %v9606 = vld [vmem:[%s3 + $0x118] sm:$0xf]
        %v9607 = vld [vmem:[%s3 + $0x11c] sm:$0xf]
        %v9609 = vlaneseq
        %v9610 = vshrl.u32 %v9609, 7
        %v9611 = vsub.s32 0, %v9610
        %v9612 = vrot.slane %v9487, %v9611
        %v9662 = vunpack.c.l.b16 %v9488
        %v9663 = vunpack.c.h.b16 %v9488
        %v9664 = vunpack.c.l.b16 %v9489
        %v9665 = vunpack.c.h.b16 %v9489
        %v9666 = vunpack.c.l.b16 %v9490
        %v9667 = vunpack.c.l.b16 %v9491
        %v9668 = vunpack.c.h.b16 %v9491
        %v9669 = vunpack.c.l.b16 %v9492
        %v9670 = vunpack.c.h.b16 %v9492
        %v9671 = vunpack.c.l.b16 %v9493
        %v9672 = vunpack.c.l.b16 %v9494
        %v9673 = vunpack.c.h.b16 %v9494
        %v9674 = vunpack.c.l.b16 %v9495
        %v9675 = vunpack.c.h.b16 %v9495
        %v9676 = vunpack.c.l.b16 %v9496
        %v9677 = vunpack.c.l.b16 %v9497
        %v9678 = vunpack.c.h.b16 %v9497
        %v9679 = vunpack.c.l.b16 %v9498
        %v9680 = vunpack.c.h.b16 %v9498
        %v9681 = vunpack.c.l.b16 %v9499
        %v9682 = vunpack.c.l.b16 %v9500
        %v9683 = vunpack.c.h.b16 %v9500
        %v9684 = vunpack.c.l.b16 %v9501
        %v9685 = vunpack.c.h.b16 %v9501
        %v9686 = vunpack.c.l.b16 %v9502
        %v9687 = vunpack.c.l.b16 %v9503
        %v9688 = vunpack.c.h.b16 %v9503
        %v9689 = vunpack.c.l.b16 %v9504
        %v9690 = vunpack.c.h.b16 %v9504
        %v9691 = vunpack.c.l.b16 %v9505
        %v9692 = vunpack.c.l.b16 %v9506
        %v9693 = vunpack.c.h.b16 %v9506
        %v9694 = vunpack.c.l.b16 %v9507
        %v9695 = vunpack.c.h.b16 %v9507
        %v9696 = vunpack.c.l.b16 %v9508
        %v9697 = vunpack.c.l.b16 %v9509
        %v9698 = vunpack.c.h.b16 %v9509
        %v9699 = vunpack.c.l.b16 %v9510
        %v9700 = vunpack.c.h.b16 %v9510
        %v9701 = vunpack.c.l.b16 %v9511
        %v9702 = vunpack.c.l.b16 %v9512
        %v9703 = vunpack.c.h.b16 %v9512
        %v9704 = vunpack.c.l.b16 %v9513
        %v9705 = vunpack.c.h.b16 %v9513
        %v9706 = vunpack.c.l.b16 %v9514
        %v9707 = vunpack.c.l.b16 %v9515
        %v9708 = vunpack.c.h.b16 %v9515
        %v9709 = vunpack.c.l.b16 %v9516
        %v9710 = vunpack.c.h.b16 %v9516
        %v9711 = vunpack.c.l.b16 %v9517
        %v9712 = vunpack.c.l.b16 %v9518
        %v9713 = vunpack.c.h.b16 %v9518
        %v9714 = vunpack.c.l.b16 %v9519
        %v9715 = vunpack.c.h.b16 %v9519
        %v9716 = vunpack.c.l.b16 %v9520
        %v9717 = vunpack.c.l.b16 %v9521
        %v9718 = vunpack.c.h.b16 %v9521
        %v9719 = vunpack.c.l.b16 %v9522
        %v9720 = vunpack.c.h.b16 %v9522
        %v9721 = vunpack.c.l.b16 %v9523
        %v9722 = vunpack.c.l.b16 %v9524
        %v9723 = vunpack.c.h.b16 %v9524
        %v9724 = vunpack.c.l.b16 %v9525
        %v9725 = vunpack.c.h.b16 %v9525
        %v9726 = vunpack.c.l.b16 %v9526
        %v9727 = vunpack.c.l.b16 %v9527
        %v9728 = vunpack.c.h.b16 %v9527
        %v9729 = vunpack.c.l.b16 %v9528
        %v9730 = vunpack.c.h.b16 %v9528
        %v9731 = vunpack.c.l.b16 %v9529
        %v9732 = vunpack.c.l.b16 %v9530
        %v9733 = vunpack.c.h.b16 %v9530
        %v9734 = vunpack.c.l.b16 %v9531
        %v9735 = vunpack.c.h.b16 %v9531
        %v9736 = vunpack.c.l.b16 %v9532
        %v9737 = vunpack.c.l.b16 %v9533
        %v9738 = vunpack.c.h.b16 %v9533
        %v9739 = vunpack.c.l.b16 %v9534
        %v9740 = vunpack.c.h.b16 %v9534
        %v9741 = vunpack.c.l.b16 %v9535
        %v9742 = vpack.c.b16 %v9667, %v9662
        %v9743 = vpack.c.b16 %v9668, %v9663
        %v9744 = vpack.c.b16 %v9669, %v9664
        %v9745 = vpack.c.b16 %v9670, %v9665
        %v9746 = vpack.c.b16 %v9671, %v9666
        %v9747 = vpack.c.b16 %v9677, %v9672
        %v9748 = vpack.c.b16 %v9678, %v9673
        %v9749 = vpack.c.b16 %v9679, %v9674
        %v9750 = vpack.c.b16 %v9680, %v9675
        %v9751 = vpack.c.b16 %v9681, %v9676
        %v9752 = vpack.c.b16 %v9687, %v9682
        %v9753 = vpack.c.b16 %v9688, %v9683
        %v9754 = vpack.c.b16 %v9689, %v9684
        %v9755 = vpack.c.b16 %v9690, %v9685
        %v9756 = vpack.c.b16 %v9691, %v9686
        %v9757 = vpack.c.b16 %v9697, %v9692
        %v9758 = vpack.c.b16 %v9698, %v9693
        %v9759 = vpack.c.b16 %v9699, %v9694
        %v9760 = vpack.c.b16 %v9700, %v9695
        %v9761 = vpack.c.b16 %v9701, %v9696
        %v9762 = vpack.c.b16 %v9707, %v9702
        %v9763 = vpack.c.b16 %v9708, %v9703
        %v9764 = vpack.c.b16 %v9709, %v9704
        %v9765 = vpack.c.b16 %v9710, %v9705
        %v9766 = vpack.c.b16 %v9711, %v9706
        %v9767 = vpack.c.b16 %v9717, %v9712
        %v9768 = vpack.c.b16 %v9718, %v9713
        %v9769 = vpack.c.b16 %v9719, %v9714
        %v9770 = vpack.c.b16 %v9720, %v9715
        %v9771 = vpack.c.b16 %v9721, %v9716
        %v9772 = vpack.c.b16 %v9727, %v9722
        %v9773 = vpack.c.b16 %v9728, %v9723
        %v9774 = vpack.c.b16 %v9729, %v9724
        %v9775 = vpack.c.b16 %v9730, %v9725
        %v9776 = vpack.c.b16 %v9731, %v9726
        %v9777 = vpack.c.b16 %v9737, %v9732
        %v9778 = vpack.c.b16 %v9738, %v9733
        %v9779 = vpack.c.b16 %v9739, %v9734
        %v9780 = vpack.c.b16 %v9740, %v9735
        %v9781 = vpack.c.b16 %v9741, %v9736
        %v9886 = vunpack.c.l.b16 %v9536
        %v9887 = vunpack.c.l.b16 %v9537
        %v9888 = vunpack.c.l.b16 %v9538
        %v9889 = vunpack.c.l.b16 %v9539
        %v9890 = vunpack.c.l.b16 %v9540
        %v9891 = vunpack.c.l.b16 %v9541
        %v9892 = vunpack.c.l.b16 %v9542
        %v9893 = vunpack.c.l.b16 %v9543
        %v9894 = vunpack.c.l.b16 %v9544
        %v9895 = vunpack.c.l.b16 %v9545
        %v9896 = vunpack.c.l.b16 %v9546
        %v9897 = vunpack.c.l.b16 %v9547
        %v9898 = vunpack.c.l.b16 %v9548
        %v9899 = vunpack.c.l.b16 %v9549
        %v9900 = vunpack.c.l.b16 %v9550
        %v9901 = vunpack.c.l.b16 %v9551
        %v9902 = vunpack.c.l.b16 %v9552
        %v9903 = vunpack.c.l.b16 %v9553
        %v9904 = vunpack.c.l.b16 %v9554
        %v9905 = vunpack.c.l.b16 %v9555
        %v9906 = vunpack.c.l.b16 %v9556
        %v9907 = vunpack.c.l.b16 %v9557
        %v9908 = vunpack.c.l.b16 %v9558
        %v9909 = vunpack.c.l.b16 %v9559
        %v9910 = vunpack.c.l.b16 %v9560
        %v9911 = vunpack.c.l.b16 %v9561
        %v9912 = vunpack.c.l.b16 %v9562
        %v9913 = vunpack.c.l.b16 %v9563
        %v9914 = vunpack.c.l.b16 %v9564
        %v9915 = vunpack.c.l.b16 %v9565
        %v9916 = vunpack.c.l.b16 %v9566
        %v9917 = vunpack.c.l.b16 %v9567
        %v9918 = vunpack.c.l.b16 %v9568
        %v9919 = vunpack.c.l.b16 %v9569
        %v9920 = vunpack.c.l.b16 %v9570
        %v9921 = vunpack.c.l.b16 %v9571
        %v9922 = vunpack.c.l.b16 %v9572
        %v9923 = vunpack.c.l.b16 %v9573
        %v9924 = vunpack.c.l.b16 %v9574
        %v9925 = vunpack.c.l.b16 %v9575
        %v9926 = vunpack.c.l.b16 %v9576
        %v9927 = vunpack.c.l.b16 %v9577
        %v9928 = vunpack.c.l.b16 %v9578
        %v9929 = vunpack.c.l.b16 %v9579
        %v9930 = vunpack.c.l.b16 %v9580
        %v9931 = vunpack.c.l.b16 %v9581
        %v9932 = vunpack.c.l.b16 %v9582
        %v9933 = vunpack.c.l.b16 %v9583
        %v9934 = vunpack.c.l.b16 %v9584
        %v9935 = vunpack.c.l.b16 %v9585
        %v9936 = vunpack.c.l.b16 %v9586
        %v9937 = vunpack.c.l.b16 %v9587
        %v9938 = vunpack.c.l.b16 %v9588
        %v9939 = vunpack.c.l.b16 %v9589
        %v9940 = vunpack.c.l.b16 %v9590
        %v9941 = vunpack.c.l.b16 %v9591
        %v9942 = vunpack.c.l.b16 %v9592
        %v9943 = vunpack.c.l.b16 %v9593
        %v9944 = vunpack.c.l.b16 %v9594
        %v9945 = vunpack.c.l.b16 %v9595
        %v9946 = vunpack.c.l.b16 %v9596
        %v9947 = vunpack.c.l.b16 %v9597
        %v9948 = vunpack.c.l.b16 %v9598
        %v9949 = vunpack.c.l.b16 %v9599
        %v9950 = vunpack.c.l.b16 %v9600
        %v9951 = vunpack.c.l.b16 %v9601
        %v9952 = vunpack.c.l.b16 %v9602
        %v9953 = vunpack.c.l.b16 %v9603
        %v9954 = vunpack.c.l.b16 %v9604
        %v9955 = vunpack.c.l.b16 %v9605
        %v9956 = vunpack.c.l.b16 %v9606
        %v9957 = vunpack.c.l.b16 %v9607
        %v9958 = vpack.c.b16 %v9887, %v9886
        %v9959 = vpack.c.b16 %v9889, %v9888
        %v9960 = vpack.c.b16 %v9891, %v9890
        %v9961 = vpack.c.b16 %v9893, %v9892
        %v9962 = vpack.c.b16 %v9895, %v9894
        %v9963 = vpack.c.b16 %v9897, %v9896
        %v9964 = vpack.c.b16 %v9899, %v9898
        %v9965 = vpack.c.b16 %v9901, %v9900
        %v9966 = vpack.c.b16 %v9903, %v9902
        %v9967 = vpack.c.b16 %v9905, %v9904
        %v9968 = vpack.c.b16 %v9907, %v9906
        %v9969 = vpack.c.b16 %v9909, %v9908
        %v9970 = vpack.c.b16 %v9911, %v9910
        %v9971 = vpack.c.b16 %v9913, %v9912
        %v9972 = vpack.c.b16 %v9915, %v9914
        %v9973 = vpack.c.b16 %v9917, %v9916
        %v9974 = vpack.c.b16 %v9919, %v9918
        %v9975 = vpack.c.b16 %v9921, %v9920
        %v9976 = vpack.c.b16 %v9923, %v9922
        %v9977 = vpack.c.b16 %v9925, %v9924
        %v9978 = vpack.c.b16 %v9927, %v9926
        %v9979 = vpack.c.b16 %v9929, %v9928
        %v9980 = vpack.c.b16 %v9931, %v9930
        %v9981 = vpack.c.b16 %v9933, %v9932
        %v9982 = vpack.c.b16 %v9935, %v9934
        %v9983 = vpack.c.b16 %v9937, %v9936
        %v9984 = vpack.c.b16 %v9939, %v9938
        %v9985 = vpack.c.b16 %v9941, %v9940
        %v9986 = vpack.c.b16 %v9943, %v9942
        %v9987 = vpack.c.b16 %v9945, %v9944
        %v9988 = vpack.c.b16 %v9947, %v9946
        %v9989 = vpack.c.b16 %v9949, %v9948
        %v9990 = vpack.c.b16 %v9951, %v9950
        %v9991 = vpack.c.b16 %v9953, %v9952
        %v9992 = vpack.c.b16 %v9955, %v9954
        %v9993 = vpack.c.b16 %v9957, %v9956
        %vm10030 = vcmask 523264
        %v10032 = vsel %vm10030, %v9746, 0
        %v10035 = vsel %vm10030, %v9751, 0
        %v10038 = vsel %vm10030, %v9756, 0
        %v10041 = vsel %vm10030, %v9761, 0
        %v10044 = vsel %vm10030, %v9766, 0
        %v10047 = vsel %vm10030, %v9771, 0
        %v10050 = vsel %vm10030, %v9776, 0
        %v10053 = vsel %vm10030, %v9781, 0
        %10055 = vmatprep.subr.bf16.mxu0 0
        %10056 = vmatpush1.bf16.msra.mxu0 %v9965
        %10057 = vmatprep.subr.bf16.mxu0 0
        %10058 = vmatpush1.bf16.msra.mxu0 %v9964
        %10059 = vmatprep.subr.bf16.mxu0 0
        %10060 = vmatpush1.bf16.msra.mxu0 %v9963
        %10061 = vmatprep.subr.bf16.mxu0 0
        %10062 = vmatpush1.bf16.msra.mxu0 %v9962
        %10063 = vmatprep.subr.bf16.mxu0 0
        %10064 = vmatpush1.bf16.msra.mxu0 %v9961
        %10065 = vmatprep.subr.bf16.mxu0 0
        %10066 = vmatpush1.bf16.msra.mxu0 %v9960
        %10067 = vmatprep.subr.bf16.mxu0 0
        %10068 = vmatpush1.bf16.msra.mxu0 %v9959
        %10069 = vmatprep.subr.bf16.mxu0 0
        %10070 = vmatpush1.bf16.msra.mxu0 %v9958
        %10071 = vmatprep.subr.bf16.mxu0 0
        %10072 = vmatpush2.bf16.msra.mxu0 %v9973
        %10073 = vmatprep.subr.bf16.mxu0 0
        %10074 = vmatpush2.bf16.msra.mxu0 %v9972
        %10075 = vmatprep.subr.bf16.mxu0 0
        %10076 = vmatpush2.bf16.msra.mxu0 %v9971
        %10077 = vmatprep.subr.bf16.mxu0 0
        %10078 = vmatpush2.bf16.msra.mxu0 %v9970
        %10079 = vmatprep.subr.bf16.mxu0 0
        %10080 = vmatpush2.bf16.msra.mxu0 %v9969
        %10081 = vmatprep.subr.bf16.mxu0 0
        %10082 = vmatpush2.bf16.msra.mxu0 %v9968
        %10083 = vmatprep.subr.bf16.mxu0 0
        %10084 = vmatpush2.bf16.msra.mxu0 %v9967
        %10085 = vmatprep.subr.bf16.mxu0 0
        %10086 = vmatpush2.bf16.msra.mxu0 %v9966
        %10087 = vmatprep.mubr.bf16.mxu0 %v9743
        %10088 = vmatmul.mubr.bf16.gmra.mxu0 %v9742
        %v10089 = vpop.f32.mrf.mxu0
        %v10090 = vadd.f32 %v9612, %v10089
        %v10091 = vpop.f32.mrf.mxu0
        %v10092 = vpop.f32.mrf.mxu0
        %v10093 = vadd.f32 %v9612, %v10092
        %v10094 = vpop.f32.mrf.mxu0
        %10095 = vmatprep.mubr.bf16.mxu0 %v9748
        %10096 = vmatmul.mubr.bf16.gmra.mxu0 %v9747
        %v10097 = vpop.f32.mrf.mxu0
        %v10098 = vadd.f32 %v9612, %v10097
        %v10099 = vpop.f32.mrf.mxu0
        %v10100 = vpop.f32.mrf.mxu0
        %v10101 = vadd.f32 %v9612, %v10100
        %v10102 = vpop.f32.mrf.mxu0
        %10103 = vmatprep.mubr.bf16.mxu0 %v9753
        %10104 = vmatmul.mubr.bf16.gmra.mxu0 %v9752
        %v10105 = vpop.f32.mrf.mxu0
        %v10106 = vadd.f32 %v9612, %v10105
        %v10107 = vpop.f32.mrf.mxu0
        %v10108 = vpop.f32.mrf.mxu0
        %v10109 = vadd.f32 %v9612, %v10108
        %v10110 = vpop.f32.mrf.mxu0
        %10111 = vmatprep.mubr.bf16.mxu0 %v9758
        %10112 = vmatmul.mubr.bf16.gmra.mxu0 %v9757
        %v10113 = vpop.f32.mrf.mxu0
        %v10114 = vadd.f32 %v9612, %v10113
        %v10115 = vpop.f32.mrf.mxu0
        %v10116 = vpop.f32.mrf.mxu0
        %v10117 = vadd.f32 %v9612, %v10116
        %v10118 = vpop.f32.mrf.mxu0
        %10119 = vmatprep.mubr.bf16.mxu0 %v9763
        %10120 = vmatmul.mubr.bf16.gmra.mxu0 %v9762
        %v10121 = vpop.f32.mrf.mxu0
        %v10122 = vadd.f32 %v9612, %v10121
        %v10123 = vpop.f32.mrf.mxu0
        %v10124 = vpop.f32.mrf.mxu0
        %v10125 = vadd.f32 %v9612, %v10124
        %v10126 = vpop.f32.mrf.mxu0
        %10127 = vmatprep.mubr.bf16.mxu0 %v9768
        %10128 = vmatmul.mubr.bf16.gmra.mxu0 %v9767
        %v10129 = vpop.f32.mrf.mxu0
        %v10130 = vadd.f32 %v9612, %v10129
        %v10131 = vpop.f32.mrf.mxu0
        %v10132 = vpop.f32.mrf.mxu0
        %v10133 = vadd.f32 %v9612, %v10132
        %v10134 = vpop.f32.mrf.mxu0
        %10135 = vmatprep.mubr.bf16.mxu0 %v9773
        %10136 = vmatmul.mubr.bf16.gmra.mxu0 %v9772
        %v10137 = vpop.f32.mrf.mxu0
        %v10138 = vadd.f32 %v9612, %v10137
        %v10139 = vpop.f32.mrf.mxu0
        %v10140 = vpop.f32.mrf.mxu0
        %v10141 = vadd.f32 %v9612, %v10140
        %v10142 = vpop.f32.mrf.mxu0
        %10143 = vmatprep.mubr.bf16.mxu0 %v9778
        %10144 = vmatmul.mubr.bf16.gmra.mxu0 %v9777
        %v10145 = vpop.f32.mrf.mxu0
        %v10146 = vadd.f32 %v9612, %v10145
        %v10147 = vpop.f32.mrf.mxu0
        %v10148 = vpop.f32.mrf.mxu0
        %v10149 = vadd.f32 %v9612, %v10148
        %v10150 = vpop.f32.mrf.mxu0
        %10151 = vdwg.mxu0
        %10152 = vmatprep.subr.bf16.mxu0 0
        %10153 = vmatpush1.bf16.msra.mxu0 %v9981
        %10154 = vmatprep.subr.bf16.mxu0 0
        %10155 = vmatpush1.bf16.msra.mxu0 %v9980
        %10156 = vmatprep.subr.bf16.mxu0 0
        %10157 = vmatpush1.bf16.msra.mxu0 %v9979
        %10158 = vmatprep.subr.bf16.mxu0 0
        %10159 = vmatpush1.bf16.msra.mxu0 %v9978
        %10160 = vmatprep.subr.bf16.mxu0 0
        %10161 = vmatpush1.bf16.msra.mxu0 %v9977
        %10162 = vmatprep.subr.bf16.mxu0 0
        %10163 = vmatpush1.bf16.msra.mxu0 %v9976
        %10164 = vmatprep.subr.bf16.mxu0 0
        %10165 = vmatpush1.bf16.msra.mxu0 %v9975
        %10166 = vmatprep.subr.bf16.mxu0 0
        %10167 = vmatpush1.bf16.msra.mxu0 %v9974
        %10168 = vmatprep.subr.bf16.mxu0 0
        %10169 = vmatpush2.bf16.msra.mxu0 %v9989
        %10170 = vmatprep.subr.bf16.mxu0 0
        %10171 = vmatpush2.bf16.msra.mxu0 %v9988
        %10172 = vmatprep.subr.bf16.mxu0 0
        %10173 = vmatpush2.bf16.msra.mxu0 %v9987
        %10174 = vmatprep.subr.bf16.mxu0 0
        %10175 = vmatpush2.bf16.msra.mxu0 %v9986
        %10176 = vmatprep.subr.bf16.mxu0 0
        %10177 = vmatpush2.bf16.msra.mxu0 %v9985
        %10178 = vmatprep.subr.bf16.mxu0 0
        %10179 = vmatpush2.bf16.msra.mxu0 %v9984
        %10180 = vmatprep.subr.bf16.mxu0 0
        %10181 = vmatpush2.bf16.msra.mxu0 %v9983
        %10182 = vmatprep.subr.bf16.mxu0 0
        %10183 = vmatpush2.bf16.msra.mxu0 %v9982
        %10184 = vmatprep.mubr.bf16.mxu0 %v9745
        %10185 = vmatmul.mubr.bf16.gmra.mxu0 %v9744
        %v10186 = vpop.f32.mrf.mxu0
        %v10187 = vadd.f32 %v10090, %v10186
        %v10188 = vpop.f32.mrf.mxu0
        %v10189 = vpop.f32.mrf.mxu0
        %v10190 = vadd.f32 %v10093, %v10189
        %v10191 = vpop.f32.mrf.mxu0
        %10192 = vmatprep.mubr.bf16.mxu0 %v9750
        %10193 = vmatmul.mubr.bf16.gmra.mxu0 %v9749
        %v10194 = vpop.f32.mrf.mxu0
        %v10195 = vadd.f32 %v10098, %v10194
        %v10196 = vpop.f32.mrf.mxu0
        %v10197 = vpop.f32.mrf.mxu0
        %v10198 = vadd.f32 %v10101, %v10197
        %v10199 = vpop.f32.mrf.mxu0
        %10200 = vmatprep.mubr.bf16.mxu0 %v9755
        %10201 = vmatmul.mubr.bf16.gmra.mxu0 %v9754
        %v10202 = vpop.f32.mrf.mxu0
        %v10203 = vadd.f32 %v10106, %v10202
        %v10204 = vpop.f32.mrf.mxu0
        %v10205 = vpop.f32.mrf.mxu0
        %v10206 = vadd.f32 %v10109, %v10205
        %v10207 = vpop.f32.mrf.mxu0
        %10208 = vmatprep.mubr.bf16.mxu0 %v9760
        %10209 = vmatmul.mubr.bf16.gmra.mxu0 %v9759
        %v10210 = vpop.f32.mrf.mxu0
        %v10211 = vadd.f32 %v10114, %v10210
        %v10212 = vpop.f32.mrf.mxu0
        %v10213 = vpop.f32.mrf.mxu0
        %v10214 = vadd.f32 %v10117, %v10213
        %v10215 = vpop.f32.mrf.mxu0
        %10216 = vmatprep.mubr.bf16.mxu0 %v9765
        %10217 = vmatmul.mubr.bf16.gmra.mxu0 %v9764
        %v10218 = vpop.f32.mrf.mxu0
        %v10219 = vadd.f32 %v10122, %v10218
        %v10220 = vpop.f32.mrf.mxu0
        %v10221 = vpop.f32.mrf.mxu0
        %v10222 = vadd.f32 %v10125, %v10221
        %v10223 = vpop.f32.mrf.mxu0
        %10224 = vmatprep.mubr.bf16.mxu0 %v9770
        %10225 = vmatmul.mubr.bf16.gmra.mxu0 %v9769
        %v10226 = vpop.f32.mrf.mxu0
        %v10227 = vadd.f32 %v10130, %v10226
        %v10228 = vpop.f32.mrf.mxu0
        %v10229 = vpop.f32.mrf.mxu0
        %v10230 = vadd.f32 %v10133, %v10229
        %v10231 = vpop.f32.mrf.mxu0
        %10232 = vmatprep.mubr.bf16.mxu0 %v9775
        %10233 = vmatmul.mubr.bf16.gmra.mxu0 %v9774
        %v10234 = vpop.f32.mrf.mxu0
        %v10235 = vadd.f32 %v10138, %v10234
        %v10236 = vpop.f32.mrf.mxu0
        %v10237 = vpop.f32.mrf.mxu0
        %v10238 = vadd.f32 %v10141, %v10237
        %v10239 = vpop.f32.mrf.mxu0
        %10240 = vmatprep.mubr.bf16.mxu0 %v9780
        %10241 = vmatmul.mubr.bf16.gmra.mxu0 %v9779
        %v10242 = vpop.f32.mrf.mxu0
        %v10243 = vadd.f32 %v10146, %v10242
        %v10244 = vpop.f32.mrf.mxu0
        %v10245 = vpop.f32.mrf.mxu0
        %v10246 = vadd.f32 %v10149, %v10245
        %v10247 = vpop.f32.mrf.mxu0
        %10248 = vdwg.mxu0
        %10249 = vmatprep.subr.bf16.mxu0 0
        %10250 = vmatpush1.bf16.msra.mxu0 0
        %10251 = vmatprep.subr.bf16.mxu0 0
        %10252 = vmatpush1.bf16.msra.mxu0 0
        %10253 = vmatprep.subr.bf16.mxu0 0
        %10254 = vmatpush1.bf16.msra.mxu0 0
        %10255 = vmatprep.subr.bf16.mxu0 0
        %10256 = vmatpush1.bf16.msra.mxu0 0
        %10257 = vmatprep.subr.bf16.mxu0 0
        %10258 = vmatpush1.bf16.msra.mxu0 %v9993
        %10259 = vmatprep.subr.bf16.mxu0 0
        %10260 = vmatpush1.bf16.msra.mxu0 %v9992
        %10261 = vmatprep.subr.bf16.mxu0 0
        %10262 = vmatpush1.bf16.msra.mxu0 %v9991
        %10263 = vmatprep.subr.bf16.mxu0 0
        %10264 = vmatpush1.bf16.msra.mxu0 %v9990
        %10265 = vmatprep.subr.bf16.mxu0 0
        %10266 = vmatpush2.bf16.msra.mxu0 0
        %10267 = vmatprep.subr.bf16.mxu0 0
        %10268 = vmatpush2.bf16.msra.mxu0 0
        %10269 = vmatprep.subr.bf16.mxu0 0
        %10270 = vmatpush2.bf16.msra.mxu0 0
        %10271 = vmatprep.subr.bf16.mxu0 0
        %10272 = vmatpush2.bf16.msra.mxu0 0
        %10273 = vmatprep.subr.bf16.mxu0 0
        %10274 = vmatpush2.bf16.msra.mxu0 0
        %10275 = vmatprep.subr.bf16.mxu0 0
        %10276 = vmatpush2.bf16.msra.mxu0 0
        %10277 = vmatprep.subr.bf16.mxu0 0
        %10278 = vmatpush2.bf16.msra.mxu0 0
        %10279 = vmatprep.subr.bf16.mxu0 0
        %10280 = vmatpush2.bf16.msra.mxu0 0
        %10281 = vmatprep.mubr.bf16.mxu0 0
        %10282 = vmatmul.mubr.bf16.gmra.mxu0 %v10032
        %v10283 = vpop.f32.mrf.mxu0
        %v10284 = vadd.f32 %v10187, %v10283
        %v10285 = vpop.f32.mrf.mxu0
        %v10286 = vpop.f32.mrf.mxu0
        %v10287 = vadd.f32 %v10190, %v10286
        %v10288 = vpop.f32.mrf.mxu0
        %10289 = vmatprep.mubr.bf16.mxu0 0
        %10290 = vmatmul.mubr.bf16.gmra.mxu0 %v10035
        %v10291 = vpop.f32.mrf.mxu0
        %v10292 = vadd.f32 %v10195, %v10291
        %v10293 = vpop.f32.mrf.mxu0
        %v10294 = vpop.f32.mrf.mxu0
        %v10295 = vadd.f32 %v10198, %v10294
        %v10296 = vpop.f32.mrf.mxu0
        %10297 = vmatprep.mubr.bf16.mxu0 0
        %10298 = vmatmul.mubr.bf16.gmra.mxu0 %v10038
        %v10299 = vpop.f32.mrf.mxu0
        %v10300 = vadd.f32 %v10203, %v10299
        %v10301 = vpop.f32.mrf.mxu0
        %v10302 = vpop.f32.mrf.mxu0
        %v10303 = vadd.f32 %v10206, %v10302
        %v10304 = vpop.f32.mrf.mxu0
        %10305 = vmatprep.mubr.bf16.mxu0 0
        %10306 = vmatmul.mubr.bf16.gmra.mxu0 %v10041
        %v10307 = vpop.f32.mrf.mxu0
        %v10308 = vadd.f32 %v10211, %v10307
        %v10309 = vpop.f32.mrf.mxu0
        %v10310 = vpop.f32.mrf.mxu0
        %v10311 = vadd.f32 %v10214, %v10310
        %v10312 = vpop.f32.mrf.mxu0
        %10313 = vmatprep.mubr.bf16.mxu0 0
        %10314 = vmatmul.mubr.bf16.gmra.mxu0 %v10044
        %v10315 = vpop.f32.mrf.mxu0
        %v10316 = vadd.f32 %v10219, %v10315
        %v10317 = vpop.f32.mrf.mxu0
        %v10318 = vpop.f32.mrf.mxu0
        %v10319 = vadd.f32 %v10222, %v10318
        %v10320 = vpop.f32.mrf.mxu0
        %10321 = vmatprep.mubr.bf16.mxu0 0
        %10322 = vmatmul.mubr.bf16.gmra.mxu0 %v10047
        %v10323 = vpop.f32.mrf.mxu0
        %v10324 = vadd.f32 %v10227, %v10323
        %v10325 = vpop.f32.mrf.mxu0
        %v10326 = vpop.f32.mrf.mxu0
        %v10327 = vadd.f32 %v10230, %v10326
        %v10328 = vpop.f32.mrf.mxu0
        %10329 = vmatprep.mubr.bf16.mxu0 0
        %10330 = vmatmul.mubr.bf16.gmra.mxu0 %v10050
        %v10331 = vpop.f32.mrf.mxu0
        %v10332 = vadd.f32 %v10235, %v10331
        %v10333 = vpop.f32.mrf.mxu0
        %v10334 = vpop.f32.mrf.mxu0
        %v10335 = vadd.f32 %v10238, %v10334
        %v10336 = vpop.f32.mrf.mxu0
        %10337 = vmatprep.mubr.bf16.mxu0 0
        %10338 = vmatmul.mubr.bf16.gmra.mxu0 %v10053
        %v10339 = vpop.f32.mrf.mxu0
        %v10340 = vadd.f32 %v10243, %v10339
        %v10341 = vpop.f32.mrf.mxu0
        %v10342 = vpop.f32.mrf.mxu0
        %v10343 = vadd.f32 %v10246, %v10342
        %v10344 = vpop.f32.mrf.mxu0
        %10345 = vdwg.mxu0
        %v10346 = vmax.f32 %v10284, 0.0
        %v10347 = vmax.f32 %v10287, 0.0
        %v10348 = vmax.f32 %v10292, 0.0
        %v10349 = vmax.f32 %v10295, 0.0
        %v10350 = vmax.f32 %v10300, 0.0
        %v10351 = vmax.f32 %v10303, 0.0
        %v10352 = vmax.f32 %v10308, 0.0
        %v10353 = vmax.f32 %v10311, 0.0
        %v10354 = vmax.f32 %v10316, 0.0
        %v10355 = vmax.f32 %v10319, 0.0
        %v10356 = vmax.f32 %v10324, 0.0
        %v10357 = vmax.f32 %v10327, 0.0
        %v10358 = vmax.f32 %v10332, 0.0
        %v10359 = vmax.f32 %v10335, 0.0
        %v10360 = vmax.f32 %v10340, 0.0
        %v10361 = vmax.f32 %v10343, 0.0
        %v10362 = vmax.f32 %v10346, %v10348
        %v10363 = vmax.f32 %v10347, %v10349
        %v10364 = vmax.f32 %v10350, %v10352
        %v10365 = vmax.f32 %v10351, %v10353
        %v10366 = vmax.f32 %v10354, %v10356
        %v10367 = vmax.f32 %v10355, %v10357
        %v10368 = vmax.f32 %v10358, %v10360
        %v10369 = vmax.f32 %v10359, %v10361
        %10370 = vst.msk [vmem:[#allocation6] sm:$0xff] %vm10030, %v10362
        %10371 = vst.msk [vmem:[#allocation6 + $0x8] sm:$0xff] %vm10030, %v10363
        %10372 = vst.msk [vmem:[#allocation6 + $0x10] sm:$0xff] %vm10030, %v10364
        %10373 = vst.msk [vmem:[#allocation6 + $0x18] sm:$0xff] %vm10030, %v10365
        %10374 = vst.msk [vmem:[#allocation6 + $0x20] sm:$0xff] %vm10030, %v10366
        %10375 = vst.msk [vmem:[#allocation6 + $0x28] sm:$0xff] %vm10030, %v10367
        %10376 = vst.msk [vmem:[#allocation6 + $0x30] sm:$0xff] %vm10030, %v10368
        %10377 = vst.msk [vmem:[#allocation6 + $0x38] sm:$0xff] %vm10030, %v10369
        %v10378 = vld [vmem:[#allocation5 + $0x140] sm:$0xff]
        %v10379 = vld [vmem:[#allocation5 + $0x148] sm:$0xff]
        %v10380 = vld [vmem:[#allocation5 + $0x150] sm:$0xf]
        %v10381 = vld [vmem:[#allocation5 + $0x154] sm:$0xff]
        %v10382 = vld [vmem:[#allocation5 + $0x15c] sm:$0xff]
        %v10383 = vld [vmem:[#allocation5 + $0x164] sm:$0xf]
        %v10384 = vld [vmem:[#allocation5 + $0x168] sm:$0xff]
        %v10385 = vld [vmem:[#allocation5 + $0x170] sm:$0xff]
        %v10386 = vld [vmem:[#allocation5 + $0x178] sm:$0xf]
        %v10387 = vld [vmem:[#allocation5 + $0x17c] sm:$0xff]
        %v10388 = vld [vmem:[#allocation5 + $0x184] sm:$0xff]
        %v10389 = vld [vmem:[#allocation5 + $0x18c] sm:$0xf]
        %v10390 = vld [vmem:[#allocation5 + $0x190] sm:$0xff]
        %v10391 = vld [vmem:[#allocation5 + $0x198] sm:$0xff]
        %v10392 = vld [vmem:[#allocation5 + $0x1a0] sm:$0xf]
        %v10393 = vld [vmem:[#allocation5 + $0x1a4] sm:$0xff]
        %v10394 = vld [vmem:[#allocation5 + $0x1ac] sm:$0xff]
        %v10395 = vld [vmem:[#allocation5 + $0x1b4] sm:$0xf]
        %v10396 = vld [vmem:[#allocation5 + $0x1b8] sm:$0xff]
        %v10397 = vld [vmem:[#allocation5 + $0x1c0] sm:$0xff]
        %v10398 = vld [vmem:[#allocation5 + $0x1c8] sm:$0xf]
        %v10399 = vld [vmem:[#allocation5 + $0x1cc] sm:$0xff]
        %v10400 = vld [vmem:[#allocation5 + $0x1d4] sm:$0xff]
        %v10401 = vld [vmem:[#allocation5 + $0x1dc] sm:$0xf]
        %v10402 = vld [vmem:[#allocation5 + $0x1e0] sm:$0xff]
        %v10403 = vld [vmem:[#allocation5 + $0x1e8] sm:$0xff]
        %v10404 = vld [vmem:[#allocation5 + $0x1f0] sm:$0xf]
        %v10405 = vld [vmem:[#allocation5 + $0x1f4] sm:$0xff]
        %v10406 = vld [vmem:[#allocation5 + $0x1fc] sm:$0xff]
        %v10407 = vld [vmem:[#allocation5 + $0x204] sm:$0xf]
        %v10408 = vld [vmem:[#allocation5 + $0x208] sm:$0xff]
        %v10409 = vld [vmem:[#allocation5 + $0x210] sm:$0xff]
        %v10410 = vld [vmem:[#allocation5 + $0x218] sm:$0xf]
        %v10411 = vld [vmem:[#allocation5 + $0x21c] sm:$0xff]
        %v10412 = vld [vmem:[#allocation5 + $0x224] sm:$0xff]
        %v10413 = vld [vmem:[#allocation5 + $0x22c] sm:$0xf]
        %v10414 = vld [vmem:[#allocation5 + $0x230] sm:$0xff]
        %v10415 = vld [vmem:[#allocation5 + $0x238] sm:$0xff]
        %v10416 = vld [vmem:[#allocation5 + $0x240] sm:$0xf]
        %v10417 = vld [vmem:[#allocation5 + $0x244] sm:$0xff]
        %v10418 = vld [vmem:[#allocation5 + $0x24c] sm:$0xff]
        %v10419 = vld [vmem:[#allocation5 + $0x254] sm:$0xf]
        %v10420 = vld [vmem:[#allocation5 + $0x258] sm:$0xff]
        %v10421 = vld [vmem:[#allocation5 + $0x260] sm:$0xff]
        %v10422 = vld [vmem:[#allocation5 + $0x268] sm:$0xf]
        %v10423 = vld [vmem:[#allocation5 + $0x26c] sm:$0xff]
        %v10424 = vld [vmem:[#allocation5 + $0x274] sm:$0xff]
        %v10425 = vld [vmem:[#allocation5 + $0x27c] sm:$0xf]
        %v10426 = vld [vmem:[%s3] sm:$0xf]
        %v10427 = vld [vmem:[%s3 + $0x4] sm:$0xf]
        %v10428 = vld [vmem:[%s3 + $0x8] sm:$0xf]
        %v10429 = vld [vmem:[%s3 + $0xc] sm:$0xf]
        %v10430 = vld [vmem:[%s3 + $0x10] sm:$0xf]
        %v10431 = vld [vmem:[%s3 + $0x14] sm:$0xf]
        %v10432 = vld [vmem:[%s3 + $0x18] sm:$0xf]
        %v10433 = vld [vmem:[%s3 + $0x1c] sm:$0xf]
        %v10434 = vld [vmem:[%s3 + $0x20] sm:$0xf]
        %v10435 = vld [vmem:[%s3 + $0x24] sm:$0xf]
        %v10436 = vld [vmem:[%s3 + $0x28] sm:$0xf]
        %v10437 = vld [vmem:[%s3 + $0x2c] sm:$0xf]
        %v10438 = vld [vmem:[%s3 + $0x30] sm:$0xf]
        %v10439 = vld [vmem:[%s3 + $0x34] sm:$0xf]
        %v10440 = vld [vmem:[%s3 + $0x38] sm:$0xf]
        %v10441 = vld [vmem:[%s3 + $0x3c] sm:$0xf]
        %v10442 = vld [vmem:[%s3 + $0x40] sm:$0xf]
        %v10443 = vld [vmem:[%s3 + $0x44] sm:$0xf]
        %v10444 = vld [vmem:[%s3 + $0x48] sm:$0xf]
        %v10445 = vld [vmem:[%s3 + $0x4c] sm:$0xf]
        %v10446 = vld [vmem:[%s3 + $0x50] sm:$0xf]
        %v10447 = vld [vmem:[%s3 + $0x54] sm:$0xf]
        %v10448 = vld [vmem:[%s3 + $0x58] sm:$0xf]
        %v10449 = vld [vmem:[%s3 + $0x5c] sm:$0xf]
        %v10450 = vld [vmem:[%s3 + $0x60] sm:$0xf]
        %v10451 = vld [vmem:[%s3 + $0x64] sm:$0xf]
        %v10452 = vld [vmem:[%s3 + $0x68] sm:$0xf]
        %v10453 = vld [vmem:[%s3 + $0x6c] sm:$0xf]
        %v10454 = vld [vmem:[%s3 + $0x70] sm:$0xf]
        %v10455 = vld [vmem:[%s3 + $0x74] sm:$0xf]
        %v10456 = vld [vmem:[%s3 + $0x78] sm:$0xf]
        %v10457 = vld [vmem:[%s3 + $0x7c] sm:$0xf]
        %v10458 = vld [vmem:[%s3 + $0x80] sm:$0xf]
        %v10459 = vld [vmem:[%s3 + $0x84] sm:$0xf]
        %v10460 = vld [vmem:[%s3 + $0x88] sm:$0xf]
        %v10461 = vld [vmem:[%s3 + $0x8c] sm:$0xf]
        %v10462 = vld [vmem:[%s3 + $0x90] sm:$0xf]
        %v10463 = vld [vmem:[%s3 + $0x94] sm:$0xf]
        %v10464 = vld [vmem:[%s3 + $0x98] sm:$0xf]
        %v10465 = vld [vmem:[%s3 + $0x9c] sm:$0xf]
        %v10466 = vld [vmem:[%s3 + $0xa0] sm:$0xf]
        %v10467 = vld [vmem:[%s3 + $0xa4] sm:$0xf]
        %v10468 = vld [vmem:[%s3 + $0xa8] sm:$0xf]
        %v10469 = vld [vmem:[%s3 + $0xac] sm:$0xf]
        %v10470 = vld [vmem:[%s3 + $0xb0] sm:$0xf]
        %v10471 = vld [vmem:[%s3 + $0xb4] sm:$0xf]
        %v10472 = vld [vmem:[%s3 + $0xb8] sm:$0xf]
        %v10473 = vld [vmem:[%s3 + $0xbc] sm:$0xf]
        %v10474 = vld [vmem:[%s3 + $0xc0] sm:$0xf]
        %v10475 = vld [vmem:[%s3 + $0xc4] sm:$0xf]
        %v10476 = vld [vmem:[%s3 + $0xc8] sm:$0xf]
        %v10477 = vld [vmem:[%s3 + $0xcc] sm:$0xf]
        %v10478 = vld [vmem:[%s3 + $0xd0] sm:$0xf]
        %v10479 = vld [vmem:[%s3 + $0xd4] sm:$0xf]
        %v10480 = vld [vmem:[%s3 + $0xd8] sm:$0xf]
        %v10481 = vld [vmem:[%s3 + $0xdc] sm:$0xf]
        %v10482 = vld [vmem:[%s3 + $0xe0] sm:$0xf]
        %v10483 = vld [vmem:[%s3 + $0xe4] sm:$0xf]
        %v10484 = vld [vmem:[%s3 + $0xe8] sm:$0xf]
        %v10485 = vld [vmem:[%s3 + $0xec] sm:$0xf]
        %v10486 = vld [vmem:[%s3 + $0xf0] sm:$0xf]
        %v10487 = vld [vmem:[%s3 + $0xf4] sm:$0xf]
        %v10488 = vld [vmem:[%s3 + $0xf8] sm:$0xf]
        %v10489 = vld [vmem:[%s3 + $0xfc] sm:$0xf]
        %v10490 = vld [vmem:[%s3 + $0x100] sm:$0xf]
        %v10491 = vld [vmem:[%s3 + $0x104] sm:$0xf]
        %v10492 = vld [vmem:[%s3 + $0x108] sm:$0xf]
        %v10493 = vld [vmem:[%s3 + $0x10c] sm:$0xf]
        %v10494 = vld [vmem:[%s3 + $0x110] sm:$0xf]
        %v10495 = vld [vmem:[%s3 + $0x114] sm:$0xf]
        %v10496 = vld [vmem:[%s3 + $0x118] sm:$0xf]
        %v10497 = vld [vmem:[%s3 + $0x11c] sm:$0xf]
        %v10546 = vunpack.c.l.b16 %v10378
        %v10547 = vunpack.c.h.b16 %v10378
        %v10548 = vunpack.c.l.b16 %v10379
        %v10549 = vunpack.c.h.b16 %v10379
        %v10550 = vunpack.c.l.b16 %v10380
        %v10551 = vunpack.c.l.b16 %v10381
        %v10552 = vunpack.c.h.b16 %v10381
        %v10553 = vunpack.c.l.b16 %v10382
        %v10554 = vunpack.c.h.b16 %v10382
        %v10555 = vunpack.c.l.b16 %v10383
        %v10556 = vunpack.c.l.b16 %v10384
        %v10557 = vunpack.c.h.b16 %v10384
        %v10558 = vunpack.c.l.b16 %v10385
        %v10559 = vunpack.c.h.b16 %v10385
        %v10560 = vunpack.c.l.b16 %v10386
        %v10561 = vunpack.c.l.b16 %v10387
        %v10562 = vunpack.c.h.b16 %v10387
        %v10563 = vunpack.c.l.b16 %v10388
        %v10564 = vunpack.c.h.b16 %v10388
        %v10565 = vunpack.c.l.b16 %v10389
        %v10566 = vunpack.c.l.b16 %v10390
        %v10567 = vunpack.c.h.b16 %v10390
        %v10568 = vunpack.c.l.b16 %v10391
        %v10569 = vunpack.c.h.b16 %v10391
        %v10570 = vunpack.c.l.b16 %v10392
        %v10571 = vunpack.c.l.b16 %v10393
        %v10572 = vunpack.c.h.b16 %v10393
        %v10573 = vunpack.c.l.b16 %v10394
        %v10574 = vunpack.c.h.b16 %v10394
        %v10575 = vunpack.c.l.b16 %v10395
        %v10576 = vunpack.c.l.b16 %v10396
        %v10577 = vunpack.c.h.b16 %v10396
        %v10578 = vunpack.c.l.b16 %v10397
        %v10579 = vunpack.c.h.b16 %v10397
        %v10580 = vunpack.c.l.b16 %v10398
        %v10581 = vunpack.c.l.b16 %v10399
        %v10582 = vunpack.c.h.b16 %v10399
        %v10583 = vunpack.c.l.b16 %v10400
        %v10584 = vunpack.c.h.b16 %v10400
        %v10585 = vunpack.c.l.b16 %v10401
        %v10586 = vunpack.c.l.b16 %v10402
        %v10587 = vunpack.c.h.b16 %v10402
        %v10588 = vunpack.c.l.b16 %v10403
        %v10589 = vunpack.c.h.b16 %v10403
        %v10590 = vunpack.c.l.b16 %v10404
        %v10591 = vunpack.c.l.b16 %v10405
        %v10592 = vunpack.c.h.b16 %v10405
        %v10593 = vunpack.c.l.b16 %v10406
        %v10594 = vunpack.c.h.b16 %v10406
        %v10595 = vunpack.c.l.b16 %v10407
        %v10596 = vunpack.c.l.b16 %v10408
        %v10597 = vunpack.c.h.b16 %v10408
        %v10598 = vunpack.c.l.b16 %v10409
        %v10599 = vunpack.c.h.b16 %v10409
        %v10600 = vunpack.c.l.b16 %v10410
        %v10601 = vunpack.c.l.b16 %v10411
        %v10602 = vunpack.c.h.b16 %v10411
        %v10603 = vunpack.c.l.b16 %v10412
        %v10604 = vunpack.c.h.b16 %v10412
        %v10605 = vunpack.c.l.b16 %v10413
        %v10606 = vunpack.c.l.b16 %v10414
        %v10607 = vunpack.c.h.b16 %v10414
        %v10608 = vunpack.c.l.b16 %v10415
        %v10609 = vunpack.c.h.b16 %v10415
        %v10610 = vunpack.c.l.b16 %v10416
        %v10611 = vunpack.c.l.b16 %v10417
        %v10612 = vunpack.c.h.b16 %v10417
        %v10613 = vunpack.c.l.b16 %v10418
        %v10614 = vunpack.c.h.b16 %v10418
        %v10615 = vunpack.c.l.b16 %v10419
        %v10616 = vunpack.c.l.b16 %v10420
        %v10617 = vunpack.c.h.b16 %v10420
        %v10618 = vunpack.c.l.b16 %v10421
        %v10619 = vunpack.c.h.b16 %v10421
        %v10620 = vunpack.c.l.b16 %v10422
        %v10621 = vunpack.c.l.b16 %v10423
        %v10622 = vunpack.c.h.b16 %v10423
        %v10623 = vunpack.c.l.b16 %v10424
        %v10624 = vunpack.c.h.b16 %v10424
        %v10625 = vunpack.c.l.b16 %v10425
        %v10626 = vpack.c.b16 %v10551, %v10546
        %v10627 = vpack.c.b16 %v10552, %v10547
        %v10628 = vpack.c.b16 %v10553, %v10548
        %v10629 = vpack.c.b16 %v10554, %v10549
        %v10630 = vpack.c.b16 %v10555, %v10550
        %v10631 = vpack.c.b16 %v10561, %v10556
        %v10632 = vpack.c.b16 %v10562, %v10557
        %v10633 = vpack.c.b16 %v10563, %v10558
        %v10634 = vpack.c.b16 %v10564, %v10559
        %v10635 = vpack.c.b16 %v10565, %v10560
        %v10636 = vpack.c.b16 %v10571, %v10566
        %v10637 = vpack.c.b16 %v10572, %v10567
        %v10638 = vpack.c.b16 %v10573, %v10568
        %v10639 = vpack.c.b16 %v10574, %v10569
        %v10640 = vpack.c.b16 %v10575, %v10570
        %v10641 = vpack.c.b16 %v10581, %v10576
        %v10642 = vpack.c.b16 %v10582, %v10577
        %v10643 = vpack.c.b16 %v10583, %v10578
        %v10644 = vpack.c.b16 %v10584, %v10579
        %v10645 = vpack.c.b16 %v10585, %v10580
        %v10646 = vpack.c.b16 %v10591, %v10586
        %v10647 = vpack.c.b16 %v10592, %v10587
        %v10648 = vpack.c.b16 %v10593, %v10588
        %v10649 = vpack.c.b16 %v10594, %v10589
        %v10650 = vpack.c.b16 %v10595, %v10590
        %v10651 = vpack.c.b16 %v10601, %v10596
        %v10652 = vpack.c.b16 %v10602, %v10597
        %v10653 = vpack.c.b16 %v10603, %v10598
        %v10654 = vpack.c.b16 %v10604, %v10599
        %v10655 = vpack.c.b16 %v10605, %v10600
        %v10656 = vpack.c.b16 %v10611, %v10606
        %v10657 = vpack.c.b16 %v10612, %v10607
        %v10658 = vpack.c.b16 %v10613, %v10608
        %v10659 = vpack.c.b16 %v10614, %v10609
        %v10660 = vpack.c.b16 %v10615, %v10610
        %v10661 = vpack.c.b16 %v10621, %v10616
        %v10662 = vpack.c.b16 %v10622, %v10617
        %v10663 = vpack.c.b16 %v10623, %v10618
        %v10664 = vpack.c.b16 %v10624, %v10619
        %v10665 = vpack.c.b16 %v10625, %v10620
        %v10770 = vunpack.c.l.b16 %v10426
        %v10771 = vunpack.c.l.b16 %v10427
        %v10772 = vunpack.c.l.b16 %v10428
        %v10773 = vunpack.c.l.b16 %v10429
        %v10774 = vunpack.c.l.b16 %v10430
        %v10775 = vunpack.c.l.b16 %v10431
        %v10776 = vunpack.c.l.b16 %v10432
        %v10777 = vunpack.c.l.b16 %v10433
        %v10778 = vunpack.c.l.b16 %v10434
        %v10779 = vunpack.c.l.b16 %v10435
        %v10780 = vunpack.c.l.b16 %v10436
        %v10781 = vunpack.c.l.b16 %v10437
        %v10782 = vunpack.c.l.b16 %v10438
        %v10783 = vunpack.c.l.b16 %v10439
        %v10784 = vunpack.c.l.b16 %v10440
        %v10785 = vunpack.c.l.b16 %v10441
        %v10786 = vunpack.c.l.b16 %v10442
        %v10787 = vunpack.c.l.b16 %v10443
        %v10788 = vunpack.c.l.b16 %v10444
        %v10789 = vunpack.c.l.b16 %v10445
        %v10790 = vunpack.c.l.b16 %v10446
        %v10791 = vunpack.c.l.b16 %v10447
        %v10792 = vunpack.c.l.b16 %v10448
        %v10793 = vunpack.c.l.b16 %v10449
        %v10794 = vunpack.c.l.b16 %v10450
        %v10795 = vunpack.c.l.b16 %v10451
        %v10796 = vunpack.c.l.b16 %v10452
        %v10797 = vunpack.c.l.b16 %v10453
        %v10798 = vunpack.c.l.b16 %v10454
        %v10799 = vunpack.c.l.b16 %v10455
        %v10800 = vunpack.c.l.b16 %v10456
        %v10801 = vunpack.c.l.b16 %v10457
        %v10802 = vunpack.c.l.b16 %v10458
        %v10803 = vunpack.c.l.b16 %v10459
        %v10804 = vunpack.c.l.b16 %v10460
        %v10805 = vunpack.c.l.b16 %v10461
        %v10806 = vunpack.c.l.b16 %v10462
        %v10807 = vunpack.c.l.b16 %v10463
        %v10808 = vunpack.c.l.b16 %v10464
        %v10809 = vunpack.c.l.b16 %v10465
        %v10810 = vunpack.c.l.b16 %v10466
        %v10811 = vunpack.c.l.b16 %v10467
        %v10812 = vunpack.c.l.b16 %v10468
        %v10813 = vunpack.c.l.b16 %v10469
        %v10814 = vunpack.c.l.b16 %v10470
        %v10815 = vunpack.c.l.b16 %v10471
        %v10816 = vunpack.c.l.b16 %v10472
        %v10817 = vunpack.c.l.b16 %v10473
        %v10818 = vunpack.c.l.b16 %v10474
        %v10819 = vunpack.c.l.b16 %v10475
        %v10820 = vunpack.c.l.b16 %v10476
        %v10821 = vunpack.c.l.b16 %v10477
        %v10822 = vunpack.c.l.b16 %v10478
        %v10823 = vunpack.c.l.b16 %v10479
        %v10824 = vunpack.c.l.b16 %v10480
        %v10825 = vunpack.c.l.b16 %v10481
        %v10826 = vunpack.c.l.b16 %v10482
        %v10827 = vunpack.c.l.b16 %v10483
        %v10828 = vunpack.c.l.b16 %v10484
        %v10829 = vunpack.c.l.b16 %v10485
        %v10830 = vunpack.c.l.b16 %v10486
        %v10831 = vunpack.c.l.b16 %v10487
        %v10832 = vunpack.c.l.b16 %v10488
        %v10833 = vunpack.c.l.b16 %v10489
        %v10834 = vunpack.c.l.b16 %v10490
        %v10835 = vunpack.c.l.b16 %v10491
        %v10836 = vunpack.c.l.b16 %v10492
        %v10837 = vunpack.c.l.b16 %v10493
        %v10838 = vunpack.c.l.b16 %v10494
        %v10839 = vunpack.c.l.b16 %v10495
        %v10840 = vunpack.c.l.b16 %v10496
        %v10841 = vunpack.c.l.b16 %v10497
        %v10842 = vpack.c.b16 %v10771, %v10770
        %v10843 = vpack.c.b16 %v10773, %v10772
        %v10844 = vpack.c.b16 %v10775, %v10774
        %v10845 = vpack.c.b16 %v10777, %v10776
        %v10846 = vpack.c.b16 %v10779, %v10778
        %v10847 = vpack.c.b16 %v10781, %v10780
        %v10848 = vpack.c.b16 %v10783, %v10782
        %v10849 = vpack.c.b16 %v10785, %v10784
        %v10850 = vpack.c.b16 %v10787, %v10786
        %v10851 = vpack.c.b16 %v10789, %v10788
        %v10852 = vpack.c.b16 %v10791, %v10790
        %v10853 = vpack.c.b16 %v10793, %v10792
        %v10854 = vpack.c.b16 %v10795, %v10794
        %v10855 = vpack.c.b16 %v10797, %v10796
        %v10856 = vpack.c.b16 %v10799, %v10798
        %v10857 = vpack.c.b16 %v10801, %v10800
        %v10858 = vpack.c.b16 %v10803, %v10802
        %v10859 = vpack.c.b16 %v10805, %v10804
        %v10860 = vpack.c.b16 %v10807, %v10806
        %v10861 = vpack.c.b16 %v10809, %v10808
        %v10862 = vpack.c.b16 %v10811, %v10810
        %v10863 = vpack.c.b16 %v10813, %v10812
        %v10864 = vpack.c.b16 %v10815, %v10814
        %v10865 = vpack.c.b16 %v10817, %v10816
        %v10866 = vpack.c.b16 %v10819, %v10818
        %v10867 = vpack.c.b16 %v10821, %v10820
        %v10868 = vpack.c.b16 %v10823, %v10822
        %v10869 = vpack.c.b16 %v10825, %v10824
        %v10870 = vpack.c.b16 %v10827, %v10826
        %v10871 = vpack.c.b16 %v10829, %v10828
        %v10872 = vpack.c.b16 %v10831, %v10830
        %v10873 = vpack.c.b16 %v10833, %v10832
        %v10874 = vpack.c.b16 %v10835, %v10834
        %v10875 = vpack.c.b16 %v10837, %v10836
        %v10876 = vpack.c.b16 %v10839, %v10838
        %v10877 = vpack.c.b16 %v10841, %v10840
        %v10915 = vsel %vm10030, %v10630, 0
        %v10918 = vsel %vm10030, %v10635, 0
        %v10921 = vsel %vm10030, %v10640, 0
        %v10924 = vsel %vm10030, %v10645, 0
        %v10927 = vsel %vm10030, %v10650, 0
        %v10930 = vsel %vm10030, %v10655, 0
        %v10933 = vsel %vm10030, %v10660, 0
        %v10936 = vsel %vm10030, %v10665, 0
        %10938 = vmatprep.subr.bf16.mxu0 0
        %10939 = vmatpush1.bf16.msra.mxu0 %v10849
        %10940 = vmatprep.subr.bf16.mxu0 0
        %10941 = vmatpush1.bf16.msra.mxu0 %v10848
        %10942 = vmatprep.subr.bf16.mxu0 0
        %10943 = vmatpush1.bf16.msra.mxu0 %v10847
        %10944 = vmatprep.subr.bf16.mxu0 0
        %10945 = vmatpush1.bf16.msra.mxu0 %v10846
        %10946 = vmatprep.subr.bf16.mxu0 0
        %10947 = vmatpush1.bf16.msra.mxu0 %v10845
        %10948 = vmatprep.subr.bf16.mxu0 0
        %10949 = vmatpush1.bf16.msra.mxu0 %v10844
        %10950 = vmatprep.subr.bf16.mxu0 0
        %10951 = vmatpush1.bf16.msra.mxu0 %v10843
        %10952 = vmatprep.subr.bf16.mxu0 0
        %10953 = vmatpush1.bf16.msra.mxu0 %v10842
        %10954 = vmatprep.subr.bf16.mxu0 0
        %10955 = vmatpush2.bf16.msra.mxu0 %v10857
        %10956 = vmatprep.subr.bf16.mxu0 0
        %10957 = vmatpush2.bf16.msra.mxu0 %v10856
        %10958 = vmatprep.subr.bf16.mxu0 0
        %10959 = vmatpush2.bf16.msra.mxu0 %v10855
        %10960 = vmatprep.subr.bf16.mxu0 0
        %10961 = vmatpush2.bf16.msra.mxu0 %v10854
        %10962 = vmatprep.subr.bf16.mxu0 0
        %10963 = vmatpush2.bf16.msra.mxu0 %v10853
        %10964 = vmatprep.subr.bf16.mxu0 0
        %10965 = vmatpush2.bf16.msra.mxu0 %v10852
        %10966 = vmatprep.subr.bf16.mxu0 0
        %10967 = vmatpush2.bf16.msra.mxu0 %v10851
        %10968 = vmatprep.subr.bf16.mxu0 0
        %10969 = vmatpush2.bf16.msra.mxu0 %v10850
        %10970 = vmatprep.mubr.bf16.mxu0 %v10627
        %10971 = vmatmul.mubr.bf16.gmra.mxu0 %v10626
        %v10972 = vpop.f32.mrf.mxu0
        %v10973 = vadd.f32 %v9612, %v10972
        %v10974 = vpop.f32.mrf.mxu0
        %v10975 = vpop.f32.mrf.mxu0
        %v10976 = vadd.f32 %v9612, %v10975
        %v10977 = vpop.f32.mrf.mxu0
        %10978 = vmatprep.mubr.bf16.mxu0 %v10632
        %10979 = vmatmul.mubr.bf16.gmra.mxu0 %v10631
        %v10980 = vpop.f32.mrf.mxu0
        %v10981 = vadd.f32 %v9612, %v10980
        %v10982 = vpop.f32.mrf.mxu0
        %v10983 = vpop.f32.mrf.mxu0
        %v10984 = vadd.f32 %v9612, %v10983
        %v10985 = vpop.f32.mrf.mxu0
        %10986 = vmatprep.mubr.bf16.mxu0 %v10637
        %10987 = vmatmul.mubr.bf16.gmra.mxu0 %v10636
        %v10988 = vpop.f32.mrf.mxu0
        %v10989 = vadd.f32 %v9612, %v10988
        %v10990 = vpop.f32.mrf.mxu0
        %v10991 = vpop.f32.mrf.mxu0
        %v10992 = vadd.f32 %v9612, %v10991
        %v10993 = vpop.f32.mrf.mxu0
        %10994 = vmatprep.mubr.bf16.mxu0 %v10642
        %10995 = vmatmul.mubr.bf16.gmra.mxu0 %v10641
        %v10996 = vpop.f32.mrf.mxu0
        %v10997 = vadd.f32 %v9612, %v10996
        %v10998 = vpop.f32.mrf.mxu0
        %v10999 = vpop.f32.mrf.mxu0
        %v11000 = vadd.f32 %v9612, %v10999
        %v11001 = vpop.f32.mrf.mxu0
        %11002 = vmatprep.mubr.bf16.mxu0 %v10647
        %11003 = vmatmul.mubr.bf16.gmra.mxu0 %v10646
        %v11004 = vpop.f32.mrf.mxu0
        %v11005 = vadd.f32 %v9612, %v11004
        %v11006 = vpop.f32.mrf.mxu0
        %v11007 = vpop.f32.mrf.mxu0
        %v11008 = vadd.f32 %v9612, %v11007
        %v11009 = vpop.f32.mrf.mxu0
        %11010 = vmatprep.mubr.bf16.mxu0 %v10652
        %11011 = vmatmul.mubr.bf16.gmra.mxu0 %v10651
        %v11012 = vpop.f32.mrf.mxu0
        %v11013 = vadd.f32 %v9612, %v11012
        %v11014 = vpop.f32.mrf.mxu0
        %v11015 = vpop.f32.mrf.mxu0
        %v11016 = vadd.f32 %v9612, %v11015
        %v11017 = vpop.f32.mrf.mxu0
        %11018 = vmatprep.mubr.bf16.mxu0 %v10657
        %11019 = vmatmul.mubr.bf16.gmra.mxu0 %v10656
        %v11020 = vpop.f32.mrf.mxu0
        %v11021 = vadd.f32 %v9612, %v11020
        %v11022 = vpop.f32.mrf.mxu0
        %v11023 = vpop.f32.mrf.mxu0
        %v11024 = vadd.f32 %v9612, %v11023
        %v11025 = vpop.f32.mrf.mxu0
        %11026 = vmatprep.mubr.bf16.mxu0 %v10662
        %11027 = vmatmul.mubr.bf16.gmra.mxu0 %v10661
        %v11028 = vpop.f32.mrf.mxu0
        %v11029 = vadd.f32 %v9612, %v11028
        %v11030 = vpop.f32.mrf.mxu0
        %v11031 = vpop.f32.mrf.mxu0
        %v11032 = vadd.f32 %v9612, %v11031
        %v11033 = vpop.f32.mrf.mxu0
        %11034 = vdwg.mxu0
        %11035 = vmatprep.subr.bf16.mxu0 0
        %11036 = vmatpush1.bf16.msra.mxu0 %v10865
        %11037 = vmatprep.subr.bf16.mxu0 0
        %11038 = vmatpush1.bf16.msra.mxu0 %v10864
        %11039 = vmatprep.subr.bf16.mxu0 0
        %11040 = vmatpush1.bf16.msra.mxu0 %v10863
        %11041 = vmatprep.subr.bf16.mxu0 0
        %11042 = vmatpush1.bf16.msra.mxu0 %v10862
        %11043 = vmatprep.subr.bf16.mxu0 0
        %11044 = vmatpush1.bf16.msra.mxu0 %v10861
        %11045 = vmatprep.subr.bf16.mxu0 0
        %11046 = vmatpush1.bf16.msra.mxu0 %v10860
        %11047 = vmatprep.subr.bf16.mxu0 0
        %11048 = vmatpush1.bf16.msra.mxu0 %v10859
        %11049 = vmatprep.subr.bf16.mxu0 0
        %11050 = vmatpush1.bf16.msra.mxu0 %v10858
        %11051 = vmatprep.subr.bf16.mxu0 0
        %11052 = vmatpush2.bf16.msra.mxu0 %v10873
        %11053 = vmatprep.subr.bf16.mxu0 0
        %11054 = vmatpush2.bf16.msra.mxu0 %v10872
        %11055 = vmatprep.subr.bf16.mxu0 0
        %11056 = vmatpush2.bf16.msra.mxu0 %v10871
        %11057 = vmatprep.subr.bf16.mxu0 0
        %11058 = vmatpush2.bf16.msra.mxu0 %v10870
        %11059 = vmatprep.subr.bf16.mxu0 0
        %11060 = vmatpush2.bf16.msra.mxu0 %v10869
        %11061 = vmatprep.subr.bf16.mxu0 0
        %11062 = vmatpush2.bf16.msra.mxu0 %v10868
        %11063 = vmatprep.subr.bf16.mxu0 0
        %11064 = vmatpush2.bf16.msra.mxu0 %v10867
        %11065 = vmatprep.subr.bf16.mxu0 0
        %11066 = vmatpush2.bf16.msra.mxu0 %v10866
        %11067 = vmatprep.mubr.bf16.mxu0 %v10629
        %11068 = vmatmul.mubr.bf16.gmra.mxu0 %v10628
        %v11069 = vpop.f32.mrf.mxu0
        %v11070 = vadd.f32 %v10973, %v11069
        %v11071 = vpop.f32.mrf.mxu0
        %v11072 = vpop.f32.mrf.mxu0
        %v11073 = vadd.f32 %v10976, %v11072
        %v11074 = vpop.f32.mrf.mxu0
        %11075 = vmatprep.mubr.bf16.mxu0 %v10634
        %11076 = vmatmul.mubr.bf16.gmra.mxu0 %v10633
        %v11077 = vpop.f32.mrf.mxu0
        %v11078 = vadd.f32 %v10981, %v11077
        %v11079 = vpop.f32.mrf.mxu0
        %v11080 = vpop.f32.mrf.mxu0
        %v11081 = vadd.f32 %v10984, %v11080
        %v11082 = vpop.f32.mrf.mxu0
        %11083 = vmatprep.mubr.bf16.mxu0 %v10639
        %11084 = vmatmul.mubr.bf16.gmra.mxu0 %v10638
        %v11085 = vpop.f32.mrf.mxu0
        %v11086 = vadd.f32 %v10989, %v11085
        %v11087 = vpop.f32.mrf.mxu0
        %v11088 = vpop.f32.mrf.mxu0
        %v11089 = vadd.f32 %v10992, %v11088
        %v11090 = vpop.f32.mrf.mxu0
        %11091 = vmatprep.mubr.bf16.mxu0 %v10644
        %11092 = vmatmul.mubr.bf16.gmra.mxu0 %v10643
        %v11093 = vpop.f32.mrf.mxu0
        %v11094 = vadd.f32 %v10997, %v11093
        %v11095 = vpop.f32.mrf.mxu0
        %v11096 = vpop.f32.mrf.mxu0
        %v11097 = vadd.f32 %v11000, %v11096
        %v11098 = vpop.f32.mrf.mxu0
        %11099 = vmatprep.mubr.bf16.mxu0 %v10649
        %11100 = vmatmul.mubr.bf16.gmra.mxu0 %v10648
        %v11101 = vpop.f32.mrf.mxu0
        %v11102 = vadd.f32 %v11005, %v11101
        %v11103 = vpop.f32.mrf.mxu0
        %v11104 = vpop.f32.mrf.mxu0
        %v11105 = vadd.f32 %v11008, %v11104
        %v11106 = vpop.f32.mrf.mxu0
        %11107 = vmatprep.mubr.bf16.mxu0 %v10654
        %11108 = vmatmul.mubr.bf16.gmra.mxu0 %v10653
        %v11109 = vpop.f32.mrf.mxu0
        %v11110 = vadd.f32 %v11013, %v11109
        %v11111 = vpop.f32.mrf.mxu0
        %v11112 = vpop.f32.mrf.mxu0
        %v11113 = vadd.f32 %v11016, %v11112
        %v11114 = vpop.f32.mrf.mxu0
        %11115 = vmatprep.mubr.bf16.mxu0 %v10659
        %11116 = vmatmul.mubr.bf16.gmra.mxu0 %v10658
        %v11117 = vpop.f32.mrf.mxu0
        %v11118 = vadd.f32 %v11021, %v11117
        %v11119 = vpop.f32.mrf.mxu0
        %v11120 = vpop.f32.mrf.mxu0
        %v11121 = vadd.f32 %v11024, %v11120
        %v11122 = vpop.f32.mrf.mxu0
        %11123 = vmatprep.mubr.bf16.mxu0 %v10664
        %11124 = vmatmul.mubr.bf16.gmra.mxu0 %v10663
        %v11125 = vpop.f32.mrf.mxu0
        %v11126 = vadd.f32 %v11029, %v11125
        %v11127 = vpop.f32.mrf.mxu0
        %v11128 = vpop.f32.mrf.mxu0
        %v11129 = vadd.f32 %v11032, %v11128
        %v11130 = vpop.f32.mrf.mxu0
        %11131 = vdwg.mxu0
        %11132 = vmatprep.subr.bf16.mxu0 0
        %11133 = vmatpush1.bf16.msra.mxu0 0
        %11134 = vmatprep.subr.bf16.mxu0 0
        %11135 = vmatpush1.bf16.msra.mxu0 0
        %11136 = vmatprep.subr.bf16.mxu0 0
        %11137 = vmatpush1.bf16.msra.mxu0 0
        %11138 = vmatprep.subr.bf16.mxu0 0
        %11139 = vmatpush1.bf16.msra.mxu0 0
        %11140 = vmatprep.subr.bf16.mxu0 0
        %11141 = vmatpush1.bf16.msra.mxu0 %v10877
        %11142 = vmatprep.subr.bf16.mxu0 0
        %11143 = vmatpush1.bf16.msra.mxu0 %v10876
        %11144 = vmatprep.subr.bf16.mxu0 0
        %11145 = vmatpush1.bf16.msra.mxu0 %v10875
        %11146 = vmatprep.subr.bf16.mxu0 0
        %11147 = vmatpush1.bf16.msra.mxu0 %v10874
        %11148 = vmatprep.subr.bf16.mxu0 0
        %11149 = vmatpush2.bf16.msra.mxu0 0
        %11150 = vmatprep.subr.bf16.mxu0 0
        %11151 = vmatpush2.bf16.msra.mxu0 0
        %11152 = vmatprep.subr.bf16.mxu0 0
        %11153 = vmatpush2.bf16.msra.mxu0 0
        %11154 = vmatprep.subr.bf16.mxu0 0
        %11155 = vmatpush2.bf16.msra.mxu0 0
        %11156 = vmatprep.subr.bf16.mxu0 0
        %11157 = vmatpush2.bf16.msra.mxu0 0
        %11158 = vmatprep.subr.bf16.mxu0 0
        %11159 = vmatpush2.bf16.msra.mxu0 0
        %11160 = vmatprep.subr.bf16.mxu0 0
        %11161 = vmatpush2.bf16.msra.mxu0 0
        %11162 = vmatprep.subr.bf16.mxu0 0
        %11163 = vmatpush2.bf16.msra.mxu0 0
        %11164 = vmatprep.mubr.bf16.mxu0 0
        %11165 = vmatmul.mubr.bf16.gmra.mxu0 %v10915
        %v11166 = vpop.f32.mrf.mxu0
        %v11167 = vadd.f32 %v11070, %v11166
        %v11168 = vpop.f32.mrf.mxu0
        %v11169 = vpop.f32.mrf.mxu0
        %v11170 = vadd.f32 %v11073, %v11169
        %v11171 = vpop.f32.mrf.mxu0
        %11172 = vmatprep.mubr.bf16.mxu0 0
        %11173 = vmatmul.mubr.bf16.gmra.mxu0 %v10918
        %v11174 = vpop.f32.mrf.mxu0
        %v11175 = vadd.f32 %v11078, %v11174
        %v11176 = vpop.f32.mrf.mxu0
        %v11177 = vpop.f32.mrf.mxu0
        %v11178 = vadd.f32 %v11081, %v11177
        %v11179 = vpop.f32.mrf.mxu0
        %11180 = vmatprep.mubr.bf16.mxu0 0
        %11181 = vmatmul.mubr.bf16.gmra.mxu0 %v10921
        %v11182 = vpop.f32.mrf.mxu0
        %v11183 = vadd.f32 %v11086, %v11182
        %v11184 = vpop.f32.mrf.mxu0
        %v11185 = vpop.f32.mrf.mxu0
        %v11186 = vadd.f32 %v11089, %v11185
        %v11187 = vpop.f32.mrf.mxu0
        %11188 = vmatprep.mubr.bf16.mxu0 0
        %11189 = vmatmul.mubr.bf16.gmra.mxu0 %v10924
        %v11190 = vpop.f32.mrf.mxu0
        %v11191 = vadd.f32 %v11094, %v11190
        %v11192 = vpop.f32.mrf.mxu0
        %v11193 = vpop.f32.mrf.mxu0
        %v11194 = vadd.f32 %v11097, %v11193
        %v11195 = vpop.f32.mrf.mxu0
        %11196 = vmatprep.mubr.bf16.mxu0 0
        %11197 = vmatmul.mubr.bf16.gmra.mxu0 %v10927
        %v11198 = vpop.f32.mrf.mxu0
        %v11199 = vadd.f32 %v11102, %v11198
        %v11200 = vpop.f32.mrf.mxu0
        %v11201 = vpop.f32.mrf.mxu0
        %v11202 = vadd.f32 %v11105, %v11201
        %v11203 = vpop.f32.mrf.mxu0
        %11204 = vmatprep.mubr.bf16.mxu0 0
        %11205 = vmatmul.mubr.bf16.gmra.mxu0 %v10930
        %v11206 = vpop.f32.mrf.mxu0
        %v11207 = vadd.f32 %v11110, %v11206
        %v11208 = vpop.f32.mrf.mxu0
        %v11209 = vpop.f32.mrf.mxu0
        %v11210 = vadd.f32 %v11113, %v11209
        %v11211 = vpop.f32.mrf.mxu0
        %11212 = vmatprep.mubr.bf16.mxu0 0
        %11213 = vmatmul.mubr.bf16.gmra.mxu0 %v10933
        %v11214 = vpop.f32.mrf.mxu0
        %v11215 = vadd.f32 %v11118, %v11214
        %v11216 = vpop.f32.mrf.mxu0
        %v11217 = vpop.f32.mrf.mxu0
        %v11218 = vadd.f32 %v11121, %v11217
        %v11219 = vpop.f32.mrf.mxu0
        %11220 = vmatprep.mubr.bf16.mxu0 0
        %11221 = vmatmul.mubr.bf16.gmra.mxu0 %v10936
        %v11222 = vpop.f32.mrf.mxu0
        %v11223 = vadd.f32 %v11126, %v11222
        %v11224 = vpop.f32.mrf.mxu0
        %v11225 = vpop.f32.mrf.mxu0
        %v11226 = vadd.f32 %v11129, %v11225
        %v11227 = vpop.f32.mrf.mxu0
        %11228 = vdwg.mxu0
        %v11229 = vmax.f32 %v11167, 0.0
        %v11230 = vmax.f32 %v11170, 0.0
        %v11231 = vmax.f32 %v11175, 0.0
        %v11232 = vmax.f32 %v11178, 0.0
        %v11233 = vmax.f32 %v11183, 0.0
        %v11234 = vmax.f32 %v11186, 0.0
        %v11235 = vmax.f32 %v11191, 0.0
        %v11236 = vmax.f32 %v11194, 0.0
        %v11237 = vmax.f32 %v11199, 0.0
        %v11238 = vmax.f32 %v11202, 0.0
        %v11239 = vmax.f32 %v11207, 0.0
        %v11240 = vmax.f32 %v11210, 0.0
        %v11241 = vmax.f32 %v11215, 0.0
        %v11242 = vmax.f32 %v11218, 0.0
        %v11243 = vmax.f32 %v11223, 0.0
        %v11244 = vmax.f32 %v11226, 0.0
        %v11245 = vmax.f32 %v11229, %v11231
        %v11246 = vmax.f32 %v11230, %v11232
        %v11247 = vmax.f32 %v11233, %v11235
        %v11248 = vmax.f32 %v11234, %v11236
        %v11249 = vmax.f32 %v11237, %v11239
        %v11250 = vmax.f32 %v11238, %v11240
        %v11251 = vmax.f32 %v11241, %v11243
        %v11252 = vmax.f32 %v11242, %v11244
        %s11253 = scalar_lea.vmem [#allocation6], 64
        %11254 = vst.msk [vmem:[%s11253] sm:$0xff] %vm10030, %v11245
        %11255 = vst.msk [vmem:[%s11253 + $0x8] sm:$0xff] %vm10030, %v11246
        %11256 = vst.msk [vmem:[%s11253 + $0x10] sm:$0xff] %vm10030, %v11247
        %11257 = vst.msk [vmem:[%s11253 + $0x18] sm:$0xff] %vm10030, %v11248
        %11258 = vst.msk [vmem:[%s11253 + $0x20] sm:$0xff] %vm10030, %v11249
        %11259 = vst.msk [vmem:[%s11253 + $0x28] sm:$0xff] %vm10030, %v11250
        %11260 = vst.msk [vmem:[%s11253 + $0x30] sm:$0xff] %vm10030, %v11251
        %11261 = vst.msk [vmem:[%s11253 + $0x38] sm:$0xff] %vm10030, %v11252
        %v11262 = vld [vmem:[#allocation6] sm:$0x1]
        %v11263 = vld [vmem:[#allocation6 + $0x10] sm:$0x1]
        %v11264 = vld [vmem:[#allocation6 + $0x20] sm:$0x1]
        %v11265 = vld [vmem:[#allocation6 + $0x30] sm:$0x1]
        %v11266 = vld [vmem:[#allocation6 + $0x40] sm:$0x1]
        %v11267 = vld [vmem:[#allocation6 + $0x50] sm:$0x1]
        %v11268 = vld [vmem:[#allocation6 + $0x60] sm:$0x1]
        %v11269 = vld [vmem:[#allocation6 + $0x70] sm:$0x1]
        %v11270 = vld [vmem:[#allocation6 + $0x1] sm:$0x1]
        %v11271 = vld [vmem:[#allocation6 + $0x11] sm:$0x1]
        %v11272 = vld [vmem:[#allocation6 + $0x21] sm:$0x1]
        %v11273 = vld [vmem:[#allocation6 + $0x31] sm:$0x1]
        %v11274 = vld [vmem:[#allocation6 + $0x41] sm:$0x1]
        %v11275 = vld [vmem:[#allocation6 + $0x51] sm:$0x1]
        %v11276 = vld [vmem:[#allocation6 + $0x61] sm:$0x1]
        %v11277 = vld [vmem:[#allocation6 + $0x71] sm:$0x1]
        %v11278 = vmax.f32 %v11262, %v11270
        %v11279 = vmax.f32 %v11263, %v11271
        %v11280 = vmax.f32 %v11264, %v11272
        %v11281 = vmax.f32 %v11265, %v11273
        %v11282 = vmax.f32 %v11266, %v11274
        %v11283 = vmax.f32 %v11267, %v11275
        %v11284 = vmax.f32 %v11268, %v11276
        %v11285 = vmax.f32 %v11269, %v11277
        %v11294 = vrot.slane %v11279, 7
        %vm11295 = vcmask 1041409
        %v11296 = vsel %vm11295, %v11294, %v11278
        %v11297 = vrot.slane %v11280, 6
        %vm11298 = vcmask 1042434
        %v11299 = vsel %vm11298, %v11297, %v11296
        %v11300 = vrot.slane %v11281, 5
        %vm11301 = vcmask 1043459
        %v11302 = vsel %vm11301, %v11300, %v11299
        %v11303 = vrot.slane %v11282, 4
        %vm11304 = vcmask 1044484
        %v11305 = vsel %vm11304, %v11303, %v11302
        %v11306 = vrot.slane %v11283, 3
        %vm11307 = vcmask 1045509
        %v11308 = vsel %vm11307, %v11306, %v11305
        %v11309 = vrot.slane %v11284, 2
        %vm11310 = vcmask 1046534
        %v11311 = vsel %vm11310, %v11309, %v11308
        %v11312 = vrot.slane %v11285, 1
        %vm11313 = vcmask 1047559
        %v11314 = vsel %vm11313, %v11312, %v11311
        %11316 = vst.msk [vmem:[%s217] sm:$0xff] %vm10030, %v11314
        %v11317 = vld [vmem:[#allocation6 + $0x2] sm:$0x1]
        %v11318 = vld [vmem:[#allocation6 + $0x12] sm:$0x1]
        %v11319 = vld [vmem:[#allocation6 + $0x22] sm:$0x1]
        %v11320 = vld [vmem:[#allocation6 + $0x32] sm:$0x1]
        %v11321 = vld [vmem:[#allocation6 + $0x42] sm:$0x1]
        %v11322 = vld [vmem:[#allocation6 + $0x52] sm:$0x1]
        %v11323 = vld [vmem:[#allocation6 + $0x62] sm:$0x1]
        %v11324 = vld [vmem:[#allocation6 + $0x72] sm:$0x1]
        %v11325 = vld [vmem:[#allocation6 + $0x3] sm:$0x1]
        %v11326 = vld [vmem:[#allocation6 + $0x13] sm:$0x1]
        %v11327 = vld [vmem:[#allocation6 + $0x23] sm:$0x1]
        %v11328 = vld [vmem:[#allocation6 + $0x33] sm:$0x1]
        %v11329 = vld [vmem:[#allocation6 + $0x43] sm:$0x1]
        %v11330 = vld [vmem:[#allocation6 + $0x53] sm:$0x1]
        %v11331 = vld [vmem:[#allocation6 + $0x63] sm:$0x1]
        %v11332 = vld [vmem:[#allocation6 + $0x73] sm:$0x1]
        %v11333 = vmax.f32 %v11317, %v11325
        %v11334 = vmax.f32 %v11318, %v11326
        %v11335 = vmax.f32 %v11319, %v11327
        %v11336 = vmax.f32 %v11320, %v11328
        %v11337 = vmax.f32 %v11321, %v11329
        %v11338 = vmax.f32 %v11322, %v11330
        %v11339 = vmax.f32 %v11323, %v11331
        %v11340 = vmax.f32 %v11324, %v11332
        %v11349 = vrot.slane %v11334, 7
        %v11350 = vsel %vm11295, %v11349, %v11333
        %v11351 = vrot.slane %v11335, 6
        %v11352 = vsel %vm11298, %v11351, %v11350
        %v11353 = vrot.slane %v11336, 5
        %v11354 = vsel %vm11301, %v11353, %v11352
        %v11355 = vrot.slane %v11337, 4
        %v11356 = vsel %vm11304, %v11355, %v11354
        %v11357 = vrot.slane %v11338, 3
        %v11358 = vsel %vm11307, %v11357, %v11356
        %v11359 = vrot.slane %v11339, 2
        %v11360 = vsel %vm11310, %v11359, %v11358
        %v11361 = vrot.slane %v11340, 1
        %v11362 = vsel %vm11313, %v11361, %v11360
        %11363 = vrot.lane.b32.xlu0 %v11362, 64
        %v11364 = vpop.permute.xlu0 %11363
        %vm11366 = vcmask 1048064
        %11367 = vst.msk [vmem:[%s217] sm:$0xff] %vm11366, %v11364
        %v11368 = vld [vmem:[#allocation6 + $0x4] sm:$0x1]
        %v11369 = vld [vmem:[#allocation6 + $0x14] sm:$0x1]
        %v11370 = vld [vmem:[#allocation6 + $0x24] sm:$0x1]
        %v11371 = vld [vmem:[#allocation6 + $0x34] sm:$0x1]
        %v11372 = vld [vmem:[#allocation6 + $0x44] sm:$0x1]
        %v11373 = vld [vmem:[#allocation6 + $0x54] sm:$0x1]
        %v11374 = vld [vmem:[#allocation6 + $0x64] sm:$0x1]
        %v11375 = vld [vmem:[#allocation6 + $0x74] sm:$0x1]
        %v11376 = vld [vmem:[#allocation6 + $0x5] sm:$0x1]
        %v11377 = vld [vmem:[#allocation6 + $0x15] sm:$0x1]
        %v11378 = vld [vmem:[#allocation6 + $0x25] sm:$0x1]
        %v11379 = vld [vmem:[#allocation6 + $0x35] sm:$0x1]
        %v11380 = vld [vmem:[#allocation6 + $0x45] sm:$0x1]
        %v11381 = vld [vmem:[#allocation6 + $0x55] sm:$0x1]
        %v11382 = vld [vmem:[#allocation6 + $0x65] sm:$0x1]
        %v11383 = vld [vmem:[#allocation6 + $0x75] sm:$0x1]
        %v11384 = vmax.f32 %v11368, %v11376
        %v11385 = vmax.f32 %v11369, %v11377
        %v11386 = vmax.f32 %v11370, %v11378
        %v11387 = vmax.f32 %v11371, %v11379
        %v11388 = vmax.f32 %v11372, %v11380
        %v11389 = vmax.f32 %v11373, %v11381
        %v11390 = vmax.f32 %v11374, %v11382
        %v11391 = vmax.f32 %v11375, %v11383
        %v11400 = vrot.slane %v11385, 7
        %v11401 = vsel %vm11295, %v11400, %v11384
        %v11402 = vrot.slane %v11386, 6
        %v11403 = vsel %vm11298, %v11402, %v11401
        %v11404 = vrot.slane %v11387, 5
        %v11405 = vsel %vm11301, %v11404, %v11403
        %v11406 = vrot.slane %v11388, 4
        %v11407 = vsel %vm11304, %v11406, %v11405
        %v11408 = vrot.slane %v11389, 3
        %v11409 = vsel %vm11307, %v11408, %v11407
        %v11410 = vrot.slane %v11390, 2
        %v11411 = vsel %vm11310, %v11410, %v11409
        %v11412 = vrot.slane %v11391, 1
        %v11413 = vsel %vm11313, %v11412, %v11411
        %11415 = vst.msk [vmem:[%s217 + $0x8] sm:$0xff] %vm10030, %v11413
        %v11416 = vld [vmem:[#allocation6 + $0x6] sm:$0x1]
        %v11417 = vld [vmem:[#allocation6 + $0x16] sm:$0x1]
        %v11418 = vld [vmem:[#allocation6 + $0x26] sm:$0x1]
        %v11419 = vld [vmem:[#allocation6 + $0x36] sm:$0x1]
        %v11420 = vld [vmem:[#allocation6 + $0x46] sm:$0x1]
        %v11421 = vld [vmem:[#allocation6 + $0x56] sm:$0x1]
        %v11422 = vld [vmem:[#allocation6 + $0x66] sm:$0x1]
        %v11423 = vld [vmem:[#allocation6 + $0x76] sm:$0x1]
        %v11424 = vld [vmem:[#allocation6 + $0x7] sm:$0x1]
        %v11425 = vld [vmem:[#allocation6 + $0x17] sm:$0x1]
        %v11426 = vld [vmem:[#allocation6 + $0x27] sm:$0x1]
        %v11427 = vld [vmem:[#allocation6 + $0x37] sm:$0x1]
        %v11428 = vld [vmem:[#allocation6 + $0x47] sm:$0x1]
        %v11429 = vld [vmem:[#allocation6 + $0x57] sm:$0x1]
        %v11430 = vld [vmem:[#allocation6 + $0x67] sm:$0x1]
        %v11431 = vld [vmem:[#allocation6 + $0x77] sm:$0x1]
        %v11432 = vmax.f32 %v11416, %v11424
        %v11433 = vmax.f32 %v11417, %v11425
        %v11434 = vmax.f32 %v11418, %v11426
        %v11435 = vmax.f32 %v11419, %v11427
        %v11436 = vmax.f32 %v11420, %v11428
        %v11437 = vmax.f32 %v11421, %v11429
        %v11438 = vmax.f32 %v11422, %v11430
        %v11439 = vmax.f32 %v11423, %v11431
        %v11448 = vrot.slane %v11433, 7
        %v11449 = vsel %vm11295, %v11448, %v11432
        %v11450 = vrot.slane %v11434, 6
        %v11451 = vsel %vm11298, %v11450, %v11449
        %v11452 = vrot.slane %v11435, 5
        %v11453 = vsel %vm11301, %v11452, %v11451
        %v11454 = vrot.slane %v11436, 4
        %v11455 = vsel %vm11304, %v11454, %v11453
        %v11456 = vrot.slane %v11437, 3
        %v11457 = vsel %vm11307, %v11456, %v11455
        %v11458 = vrot.slane %v11438, 2
        %v11459 = vsel %vm11310, %v11458, %v11457
        %v11460 = vrot.slane %v11439, 1
        %v11461 = vsel %vm11313, %v11460, %v11459
        %11462 = vrot.lane.b32.xlu0 %v11461, 64
        %v11463 = vpop.permute.xlu0 %11462
        %11465 = vst.msk [vmem:[%s217 + $0x8] sm:$0xff] %vm11366, %v11463
        %v11466 = vld [vmem:[#allocation6 + $0x8] sm:$0x1]
        %v11467 = vld [vmem:[#allocation6 + $0x18] sm:$0x1]
        %v11468 = vld [vmem:[#allocation6 + $0x28] sm:$0x1]
        %v11469 = vld [vmem:[#allocation6 + $0x38] sm:$0x1]
        %v11470 = vld [vmem:[#allocation6 + $0x48] sm:$0x1]
        %v11471 = vld [vmem:[#allocation6 + $0x58] sm:$0x1]
        %v11472 = vld [vmem:[#allocation6 + $0x68] sm:$0x1]
        %v11473 = vld [vmem:[#allocation6 + $0x78] sm:$0x1]
        %v11474 = vld [vmem:[#allocation6 + $0x9] sm:$0x1]
        %v11475 = vld [vmem:[#allocation6 + $0x19] sm:$0x1]
        %v11476 = vld [vmem:[#allocation6 + $0x29] sm:$0x1]
        %v11477 = vld [vmem:[#allocation6 + $0x39] sm:$0x1]
        %v11478 = vld [vmem:[#allocation6 + $0x49] sm:$0x1]
        %v11479 = vld [vmem:[#allocation6 + $0x59] sm:$0x1]
        %v11480 = vld [vmem:[#allocation6 + $0x69] sm:$0x1]
        %v11481 = vld [vmem:[#allocation6 + $0x79] sm:$0x1]
        %v11482 = vmax.f32 %v11466, %v11474
        %v11483 = vmax.f32 %v11467, %v11475
        %v11484 = vmax.f32 %v11468, %v11476
        %v11485 = vmax.f32 %v11469, %v11477
        %v11486 = vmax.f32 %v11470, %v11478
        %v11487 = vmax.f32 %v11471, %v11479
        %v11488 = vmax.f32 %v11472, %v11480
        %v11489 = vmax.f32 %v11473, %v11481
        %v11498 = vrot.slane %v11483, 7
        %v11499 = vsel %vm11295, %v11498, %v11482
        %v11500 = vrot.slane %v11484, 6
        %v11501 = vsel %vm11298, %v11500, %v11499
        %v11502 = vrot.slane %v11485, 5
        %v11503 = vsel %vm11301, %v11502, %v11501
        %v11504 = vrot.slane %v11486, 4
        %v11505 = vsel %vm11304, %v11504, %v11503
        %v11506 = vrot.slane %v11487, 3
        %v11507 = vsel %vm11307, %v11506, %v11505
        %v11508 = vrot.slane %v11488, 2
        %v11509 = vsel %vm11310, %v11508, %v11507
        %v11510 = vrot.slane %v11489, 1
        %v11511 = vsel %vm11313, %v11510, %v11509
        %11513 = vst.msk [vmem:[%s217 + $0x10] sm:$0xff] %vm10030, %v11511
        %v11514 = vld [vmem:[#allocation6 + $0xa] sm:$0x1]
        %v11515 = vld [vmem:[#allocation6 + $0x1a] sm:$0x1]
        %v11516 = vld [vmem:[#allocation6 + $0x2a] sm:$0x1]
        %v11517 = vld [vmem:[#allocation6 + $0x3a] sm:$0x1]
        %v11518 = vld [vmem:[#allocation6 + $0x4a] sm:$0x1]
        %v11519 = vld [vmem:[#allocation6 + $0x5a] sm:$0x1]
        %v11520 = vld [vmem:[#allocation6 + $0x6a] sm:$0x1]
        %v11521 = vld [vmem:[#allocation6 + $0x7a] sm:$0x1]
        %v11522 = vld [vmem:[#allocation6 + $0xb] sm:$0x1]
        %v11523 = vld [vmem:[#allocation6 + $0x1b] sm:$0x1]
        %v11524 = vld [vmem:[#allocation6 + $0x2b] sm:$0x1]
        %v11525 = vld [vmem:[#allocation6 + $0x3b] sm:$0x1]
        %v11526 = vld [vmem:[#allocation6 + $0x4b] sm:$0x1]
        %v11527 = vld [vmem:[#allocation6 + $0x5b] sm:$0x1]
        %v11528 = vld [vmem:[#allocation6 + $0x6b] sm:$0x1]
        %v11529 = vld [vmem:[#allocation6 + $0x7b] sm:$0x1]
        %v11530 = vmax.f32 %v11514, %v11522
        %v11531 = vmax.f32 %v11515, %v11523
        %v11532 = vmax.f32 %v11516, %v11524
        %v11533 = vmax.f32 %v11517, %v11525
        %v11534 = vmax.f32 %v11518, %v11526
        %v11535 = vmax.f32 %v11519, %v11527
        %v11536 = vmax.f32 %v11520, %v11528
        %v11537 = vmax.f32 %v11521, %v11529
        %v11546 = vrot.slane %v11531, 7
        %v11547 = vsel %vm11295, %v11546, %v11530
        %v11548 = vrot.slane %v11532, 6
        %v11549 = vsel %vm11298, %v11548, %v11547
        %v11550 = vrot.slane %v11533, 5
        %v11551 = vsel %vm11301, %v11550, %v11549
        %v11552 = vrot.slane %v11534, 4
        %v11553 = vsel %vm11304, %v11552, %v11551
        %v11554 = vrot.slane %v11535, 3
        %v11555 = vsel %vm11307, %v11554, %v11553
        %v11556 = vrot.slane %v11536, 2
        %v11557 = vsel %vm11310, %v11556, %v11555
        %v11558 = vrot.slane %v11537, 1
        %v11559 = vsel %vm11313, %v11558, %v11557
        %11560 = vrot.lane.b32.xlu0 %v11559, 64
        %v11561 = vpop.permute.xlu0 %11560
        %11563 = vst.msk [vmem:[%s217 + $0x10] sm:$0xff] %vm11366, %v11561
        %v11564 = vld [vmem:[#allocation6 + $0xc] sm:$0x1]
        %v11565 = vld [vmem:[#allocation6 + $0x1c] sm:$0x1]
        %v11566 = vld [vmem:[#allocation6 + $0x2c] sm:$0x1]
        %v11567 = vld [vmem:[#allocation6 + $0x3c] sm:$0x1]
        %v11568 = vld [vmem:[#allocation6 + $0x4c] sm:$0x1]
        %v11569 = vld [vmem:[#allocation6 + $0x5c] sm:$0x1]
        %v11570 = vld [vmem:[#allocation6 + $0x6c] sm:$0x1]
        %v11571 = vld [vmem:[#allocation6 + $0x7c] sm:$0x1]
        %v11572 = vld [vmem:[#allocation6 + $0xd] sm:$0x1]
        %v11573 = vld [vmem:[#allocation6 + $0x1d] sm:$0x1]
        %v11574 = vld [vmem:[#allocation6 + $0x2d] sm:$0x1]
        %v11575 = vld [vmem:[#allocation6 + $0x3d] sm:$0x1]
        %v11576 = vld [vmem:[#allocation6 + $0x4d] sm:$0x1]
        %v11577 = vld [vmem:[#allocation6 + $0x5d] sm:$0x1]
        %v11578 = vld [vmem:[#allocation6 + $0x6d] sm:$0x1]
        %v11579 = vld [vmem:[#allocation6 + $0x7d] sm:$0x1]
        %v11580 = vmax.f32 %v11564, %v11572
        %v11581 = vmax.f32 %v11565, %v11573
        %v11582 = vmax.f32 %v11566, %v11574
        %v11583 = vmax.f32 %v11567, %v11575
        %v11584 = vmax.f32 %v11568, %v11576
        %v11585 = vmax.f32 %v11569, %v11577
        %v11586 = vmax.f32 %v11570, %v11578
        %v11587 = vmax.f32 %v11571, %v11579
        %v11596 = vrot.slane %v11581, 7
        %v11597 = vsel %vm11295, %v11596, %v11580
        %v11598 = vrot.slane %v11582, 6
        %v11599 = vsel %vm11298, %v11598, %v11597
        %v11600 = vrot.slane %v11583, 5
        %v11601 = vsel %vm11301, %v11600, %v11599
        %v11602 = vrot.slane %v11584, 4
        %v11603 = vsel %vm11304, %v11602, %v11601
        %v11604 = vrot.slane %v11585, 3
        %v11605 = vsel %vm11307, %v11604, %v11603
        %v11606 = vrot.slane %v11586, 2
        %v11607 = vsel %vm11310, %v11606, %v11605
        %v11608 = vrot.slane %v11587, 1
        %v11609 = vsel %vm11313, %v11608, %v11607
        %11611 = vst.msk [vmem:[%s217 + $0x18] sm:$0xff] %vm10030, %v11609
        %v11612 = vld [vmem:[#allocation6 + $0xe] sm:$0x1]
        %v11613 = vld [vmem:[#allocation6 + $0x1e] sm:$0x1]
        %v11614 = vld [vmem:[#allocation6 + $0x2e] sm:$0x1]
        %v11615 = vld [vmem:[#allocation6 + $0x3e] sm:$0x1]
        %v11616 = vld [vmem:[#allocation6 + $0x4e] sm:$0x1]
        %v11617 = vld [vmem:[#allocation6 + $0x5e] sm:$0x1]
        %v11618 = vld [vmem:[#allocation6 + $0x6e] sm:$0x1]
        %v11619 = vld [vmem:[#allocation6 + $0x7e] sm:$0x1]
        %v11620 = vld [vmem:[#allocation6 + $0xf] sm:$0x1]
        %v11621 = vld [vmem:[#allocation6 + $0x1f] sm:$0x1]
        %v11622 = vld [vmem:[#allocation6 + $0x2f] sm:$0x1]
        %v11623 = vld [vmem:[#allocation6 + $0x3f] sm:$0x1]
        %v11624 = vld [vmem:[#allocation6 + $0x4f] sm:$0x1]
        %v11625 = vld [vmem:[#allocation6 + $0x5f] sm:$0x1]
        %v11626 = vld [vmem:[#allocation6 + $0x6f] sm:$0x1]
        %v11627 = vld [vmem:[#allocation6 + $0x7f] sm:$0x1]
        %v11628 = vmax.f32 %v11612, %v11620
        %v11629 = vmax.f32 %v11613, %v11621
        %v11630 = vmax.f32 %v11614, %v11622
        %v11631 = vmax.f32 %v11615, %v11623
        %v11632 = vmax.f32 %v11616, %v11624
        %v11633 = vmax.f32 %v11617, %v11625
        %v11634 = vmax.f32 %v11618, %v11626
        %v11635 = vmax.f32 %v11619, %v11627
        %v11644 = vrot.slane %v11629, 7
        %v11645 = vsel %vm11295, %v11644, %v11628
        %v11646 = vrot.slane %v11630, 6
        %v11647 = vsel %vm11298, %v11646, %v11645
        %v11648 = vrot.slane %v11631, 5
        %v11649 = vsel %vm11301, %v11648, %v11647
        %v11650 = vrot.slane %v11632, 4
        %v11651 = vsel %vm11304, %v11650, %v11649
        %v11652 = vrot.slane %v11633, 3
        %v11653 = vsel %vm11307, %v11652, %v11651
        %v11654 = vrot.slane %v11634, 2
        %v11655 = vsel %vm11310, %v11654, %v11653
        %v11656 = vrot.slane %v11635, 1
        %v11657 = vsel %vm11313, %v11656, %v11655
        %11658 = vrot.lane.b32.xlu0 %v11657, 64
        %v11659 = vpop.permute.xlu0 %11658
        %11661 = vst.msk [vmem:[%s217 + $0x18] sm:$0xff] %vm11366, %v11659
        %s11662 = sand.u32 %s137, 1
        %s11663 = scalar_lea.sflag [#allocation8], %s11662
        %s11664 = sand.u32 %s137, 1
        %s11665 = smul.addr %s11664, 32
        %s11666 = scalar_lea.vmem [#allocation7], %s11665
        // Predicated region
        $region41: #{tpu_custom_call.1} parent=39 // pred_check
          %p11667 = pneg %p147
        $region42: #{tpu_custom_call.1} parent=39 // pred_check_branch
          %11669 = sbr.rel (%p11667) target = $region44
        $region43: #{tpu_custom_call.1} parent=39 // pred_region
          %s11671 = ssub.s32 512, 512
          %11672 = vsyncadd %s11663, %s11671
          %s11673 = smul.addr %s19, 4
          %s11674 = smul.addr %s11673, 128
          %s11675 = scalar_lea.hbm %s5, %s11674
          %s11677 = sshll.u32 %s11666, 4
          %s11678 = int_to_ptr.vmem [resolvable:$true] %s11677
          %11680 = dma.vmem_to_hbm [thread:$0]  %s11678, 512, %s11675, %s11663
        $region44: #{tpu_custom_call.1} parent=39 // pred_fallthru
          _
      $region40: #{tpu_custom_call.1} parent=5 // pred_fallthru
        _
      %p11681 = scmp.le.s32.totalorder 2, %s14
      // Predicated region
      $region45: #{tpu_custom_call.1} parent=5 // pred_check
        %p11682 = pneg %p11681
      $region46: #{tpu_custom_call.1} parent=5 // pred_check_branch
        %11684 = sbr.rel (%p11682) target = $region48
      $region47: #{tpu_custom_call.1} parent=5 // pred_region
        %s11685 = ssub.s32 %s14, 2
        // Predicated region
        $region49: #{tpu_custom_call.1} parent=47 // pred_check
          %p11686 = pneg %p153
        $region50: #{tpu_custom_call.1} parent=47 // pred_check_branch
          %11688 = sbr.rel (%p11686) target = $region52
        $region51: #{tpu_custom_call.1} parent=47 // pred_region
          %s11689 = sand.u32 %s138, 1
          %s11690 = scalar_lea.sflag [#allocation8], %s11689
          %s11691 = sand.u32 %s138, 1
          %s11692 = smul.addr %s11691, 32
          %s11693 = scalar_lea.vmem [#allocation7], %s11692
          %11694 = dma.done %s11690, 512
        $region52: #{tpu_custom_call.1} parent=47 // pred_fallthru
          _
      $region48: #{tpu_custom_call.1} parent=5 // pred_fallthru
        _
    $region6: #{tpu_custom_call.1} parent=1 // loop_footer
      %s18 = sadd.s32 1, %s14
    $region7: #{tpu_custom_call.1} parent=1 // loop_footer_branch
      %13 = sbr.rel target = $region3
    $region8: #{tpu_custom_call.1} parent=1 // loop_exit
      _
    %11695 = vsyncpa [#allocation8], 1
    %s11696 = scalar_lea.sflag [#allocation8], 1
    %11697 = vsyncpa %s11696, 1

</llo_original>
